<compile_context>
chip_gen: v6e
topology: v6e:2x2x1
jax: 0.10.0
libtpu: 0.0.40
codegen_flags: <defaults>
</compile_context>

<pallas_src>
import functools

import jax
import jax.numpy as jnp
import numpy as np
from jax.experimental import pallas as pl
from jax.experimental.pallas import tpu as pltpu


def _round_up(x, m):
    return (x + m - 1) // m * m


def _m_tiles(M):
    """M tile / padded M.  Use the whole (8-rounded) M when it is small."""
    M8 = _round_up(max(M, 8), 8)
    if M8 <= 1024:
        return M8, M8
    TM = 512
    return TM, _round_up(M, TM)


def _k_tiles(K):
    """K tile / padded K.  4096 cap keeps double-buffered fc1 weights ~8 MiB."""
    TK = min(4096, _round_up(K, 128))
    return TK, _round_up(K, TK)


# ----------------------------------------------------------------------------
# Kernel 1: matmul + bias + optional ReLU (used by the conv layers).
# Grid = (M tiles, K tiles); K innermost ("arbitrary").  Output block is
# resident across K, so we accumulate directly into o_ref (f32) -- no scratch.
# ----------------------------------------------------------------------------
def _mm_kernel(x_ref, w_ref, b_ref, o_ref, *, relu, nk):
    if nk == 1:
        r = jnp.dot(x_ref[...], w_ref[...], preferred_element_type=jnp.float32)
        r = r + b_ref[...]
        if relu:
            r = jnp.maximum(r, 0.0)
        o_ref[...] = r
        return

    k = pl.program_id(1)

    @pl.when(k == 0)
    def _():
        o_ref[...] = jnp.zeros_like(o_ref)

    o_ref[...] += jnp.dot(x_ref[...], w_ref[...], preferred_element_type=jnp.float32)

    @pl.when(k == nk - 1)
    def _():
        r = o_ref[...] + b_ref[...]
        if relu:
            r = jnp.maximum(r, 0.0)
        o_ref[...] = r


def matmul_bias(x, wp, bp, *, K, N, relu):
    """act(x @ w + b).  x: (M, K); wp: (Kp, Np) pre-padded bf16; bp: (1, Np) f32."""
    M = x.shape[0]
    Kp, Np = wp.shape
    TM, Mp = _m_tiles(M)
    TK, Kp_chk = _k_tiles(K)
    assert Kp_chk == Kp, "weight padding must match kernel K tiling"
    nk = Kp // TK

    xp = jnp.pad(x.astype(wp.dtype), ((0, Mp - M), (0, Kp - K)))

    out = pl.pallas_call(
        functools.partial(_mm_kernel, relu=relu, nk=nk),
        out_shape=jax.ShapeDtypeStruct((Mp, Np), jnp.float32),
        grid_spec=pltpu.PrefetchScalarGridSpec(
            num_scalar_prefetch=0,
            grid=(Mp // TM, nk),
            in_specs=[
                pl.BlockSpec((TM, TK), lambda i, k: (i, k)),
                pl.BlockSpec((TK, Np), lambda i, k: (k, 0)),
                pl.BlockSpec((1, Np), lambda i, k: (0, 0)),
            ],
            out_specs=pl.BlockSpec((TM, Np), lambda i, k: (i, 0)),
        ),
        compiler_params=pltpu.CompilerParams(
            dimension_semantics=("parallel", "arbitrary"),
            vmem_limit_bytes=32 << 20,
        ),
    )(xp, wp, bp)
    return out[:M, :N]


# ----------------------------------------------------------------------------
# Kernel 2: fused fc1 (+ReLU) + fc2.  fc1 accumulates into a (TM, 512) f32
# scratch over K=16384 (TK=4096); the last K step applies bias+ReLU and the
# tiny VMEM-resident fc2 matmul, writing only the final (TM, 128) output.
# ----------------------------------------------------------------------------
def _fc_fused_kernel(x_ref, w1_ref, b1_ref, w2_ref, b2_ref, o_ref, acc_ref):
    k = pl.program_id(1)

    @pl.when(k == 0)
    def _():
        acc_ref[...] = jnp.zeros_like(acc_ref)

    acc_ref[...] += jnp.dot(x_ref[...], w1_ref[...], preferred_element_type=jnp.float32)

    @pl.when(k == pl.num_programs(1) - 1)
    def _():
        h = jnp.maximum(acc_ref[...] + b1_ref[...], 0.0)
        o_ref[...] = (
            jnp.dot(h, w2_ref[...], preferred_element_type=jnp.float32) + b2_ref[...]
        )


def fc_fused(x, w1p, b1p, w2p, b2p):
    """relu(x @ w1 + b1) @ w2 + b2 in one pallas_call.  Returns padded output."""
    M, K = x.shape
    Kp, N1 = w1p.shape
    N2p = w2p.shape[1]
    TM, Mp = _m_tiles(M)
    TK, Kp_chk = _k_tiles(K)
    assert Kp_chk == Kp

    xp = jnp.pad(x.astype(w1p.dtype), ((0, Mp - M), (0, Kp - K)))

    out = pl.pallas_call(
        _fc_fused_kernel,
        out_shape=jax.ShapeDtypeStruct((Mp, N2p), jnp.float32),
        grid_spec=pltpu.PrefetchScalarGridSpec(
            num_scalar_prefetch=0,
            grid=(Mp // TM, Kp // TK),
            in_specs=[
                pl.BlockSpec((TM, TK), lambda i, k: (i, k)),
                pl.BlockSpec((TK, N1), lambda i, k: (k, 0)),
                pl.BlockSpec((1, N1), lambda i, k: (0, 0)),
                pl.BlockSpec((N1, N2p), lambda i, k: (0, 0)),
                pl.BlockSpec((1, N2p), lambda i, k: (0, 0)),
            ],
            out_specs=pl.BlockSpec((TM, N2p), lambda i, k: (i, 0)),
            scratch_shapes=[pltpu.VMEM((TM, N1), jnp.float32)],
        ),
        compiler_params=pltpu.CompilerParams(
            dimension_semantics=("parallel", "arbitrary"),
            vmem_limit_bytes=32 << 20,
        ),
    )(xp, w1p, b1p, w2p, b2p)
    return out


# ----------------------------------------------------------------------------
# Conv2d (valid padding) = NHWC im2col (glue) + Pallas matmul kernel.
# ----------------------------------------------------------------------------
_CONV_CFG = (
    ("conv1", dict(cin=4, cout=32, k=8, stride=2)),
    ("conv2", dict(cin=32, cout=64, k=4, stride=2)),
    ("conv3", dict(cin=64, cout=64, k=3, stride=1)),
)


def _im2col_nhwc(x, kh, kw, stride):
    """x: (B, H, W, C) -> (B*Ho*Wo, kh*kw*C).  Column order: (kh, kw, c)."""
    B, H, W, C = x.shape
    Ho = (H - kh) // stride + 1
    Wo = (W - kw) // stride + 1
    patches = []
    for i in range(kh):
        for j in range(kw):
            patches.append(
                x[:, i : i + stride * Ho : stride, j : j + stride * Wo : stride, :]
            )
    p = jnp.stack(patches, axis=3)               # (B, Ho, Wo, kh*kw, C)
    p = p.reshape(B * Ho * Wo, kh * kw * C)
    return p, Ho, Wo


def conv2d_relu_nhwc(x, wp, bp, *, cout, k, stride):
    """x: (B, H, W, Cin) NHWC -> (B, Ho, Wo, Cout) NHWC (ReLU applied)."""
    B = x.shape[0]
    cin = x.shape[-1]
    cols, Ho, Wo = _im2col_nhwc(x, k, k, stride)
    y = matmul_bias(cols, wp, bp, K=cin * k * k, N=cout, relu=True)
    return y.reshape(B, Ho, Wo, cout)


# ----------------------------------------------------------------------------
# Parameter init (PyTorch-style uniform(+-1/sqrt(fan_in))) and one-time packing.
# ----------------------------------------------------------------------------
def _init_conv(key, cout, cin, k):
    kw_key, kb_key = jax.random.split(key)
    bound = 1.0 / np.sqrt(cin * k * k)
    w = jax.random.uniform(kw_key, (cout, cin, k, k), jnp.float32, -bound, bound)
    b = jax.random.uniform(kb_key, (cout,), jnp.float32, -bound, bound)
    return w, b


def _init_linear(key, fin, fout):
    kw_key, kb_key = jax.random.split(key)
    bound = 1.0 / np.sqrt(fin)
    w = jax.random.uniform(kw_key, (fout, fin), jnp.float32, -bound, bound)
    b = jax.random.uniform(kb_key, (fout,), jnp.float32, -bound, bound)
    return w, b


def init_raw_params(key, fout=18):
    k1, k2, k3, k4, k5 = jax.random.split(key, 5)
    return {
        "conv1": _init_conv(k1, 32, 4, 8),
        "conv2": _init_conv(k2, 64, 32, 4),
        "conv3": _init_conv(k3, 64, 64, 3),
        "fc1": _init_linear(k4, 16384, 512),
        "fc2": _init_linear(k5, 512, fout),
    }


def prepare_params(raw):
    """One-time weight packing: HWIO flatten, transpose, pad to tile bounds,
    bf16 cast, fc1 column permutation (NCHW->NHWC flatten order)."""
    pp = {}
    for name, _cfg in _CONV_CFG:
        w, b = raw[name]
        cout, cin, kh, kw = w.shape
        K = cin * kh * kw
        _, Kp = _k_tiles(K)
        Np = _round_up(cout, 128)
        w2d = w.transpose(2, 3, 1, 0).reshape(K, cout)        # (kh,kw,cin) x cout
        wp = jnp.zeros((Kp, Np), jnp.bfloat16).at[:K, :cout].set(
            w2d.astype(jnp.bfloat16))
        bp = jnp.zeros((1, Np), jnp.float32).at[0, :cout].set(b)
        pp[name] = (wp, bp)

    # fc1: permute columns from torch (c,h,w) flatten order to our (h,w,c) order.
    w1, b1 = raw["fc1"]
    C3, H3, W3 = 64, 16, 16
    w1 = w1.reshape(-1, C3, H3, W3).transpose(0, 2, 3, 1).reshape(w1.shape[0], -1)
    w1p = w1.T.astype(jnp.bfloat16)                            # (16384, 512)
    b1p = b1.reshape(1, -1).astype(jnp.float32)                # (1, 512)

    # fc2: tiny, kept f32, fused into fc1 kernel epilogue.
    w2, b2 = raw["fc2"]
    fout = w2.shape[0]
    N2p = _round_up(fout, 128)
    w2p = jnp.zeros((512, N2p), jnp.float32).at[:, :fout].set(w2.T)
    b2p = jnp.zeros((1, N2p), jnp.float32).at[0, :fout].set(b2)
    pp["fc"] = (w1p, b1p, w2p, b2p)
    return pp


# ----------------------------------------------------------------------------
# Forward pass (matches Net.forward)
# ----------------------------------------------------------------------------
def net_forward(pp, x, fout=18):
    # x: (B, 4, 84, 84) NCHW float32 (as the PyTorch module expects).
    B = x.shape[0]
    h = x.transpose(0, 2, 3, 1)                      # to NHWC once; stays NHWC
    for name, cfg in _CONV_CFG:
        wp, bp = pp[name]
        h = conv2d_relu_nhwc(h, wp, bp, cout=cfg["cout"], k=cfg["k"],
                             stride=cfg["stride"])
    h = h.reshape(B, -1)                             # NHWC flatten (fc1 cols pre-permuted)
    w1p, b1p, w2p, b2p = pp["fc"]
    out = fc_fused(h, w1p, b1p, w2p, b2p)            # fused fc1+ReLU+fc2
    return out[:B, :fout]
    # TODO(synk): on v7x, a parallel N split of fc1 across both TensorCores is
    # possible but conflicts with the fc2 fusion; left single-core for fc.


# ----------------------------------------------------------------------------
# Pure-JAX reference (uses the raw, unpacked params)
# ----------------------------------------------------------------------------
def net_forward_ref(raw, x):
    def conv(x, w, b, stride):
        y = jax.lax.conv_general_dilated(
            x, w, window_strides=(stride, stride), padding="VALID",
            dimension_numbers=("NCHW", "OIHW", "NCHW"))
        return jax.nn.relu(y + b[None, :, None, None])

    x = conv(x, *raw["conv1"], 2)
    x = conv(x, *raw["conv2"], 2)
    x = conv(x, *raw["conv3"], 1)
    x = x.reshape(x.shape[0], -1)
    w1, b1 = raw["fc1"]
    x = jax.nn.relu(x @ w1.T + b1)
    w2, b2 = raw["fc2"]
    return x @ w2.T + b2


if __name__ == "__main__":
    key = jax.random.PRNGKey(0)
    pkey, xkey = jax.random.split(key)
    raw = init_raw_params(pkey, fout=18)
    pp = prepare_params(raw)          # one-time packing, NOT in the forward path

    # fc1 expects 16384 = 64*16*16 features, which forces img_size=84; batch=2.
    x = jax.random.normal(xkey, (2, 4, 84, 84), jnp.float32)

    fwd = jax.jit(net_forward)
    out = jax.block_until_ready(fwd(pp, x))
    ref = jax.block_until_ready(net_forward_ref(raw, x))

    assert out.shape == (2, 18) and out.dtype == jnp.float32
    np.testing.assert_allclose(np.asarray(out), np.asarray(ref), rtol=3e-2, atol=3e-2)
    print("KERNEL_OK")
</pallas_src>

<mosaic_0001>
module attributes {stable_mosaic.version = 11 : i64} {
  func.func @_mm_kernel(%arg0: i32, %arg1: i32, %arg2: memref<512x256xbf16, #tpu.memory_space<vmem>>, %arg3: memref<256x128xbf16, #tpu.memory_space<vmem>>, %arg4: memref<1x128xf32, #tpu.memory_space<vmem>>, %arg5: memref<512x128xf32, #tpu.memory_space<vmem>>) attributes {dimension_semantics = [#tpu.dimension_semantics<parallel>, #tpu.dimension_semantics<arbitrary>], iteration_bounds = array<i64: 6, 1>, scalar_prefetch = 0 : i64, scratch_operands = 0 : i64, tpu.core_type = #tpu.core_type<tc>, window_params = [{transform_indices = @transform_0, window_bounds = array<i64: 512, 256>}, {transform_indices = @transform_1, window_bounds = array<i64: 256, 128>}, {pipeline_mode = #tpu.pipeline_mode<synchronous>, transform_indices = @transform_2, window_bounds = array<i64: 1, 128>}, {transform_indices = @transform_3, window_bounds = array<i64: 512, 128>}]} {
    %c0 = arith.constant 0 : index
    %c0_0 = arith.constant 0 : index
    %0 = vector.load %arg2[%c0, %c0_0] : memref<512x256xbf16, #tpu.memory_space<vmem>>, vector<512x256xbf16>
    %c0_1 = arith.constant 0 : index
    %c0_2 = arith.constant 0 : index
    %1 = vector.load %arg3[%c0_1, %c0_2] : memref<256x128xbf16, #tpu.memory_space<vmem>>, vector<256x128xbf16>
    %cst = arith.constant dense<0.000000e+00> : vector<512x128xf32>
    %2 = tpu.matmul %0, %1, %cst {dimension_numbers = #tpu.dot_dimension_numbers<[1], [0], [0], [1], [0, 0, 1, 1], [], []>} : vector<512x256xbf16>, vector<256x128xbf16>, vector<512x128xf32> -> vector<512x128xf32>
    %c0_3 = arith.constant 0 : index
    %c0_4 = arith.constant 0 : index
    %3 = vector.load %arg4[%c0_3, %c0_4] : memref<1x128xf32, #tpu.memory_space<vmem>>, vector<1x128xf32>
    %4 = vector.broadcast %3 : vector<1x128xf32> to vector<512x128xf32>
    %5 = arith.addf %2, %4 : vector<512x128xf32>
    %cst_5 = arith.constant 0.000000e+00 : f32
    %6 = vector.broadcast %cst_5 : f32 to vector<512x128xf32>
    %7 = arith.maximumf %5, %6 : vector<512x128xf32>
    %c0_6 = arith.constant 0 : index
    %c0_7 = arith.constant 0 : index
    %8 = vector.load %arg5[%c0_6, %c0_7] : memref<512x128xf32, #tpu.memory_space<vmem>>, vector<512x128xf32>
    tpu.vector_store %arg5[%c0_6, %c0_7], %7 {strides = array<i32>} : memref<512x128xf32, #tpu.memory_space<vmem>>, vector<512x128xf32>,
    return
  }
  func.func @transform_0(%arg0: i32, %arg1: i32) -> (i32, i32) {
    %c0_i32 = arith.constant 0 : i32
    return %arg0, %arg1 : i32, i32
  }
  func.func @transform_1(%arg0: i32, %arg1: i32) -> (i32, i32) {
    %c0_i32 = arith.constant 0 : i32
    %c0_i32_0 = arith.constant 0 : i32
    return %arg1, %c0_i32 : i32, i32
  }
  func.func @transform_2(%arg0: i32, %arg1: i32) -> (i32, i32) {
    %c0_i32 = arith.constant 0 : i32
    %c0_i32_0 = arith.constant 0 : i32
    %c0_i32_1 = arith.constant 0 : i32
    return %c0_i32, %c0_i32_0 : i32, i32
  }
  func.func @transform_3(%arg0: i32, %arg1: i32) -> (i32, i32) {
    %c0_i32 = arith.constant 0 : i32
    %c0_i32_0 = arith.constant 0 : i32
    return %arg0, %c0_i32 : i32, i32
  }
}

module attributes {stable_mosaic.version = 11 : i64} {
  func.func @_mm_kernel(%arg0: i32, %arg1: i32, %arg2: memref<648x512xbf16, #tpu.memory_space<vmem>>, %arg3: memref<512x128xbf16, #tpu.memory_space<vmem>>, %arg4: memref<1x128xf32, #tpu.memory_space<vmem>>, %arg5: memref<648x128xf32, #tpu.memory_space<vmem>>) attributes {dimension_semantics = [#tpu.dimension_semantics<parallel>, #tpu.dimension_semantics<arbitrary>], iteration_bounds = array<i64: 1, 1>, scalar_prefetch = 0 : i64, scratch_operands = 0 : i64, tpu.core_type = #tpu.core_type<tc>, window_params = [{transform_indices = @transform_0, window_bounds = array<i64: 648, 512>}, {transform_indices = @transform_1, window_bounds = array<i64: 512, 128>}, {pipeline_mode = #tpu.pipeline_mode<synchronous>, transform_indices = @transform_2, window_bounds = array<i64: 1, 128>}, {transform_indices = @transform_3, window_bounds = array<i64: 648, 128>}]} {
    %c0 = arith.constant 0 : index
    %c0_0 = arith.constant 0 : index
    %0 = vector.load %arg2[%c0, %c0_0] : memref<648x512xbf16, #tpu.memory_space<vmem>>, vector<648x512xbf16>
    %c0_1 = arith.constant 0 : index
    %c0_2 = arith.constant 0 : index
    %1 = vector.load %arg3[%c0_1, %c0_2] : memref<512x128xbf16, #tpu.memory_space<vmem>>, vector<512x128xbf16>
    %cst = arith.constant dense<0.000000e+00> : vector<648x128xf32>
    %2 = tpu.matmul %0, %1, %cst {dimension_numbers = #tpu.dot_dimension_numbers<[1], [0], [0], [1], [0, 0, 1, 1], [], []>} : vector<648x512xbf16>, vector<512x128xbf16>, vector<648x128xf32> -> vector<648x128xf32>
    %c0_3 = arith.constant 0 : index
    %c0_4 = arith.constant 0 : index
    %3 = vector.load %arg4[%c0_3, %c0_4] : memref<1x128xf32, #tpu.memory_space<vmem>>, vector<1x128xf32>
    %4 = vector.broadcast %3 : vector<1x128xf32> to vector<648x128xf32>
    %5 = arith.addf %2, %4 : vector<648x128xf32>
    %cst_5 = arith.constant 0.000000e+00 : f32
    %6 = vector.broadcast %cst_5 : f32 to vector<648x128xf32>
    %7 = arith.maximumf %5, %6 : vector<648x128xf32>
    %c0_6 = arith.constant 0 : index
    %c0_7 = arith.constant 0 : index
    %8 = vector.load %arg5[%c0_6, %c0_7] : memref<648x128xf32, #tpu.memory_space<vmem>>, vector<648x128xf32>
    tpu.vector_store %arg5[%c0_6, %c0_7], %7 {strides = array<i32>} : memref<648x128xf32, #tpu.memory_space<vmem>>, vector<648x128xf32>,
    return
  }
  func.func @transform_0(%arg0: i32, %arg1: i32) -> (i32, i32) {
    %c0_i32 = arith.constant 0 : i32
    return %arg0, %arg1 : i32, i32
  }
  func.func @transform_1(%arg0: i32, %arg1: i32) -> (i32, i32) {
    %c0_i32 = arith.constant 0 : i32
    %c0_i32_0 = arith.constant 0 : i32
    return %arg1, %c0_i32 : i32, i32
  }
  func.func @transform_2(%arg0: i32, %arg1: i32) -> (i32, i32) {
    %c0_i32 = arith.constant 0 : i32
    %c0_i32_0 = arith.constant 0 : i32
    %c0_i32_1 = arith.constant 0 : i32
    return %c0_i32, %c0_i32_0 : i32, i32
  }
  func.func @transform_3(%arg0: i32, %arg1: i32) -> (i32, i32) {
    %c0_i32 = arith.constant 0 : i32
    %c0_i32_0 = arith.constant 0 : i32
    return %arg0, %c0_i32 : i32, i32
  }
}

module attributes {stable_mosaic.version = 11 : i64} {
  func.func @_mm_kernel(%arg0: i32, %arg1: i32, %arg2: memref<512x640xbf16, #tpu.memory_space<vmem>>, %arg3: memref<640x128xbf16, #tpu.memory_space<vmem>>, %arg4: memref<1x128xf32, #tpu.memory_space<vmem>>, %arg5: memref<512x128xf32, #tpu.memory_space<vmem>>) attributes {dimension_semantics = [#tpu.dimension_semantics<parallel>, #tpu.dimension_semantics<arbitrary>], iteration_bounds = array<i64: 1, 1>, scalar_prefetch = 0 : i64, scratch_operands = 0 : i64, tpu.core_type = #tpu.core_type<tc>, window_params = [{transform_indices = @transform_0, window_bounds = array<i64: 512, 640>}, {transform_indices = @transform_1, window_bounds = array<i64: 640, 128>}, {pipeline_mode = #tpu.pipeline_mode<synchronous>, transform_indices = @transform_2, window_bounds = array<i64: 1, 128>}, {transform_indices = @transform_3, window_bounds = array<i64: 512, 128>}]} {
    %c0 = arith.constant 0 : index
    %c0_0 = arith.constant 0 : index
    %0 = vector.load %arg2[%c0, %c0_0] : memref<512x640xbf16, #tpu.memory_space<vmem>>, vector<512x640xbf16>
    %c0_1 = arith.constant 0 : index
    %c0_2 = arith.constant 0 : index
    %1 = vector.load %arg3[%c0_1, %c0_2] : memref<640x128xbf16, #tpu.memory_space<vmem>>, vector<640x128xbf16>
    %cst = arith.constant dense<0.000000e+00> : vector<512x128xf32>
    %2 = tpu.matmul %0, %1, %cst {dimension_numbers = #tpu.dot_dimension_numbers<[1], [0], [0], [1], [0, 0, 1, 1], [], []>} : vector<512x640xbf16>, vector<640x128xbf16>, vector<512x128xf32> -> vector<512x128xf32>
    %c0_3 = arith.constant 0 : index
    %c0_4 = arith.constant 0 : index
    %3 = vector.load %arg4[%c0_3, %c0_4] : memref<1x128xf32, #tpu.memory_space<vmem>>, vector<1x128xf32>
    %4 = vector.broadcast %3 : vector<1x128xf32> to vector<512x128xf32>
    %5 = arith.addf %2, %4 : vector<512x128xf32>
    %cst_5 = arith.constant 0.000000e+00 : f32
    %6 = vector.broadcast %cst_5 : f32 to vector<512x128xf32>
    %7 = arith.maximumf %5, %6 : vector<512x128xf32>
    %c0_6 = arith.constant 0 : index
    %c0_7 = arith.constant 0 : index
    %8 = vector.load %arg5[%c0_6, %c0_7] : memref<512x128xf32, #tpu.memory_space<vmem>>, vector<512x128xf32>
    tpu.vector_store %arg5[%c0_6, %c0_7], %7 {strides = array<i32>} : memref<512x128xf32, #tpu.memory_space<vmem>>, vector<512x128xf32>,
    return
  }
  func.func @transform_0(%arg0: i32, %arg1: i32) -> (i32, i32) {
    %c0_i32 = arith.constant 0 : i32
    return %arg0, %arg1 : i32, i32
  }
  func.func @transform_1(%arg0: i32, %arg1: i32) -> (i32, i32) {
    %c0_i32 = arith.constant 0 : i32
    %c0_i32_0 = arith.constant 0 : i32
    return %arg1, %c0_i32 : i32, i32
  }
  func.func @transform_2(%arg0: i32, %arg1: i32) -> (i32, i32) {
    %c0_i32 = arith.constant 0 : i32
    %c0_i32_0 = arith.constant 0 : i32
    %c0_i32_1 = arith.constant 0 : i32
    return %c0_i32, %c0_i32_0 : i32, i32
  }
  func.func @transform_3(%arg0: i32, %arg1: i32) -> (i32, i32) {
    %c0_i32 = arith.constant 0 : i32
    %c0_i32_0 = arith.constant 0 : i32
    return %arg0, %c0_i32 : i32, i32
  }
}

module attributes {stable_mosaic.version = 11 : i64} {
  func.func @_fc_fused_kernel(%arg0: i32, %arg1: i32, %arg2: memref<8x4096xbf16, #tpu.memory_space<vmem>>, %arg3: memref<4096x512xbf16, #tpu.memory_space<vmem>>, %arg4: memref<1x512xf32, #tpu.memory_space<vmem>>, %arg5: memref<512x128xf32, #tpu.memory_space<vmem>>, %arg6: memref<1x128xf32, #tpu.memory_space<vmem>>, %arg7: memref<8x128xf32, #tpu.memory_space<vmem>>, %arg8: memref<8x512xf32, #tpu.memory_space<vmem>>) attributes {dimension_semantics = [#tpu.dimension_semantics<parallel>, #tpu.dimension_semantics<arbitrary>], iteration_bounds = array<i64: 1, 4>, scalar_prefetch = 0 : i64, scratch_operands = 1 : i64, tpu.core_type = #tpu.core_type<tc>, window_params = [{transform_indices = @transform_0, window_bounds = array<i64: 8, 4096>}, {transform_indices = @transform_1, window_bounds = array<i64: 4096, 512>}, {pipeline_mode = #tpu.pipeline_mode<synchronous>, transform_indices = @transform_2, window_bounds = array<i64: 1, 512>}, {pipeline_mode = #tpu.pipeline_mode<synchronous>, transform_indices = @transform_3, window_bounds = array<i64: 512, 128>}, {pipeline_mode = #tpu.pipeline_mode<synchronous>, transform_indices = @transform_4, window_bounds = array<i64: 1, 128>}, {transform_indices = @transform_5, window_bounds = array<i64: 8, 128>}]} {
    %c0_i32 = arith.constant 0 : i32
    %0 = arith.cmpi eq, %arg1, %c0_i32 : i32
    %1 = arith.extui %0 : i1 to i32
    %c0_i32_0 = arith.constant 0 : i32
    %2 = arith.cmpi ne, %1, %c0_i32_0 : i32
    scf.if %2 {
      %cst_9 = arith.constant 0.000000e+00 : f32
      %12 = vector.broadcast %cst_9 : f32 to vector<8x512xf32>
      %c0_10 = arith.constant 0 : index
      %c0_11 = arith.constant 0 : index
      %13 = vector.load %arg8[%c0_10, %c0_11] : memref<8x512xf32, #tpu.memory_space<vmem>>, vector<8x512xf32>
      tpu.vector_store %arg8[%c0_10, %c0_11], %12 {strides = array<i32>} : memref<8x512xf32, #tpu.memory_space<vmem>>, vector<8x512xf32>,
    } else {
    }
    %c0 = arith.constant 0 : index
    %c0_1 = arith.constant 0 : index
    %3 = vector.load %arg8[%c0, %c0_1] : memref<8x512xf32, #tpu.memory_space<vmem>>, vector<8x512xf32>
    %c0_2 = arith.constant 0 : index
    %c0_3 = arith.constant 0 : index
    %4 = vector.load %arg2[%c0_2, %c0_3] : memref<8x4096xbf16, #tpu.memory_space<vmem>>, vector<8x4096xbf16>
    %c0_4 = arith.constant 0 : index
    %c0_5 = arith.constant 0 : index
    %5 = vector.load %arg3[%c0_4, %c0_5] : memref<4096x512xbf16, #tpu.memory_space<vmem>>, vector<4096x512xbf16>
    %cst = arith.constant dense<0.000000e+00> : vector<8x512xf32>
    %6 = tpu.matmul %4, %5, %cst {dimension_numbers = #tpu.dot_dimension_numbers<[1], [0], [0], [1], [0, 0, 1, 1], [], []>} : vector<8x4096xbf16>, vector<4096x512xbf16>, vector<8x512xf32> -> vector<8x512xf32>
    %7 = arith.addf %3, %6 : vector<8x512xf32>
    %c0_6 = arith.constant 0 : index
    %c0_7 = arith.constant 0 : index
    %8 = vector.load %arg8[%c0_6, %c0_7] : memref<8x512xf32, #tpu.memory_space<vmem>>, vector<8x512xf32>
    tpu.vector_store %arg8[%c0_6, %c0_7], %7 {strides = array<i32>} : memref<8x512xf32, #tpu.memory_space<vmem>>, vector<8x512xf32>,
    %c3_i32 = arith.constant 3 : i32
    %9 = arith.cmpi eq, %arg1, %c3_i32 : i32
    %10 = arith.extui %9 : i1 to i32
    %c0_i32_8 = arith.constant 0 : i32
    %11 = arith.cmpi ne, %10, %c0_i32_8 : i32
    scf.if %11 {
      %c0_9 = arith.constant 0 : index
      %c0_10 = arith.constant 0 : index
      %12 = vector.load %arg8[%c0_9, %c0_10] : memref<8x512xf32, #tpu.memory_space<vmem>>, vector<8x512xf32>
      %c0_11 = arith.constant 0 : index
      %c0_12 = arith.constant 0 : index
      %13 = vector.load %arg4[%c0_11, %c0_12] : memref<1x512xf32, #tpu.memory_space<vmem>>, vector<1x512xf32>
      %14 = vector.broadcast %13 : vector<1x512xf32> to vector<8x512xf32>
      %15 = arith.addf %12, %14 : vector<8x512xf32>
      %cst_13 = arith.constant 0.000000e+00 : f32
      %16 = vector.broadcast %cst_13 : f32 to vector<8x512xf32>
      %17 = arith.maximumf %15, %16 : vector<8x512xf32>
      %c0_14 = arith.constant 0 : index
      %c0_15 = arith.constant 0 : index
      %18 = vector.load %arg5[%c0_14, %c0_15] : memref<512x128xf32, #tpu.memory_space<vmem>>, vector<512x128xf32>
      %cst_16 = arith.constant dense<0.000000e+00> : vector<8x128xf32>
      %19 = tpu.matmul %17, %18, %cst_16 {dimension_numbers = #tpu.dot_dimension_numbers<[1], [0], [0], [1], [0, 0, 1, 1], [], []>} : vector<8x512xf32>, vector<512x128xf32>, vector<8x128xf32> -> vector<8x128xf32>
      %c0_17 = arith.constant 0 : index
      %c0_18 = arith.constant 0 : index
      %20 = vector.load %arg6[%c0_17, %c0_18] : memref<1x128xf32, #tpu.memory_space<vmem>>, vector<1x128xf32>
      %21 = vector.broadcast %20 : vector<1x128xf32> to vector<8x128xf32>
      %22 = arith.addf %19, %21 : vector<8x128xf32>
      %c0_19 = arith.constant 0 : index
      %c0_20 = arith.constant 0 : index
      %23 = vector.load %arg7[%c0_19, %c0_20] : memref<8x128xf32, #tpu.memory_space<vmem>>, vector<8x128xf32>
      tpu.vector_store %arg7[%c0_19, %c0_20], %22 {strides = array<i32>} : memref<8x128xf32, #tpu.memory_space<vmem>>, vector<8x128xf32>,
    } else {
    }
    return
  }
  func.func @transform_0(%arg0: i32, %arg1: i32) -> (i32, i32) {
    %c0_i32 = arith.constant 0 : i32
    return %arg0, %arg1 : i32, i32
  }
  func.func @transform_1(%arg0: i32, %arg1: i32) -> (i32, i32) {
    %c0_i32 = arith.constant 0 : i32
    %c0_i32_0 = arith.constant 0 : i32
    return %arg1, %c0_i32 : i32, i32
  }
  func.func @transform_2(%arg0: i32, %arg1: i32) -> (i32, i32) {
    %c0_i32 = arith.constant 0 : i32
    %c0_i32_0 = arith.constant 0 : i32
    %c0_i32_1 = arith.constant 0 : i32
    return %c0_i32, %c0_i32_0 : i32, i32
  }
  func.func @transform_3(%arg0: i32, %arg1: i32) -> (i32, i32) {
    %c0_i32 = arith.constant 0 : i32
    %c0_i32_0 = arith.constant 0 : i32
    %c0_i32_1 = arith.constant 0 : i32
    return %c0_i32, %c0_i32_0 : i32, i32
  }
  func.func @transform_4(%arg0: i32, %arg1: i32) -> (i32, i32) {
    %c0_i32 = arith.constant 0 : i32
    %c0_i32_0 = arith.constant 0 : i32
    %c0_i32_1 = arith.constant 0 : i32
    return %c0_i32, %c0_i32_0 : i32, i32
  }
  func.func @transform_5(%arg0: i32, %arg1: i32) -> (i32, i32) {
    %c0_i32 = arith.constant 0 : i32
    %c0_i32_0 = arith.constant 0 : i32
    return %arg0, %c0_i32 : i32, i32
  }
}

</mosaic_0001>

<llo_original>
// kernel: net_forward.4
$region0: #{net_forward.4}
  #allocation0 [shape = 'u32[]', space=smem, size = 0x4, offset = 0x4, fixed_abs, tag = 'smem constant byte address 0x4 - core index']
  #allocation1 [shape = 'u32[144,128]{1,0:T(1,128)}', space=vmem, size = 0x12000, scoped, tag = 'internal scratch']
  %s0 = inlined_call_operand.vmem [shape: bf16[3072,256], index: 0, kind: input, shape index: {}]
  %s1 = inlined_call_operand.vmem [shape: bf16[256,128], index: 1, kind: input, shape index: {}]
  %s2 = inlined_call_operand.vmem [shape: f32[1,128], index: 2, kind: input, shape index: {}]
  %s3 = inlined_call_operand.vmem [shape: f32[3072,128], index: 3, kind: output, shape index: {}]
  %s4 = sld [smem:[#allocation0]]
  $region45: #{net_forward.4} parent=0
    _
  %s6 = ssub.s32 1, %s4
  %s7 = scalar_select 0, %s6, %s4
  loop: start=0, step=1, limit=8
  $region2: #{net_forward.4} parent=0 // loop_pre_header
    _
  $region3: #{net_forward.4} parent=0 // loop_header
    %s9 = sphi 0, %s13
    %p10 = scmp.ge.s32.totalorder %s9, 8
    %s16 = sphi 0, %s28
    %s17 = sphi 0, %s24
    %s18 = sphi 0, %s16
    %s19 = sphi 0, %s17
    %s20 = sphi 0, %s18
    %s21 = sphi 0, %s19
    %s33 = sphi 0, %s35
    %s36 = sphi 0, %s33
    %s37 = sphi 0, %s36
    %s53 = sphi 0, %s37
    %s59 = sphi 0, %s61
    %s62 = sphi 0, %s59
    %s63 = sphi 0, %s62
    %s79 = sphi 0, %s63
    %s83 = sphi 0, %s83
    %s85 = sphi 0, %s83
    %s86 = sphi 0, %s85
    %s100 = sphi 0, %s86
    %s106 = sphi 0, %s108
    %s109 = sphi 0, %s106
    %s110 = sphi 0, %s109
    %s126 = sphi 0, %s110
  $region4: #{net_forward.4} parent=0 // loop_header_branch
    %12 = sbr.rel (%p10) target = $region8
  $region5: #{net_forward.4} parent=0 // loop_body
    %s14 = ssub.s32 %s9, 1
    %s15 = ssub.s32 %s9, 2
    %s22 = sadd.s32 1, %s17
    %p23 = scmp.ge.s32.totalorder %s22, 1
    %s24 = scalar_select %p23, 0, %s22
    %s25 = sadd.s32 1, %s16
    %s26 = scalar_select %p23, %s25, %s16
    %p27 = scmp.ge.s32.totalorder %s26, 6
    %s28 = scalar_select %p27, 0, %s26
    %s29 = ssub.s32 %s16, %s28
    %s30 = ssub.s32 %s17, %s24
    %s31 = sor.u32 %s29, %s30
    %p32 = scmp.eq.s32.totalorder %s31, 0
    %s34 = sadd.s32 %s33, 1
    %s35 = scalar_select %p32, %s33, %s34
    %p38 = pneg %p32
    %p39 = scmp.eq.s32.totalorder %s9, 5
    %p40 = por %p38, %p39
    %p41 = scmp.ne.s32.totalorder %s33, %s36
    %p42 = scmp.eq.s32.totalorder %s9, 0
    %p43 = por %p41, %p42
    %p44 = scmp.ne.s32.totalorder %s33, %s36
    %p45 = scmp.eq.s32.totalorder %s14, 5
    %p46 = por %p44, %p45
    %p47 = scmp.ne.s32.totalorder %s36, %s37
    %p48 = scmp.eq.s32.totalorder %s14, 0
    %p49 = por %p47, %p48
    %p50 = scmp.ne.s32.totalorder %s36, %s37
    %p51 = scmp.eq.s32.totalorder %s15, 5
    %p52 = por %p50, %p51
    %p54 = scmp.ne.s32.totalorder %s37, %s53
    %p55 = scmp.eq.s32.totalorder %s15, 0
    %p56 = por %p54, %p55
    %s57 = ssub.s32 %s17, %s24
    %p58 = scmp.eq.s32.totalorder %s57, 0
    %s60 = sadd.s32 %s59, 1
    %s61 = scalar_select %p58, %s59, %s60
    %p64 = pneg %p58
    %p65 = scmp.eq.s32.totalorder %s9, 5
    %p66 = por %p64, %p65
    %p67 = scmp.ne.s32.totalorder %s59, %s62
    %p68 = scmp.eq.s32.totalorder %s9, 0
    %p69 = por %p67, %p68
    %p70 = scmp.ne.s32.totalorder %s59, %s62
    %p71 = scmp.eq.s32.totalorder %s14, 5
    %p72 = por %p70, %p71
    %p73 = scmp.ne.s32.totalorder %s62, %s63
    %p74 = scmp.eq.s32.totalorder %s14, 0
    %p75 = por %p73, %p74
    %p76 = scmp.ne.s32.totalorder %s62, %s63
    %p77 = scmp.eq.s32.totalorder %s15, 5
    %p78 = por %p76, %p77
    %p80 = scmp.ne.s32.totalorder %s63, %s79
    %p81 = scmp.eq.s32.totalorder %s15, 0
    %p82 = por %p80, %p81
    %s84 = sadd.s32 %s83, 1
    %p87 = scmp.eq.s32.totalorder %s9, 5
    %p88 = scmp.ne.s32.totalorder %s83, %s85
    %p89 = scmp.eq.s32.totalorder %s9, 0
    %p90 = por %p88, %p89
    %p91 = scmp.ne.s32.totalorder %s83, %s85
    %p92 = scmp.eq.s32.totalorder %s14, 5
    %p93 = por %p91, %p92
    %p94 = scmp.ne.s32.totalorder %s85, %s86
    %p95 = scmp.eq.s32.totalorder %s14, 0
    %p96 = por %p94, %p95
    %p97 = scmp.ne.s32.totalorder %s85, %s86
    %p98 = scmp.eq.s32.totalorder %s15, 5
    %p99 = por %p97, %p98
    %p101 = scmp.ne.s32.totalorder %s86, %s100
    %p102 = scmp.eq.s32.totalorder %s15, 0
    %p103 = por %p101, %p102
    %s104 = ssub.s32 %s16, %s28
    %p105 = scmp.eq.s32.totalorder %s104, 0
    %s107 = sadd.s32 %s106, 1
    %s108 = scalar_select %p105, %s106, %s107
    %p111 = pneg %p105
    %p112 = scmp.eq.s32.totalorder %s9, 5
    %p113 = por %p111, %p112
    %p114 = scmp.ne.s32.totalorder %s106, %s109
    %p115 = scmp.eq.s32.totalorder %s9, 0
    %p116 = por %p114, %p115
    %p117 = scmp.ne.s32.totalorder %s106, %s109
    %p118 = scmp.eq.s32.totalorder %s14, 5
    %p119 = por %p117, %p118
    %p120 = scmp.ne.s32.totalorder %s109, %s110
    %p121 = scmp.eq.s32.totalorder %s14, 0
    %p122 = por %p120, %p121
    %p123 = scmp.ne.s32.totalorder %s109, %s110
    %p124 = scmp.eq.s32.totalorder %s15, 5
    %p125 = por %p123, %p124
    %p127 = scmp.ne.s32.totalorder %s110, %s126
    %p128 = scmp.eq.s32.totalorder %s15, 0
    %p129 = por %p127, %p128
    %p130 = scmp.le.s32.totalorder 1, %s9
    %p131 = scmp.lt.s32.totalorder %s9, 7
    %p132 = pnand %p130, %p131
    %p133 = pneg %p132
    // Predicated region
    $region9: #{net_forward.4} parent=5 // pred_check
      _
    $region10: #{net_forward.4} parent=5 // pred_check_branch
      %135 = sbr.rel (%p132) target = $region12
    $region11: #{net_forward.4} parent=5 // pred_region
      %s136 = ssub.s32 %s9, 1
      // Predicated region
      $region13: #{net_forward.4} parent=11 // pred_check
        %p137 = pneg %p75
      $region14: #{net_forward.4} parent=11 // pred_check_branch
        %139 = sbr.rel (%p137) target = $region16
      $region15: #{net_forward.4} parent=11 // pred_region
        %s140 = smul.u32 32, %s19
        %p141 = scmp.lt.s32.totalorder %s140, 31
        %s142 = scalar_select %p141, %s140, 31
        %s143 = smul.addr %s142, 4
        %s144 = scalar_lea.vmem %s1, %s143
        %s145 = smul.u32 32, %s19
      $region16: #{net_forward.4} parent=11 // pred_fallthru
        _
      // Predicated region
      $region17: #{net_forward.4} parent=11 // pred_check
        %p146 = pneg %p96
      $region18: #{net_forward.4} parent=11 // pred_check_branch
        %148 = sbr.rel (%p146) target = $region20
      $region19: #{net_forward.4} parent=11 // pred_region
        _
      $region20: #{net_forward.4} parent=11 // pred_fallthru
        _
    $region12: #{net_forward.4} parent=5 // pred_fallthru
      _
    %p149 = scmp.lt.s32.totalorder %s9, 6
    // Predicated region
    $region21: #{net_forward.4} parent=5 // pred_check
      %p150 = pneg %p149
    $region22: #{net_forward.4} parent=5 // pred_check_branch
      %152 = sbr.rel (%p150) target = $region24
    $region23: #{net_forward.4} parent=5 // pred_region
      // Predicated region
      $region25: #{net_forward.4} parent=23 // pred_check
        %p153 = pneg %p43
      $region26: #{net_forward.4} parent=23 // pred_check_branch
        %155 = sbr.rel (%p153) target = $region28
      $region27: #{net_forward.4} parent=23 // pred_region
        %s156 = smul.u32 64, %s16
        %s157 = smul.u32 2, %s17
        %p158 = scmp.lt.s32.totalorder %s156, 383
        %s159 = scalar_select %p158, %s156, 383
        %p160 = scmp.lt.s32.totalorder %s157, 1
        %s161 = scalar_select %p160, %s157, 1
        %s162 = smul.addr %s159, 2
        %s163 = sadd.s32 %s161, %s162
        %s164 = smul.addr %s163, 4
        %s165 = scalar_lea.vmem %s0, %s164
        %s166 = smul.u32 64, %s16
        %s167 = smul.u32 2, %s17
      $region28: #{net_forward.4} parent=23 // pred_fallthru
        _
    $region24: #{net_forward.4} parent=5 // pred_fallthru
      _
    %p168 = scmp.le.s32.totalorder 1, %s9
    %p169 = scmp.lt.s32.totalorder %s9, 7
    %p170 = pnand %p168, %p169
    %p171 = pneg %p170
    // Predicated region
    $region29: #{net_forward.4} parent=5 // pred_check
      _
    $region30: #{net_forward.4} parent=5 // pred_check_branch
      %173 = sbr.rel (%p170) target = $region32
    $region31: #{net_forward.4} parent=5 // pred_region
      %s174 = ssub.s32 %s9, 1
      %s175 = smul.u32 64, %s18
      %s176 = smul.u32 2, %s19
      %p177 = scmp.lt.s32.totalorder %s175, 383
      %s178 = scalar_select %p177, %s175, 383
      %p179 = scmp.lt.s32.totalorder %s176, 1
      %s180 = scalar_select %p179, %s176, 1
      %s181 = smul.addr %s178, 2
      %s182 = sadd.s32 %s180, %s181
      %s183 = smul.addr %s182, 4
      %s184 = scalar_lea.vmem %s0, %s183
      %p185 = pneg %p49
      %p186 = pneg %p46
      %s187 = smul.u32 32, %s19
      %p188 = scmp.lt.s32.totalorder %s187, 31
      %s189 = scalar_select %p188, %s187, 31
      %s190 = smul.addr %s189, 4
      %s191 = scalar_lea.vmem %s1, %s190
      %p192 = pneg %p75
      %p193 = pneg %p72
      %p194 = pneg %p96
      %p195 = pneg %p93
      %p196 = pneg %p122
      %p197 = pneg %p119
      %s198 = smul.u32 64, %s18
      %p199 = scmp.lt.s32.totalorder %s198, 383
      %s200 = scalar_select %p199, %s198, 383
      %s201 = smul.addr %s200, 8
      %s202 = scalar_lea.vmem %s3, %s201
      %s203 = smul.u32 64, %s18
      %s204 = smul.u32 2, %s19
      %p205 = scmp.lt.s32.totalorder %s203, 383
      %s206 = scalar_select %p205, %s203, 383
      %p207 = scmp.lt.s32.totalorder %s204, 1
      %s208 = scalar_select %p207, %s204, 1
      %s209 = smul.addr %s206, 2
      %s210 = sadd.s32 %s208, %s209
      %s211 = smul.addr %s210, 4
      %s212 = scalar_lea.vmem %s0, %s211
      %s213 = smul.u32 64, %s18
      %s214 = smul.u32 2, %s19
      %s215 = smul.u32 32, %s19
      %p216 = scmp.lt.s32.totalorder %s215, 31
      %s217 = scalar_select %p216, %s215, 31
      %s218 = smul.addr %s217, 4
      %s219 = scalar_lea.vmem %s1, %s218
      %s220 = smul.u32 32, %s19
      %s221 = smul.u32 64, %s18
      %p222 = scmp.lt.s32.totalorder %s221, 383
      %s223 = scalar_select %p222, %s221, 383
      %s224 = smul.addr %s223, 8
      %s225 = scalar_lea.vmem %s3, %s224
      %s226 = smul.u32 64, %s18
      %v228 = vld [vmem:[%s212] sm:$0xff]
      %v229 = vld [vmem:[%s212 + $0x8] sm:$0xff]
      %v230 = vld [vmem:[%s212 + $0x10] sm:$0xff]
      %v231 = vld [vmem:[%s212 + $0x18] sm:$0xff]
      %v232 = vld [vmem:[%s212 + $0x20] sm:$0xff]
      %v233 = vld [vmem:[%s212 + $0x28] sm:$0xff]
      %v234 = vld [vmem:[%s212 + $0x30] sm:$0xff]
      %v235 = vld [vmem:[%s212 + $0x38] sm:$0xff]
      %v236 = vld [vmem:[%s212 + $0x40] sm:$0xff]
      %v237 = vld [vmem:[%s212 + $0x48] sm:$0xff]
      %v238 = vld [vmem:[%s212 + $0x50] sm:$0xff]
      %v239 = vld [vmem:[%s212 + $0x58] sm:$0xff]
      %v240 = vld [vmem:[%s212 + $0x60] sm:$0xff]
      %v241 = vld [vmem:[%s212 + $0x68] sm:$0xff]
      %v242 = vld [vmem:[%s212 + $0x70] sm:$0xff]
      %v243 = vld [vmem:[%s212 + $0x78] sm:$0xff]
      %v244 = vld [vmem:[%s212 + $0x80] sm:$0xff]
      %v245 = vld [vmem:[%s212 + $0x88] sm:$0xff]
      %v246 = vld [vmem:[%s212 + $0x90] sm:$0xff]
      %v247 = vld [vmem:[%s212 + $0x98] sm:$0xff]
      %v248 = vld [vmem:[%s212 + $0xa0] sm:$0xff]
      %v249 = vld [vmem:[%s212 + $0xa8] sm:$0xff]
      %v250 = vld [vmem:[%s212 + $0xb0] sm:$0xff]
      %v251 = vld [vmem:[%s212 + $0xb8] sm:$0xff]
      %v252 = vld [vmem:[%s212 + $0xc0] sm:$0xff]
      %v253 = vld [vmem:[%s212 + $0xc8] sm:$0xff]
      %v254 = vld [vmem:[%s212 + $0xd0] sm:$0xff]
      %v255 = vld [vmem:[%s212 + $0xd8] sm:$0xff]
      %v256 = vld [vmem:[%s212 + $0xe0] sm:$0xff]
      %v257 = vld [vmem:[%s212 + $0xe8] sm:$0xff]
      %v258 = vld [vmem:[%s212 + $0xf0] sm:$0xff]
      %v259 = vld [vmem:[%s212 + $0xf8] sm:$0xff]
      %v260 = vld [vmem:[%s212 + $0x100] sm:$0xff]
      %v261 = vld [vmem:[%s212 + $0x108] sm:$0xff]
      %v262 = vld [vmem:[%s212 + $0x110] sm:$0xff]
      %v263 = vld [vmem:[%s212 + $0x118] sm:$0xff]
      %v264 = vld [vmem:[%s212 + $0x120] sm:$0xff]
      %v265 = vld [vmem:[%s212 + $0x128] sm:$0xff]
      %v266 = vld [vmem:[%s212 + $0x130] sm:$0xff]
      %v267 = vld [vmem:[%s212 + $0x138] sm:$0xff]
      %v268 = vld [vmem:[%s212 + $0x140] sm:$0xff]
      %v269 = vld [vmem:[%s212 + $0x148] sm:$0xff]
      %v270 = vld [vmem:[%s212 + $0x150] sm:$0xff]
      %v271 = vld [vmem:[%s212 + $0x158] sm:$0xff]
      %v272 = vld [vmem:[%s212 + $0x160] sm:$0xff]
      %v273 = vld [vmem:[%s212 + $0x168] sm:$0xff]
      %v274 = vld [vmem:[%s212 + $0x170] sm:$0xff]
      %v275 = vld [vmem:[%s212 + $0x178] sm:$0xff]
      %v276 = vld [vmem:[%s212 + $0x180] sm:$0xff]
      %v277 = vld [vmem:[%s212 + $0x188] sm:$0xff]
      %v278 = vld [vmem:[%s212 + $0x190] sm:$0xff]
      %v279 = vld [vmem:[%s212 + $0x198] sm:$0xff]
      %v280 = vld [vmem:[%s212 + $0x1a0] sm:$0xff]
      %v281 = vld [vmem:[%s212 + $0x1a8] sm:$0xff]
      %v282 = vld [vmem:[%s212 + $0x1b0] sm:$0xff]
      %v283 = vld [vmem:[%s212 + $0x1b8] sm:$0xff]
      %v284 = vld [vmem:[%s212 + $0x1c0] sm:$0xff]
      %v285 = vld [vmem:[%s212 + $0x1c8] sm:$0xff]
      %v286 = vld [vmem:[%s212 + $0x1d0] sm:$0xff]
      %v287 = vld [vmem:[%s212 + $0x1d8] sm:$0xff]
      %v288 = vld [vmem:[%s212 + $0x1e0] sm:$0xff]
      %v289 = vld [vmem:[%s212 + $0x1e8] sm:$0xff]
      %v290 = vld [vmem:[%s212 + $0x1f0] sm:$0xff]
      %v291 = vld [vmem:[%s212 + $0x1f8] sm:$0xff]
      %v292 = vld [vmem:[%s219] sm:$0xf]
      %v293 = vld [vmem:[%s219 + $0x4] sm:$0xf]
      %v294 = vld [vmem:[%s219 + $0x8] sm:$0xf]
      %v295 = vld [vmem:[%s219 + $0xc] sm:$0xf]
      %v296 = vld [vmem:[%s219 + $0x10] sm:$0xf]
      %v297 = vld [vmem:[%s219 + $0x14] sm:$0xf]
      %v298 = vld [vmem:[%s219 + $0x18] sm:$0xf]
      %v299 = vld [vmem:[%s219 + $0x1c] sm:$0xf]
      %v300 = vld [vmem:[%s219 + $0x20] sm:$0xf]
      %v301 = vld [vmem:[%s219 + $0x24] sm:$0xf]
      %v302 = vld [vmem:[%s219 + $0x28] sm:$0xf]
      %v303 = vld [vmem:[%s219 + $0x2c] sm:$0xf]
      %v304 = vld [vmem:[%s219 + $0x30] sm:$0xf]
      %v305 = vld [vmem:[%s219 + $0x34] sm:$0xf]
      %v306 = vld [vmem:[%s219 + $0x38] sm:$0xf]
      %v307 = vld [vmem:[%s219 + $0x3c] sm:$0xf]
      %v308 = vld [vmem:[%s219 + $0x40] sm:$0xf]
      %v309 = vld [vmem:[%s219 + $0x44] sm:$0xf]
      %v310 = vld [vmem:[%s219 + $0x48] sm:$0xf]
      %v311 = vld [vmem:[%s219 + $0x4c] sm:$0xf]
      %v312 = vld [vmem:[%s219 + $0x50] sm:$0xf]
      %v313 = vld [vmem:[%s219 + $0x54] sm:$0xf]
      %v314 = vld [vmem:[%s219 + $0x58] sm:$0xf]
      %v315 = vld [vmem:[%s219 + $0x5c] sm:$0xf]
      %v316 = vld [vmem:[%s219 + $0x60] sm:$0xf]
      %v317 = vld [vmem:[%s219 + $0x64] sm:$0xf]
      %v318 = vld [vmem:[%s219 + $0x68] sm:$0xf]
      %v319 = vld [vmem:[%s219 + $0x6c] sm:$0xf]
      %v320 = vld [vmem:[%s219 + $0x70] sm:$0xf]
      %v321 = vld [vmem:[%s219 + $0x74] sm:$0xf]
      %v322 = vld [vmem:[%s219 + $0x78] sm:$0xf]
      %v323 = vld [vmem:[%s219 + $0x7c] sm:$0xf]
      %v324 = vld [vmem:[%s2] sm:$0x1]
      %v326 = vlaneseq
      %v327 = vshrl.u32 %v326, 7
      %v328 = vsub.s32 0, %v327
      %v329 = vrot.slane %v324, %v328
      %v395 = vunpack.c.l.b16 %v228
      %v396 = vunpack.c.h.b16 %v228
      %v397 = vunpack.c.l.b16 %v229
      %v398 = vunpack.c.h.b16 %v229
      %v399 = vunpack.c.l.b16 %v230
      %v400 = vunpack.c.h.b16 %v230
      %v401 = vunpack.c.l.b16 %v231
      %v402 = vunpack.c.h.b16 %v231
      %v403 = vunpack.c.l.b16 %v232
      %v404 = vunpack.c.h.b16 %v232
      %v405 = vunpack.c.l.b16 %v233
      %v406 = vunpack.c.h.b16 %v233
      %v407 = vunpack.c.l.b16 %v234
      %v408 = vunpack.c.h.b16 %v234
      %v409 = vunpack.c.l.b16 %v235
      %v410 = vunpack.c.h.b16 %v235
      %v411 = vunpack.c.l.b16 %v236
      %v412 = vunpack.c.h.b16 %v236
      %v413 = vunpack.c.l.b16 %v237
      %v414 = vunpack.c.h.b16 %v237
      %v415 = vunpack.c.l.b16 %v238
      %v416 = vunpack.c.h.b16 %v238
      %v417 = vunpack.c.l.b16 %v239
      %v418 = vunpack.c.h.b16 %v239
      %v419 = vunpack.c.l.b16 %v240
      %v420 = vunpack.c.h.b16 %v240
      %v421 = vunpack.c.l.b16 %v241
      %v422 = vunpack.c.h.b16 %v241
      %v423 = vunpack.c.l.b16 %v242
      %v424 = vunpack.c.h.b16 %v242
      %v425 = vunpack.c.l.b16 %v243
      %v426 = vunpack.c.h.b16 %v243
      %v427 = vunpack.c.l.b16 %v244
      %v428 = vunpack.c.h.b16 %v244
      %v429 = vunpack.c.l.b16 %v245
      %v430 = vunpack.c.h.b16 %v245
      %v431 = vunpack.c.l.b16 %v246
      %v432 = vunpack.c.h.b16 %v246
      %v433 = vunpack.c.l.b16 %v247
      %v434 = vunpack.c.h.b16 %v247
      %v435 = vunpack.c.l.b16 %v248
      %v436 = vunpack.c.h.b16 %v248
      %v437 = vunpack.c.l.b16 %v249
      %v438 = vunpack.c.h.b16 %v249
      %v439 = vunpack.c.l.b16 %v250
      %v440 = vunpack.c.h.b16 %v250
      %v441 = vunpack.c.l.b16 %v251
      %v442 = vunpack.c.h.b16 %v251
      %v443 = vunpack.c.l.b16 %v252
      %v444 = vunpack.c.h.b16 %v252
      %v445 = vunpack.c.l.b16 %v253
      %v446 = vunpack.c.h.b16 %v253
      %v447 = vunpack.c.l.b16 %v254
      %v448 = vunpack.c.h.b16 %v254
      %v449 = vunpack.c.l.b16 %v255
      %v450 = vunpack.c.h.b16 %v255
      %v451 = vunpack.c.l.b16 %v256
      %v452 = vunpack.c.h.b16 %v256
      %v453 = vunpack.c.l.b16 %v257
      %v454 = vunpack.c.h.b16 %v257
      %v455 = vunpack.c.l.b16 %v258
      %v456 = vunpack.c.h.b16 %v258
      %v457 = vunpack.c.l.b16 %v259
      %v458 = vunpack.c.h.b16 %v259
      %v459 = vunpack.c.l.b16 %v260
      %v460 = vunpack.c.h.b16 %v260
      %v461 = vunpack.c.l.b16 %v261
      %v462 = vunpack.c.h.b16 %v261
      %v463 = vunpack.c.l.b16 %v262
      %v464 = vunpack.c.h.b16 %v262
      %v465 = vunpack.c.l.b16 %v263
      %v466 = vunpack.c.h.b16 %v263
      %v467 = vunpack.c.l.b16 %v264
      %v468 = vunpack.c.h.b16 %v264
      %v469 = vunpack.c.l.b16 %v265
      %v470 = vunpack.c.h.b16 %v265
      %v471 = vunpack.c.l.b16 %v266
      %v472 = vunpack.c.h.b16 %v266
      %v473 = vunpack.c.l.b16 %v267
      %v474 = vunpack.c.h.b16 %v267
      %v475 = vunpack.c.l.b16 %v268
      %v476 = vunpack.c.h.b16 %v268
      %v477 = vunpack.c.l.b16 %v269
      %v478 = vunpack.c.h.b16 %v269
      %v479 = vunpack.c.l.b16 %v270
      %v480 = vunpack.c.h.b16 %v270
      %v481 = vunpack.c.l.b16 %v271
      %v482 = vunpack.c.h.b16 %v271
      %v483 = vunpack.c.l.b16 %v272
      %v484 = vunpack.c.h.b16 %v272
      %v485 = vunpack.c.l.b16 %v273
      %v486 = vunpack.c.h.b16 %v273
      %v487 = vunpack.c.l.b16 %v274
      %v488 = vunpack.c.h.b16 %v274
      %v489 = vunpack.c.l.b16 %v275
      %v490 = vunpack.c.h.b16 %v275
      %v491 = vunpack.c.l.b16 %v276
      %v492 = vunpack.c.h.b16 %v276
      %v493 = vunpack.c.l.b16 %v277
      %v494 = vunpack.c.h.b16 %v277
      %v495 = vunpack.c.l.b16 %v278
      %v496 = vunpack.c.h.b16 %v278
      %v497 = vunpack.c.l.b16 %v279
      %v498 = vunpack.c.h.b16 %v279
      %v499 = vunpack.c.l.b16 %v280
      %v500 = vunpack.c.h.b16 %v280
      %v501 = vunpack.c.l.b16 %v281
      %v502 = vunpack.c.h.b16 %v281
      %v503 = vunpack.c.l.b16 %v282
      %v504 = vunpack.c.h.b16 %v282
      %v505 = vunpack.c.l.b16 %v283
      %v506 = vunpack.c.h.b16 %v283
      %v507 = vunpack.c.l.b16 %v284
      %v508 = vunpack.c.h.b16 %v284
      %v509 = vunpack.c.l.b16 %v285
      %v510 = vunpack.c.h.b16 %v285
      %v511 = vunpack.c.l.b16 %v286
      %v512 = vunpack.c.h.b16 %v286
      %v513 = vunpack.c.l.b16 %v287
      %v514 = vunpack.c.h.b16 %v287
      %v515 = vunpack.c.l.b16 %v288
      %v516 = vunpack.c.h.b16 %v288
      %v517 = vunpack.c.l.b16 %v289
      %v518 = vunpack.c.h.b16 %v289
      %v519 = vunpack.c.l.b16 %v290
      %v520 = vunpack.c.h.b16 %v290
      %v521 = vunpack.c.l.b16 %v291
      %v522 = vunpack.c.h.b16 %v291
      %v523 = vpack.c.b16 %v397, %v395
      %v524 = vpack.c.b16 %v398, %v396
      %v525 = vpack.c.b16 %v401, %v399
      %v526 = vpack.c.b16 %v402, %v400
      %v527 = vpack.c.b16 %v405, %v403
      %v528 = vpack.c.b16 %v406, %v404
      %v529 = vpack.c.b16 %v409, %v407
      %v530 = vpack.c.b16 %v410, %v408
      %v531 = vpack.c.b16 %v413, %v411
      %v532 = vpack.c.b16 %v414, %v412
      %v533 = vpack.c.b16 %v417, %v415
      %v534 = vpack.c.b16 %v418, %v416
      %v535 = vpack.c.b16 %v421, %v419
      %v536 = vpack.c.b16 %v422, %v420
      %v537 = vpack.c.b16 %v425, %v423
      %v538 = vpack.c.b16 %v426, %v424
      %v539 = vpack.c.b16 %v429, %v427
      %v540 = vpack.c.b16 %v430, %v428
      %v541 = vpack.c.b16 %v433, %v431
      %v542 = vpack.c.b16 %v434, %v432
      %v543 = vpack.c.b16 %v437, %v435
      %v544 = vpack.c.b16 %v438, %v436
      %v545 = vpack.c.b16 %v441, %v439
      %v546 = vpack.c.b16 %v442, %v440
      %v547 = vpack.c.b16 %v445, %v443
      %v548 = vpack.c.b16 %v446, %v444
      %v549 = vpack.c.b16 %v449, %v447
      %v550 = vpack.c.b16 %v450, %v448
      %v551 = vpack.c.b16 %v453, %v451
      %v552 = vpack.c.b16 %v454, %v452
      %v553 = vpack.c.b16 %v457, %v455
      %v554 = vpack.c.b16 %v458, %v456
      %v555 = vpack.c.b16 %v461, %v459
      %v556 = vpack.c.b16 %v462, %v460
      %v557 = vpack.c.b16 %v465, %v463
      %v558 = vpack.c.b16 %v466, %v464
      %v559 = vpack.c.b16 %v469, %v467
      %v560 = vpack.c.b16 %v470, %v468
      %v561 = vpack.c.b16 %v473, %v471
      %v562 = vpack.c.b16 %v474, %v472
      %v563 = vpack.c.b16 %v477, %v475
      %v564 = vpack.c.b16 %v478, %v476
      %v565 = vpack.c.b16 %v481, %v479
      %v566 = vpack.c.b16 %v482, %v480
      %v567 = vpack.c.b16 %v485, %v483
      %v568 = vpack.c.b16 %v486, %v484
      %v569 = vpack.c.b16 %v489, %v487
      %v570 = vpack.c.b16 %v490, %v488
      %v571 = vpack.c.b16 %v493, %v491
      %v572 = vpack.c.b16 %v494, %v492
      %v573 = vpack.c.b16 %v497, %v495
      %v574 = vpack.c.b16 %v498, %v496
      %v575 = vpack.c.b16 %v501, %v499
      %v576 = vpack.c.b16 %v502, %v500
      %v577 = vpack.c.b16 %v505, %v503
      %v578 = vpack.c.b16 %v506, %v504
      %v579 = vpack.c.b16 %v509, %v507
      %v580 = vpack.c.b16 %v510, %v508
      %v581 = vpack.c.b16 %v513, %v511
      %v582 = vpack.c.b16 %v514, %v512
      %v583 = vpack.c.b16 %v517, %v515
      %v584 = vpack.c.b16 %v518, %v516
      %v585 = vpack.c.b16 %v521, %v519
      %v586 = vpack.c.b16 %v522, %v520
      %v683 = vunpack.c.l.b16 %v292
      %v684 = vunpack.c.l.b16 %v293
      %v685 = vunpack.c.l.b16 %v294
      %v686 = vunpack.c.l.b16 %v295
      %v687 = vunpack.c.l.b16 %v296
      %v688 = vunpack.c.l.b16 %v297
      %v689 = vunpack.c.l.b16 %v298
      %v690 = vunpack.c.l.b16 %v299
      %v691 = vunpack.c.l.b16 %v300
      %v692 = vunpack.c.l.b16 %v301
      %v693 = vunpack.c.l.b16 %v302
      %v694 = vunpack.c.l.b16 %v303
      %v695 = vunpack.c.l.b16 %v304
      %v696 = vunpack.c.l.b16 %v305
      %v697 = vunpack.c.l.b16 %v306
      %v698 = vunpack.c.l.b16 %v307
      %v699 = vunpack.c.l.b16 %v308
      %v700 = vunpack.c.l.b16 %v309
      %v701 = vunpack.c.l.b16 %v310
      %v702 = vunpack.c.l.b16 %v311
      %v703 = vunpack.c.l.b16 %v312
      %v704 = vunpack.c.l.b16 %v313
      %v705 = vunpack.c.l.b16 %v314
      %v706 = vunpack.c.l.b16 %v315
      %v707 = vunpack.c.l.b16 %v316
      %v708 = vunpack.c.l.b16 %v317
      %v709 = vunpack.c.l.b16 %v318
      %v710 = vunpack.c.l.b16 %v319
      %v711 = vunpack.c.l.b16 %v320
      %v712 = vunpack.c.l.b16 %v321
      %v713 = vunpack.c.l.b16 %v322
      %v714 = vunpack.c.l.b16 %v323
      %v715 = vpack.c.b16 %v684, %v683
      %v716 = vpack.c.b16 %v686, %v685
      %v717 = vpack.c.b16 %v688, %v687
      %v718 = vpack.c.b16 %v690, %v689
      %v719 = vpack.c.b16 %v692, %v691
      %v720 = vpack.c.b16 %v694, %v693
      %v721 = vpack.c.b16 %v696, %v695
      %v722 = vpack.c.b16 %v698, %v697
      %v723 = vpack.c.b16 %v700, %v699
      %v724 = vpack.c.b16 %v702, %v701
      %v725 = vpack.c.b16 %v704, %v703
      %v726 = vpack.c.b16 %v706, %v705
      %v727 = vpack.c.b16 %v708, %v707
      %v728 = vpack.c.b16 %v710, %v709
      %v729 = vpack.c.b16 %v712, %v711
      %v730 = vpack.c.b16 %v714, %v713
      %747 = vmatprep.subr.bf16.mxu0 0
      %748 = vmatpush1.bf16.msra.mxu0 %v722
      %749 = vmatprep.subr.bf16.mxu0 0
      %750 = vmatpush1.bf16.msra.mxu0 %v721
      %751 = vmatprep.subr.bf16.mxu0 0
      %752 = vmatpush1.bf16.msra.mxu0 %v720
      %753 = vmatprep.subr.bf16.mxu0 0
      %754 = vmatpush1.bf16.msra.mxu0 %v719
      %755 = vmatprep.subr.bf16.mxu0 0
      %756 = vmatpush1.bf16.msra.mxu0 %v718
      %757 = vmatprep.subr.bf16.mxu0 0
      %758 = vmatpush1.bf16.msra.mxu0 %v717
      %759 = vmatprep.subr.bf16.mxu0 0
      %760 = vmatpush1.bf16.msra.mxu0 %v716
      %761 = vmatprep.subr.bf16.mxu0 0
      %762 = vmatpush1.bf16.msra.mxu0 %v715
      %763 = vmatprep.subr.bf16.mxu0 0
      %764 = vmatpush2.bf16.msra.mxu0 %v730
      %765 = vmatprep.subr.bf16.mxu0 0
      %766 = vmatpush2.bf16.msra.mxu0 %v729
      %767 = vmatprep.subr.bf16.mxu0 0
      %768 = vmatpush2.bf16.msra.mxu0 %v728
      %769 = vmatprep.subr.bf16.mxu0 0
      %770 = vmatpush2.bf16.msra.mxu0 %v727
      %771 = vmatprep.subr.bf16.mxu0 0
      %772 = vmatpush2.bf16.msra.mxu0 %v726
      %773 = vmatprep.subr.bf16.mxu0 0
      %774 = vmatpush2.bf16.msra.mxu0 %v725
      %775 = vmatprep.subr.bf16.mxu0 0
      %776 = vmatpush2.bf16.msra.mxu0 %v724
      %777 = vmatprep.subr.bf16.mxu0 0
      %778 = vmatpush2.bf16.msra.mxu0 %v723
      %779 = vmatprep.mubr.bf16.mxu0 %v524
      %780 = vmatmul.mubr.bf16.gmra.mxu0 %v523
      %v781 = vpop.f32.mrf.mxu0
      %v782 = vadd.f32 %v329, %v781
      %v783 = vpop.f32.mrf.mxu0
      %v784 = vpop.f32.mrf.mxu0
      %v785 = vadd.f32 %v329, %v784
      %v786 = vpop.f32.mrf.mxu0
      %787 = vmatprep.mubr.bf16.mxu0 %v526
      %788 = vmatmul.mubr.bf16.gmra.mxu0 %v525
      %v789 = vpop.f32.mrf.mxu0
      %v790 = vadd.f32 %v329, %v789
      %v791 = vpop.f32.mrf.mxu0
      %v792 = vpop.f32.mrf.mxu0
      %v793 = vadd.f32 %v329, %v792
      %v794 = vpop.f32.mrf.mxu0
      %795 = vmatprep.mubr.bf16.mxu0 %v528
      %796 = vmatmul.mubr.bf16.gmra.mxu0 %v527
      %v797 = vpop.f32.mrf.mxu0
      %v798 = vadd.f32 %v329, %v797
      %v799 = vpop.f32.mrf.mxu0
      %v800 = vpop.f32.mrf.mxu0
      %v801 = vadd.f32 %v329, %v800
      %v802 = vpop.f32.mrf.mxu0
      %803 = vmatprep.mubr.bf16.mxu0 %v530
      %804 = vmatmul.mubr.bf16.gmra.mxu0 %v529
      %v805 = vpop.f32.mrf.mxu0
      %v806 = vadd.f32 %v329, %v805
      %v807 = vpop.f32.mrf.mxu0
      %v808 = vpop.f32.mrf.mxu0
      %v809 = vadd.f32 %v329, %v808
      %v810 = vpop.f32.mrf.mxu0
      %811 = vmatprep.mubr.bf16.mxu0 %v532
      %812 = vmatmul.mubr.bf16.gmra.mxu0 %v531
      %v813 = vpop.f32.mrf.mxu0
      %v814 = vadd.f32 %v329, %v813
      %v815 = vpop.f32.mrf.mxu0
      %v816 = vpop.f32.mrf.mxu0
      %v817 = vadd.f32 %v329, %v816
      %v818 = vpop.f32.mrf.mxu0
      %819 = vmatprep.mubr.bf16.mxu0 %v534
      %820 = vmatmul.mubr.bf16.gmra.mxu0 %v533
      %v821 = vpop.f32.mrf.mxu0
      %v822 = vadd.f32 %v329, %v821
      %v823 = vpop.f32.mrf.mxu0
      %v824 = vpop.f32.mrf.mxu0
      %v825 = vadd.f32 %v329, %v824
      %v826 = vpop.f32.mrf.mxu0
      %827 = vmatprep.mubr.bf16.mxu0 %v536
      %828 = vmatmul.mubr.bf16.gmra.mxu0 %v535
      %v829 = vpop.f32.mrf.mxu0
      %v830 = vadd.f32 %v329, %v829
      %v831 = vpop.f32.mrf.mxu0
      %v832 = vpop.f32.mrf.mxu0
      %v833 = vadd.f32 %v329, %v832
      %v834 = vpop.f32.mrf.mxu0
      %835 = vmatprep.mubr.bf16.mxu0 %v538
      %836 = vmatmul.mubr.bf16.gmra.mxu0 %v537
      %v837 = vpop.f32.mrf.mxu0
      %v838 = vadd.f32 %v329, %v837
      %v839 = vpop.f32.mrf.mxu0
      %v840 = vpop.f32.mrf.mxu0
      %v841 = vadd.f32 %v329, %v840
      %v842 = vpop.f32.mrf.mxu0
      %843 = vmatprep.mubr.bf16.mxu0 %v540
      %844 = vmatmul.mubr.bf16.gmra.mxu0 %v539
      %v845 = vpop.f32.mrf.mxu0
      %v846 = vadd.f32 %v329, %v845
      %v847 = vpop.f32.mrf.mxu0
      %v848 = vpop.f32.mrf.mxu0
      %v849 = vadd.f32 %v329, %v848
      %v850 = vpop.f32.mrf.mxu0
      %851 = vmatprep.mubr.bf16.mxu0 %v542
      %852 = vmatmul.mubr.bf16.gmra.mxu0 %v541
      %v853 = vpop.f32.mrf.mxu0
      %v854 = vadd.f32 %v329, %v853
      %v855 = vpop.f32.mrf.mxu0
      %v856 = vpop.f32.mrf.mxu0
      %v857 = vadd.f32 %v329, %v856
      %v858 = vpop.f32.mrf.mxu0
      %859 = vmatprep.mubr.bf16.mxu0 %v544
      %860 = vmatmul.mubr.bf16.gmra.mxu0 %v543
      %v861 = vpop.f32.mrf.mxu0
      %v862 = vadd.f32 %v329, %v861
      %v863 = vpop.f32.mrf.mxu0
      %v864 = vpop.f32.mrf.mxu0
      %v865 = vadd.f32 %v329, %v864
      %v866 = vpop.f32.mrf.mxu0
      %867 = vmatprep.mubr.bf16.mxu0 %v546
      %868 = vmatmul.mubr.bf16.gmra.mxu0 %v545
      %v869 = vpop.f32.mrf.mxu0
      %v870 = vadd.f32 %v329, %v869
      %v871 = vpop.f32.mrf.mxu0
      %v872 = vpop.f32.mrf.mxu0
      %v873 = vadd.f32 %v329, %v872
      %v874 = vpop.f32.mrf.mxu0
      %875 = vmatprep.mubr.bf16.mxu0 %v548
      %876 = vmatmul.mubr.bf16.gmra.mxu0 %v547
      %v877 = vpop.f32.mrf.mxu0
      %v878 = vadd.f32 %v329, %v877
      %v879 = vpop.f32.mrf.mxu0
      %v880 = vpop.f32.mrf.mxu0
      %v881 = vadd.f32 %v329, %v880
      %v882 = vpop.f32.mrf.mxu0
      %883 = vmatprep.mubr.bf16.mxu0 %v550
      %884 = vmatmul.mubr.bf16.gmra.mxu0 %v549
      %v885 = vpop.f32.mrf.mxu0
      %v886 = vadd.f32 %v329, %v885
      %v887 = vpop.f32.mrf.mxu0
      %v888 = vpop.f32.mrf.mxu0
      %v889 = vadd.f32 %v329, %v888
      %v890 = vpop.f32.mrf.mxu0
      %891 = vmatprep.mubr.bf16.mxu0 %v552
      %892 = vmatmul.mubr.bf16.gmra.mxu0 %v551
      %v893 = vpop.f32.mrf.mxu0
      %v894 = vadd.f32 %v329, %v893
      %v895 = vpop.f32.mrf.mxu0
      %v896 = vpop.f32.mrf.mxu0
      %v897 = vadd.f32 %v329, %v896
      %v898 = vpop.f32.mrf.mxu0
      %899 = vmatprep.mubr.bf16.mxu0 %v554
      %900 = vmatmul.mubr.bf16.gmra.mxu0 %v553
      %v901 = vpop.f32.mrf.mxu0
      %v902 = vadd.f32 %v329, %v901
      %v903 = vpop.f32.mrf.mxu0
      %v904 = vpop.f32.mrf.mxu0
      %v905 = vadd.f32 %v329, %v904
      %v906 = vpop.f32.mrf.mxu0
      %907 = vmatprep.mubr.bf16.mxu0 %v556
      %908 = vmatmul.mubr.bf16.gmra.mxu0 %v555
      %v909 = vpop.f32.mrf.mxu0
      %v910 = vadd.f32 %v329, %v909
      %v911 = vpop.f32.mrf.mxu0
      %v912 = vpop.f32.mrf.mxu0
      %v913 = vadd.f32 %v329, %v912
      %v914 = vpop.f32.mrf.mxu0
      %915 = vmatprep.mubr.bf16.mxu0 %v558
      %916 = vmatmul.mubr.bf16.gmra.mxu0 %v557
      %v917 = vpop.f32.mrf.mxu0
      %v918 = vadd.f32 %v329, %v917
      %v919 = vpop.f32.mrf.mxu0
      %v920 = vpop.f32.mrf.mxu0
      %v921 = vadd.f32 %v329, %v920
      %v922 = vpop.f32.mrf.mxu0
      %923 = vmatprep.mubr.bf16.mxu0 %v560
      %924 = vmatmul.mubr.bf16.gmra.mxu0 %v559
      %v925 = vpop.f32.mrf.mxu0
      %v926 = vadd.f32 %v329, %v925
      %v927 = vpop.f32.mrf.mxu0
      %v928 = vpop.f32.mrf.mxu0
      %v929 = vadd.f32 %v329, %v928
      %v930 = vpop.f32.mrf.mxu0
      %931 = vmatprep.mubr.bf16.mxu0 %v562
      %932 = vmatmul.mubr.bf16.gmra.mxu0 %v561
      %v933 = vpop.f32.mrf.mxu0
      %v934 = vadd.f32 %v329, %v933
      %v935 = vpop.f32.mrf.mxu0
      %v936 = vpop.f32.mrf.mxu0
      %v937 = vadd.f32 %v329, %v936
      %v938 = vpop.f32.mrf.mxu0
      %939 = vmatprep.mubr.bf16.mxu0 %v564
      %940 = vmatmul.mubr.bf16.gmra.mxu0 %v563
      %v941 = vpop.f32.mrf.mxu0
      %v942 = vadd.f32 %v329, %v941
      %v943 = vpop.f32.mrf.mxu0
      %v944 = vpop.f32.mrf.mxu0
      %v945 = vadd.f32 %v329, %v944
      %v946 = vpop.f32.mrf.mxu0
      %947 = vmatprep.mubr.bf16.mxu0 %v566
      %948 = vmatmul.mubr.bf16.gmra.mxu0 %v565
      %v949 = vpop.f32.mrf.mxu0
      %v950 = vadd.f32 %v329, %v949
      %v951 = vpop.f32.mrf.mxu0
      %v952 = vpop.f32.mrf.mxu0
      %v953 = vadd.f32 %v329, %v952
      %v954 = vpop.f32.mrf.mxu0
      %955 = vmatprep.mubr.bf16.mxu0 %v568
      %956 = vmatmul.mubr.bf16.gmra.mxu0 %v567
      %v957 = vpop.f32.mrf.mxu0
      %v958 = vadd.f32 %v329, %v957
      %v959 = vpop.f32.mrf.mxu0
      %v960 = vpop.f32.mrf.mxu0
      %v961 = vadd.f32 %v329, %v960
      %v962 = vpop.f32.mrf.mxu0
      %963 = vmatprep.mubr.bf16.mxu0 %v570
      %964 = vmatmul.mubr.bf16.gmra.mxu0 %v569
      %v965 = vpop.f32.mrf.mxu0
      %v966 = vadd.f32 %v329, %v965
      %v967 = vpop.f32.mrf.mxu0
      %v968 = vpop.f32.mrf.mxu0
      %v969 = vadd.f32 %v329, %v968
      %v970 = vpop.f32.mrf.mxu0
      %971 = vmatprep.mubr.bf16.mxu0 %v572
      %972 = vmatmul.mubr.bf16.gmra.mxu0 %v571
      %v973 = vpop.f32.mrf.mxu0
      %v974 = vadd.f32 %v329, %v973
      %v975 = vpop.f32.mrf.mxu0
      %v976 = vpop.f32.mrf.mxu0
      %v977 = vadd.f32 %v329, %v976
      %v978 = vpop.f32.mrf.mxu0
      %979 = vmatprep.mubr.bf16.mxu0 %v574
      %980 = vmatmul.mubr.bf16.gmra.mxu0 %v573
      %v981 = vpop.f32.mrf.mxu0
      %v982 = vadd.f32 %v329, %v981
      %v983 = vpop.f32.mrf.mxu0
      %v984 = vpop.f32.mrf.mxu0
      %v985 = vadd.f32 %v329, %v984
      %v986 = vpop.f32.mrf.mxu0
      %987 = vmatprep.mubr.bf16.mxu0 %v576
      %988 = vmatmul.mubr.bf16.gmra.mxu0 %v575
      %v989 = vpop.f32.mrf.mxu0
      %v990 = vadd.f32 %v329, %v989
      %v991 = vpop.f32.mrf.mxu0
      %v992 = vpop.f32.mrf.mxu0
      %v993 = vadd.f32 %v329, %v992
      %v994 = vpop.f32.mrf.mxu0
      %995 = vmatprep.mubr.bf16.mxu0 %v578
      %996 = vmatmul.mubr.bf16.gmra.mxu0 %v577
      %v997 = vpop.f32.mrf.mxu0
      %v998 = vadd.f32 %v329, %v997
      %v999 = vpop.f32.mrf.mxu0
      %v1000 = vpop.f32.mrf.mxu0
      %v1001 = vadd.f32 %v329, %v1000
      %v1002 = vpop.f32.mrf.mxu0
      %1003 = vmatprep.mubr.bf16.mxu0 %v580
      %1004 = vmatmul.mubr.bf16.gmra.mxu0 %v579
      %v1005 = vpop.f32.mrf.mxu0
      %v1006 = vadd.f32 %v329, %v1005
      %v1007 = vpop.f32.mrf.mxu0
      %v1008 = vpop.f32.mrf.mxu0
      %v1009 = vadd.f32 %v329, %v1008
      %v1010 = vpop.f32.mrf.mxu0
      %1011 = vmatprep.mubr.bf16.mxu0 %v582
      %1012 = vmatmul.mubr.bf16.gmra.mxu0 %v581
      %v1013 = vpop.f32.mrf.mxu0
      %v1014 = vadd.f32 %v329, %v1013
      %v1015 = vpop.f32.mrf.mxu0
      %v1016 = vpop.f32.mrf.mxu0
      %v1017 = vadd.f32 %v329, %v1016
      %v1018 = vpop.f32.mrf.mxu0
      %1019 = vmatprep.mubr.bf16.mxu0 %v584
      %1020 = vmatmul.mubr.bf16.gmra.mxu0 %v583
      %v1021 = vpop.f32.mrf.mxu0
      %v1022 = vadd.f32 %v329, %v1021
      %v1023 = vpop.f32.mrf.mxu0
      %v1024 = vpop.f32.mrf.mxu0
      %v1025 = vadd.f32 %v329, %v1024
      %v1026 = vpop.f32.mrf.mxu0
      %1027 = vmatprep.mubr.bf16.mxu0 %v586
      %1028 = vmatmul.mubr.bf16.gmra.mxu0 %v585
      %v1029 = vpop.f32.mrf.mxu0
      %v1030 = vadd.f32 %v329, %v1029
      %v1031 = vpop.f32.mrf.mxu0
      %v1032 = vpop.f32.mrf.mxu0
      %v1033 = vadd.f32 %v329, %v1032
      %v1034 = vpop.f32.mrf.mxu0
      %1035 = vdwg.mxu0
      %v1036 = vmax.f32 %v782, 0.0
      %v1037 = vmax.f32 %v785, 0.0
      %v1038 = vmax.f32 %v790, 0.0
      %v1039 = vmax.f32 %v793, 0.0
      %v1040 = vmax.f32 %v798, 0.0
      %v1041 = vmax.f32 %v801, 0.0
      %v1042 = vmax.f32 %v806, 0.0
      %v1043 = vmax.f32 %v809, 0.0
      %v1044 = vmax.f32 %v814, 0.0
      %v1045 = vmax.f32 %v817, 0.0
      %v1046 = vmax.f32 %v822, 0.0
      %v1047 = vmax.f32 %v825, 0.0
      %v1048 = vmax.f32 %v830, 0.0
      %v1049 = vmax.f32 %v833, 0.0
      %v1050 = vmax.f32 %v838, 0.0
      %v1051 = vmax.f32 %v841, 0.0
      %v1052 = vmax.f32 %v846, 0.0
      %v1053 = vmax.f32 %v849, 0.0
      %v1054 = vmax.f32 %v854, 0.0
      %v1055 = vmax.f32 %v857, 0.0
      %v1056 = vmax.f32 %v862, 0.0
      %v1057 = vmax.f32 %v865, 0.0
      %v1058 = vmax.f32 %v870, 0.0
      %v1059 = vmax.f32 %v873, 0.0
      %v1060 = vmax.f32 %v878, 0.0
      %v1061 = vmax.f32 %v881, 0.0
      %v1062 = vmax.f32 %v886, 0.0
      %v1063 = vmax.f32 %v889, 0.0
      %v1064 = vmax.f32 %v894, 0.0
      %v1065 = vmax.f32 %v897, 0.0
      %v1066 = vmax.f32 %v902, 0.0
      %v1067 = vmax.f32 %v905, 0.0
      %v1068 = vmax.f32 %v910, 0.0
      %v1069 = vmax.f32 %v913, 0.0
      %v1070 = vmax.f32 %v918, 0.0
      %v1071 = vmax.f32 %v921, 0.0
      %v1072 = vmax.f32 %v926, 0.0
      %v1073 = vmax.f32 %v929, 0.0
      %v1074 = vmax.f32 %v934, 0.0
      %v1075 = vmax.f32 %v937, 0.0
      %v1076 = vmax.f32 %v942, 0.0
      %v1077 = vmax.f32 %v945, 0.0
      %v1078 = vmax.f32 %v950, 0.0
      %v1079 = vmax.f32 %v953, 0.0
      %v1080 = vmax.f32 %v958, 0.0
      %v1081 = vmax.f32 %v961, 0.0
      %v1082 = vmax.f32 %v966, 0.0
      %v1083 = vmax.f32 %v969, 0.0
      %v1084 = vmax.f32 %v974, 0.0
      %v1085 = vmax.f32 %v977, 0.0
      %v1086 = vmax.f32 %v982, 0.0
      %v1087 = vmax.f32 %v985, 0.0
      %v1088 = vmax.f32 %v990, 0.0
      %v1089 = vmax.f32 %v993, 0.0
      %v1090 = vmax.f32 %v998, 0.0
      %v1091 = vmax.f32 %v1001, 0.0
      %v1092 = vmax.f32 %v1006, 0.0
      %v1093 = vmax.f32 %v1009, 0.0
      %v1094 = vmax.f32 %v1014, 0.0
      %v1095 = vmax.f32 %v1017, 0.0
      %v1096 = vmax.f32 %v1022, 0.0
      %v1097 = vmax.f32 %v1025, 0.0
      %v1098 = vmax.f32 %v1030, 0.0
      %v1099 = vmax.f32 %v1033, 0.0
      %1100 = vst [vmem:[%s225] sm:$0xff] %v1036
      %1101 = vst [vmem:[%s225 + $0x8] sm:$0xff] %v1037
      %1102 = vst [vmem:[%s225 + $0x10] sm:$0xff] %v1038
      %1103 = vst [vmem:[%s225 + $0x18] sm:$0xff] %v1039
      %1104 = vst [vmem:[%s225 + $0x20] sm:$0xff] %v1040
      %1105 = vst [vmem:[%s225 + $0x28] sm:$0xff] %v1041
      %1106 = vst [vmem:[%s225 + $0x30] sm:$0xff] %v1042
      %1107 = vst [vmem:[%s225 + $0x38] sm:$0xff] %v1043
      %1108 = vst [vmem:[%s225 + $0x40] sm:$0xff] %v1044
      %1109 = vst [vmem:[%s225 + $0x48] sm:$0xff] %v1045
      %1110 = vst [vmem:[%s225 + $0x50] sm:$0xff] %v1046
      %1111 = vst [vmem:[%s225 + $0x58] sm:$0xff] %v1047
      %1112 = vst [vmem:[%s225 + $0x60] sm:$0xff] %v1048
      %1113 = vst [vmem:[%s225 + $0x68] sm:$0xff] %v1049
      %1114 = vst [vmem:[%s225 + $0x70] sm:$0xff] %v1050
      %1115 = vst [vmem:[%s225 + $0x78] sm:$0xff] %v1051
      %1116 = vst [vmem:[%s225 + $0x80] sm:$0xff] %v1052
      %1117 = vst [vmem:[%s225 + $0x88] sm:$0xff] %v1053
      %1118 = vst [vmem:[%s225 + $0x90] sm:$0xff] %v1054
      %1119 = vst [vmem:[%s225 + $0x98] sm:$0xff] %v1055
      %1120 = vst [vmem:[%s225 + $0xa0] sm:$0xff] %v1056
      %1121 = vst [vmem:[%s225 + $0xa8] sm:$0xff] %v1057
      %1122 = vst [vmem:[%s225 + $0xb0] sm:$0xff] %v1058
      %1123 = vst [vmem:[%s225 + $0xb8] sm:$0xff] %v1059
      %1124 = vst [vmem:[%s225 + $0xc0] sm:$0xff] %v1060
      %1125 = vst [vmem:[%s225 + $0xc8] sm:$0xff] %v1061
      %1126 = vst [vmem:[%s225 + $0xd0] sm:$0xff] %v1062
      %1127 = vst [vmem:[%s225 + $0xd8] sm:$0xff] %v1063
      %1128 = vst [vmem:[%s225 + $0xe0] sm:$0xff] %v1064
      %1129 = vst [vmem:[%s225 + $0xe8] sm:$0xff] %v1065
      %1130 = vst [vmem:[%s225 + $0xf0] sm:$0xff] %v1066
      %1131 = vst [vmem:[%s225 + $0xf8] sm:$0xff] %v1067
      %1132 = vst [vmem:[%s225 + $0x100] sm:$0xff] %v1068
      %1133 = vst [vmem:[%s225 + $0x108] sm:$0xff] %v1069
      %1134 = vst [vmem:[%s225 + $0x110] sm:$0xff] %v1070
      %1135 = vst [vmem:[%s225 + $0x118] sm:$0xff] %v1071
      %1136 = vst [vmem:[%s225 + $0x120] sm:$0xff] %v1072
      %1137 = vst [vmem:[%s225 + $0x128] sm:$0xff] %v1073
      %1138 = vst [vmem:[%s225 + $0x130] sm:$0xff] %v1074
      %1139 = vst [vmem:[%s225 + $0x138] sm:$0xff] %v1075
      %1140 = vst [vmem:[%s225 + $0x140] sm:$0xff] %v1076
      %1141 = vst [vmem:[%s225 + $0x148] sm:$0xff] %v1077
      %1142 = vst [vmem:[%s225 + $0x150] sm:$0xff] %v1078
      %1143 = vst [vmem:[%s225 + $0x158] sm:$0xff] %v1079
      %1144 = vst [vmem:[%s225 + $0x160] sm:$0xff] %v1080
      %1145 = vst [vmem:[%s225 + $0x168] sm:$0xff] %v1081
      %1146 = vst [vmem:[%s225 + $0x170] sm:$0xff] %v1082
      %1147 = vst [vmem:[%s225 + $0x178] sm:$0xff] %v1083
      %1148 = vst [vmem:[%s225 + $0x180] sm:$0xff] %v1084
      %1149 = vst [vmem:[%s225 + $0x188] sm:$0xff] %v1085
      %1150 = vst [vmem:[%s225 + $0x190] sm:$0xff] %v1086
      %1151 = vst [vmem:[%s225 + $0x198] sm:$0xff] %v1087
      %1152 = vst [vmem:[%s225 + $0x1a0] sm:$0xff] %v1088
      %1153 = vst [vmem:[%s225 + $0x1a8] sm:$0xff] %v1089
      %1154 = vst [vmem:[%s225 + $0x1b0] sm:$0xff] %v1090
      %1155 = vst [vmem:[%s225 + $0x1b8] sm:$0xff] %v1091
      %1156 = vst [vmem:[%s225 + $0x1c0] sm:$0xff] %v1092
      %1157 = vst [vmem:[%s225 + $0x1c8] sm:$0xff] %v1093
      %1158 = vst [vmem:[%s225 + $0x1d0] sm:$0xff] %v1094
      %1159 = vst [vmem:[%s225 + $0x1d8] sm:$0xff] %v1095
      %1160 = vst [vmem:[%s225 + $0x1e0] sm:$0xff] %v1096
      %1161 = vst [vmem:[%s225 + $0x1e8] sm:$0xff] %v1097
      %1162 = vst [vmem:[%s225 + $0x1f0] sm:$0xff] %v1098
      %1163 = vst [vmem:[%s225 + $0x1f8] sm:$0xff] %v1099
      %s1164 = smul.u32 64, %s18
      %p1165 = scmp.lt.s32.totalorder %s1164, 383
      %s1166 = scalar_select %p1165, %s1164, 383
      %s1167 = smul.addr %s1166, 8
      %s1168 = scalar_lea.vmem %s3, %s1167
      // Predicated region
      $region33: #{net_forward.4} parent=31 // pred_check
        %p1169 = pneg %p119
      $region34: #{net_forward.4} parent=31 // pred_check_branch
        %1171 = sbr.rel (%p1169) target = $region36
      $region35: #{net_forward.4} parent=31 // pred_region
        %s1172 = smul.u32 64, %s18
      $region36: #{net_forward.4} parent=31 // pred_fallthru
        _
    $region32: #{net_forward.4} parent=5 // pred_fallthru
      _
    %p1173 = scmp.le.s32.totalorder 2, %s9
    // Predicated region
    $region37: #{net_forward.4} parent=5 // pred_check
      %p1174 = pneg %p1173
    $region38: #{net_forward.4} parent=5 // pred_check_branch
      %1176 = sbr.rel (%p1174) target = $region40
    $region39: #{net_forward.4} parent=5 // pred_region
      %s1177 = ssub.s32 %s9, 2
      // Predicated region
      $region41: #{net_forward.4} parent=39 // pred_check
        %p1178 = pneg %p125
      $region42: #{net_forward.4} parent=39 // pred_check_branch
        %1180 = sbr.rel (%p1178) target = $region44
      $region43: #{net_forward.4} parent=39 // pred_region
        %s1181 = smul.u32 64, %s20
        %p1182 = scmp.lt.s32.totalorder %s1181, 383
        %s1183 = scalar_select %p1182, %s1181, 383
        %s1184 = smul.addr %s1183, 8
        %s1185 = scalar_lea.vmem %s3, %s1184
      $region44: #{net_forward.4} parent=39 // pred_fallthru
        _
    $region40: #{net_forward.4} parent=5 // pred_fallthru
      _
  $region6: #{net_forward.4} parent=0 // loop_footer
    %s13 = sadd.s32 1, %s9
  $region7: #{net_forward.4} parent=0 // loop_footer_branch
    %8 = sbr.rel target = $region3
  $region8: #{net_forward.4} parent=0 // loop_exit
    _

// kernel: net_forward.5
$region0: #{net_forward.5}
  #allocation0 [shape = 'u32[]', space=smem, size = 0x4, offset = 0x4, fixed_abs, tag = 'smem constant byte address 0x4 - core index']
  #allocation1 [shape = 'u32[144,128]{1,0:T(1,128)}', space=vmem, size = 0x12000, scoped, tag = 'internal scratch']
  %s0 = inlined_call_operand.vmem [shape: bf16[648,512], index: 0, kind: input, shape index: {}]
  %s1 = inlined_call_operand.vmem [shape: bf16[512,128], index: 1, kind: input, shape index: {}]
  %s2 = inlined_call_operand.vmem [shape: f32[1,128], index: 2, kind: input, shape index: {}]
  %s3 = inlined_call_operand.vmem [shape: f32[648,128], index: 3, kind: output, shape index: {}]
  %s4 = sld [smem:[#allocation0]]
  $region22: #{net_forward.5} parent=0
    _
  %s6 = ssub.s32 1, %s4
  %s7 = scalar_select 0, %s6, %s4
  // Predicated region
  $region2: #{net_forward.5} parent=0 // pred_check
    _
  $region3: #{net_forward.5} parent=0 // pred_check_branch
    %9 = sbr.rel (0) target = $region5
  $region4: #{net_forward.5} parent=0 // pred_region
    _
  $region5: #{net_forward.5} parent=0 // pred_fallthru
    _
  // Predicated region
  $region6: #{net_forward.5} parent=0 // pred_check
    _
  $region7: #{net_forward.5} parent=0 // pred_check_branch
    %11 = sbr.rel (0) target = $region9
  $region8: #{net_forward.5} parent=0 // pred_region
    _
  $region9: #{net_forward.5} parent=0 // pred_fallthru
    _
  // Predicated region
  $region10: #{net_forward.5} parent=0 // pred_check
    _
  $region11: #{net_forward.5} parent=0 // pred_check_branch
    %13 = sbr.rel (0) target = $region13
  $region12: #{net_forward.5} parent=0 // pred_region
    _
  $region13: #{net_forward.5} parent=0 // pred_fallthru
    _
  %v15 = vld [vmem:[%s0] sm:$0xff]
  %v16 = vld [vmem:[%s0 + $0x8] sm:$0xff]
  %v17 = vld [vmem:[%s0 + $0x10] sm:$0xff]
  %v18 = vld [vmem:[%s0 + $0x18] sm:$0xff]
  %v19 = vld [vmem:[%s0 + $0x20] sm:$0xff]
  %v20 = vld [vmem:[%s0 + $0x28] sm:$0xff]
  %v21 = vld [vmem:[%s0 + $0x30] sm:$0xff]
  %v22 = vld [vmem:[%s0 + $0x38] sm:$0xff]
  %v23 = vld [vmem:[%s0 + $0x40] sm:$0xff]
  %v24 = vld [vmem:[%s0 + $0x48] sm:$0xff]
  %v25 = vld [vmem:[%s0 + $0x50] sm:$0xff]
  %v26 = vld [vmem:[%s0 + $0x58] sm:$0xff]
  %v27 = vld [vmem:[%s0 + $0x60] sm:$0xff]
  %v28 = vld [vmem:[%s0 + $0x68] sm:$0xff]
  %v29 = vld [vmem:[%s0 + $0x70] sm:$0xff]
  %v30 = vld [vmem:[%s0 + $0x78] sm:$0xff]
  %v31 = vld [vmem:[%s0 + $0x80] sm:$0xff]
  %v32 = vld [vmem:[%s0 + $0x88] sm:$0xff]
  %v33 = vld [vmem:[%s0 + $0x90] sm:$0xff]
  %v34 = vld [vmem:[%s0 + $0x98] sm:$0xff]
  %v35 = vld [vmem:[%s0 + $0xa0] sm:$0xff]
  %v36 = vld [vmem:[%s0 + $0xa8] sm:$0xff]
  %v37 = vld [vmem:[%s0 + $0xb0] sm:$0xff]
  %v38 = vld [vmem:[%s0 + $0xb8] sm:$0xff]
  %v39 = vld [vmem:[%s0 + $0xc0] sm:$0xff]
  %v40 = vld [vmem:[%s0 + $0xc8] sm:$0xff]
  %v41 = vld [vmem:[%s0 + $0xd0] sm:$0xff]
  %v42 = vld [vmem:[%s0 + $0xd8] sm:$0xff]
  %v43 = vld [vmem:[%s0 + $0xe0] sm:$0xff]
  %v44 = vld [vmem:[%s0 + $0xe8] sm:$0xff]
  %v45 = vld [vmem:[%s0 + $0xf0] sm:$0xff]
  %v46 = vld [vmem:[%s0 + $0xf8] sm:$0xff]
  %v47 = vld [vmem:[%s0 + $0x100] sm:$0xff]
  %v48 = vld [vmem:[%s0 + $0x108] sm:$0xff]
  %v49 = vld [vmem:[%s0 + $0x110] sm:$0xff]
  %v50 = vld [vmem:[%s0 + $0x118] sm:$0xff]
  %v51 = vld [vmem:[%s0 + $0x120] sm:$0xff]
  %v52 = vld [vmem:[%s0 + $0x128] sm:$0xff]
  %v53 = vld [vmem:[%s0 + $0x130] sm:$0xff]
  %v54 = vld [vmem:[%s0 + $0x138] sm:$0xff]
  %v55 = vld [vmem:[%s0 + $0x140] sm:$0xff]
  %v56 = vld [vmem:[%s0 + $0x148] sm:$0xff]
  %v57 = vld [vmem:[%s0 + $0x150] sm:$0xff]
  %v58 = vld [vmem:[%s0 + $0x158] sm:$0xff]
  %v59 = vld [vmem:[%s0 + $0x160] sm:$0xff]
  %v60 = vld [vmem:[%s0 + $0x168] sm:$0xff]
  %v61 = vld [vmem:[%s0 + $0x170] sm:$0xff]
  %v62 = vld [vmem:[%s0 + $0x178] sm:$0xff]
  %v63 = vld [vmem:[%s0 + $0x180] sm:$0xff]
  %v64 = vld [vmem:[%s0 + $0x188] sm:$0xff]
  %v65 = vld [vmem:[%s0 + $0x190] sm:$0xff]
  %v66 = vld [vmem:[%s0 + $0x198] sm:$0xff]
  %v67 = vld [vmem:[%s0 + $0x1a0] sm:$0xff]
  %v68 = vld [vmem:[%s0 + $0x1a8] sm:$0xff]
  %v69 = vld [vmem:[%s0 + $0x1b0] sm:$0xff]
  %v70 = vld [vmem:[%s0 + $0x1b8] sm:$0xff]
  %v71 = vld [vmem:[%s0 + $0x1c0] sm:$0xff]
  %v72 = vld [vmem:[%s0 + $0x1c8] sm:$0xff]
  %v73 = vld [vmem:[%s0 + $0x1d0] sm:$0xff]
  %v74 = vld [vmem:[%s0 + $0x1d8] sm:$0xff]
  %v75 = vld [vmem:[%s0 + $0x1e0] sm:$0xff]
  %v76 = vld [vmem:[%s0 + $0x1e8] sm:$0xff]
  %v77 = vld [vmem:[%s0 + $0x1f0] sm:$0xff]
  %v78 = vld [vmem:[%s0 + $0x1f8] sm:$0xff]
  %v79 = vld [vmem:[%s0 + $0x200] sm:$0xff]
  %v80 = vld [vmem:[%s0 + $0x208] sm:$0xff]
  %v81 = vld [vmem:[%s0 + $0x210] sm:$0xff]
  %v82 = vld [vmem:[%s0 + $0x218] sm:$0xff]
  %v83 = vld [vmem:[%s0 + $0x220] sm:$0xff]
  %v84 = vld [vmem:[%s0 + $0x228] sm:$0xff]
  %v85 = vld [vmem:[%s0 + $0x230] sm:$0xff]
  %v86 = vld [vmem:[%s0 + $0x238] sm:$0xff]
  %v87 = vld [vmem:[%s0 + $0x240] sm:$0xff]
  %v88 = vld [vmem:[%s0 + $0x248] sm:$0xff]
  %v89 = vld [vmem:[%s0 + $0x250] sm:$0xff]
  %v90 = vld [vmem:[%s0 + $0x258] sm:$0xff]
  %v91 = vld [vmem:[%s0 + $0x260] sm:$0xff]
  %v92 = vld [vmem:[%s0 + $0x268] sm:$0xff]
  %v93 = vld [vmem:[%s0 + $0x270] sm:$0xff]
  %v94 = vld [vmem:[%s0 + $0x278] sm:$0xff]
  %v95 = vld [vmem:[%s0 + $0x280] sm:$0xff]
  %v96 = vld [vmem:[%s0 + $0x288] sm:$0xff]
  %v97 = vld [vmem:[%s0 + $0x290] sm:$0xff]
  %v98 = vld [vmem:[%s0 + $0x298] sm:$0xff]
  %v99 = vld [vmem:[%s0 + $0x2a0] sm:$0xff]
  %v100 = vld [vmem:[%s0 + $0x2a8] sm:$0xff]
  %v101 = vld [vmem:[%s0 + $0x2b0] sm:$0xff]
  %v102 = vld [vmem:[%s0 + $0x2b8] sm:$0xff]
  %v103 = vld [vmem:[%s0 + $0x2c0] sm:$0xff]
  %v104 = vld [vmem:[%s0 + $0x2c8] sm:$0xff]
  %v105 = vld [vmem:[%s0 + $0x2d0] sm:$0xff]
  %v106 = vld [vmem:[%s0 + $0x2d8] sm:$0xff]
  %v107 = vld [vmem:[%s0 + $0x2e0] sm:$0xff]
  %v108 = vld [vmem:[%s0 + $0x2e8] sm:$0xff]
  %v109 = vld [vmem:[%s0 + $0x2f0] sm:$0xff]
  %v110 = vld [vmem:[%s0 + $0x2f8] sm:$0xff]
  %v111 = vld [vmem:[%s0 + $0x300] sm:$0xff]
  %v112 = vld [vmem:[%s0 + $0x308] sm:$0xff]
  %v113 = vld [vmem:[%s0 + $0x310] sm:$0xff]
  %v114 = vld [vmem:[%s0 + $0x318] sm:$0xff]
  %v115 = vld [vmem:[%s0 + $0x320] sm:$0xff]
  %v116 = vld [vmem:[%s0 + $0x328] sm:$0xff]
  %v117 = vld [vmem:[%s0 + $0x330] sm:$0xff]
  %v118 = vld [vmem:[%s0 + $0x338] sm:$0xff]
  %v119 = vld [vmem:[%s0 + $0x340] sm:$0xff]
  %v120 = vld [vmem:[%s0 + $0x348] sm:$0xff]
  %v121 = vld [vmem:[%s0 + $0x350] sm:$0xff]
  %v122 = vld [vmem:[%s0 + $0x358] sm:$0xff]
  %v123 = vld [vmem:[%s0 + $0x360] sm:$0xff]
  %v124 = vld [vmem:[%s0 + $0x368] sm:$0xff]
  %v125 = vld [vmem:[%s0 + $0x370] sm:$0xff]
  %v126 = vld [vmem:[%s0 + $0x378] sm:$0xff]
  %v127 = vld [vmem:[%s0 + $0x380] sm:$0xff]
  %v128 = vld [vmem:[%s0 + $0x388] sm:$0xff]
  %v129 = vld [vmem:[%s0 + $0x390] sm:$0xff]
  %v130 = vld [vmem:[%s0 + $0x398] sm:$0xff]
  %v131 = vld [vmem:[%s0 + $0x3a0] sm:$0xff]
  %v132 = vld [vmem:[%s0 + $0x3a8] sm:$0xff]
  %v133 = vld [vmem:[%s0 + $0x3b0] sm:$0xff]
  %v134 = vld [vmem:[%s0 + $0x3b8] sm:$0xff]
  %v135 = vld [vmem:[%s0 + $0x3c0] sm:$0xff]
  %v136 = vld [vmem:[%s0 + $0x3c8] sm:$0xff]
  %v137 = vld [vmem:[%s0 + $0x3d0] sm:$0xff]
  %v138 = vld [vmem:[%s0 + $0x3d8] sm:$0xff]
  %v139 = vld [vmem:[%s0 + $0x3e0] sm:$0xff]
  %v140 = vld [vmem:[%s0 + $0x3e8] sm:$0xff]
  %v141 = vld [vmem:[%s0 + $0x3f0] sm:$0xff]
  %v142 = vld [vmem:[%s0 + $0x3f8] sm:$0xff]
  %v143 = vld [vmem:[%s0 + $0x400] sm:$0xff]
  %v144 = vld [vmem:[%s0 + $0x408] sm:$0xff]
  %v145 = vld [vmem:[%s0 + $0x410] sm:$0xff]
  %v146 = vld [vmem:[%s0 + $0x418] sm:$0xff]
  %v147 = vld [vmem:[%s0 + $0x420] sm:$0xff]
  %v148 = vld [vmem:[%s0 + $0x428] sm:$0xff]
  %v149 = vld [vmem:[%s0 + $0x430] sm:$0xff]
  %v150 = vld [vmem:[%s0 + $0x438] sm:$0xff]
  %v151 = vld [vmem:[%s0 + $0x440] sm:$0xff]
  %v152 = vld [vmem:[%s0 + $0x448] sm:$0xff]
  %v153 = vld [vmem:[%s0 + $0x450] sm:$0xff]
  %v154 = vld [vmem:[%s0 + $0x458] sm:$0xff]
  %v155 = vld [vmem:[%s0 + $0x460] sm:$0xff]
  %v156 = vld [vmem:[%s0 + $0x468] sm:$0xff]
  %v157 = vld [vmem:[%s0 + $0x470] sm:$0xff]
  %v158 = vld [vmem:[%s0 + $0x478] sm:$0xff]
  %v159 = vld [vmem:[%s0 + $0x480] sm:$0xff]
  %v160 = vld [vmem:[%s0 + $0x488] sm:$0xff]
  %v161 = vld [vmem:[%s0 + $0x490] sm:$0xff]
  %v162 = vld [vmem:[%s0 + $0x498] sm:$0xff]
  %v163 = vld [vmem:[%s0 + $0x4a0] sm:$0xff]
  %v164 = vld [vmem:[%s0 + $0x4a8] sm:$0xff]
  %v165 = vld [vmem:[%s0 + $0x4b0] sm:$0xff]
  %v166 = vld [vmem:[%s0 + $0x4b8] sm:$0xff]
  %v167 = vld [vmem:[%s0 + $0x4c0] sm:$0xff]
  %v168 = vld [vmem:[%s0 + $0x4c8] sm:$0xff]
  %v169 = vld [vmem:[%s0 + $0x4d0] sm:$0xff]
  %v170 = vld [vmem:[%s0 + $0x4d8] sm:$0xff]
  %v171 = vld [vmem:[%s0 + $0x4e0] sm:$0xff]
  %v172 = vld [vmem:[%s0 + $0x4e8] sm:$0xff]
  %v173 = vld [vmem:[%s0 + $0x4f0] sm:$0xff]
  %v174 = vld [vmem:[%s0 + $0x4f8] sm:$0xff]
  %v175 = vld [vmem:[%s0 + $0x500] sm:$0xff]
  %v176 = vld [vmem:[%s0 + $0x508] sm:$0xff]
  %v177 = vld [vmem:[%s1] sm:$0xf]
  %v178 = vld [vmem:[%s1 + $0x4] sm:$0xf]
  %v179 = vld [vmem:[%s1 + $0x8] sm:$0xf]
  %v180 = vld [vmem:[%s1 + $0xc] sm:$0xf]
  %v181 = vld [vmem:[%s1 + $0x10] sm:$0xf]
  %v182 = vld [vmem:[%s1 + $0x14] sm:$0xf]
  %v183 = vld [vmem:[%s1 + $0x18] sm:$0xf]
  %v184 = vld [vmem:[%s1 + $0x1c] sm:$0xf]
  %v185 = vld [vmem:[%s1 + $0x20] sm:$0xf]
  %v186 = vld [vmem:[%s1 + $0x24] sm:$0xf]
  %v187 = vld [vmem:[%s1 + $0x28] sm:$0xf]
  %v188 = vld [vmem:[%s1 + $0x2c] sm:$0xf]
  %v189 = vld [vmem:[%s1 + $0x30] sm:$0xf]
  %v190 = vld [vmem:[%s1 + $0x34] sm:$0xf]
  %v191 = vld [vmem:[%s1 + $0x38] sm:$0xf]
  %v192 = vld [vmem:[%s1 + $0x3c] sm:$0xf]
  %v193 = vld [vmem:[%s1 + $0x40] sm:$0xf]
  %v194 = vld [vmem:[%s1 + $0x44] sm:$0xf]
  %v195 = vld [vmem:[%s1 + $0x48] sm:$0xf]
  %v196 = vld [vmem:[%s1 + $0x4c] sm:$0xf]
  %v197 = vld [vmem:[%s1 + $0x50] sm:$0xf]
  %v198 = vld [vmem:[%s1 + $0x54] sm:$0xf]
  %v199 = vld [vmem:[%s1 + $0x58] sm:$0xf]
  %v200 = vld [vmem:[%s1 + $0x5c] sm:$0xf]
  %v201 = vld [vmem:[%s1 + $0x60] sm:$0xf]
  %v202 = vld [vmem:[%s1 + $0x64] sm:$0xf]
  %v203 = vld [vmem:[%s1 + $0x68] sm:$0xf]
  %v204 = vld [vmem:[%s1 + $0x6c] sm:$0xf]
  %v205 = vld [vmem:[%s1 + $0x70] sm:$0xf]
  %v206 = vld [vmem:[%s1 + $0x74] sm:$0xf]
  %v207 = vld [vmem:[%s1 + $0x78] sm:$0xf]
  %v208 = vld [vmem:[%s1 + $0x7c] sm:$0xf]
  %v209 = vld [vmem:[%s1 + $0x80] sm:$0xf]
  %v210 = vld [vmem:[%s1 + $0x84] sm:$0xf]
  %v211 = vld [vmem:[%s1 + $0x88] sm:$0xf]
  %v212 = vld [vmem:[%s1 + $0x8c] sm:$0xf]
  %v213 = vld [vmem:[%s1 + $0x90] sm:$0xf]
  %v214 = vld [vmem:[%s1 + $0x94] sm:$0xf]
  %v215 = vld [vmem:[%s1 + $0x98] sm:$0xf]
  %v216 = vld [vmem:[%s1 + $0x9c] sm:$0xf]
  %v217 = vld [vmem:[%s1 + $0xa0] sm:$0xf]
  %v218 = vld [vmem:[%s1 + $0xa4] sm:$0xf]
  %v219 = vld [vmem:[%s1 + $0xa8] sm:$0xf]
  %v220 = vld [vmem:[%s1 + $0xac] sm:$0xf]
  %v221 = vld [vmem:[%s1 + $0xb0] sm:$0xf]
  %v222 = vld [vmem:[%s1 + $0xb4] sm:$0xf]
  %v223 = vld [vmem:[%s1 + $0xb8] sm:$0xf]
  %v224 = vld [vmem:[%s1 + $0xbc] sm:$0xf]
  %v225 = vld [vmem:[%s1 + $0xc0] sm:$0xf]
  %v226 = vld [vmem:[%s1 + $0xc4] sm:$0xf]
  %v227 = vld [vmem:[%s1 + $0xc8] sm:$0xf]
  %v228 = vld [vmem:[%s1 + $0xcc] sm:$0xf]
  %v229 = vld [vmem:[%s1 + $0xd0] sm:$0xf]
  %v230 = vld [vmem:[%s1 + $0xd4] sm:$0xf]
  %v231 = vld [vmem:[%s1 + $0xd8] sm:$0xf]
  %v232 = vld [vmem:[%s1 + $0xdc] sm:$0xf]
  %v233 = vld [vmem:[%s1 + $0xe0] sm:$0xf]
  %v234 = vld [vmem:[%s1 + $0xe4] sm:$0xf]
  %v235 = vld [vmem:[%s1 + $0xe8] sm:$0xf]
  %v236 = vld [vmem:[%s1 + $0xec] sm:$0xf]
  %v237 = vld [vmem:[%s1 + $0xf0] sm:$0xf]
  %v238 = vld [vmem:[%s1 + $0xf4] sm:$0xf]
  %v239 = vld [vmem:[%s1 + $0xf8] sm:$0xf]
  %v240 = vld [vmem:[%s1 + $0xfc] sm:$0xf]
  %v241 = vld [vmem:[%s2] sm:$0x1]
  %v243 = vlaneseq
  %v244 = vshrl.u32 %v243, 7
  %v245 = vsub.s32 0, %v244
  %v246 = vrot.slane %v241, %v245
  %v410 = vunpack.c.l.b16 %v15
  %v411 = vunpack.c.h.b16 %v15
  %v412 = vunpack.c.l.b16 %v16
  %v413 = vunpack.c.h.b16 %v16
  %v414 = vunpack.c.l.b16 %v17
  %v415 = vunpack.c.h.b16 %v17
  %v416 = vunpack.c.l.b16 %v18
  %v417 = vunpack.c.h.b16 %v18
  %v418 = vunpack.c.l.b16 %v19
  %v419 = vunpack.c.h.b16 %v19
  %v420 = vunpack.c.l.b16 %v20
  %v421 = vunpack.c.h.b16 %v20
  %v422 = vunpack.c.l.b16 %v21
  %v423 = vunpack.c.h.b16 %v21
  %v424 = vunpack.c.l.b16 %v22
  %v425 = vunpack.c.h.b16 %v22
  %v426 = vunpack.c.l.b16 %v23
  %v427 = vunpack.c.h.b16 %v23
  %v428 = vunpack.c.l.b16 %v24
  %v429 = vunpack.c.h.b16 %v24
  %v430 = vunpack.c.l.b16 %v25
  %v431 = vunpack.c.h.b16 %v25
  %v432 = vunpack.c.l.b16 %v26
  %v433 = vunpack.c.h.b16 %v26
  %v434 = vunpack.c.l.b16 %v27
  %v435 = vunpack.c.h.b16 %v27
  %v436 = vunpack.c.l.b16 %v28
  %v437 = vunpack.c.h.b16 %v28
  %v438 = vunpack.c.l.b16 %v29
  %v439 = vunpack.c.h.b16 %v29
  %v440 = vunpack.c.l.b16 %v30
  %v441 = vunpack.c.h.b16 %v30
  %v442 = vunpack.c.l.b16 %v31
  %v443 = vunpack.c.h.b16 %v31
  %v444 = vunpack.c.l.b16 %v32
  %v445 = vunpack.c.h.b16 %v32
  %v446 = vunpack.c.l.b16 %v33
  %v447 = vunpack.c.h.b16 %v33
  %v448 = vunpack.c.l.b16 %v34
  %v449 = vunpack.c.h.b16 %v34
  %v450 = vunpack.c.l.b16 %v35
  %v451 = vunpack.c.h.b16 %v35
  %v452 = vunpack.c.l.b16 %v36
  %v453 = vunpack.c.h.b16 %v36
  %v454 = vunpack.c.l.b16 %v37
  %v455 = vunpack.c.h.b16 %v37
  %v456 = vunpack.c.l.b16 %v38
  %v457 = vunpack.c.h.b16 %v38
  %v458 = vunpack.c.l.b16 %v39
  %v459 = vunpack.c.h.b16 %v39
  %v460 = vunpack.c.l.b16 %v40
  %v461 = vunpack.c.h.b16 %v40
  %v462 = vunpack.c.l.b16 %v41
  %v463 = vunpack.c.h.b16 %v41
  %v464 = vunpack.c.l.b16 %v42
  %v465 = vunpack.c.h.b16 %v42
  %v466 = vunpack.c.l.b16 %v43
  %v467 = vunpack.c.h.b16 %v43
  %v468 = vunpack.c.l.b16 %v44
  %v469 = vunpack.c.h.b16 %v44
  %v470 = vunpack.c.l.b16 %v45
  %v471 = vunpack.c.h.b16 %v45
  %v472 = vunpack.c.l.b16 %v46
  %v473 = vunpack.c.h.b16 %v46
  %v474 = vunpack.c.l.b16 %v47
  %v475 = vunpack.c.h.b16 %v47
  %v476 = vunpack.c.l.b16 %v48
  %v477 = vunpack.c.h.b16 %v48
  %v478 = vunpack.c.l.b16 %v49
  %v479 = vunpack.c.h.b16 %v49
  %v480 = vunpack.c.l.b16 %v50
  %v481 = vunpack.c.h.b16 %v50
  %v482 = vunpack.c.l.b16 %v51
  %v483 = vunpack.c.h.b16 %v51
  %v484 = vunpack.c.l.b16 %v52
  %v485 = vunpack.c.h.b16 %v52
  %v486 = vunpack.c.l.b16 %v53
  %v487 = vunpack.c.h.b16 %v53
  %v488 = vunpack.c.l.b16 %v54
  %v489 = vunpack.c.h.b16 %v54
  %v490 = vunpack.c.l.b16 %v55
  %v491 = vunpack.c.h.b16 %v55
  %v492 = vunpack.c.l.b16 %v56
  %v493 = vunpack.c.h.b16 %v56
  %v494 = vunpack.c.l.b16 %v57
  %v495 = vunpack.c.h.b16 %v57
  %v496 = vunpack.c.l.b16 %v58
  %v497 = vunpack.c.h.b16 %v58
  %v498 = vunpack.c.l.b16 %v59
  %v499 = vunpack.c.h.b16 %v59
  %v500 = vunpack.c.l.b16 %v60
  %v501 = vunpack.c.h.b16 %v60
  %v502 = vunpack.c.l.b16 %v61
  %v503 = vunpack.c.h.b16 %v61
  %v504 = vunpack.c.l.b16 %v62
  %v505 = vunpack.c.h.b16 %v62
  %v506 = vunpack.c.l.b16 %v63
  %v507 = vunpack.c.h.b16 %v63
  %v508 = vunpack.c.l.b16 %v64
  %v509 = vunpack.c.h.b16 %v64
  %v510 = vunpack.c.l.b16 %v65
  %v511 = vunpack.c.h.b16 %v65
  %v512 = vunpack.c.l.b16 %v66
  %v513 = vunpack.c.h.b16 %v66
  %v514 = vunpack.c.l.b16 %v67
  %v515 = vunpack.c.h.b16 %v67
  %v516 = vunpack.c.l.b16 %v68
  %v517 = vunpack.c.h.b16 %v68
  %v518 = vunpack.c.l.b16 %v69
  %v519 = vunpack.c.h.b16 %v69
  %v520 = vunpack.c.l.b16 %v70
  %v521 = vunpack.c.h.b16 %v70
  %v522 = vunpack.c.l.b16 %v71
  %v523 = vunpack.c.h.b16 %v71
  %v524 = vunpack.c.l.b16 %v72
  %v525 = vunpack.c.h.b16 %v72
  %v526 = vunpack.c.l.b16 %v73
  %v527 = vunpack.c.h.b16 %v73
  %v528 = vunpack.c.l.b16 %v74
  %v529 = vunpack.c.h.b16 %v74
  %v530 = vunpack.c.l.b16 %v75
  %v531 = vunpack.c.h.b16 %v75
  %v532 = vunpack.c.l.b16 %v76
  %v533 = vunpack.c.h.b16 %v76
  %v534 = vunpack.c.l.b16 %v77
  %v535 = vunpack.c.h.b16 %v77
  %v536 = vunpack.c.l.b16 %v78
  %v537 = vunpack.c.h.b16 %v78
  %v538 = vunpack.c.l.b16 %v79
  %v539 = vunpack.c.h.b16 %v79
  %v540 = vunpack.c.l.b16 %v80
  %v541 = vunpack.c.h.b16 %v80
  %v542 = vunpack.c.l.b16 %v81
  %v543 = vunpack.c.h.b16 %v81
  %v544 = vunpack.c.l.b16 %v82
  %v545 = vunpack.c.h.b16 %v82
  %v546 = vunpack.c.l.b16 %v83
  %v547 = vunpack.c.h.b16 %v83
  %v548 = vunpack.c.l.b16 %v84
  %v549 = vunpack.c.h.b16 %v84
  %v550 = vunpack.c.l.b16 %v85
  %v551 = vunpack.c.h.b16 %v85
  %v552 = vunpack.c.l.b16 %v86
  %v553 = vunpack.c.h.b16 %v86
  %v554 = vunpack.c.l.b16 %v87
  %v555 = vunpack.c.h.b16 %v87
  %v556 = vunpack.c.l.b16 %v88
  %v557 = vunpack.c.h.b16 %v88
  %v558 = vunpack.c.l.b16 %v89
  %v559 = vunpack.c.h.b16 %v89
  %v560 = vunpack.c.l.b16 %v90
  %v561 = vunpack.c.h.b16 %v90
  %v562 = vunpack.c.l.b16 %v91
  %v563 = vunpack.c.h.b16 %v91
  %v564 = vunpack.c.l.b16 %v92
  %v565 = vunpack.c.h.b16 %v92
  %v566 = vunpack.c.l.b16 %v93
  %v567 = vunpack.c.h.b16 %v93
  %v568 = vunpack.c.l.b16 %v94
  %v569 = vunpack.c.h.b16 %v94
  %v570 = vunpack.c.l.b16 %v95
  %v571 = vunpack.c.h.b16 %v95
  %v572 = vunpack.c.l.b16 %v96
  %v573 = vunpack.c.h.b16 %v96
  %v574 = vunpack.c.l.b16 %v97
  %v575 = vunpack.c.h.b16 %v97
  %v576 = vunpack.c.l.b16 %v98
  %v577 = vunpack.c.h.b16 %v98
  %v578 = vunpack.c.l.b16 %v99
  %v579 = vunpack.c.h.b16 %v99
  %v580 = vunpack.c.l.b16 %v100
  %v581 = vunpack.c.h.b16 %v100
  %v582 = vunpack.c.l.b16 %v101
  %v583 = vunpack.c.h.b16 %v101
  %v584 = vunpack.c.l.b16 %v102
  %v585 = vunpack.c.h.b16 %v102
  %v586 = vunpack.c.l.b16 %v103
  %v587 = vunpack.c.h.b16 %v103
  %v588 = vunpack.c.l.b16 %v104
  %v589 = vunpack.c.h.b16 %v104
  %v590 = vunpack.c.l.b16 %v105
  %v591 = vunpack.c.h.b16 %v105
  %v592 = vunpack.c.l.b16 %v106
  %v593 = vunpack.c.h.b16 %v106
  %v594 = vunpack.c.l.b16 %v107
  %v595 = vunpack.c.h.b16 %v107
  %v596 = vunpack.c.l.b16 %v108
  %v597 = vunpack.c.h.b16 %v108
  %v598 = vunpack.c.l.b16 %v109
  %v599 = vunpack.c.h.b16 %v109
  %v600 = vunpack.c.l.b16 %v110
  %v601 = vunpack.c.h.b16 %v110
  %v602 = vunpack.c.l.b16 %v111
  %v603 = vunpack.c.h.b16 %v111
  %v604 = vunpack.c.l.b16 %v112
  %v605 = vunpack.c.h.b16 %v112
  %v606 = vunpack.c.l.b16 %v113
  %v607 = vunpack.c.h.b16 %v113
  %v608 = vunpack.c.l.b16 %v114
  %v609 = vunpack.c.h.b16 %v114
  %v610 = vunpack.c.l.b16 %v115
  %v611 = vunpack.c.h.b16 %v115
  %v612 = vunpack.c.l.b16 %v116
  %v613 = vunpack.c.h.b16 %v116
  %v614 = vunpack.c.l.b16 %v117
  %v615 = vunpack.c.h.b16 %v117
  %v616 = vunpack.c.l.b16 %v118
  %v617 = vunpack.c.h.b16 %v118
  %v618 = vunpack.c.l.b16 %v119
  %v619 = vunpack.c.h.b16 %v119
  %v620 = vunpack.c.l.b16 %v120
  %v621 = vunpack.c.h.b16 %v120
  %v622 = vunpack.c.l.b16 %v121
  %v623 = vunpack.c.h.b16 %v121
  %v624 = vunpack.c.l.b16 %v122
  %v625 = vunpack.c.h.b16 %v122
  %v626 = vunpack.c.l.b16 %v123
  %v627 = vunpack.c.h.b16 %v123
  %v628 = vunpack.c.l.b16 %v124
  %v629 = vunpack.c.h.b16 %v124
  %v630 = vunpack.c.l.b16 %v125
  %v631 = vunpack.c.h.b16 %v125
  %v632 = vunpack.c.l.b16 %v126
  %v633 = vunpack.c.h.b16 %v126
  %v634 = vunpack.c.l.b16 %v127
  %v635 = vunpack.c.h.b16 %v127
  %v636 = vunpack.c.l.b16 %v128
  %v637 = vunpack.c.h.b16 %v128
  %v638 = vunpack.c.l.b16 %v129
  %v639 = vunpack.c.h.b16 %v129
  %v640 = vunpack.c.l.b16 %v130
  %v641 = vunpack.c.h.b16 %v130
  %v642 = vunpack.c.l.b16 %v131
  %v643 = vunpack.c.h.b16 %v131
  %v644 = vunpack.c.l.b16 %v132
  %v645 = vunpack.c.h.b16 %v132
  %v646 = vunpack.c.l.b16 %v133
  %v647 = vunpack.c.h.b16 %v133
  %v648 = vunpack.c.l.b16 %v134
  %v649 = vunpack.c.h.b16 %v134
  %v650 = vunpack.c.l.b16 %v135
  %v651 = vunpack.c.h.b16 %v135
  %v652 = vunpack.c.l.b16 %v136
  %v653 = vunpack.c.h.b16 %v136
  %v654 = vunpack.c.l.b16 %v137
  %v655 = vunpack.c.h.b16 %v137
  %v656 = vunpack.c.l.b16 %v138
  %v657 = vunpack.c.h.b16 %v138
  %v658 = vunpack.c.l.b16 %v139
  %v659 = vunpack.c.h.b16 %v139
  %v660 = vunpack.c.l.b16 %v140
  %v661 = vunpack.c.h.b16 %v140
  %v662 = vunpack.c.l.b16 %v141
  %v663 = vunpack.c.h.b16 %v141
  %v664 = vunpack.c.l.b16 %v142
  %v665 = vunpack.c.h.b16 %v142
  %v666 = vunpack.c.l.b16 %v143
  %v667 = vunpack.c.h.b16 %v143
  %v668 = vunpack.c.l.b16 %v144
  %v669 = vunpack.c.h.b16 %v144
  %v670 = vunpack.c.l.b16 %v145
  %v671 = vunpack.c.h.b16 %v145
  %v672 = vunpack.c.l.b16 %v146
  %v673 = vunpack.c.h.b16 %v146
  %v674 = vunpack.c.l.b16 %v147
  %v675 = vunpack.c.h.b16 %v147
  %v676 = vunpack.c.l.b16 %v148
  %v677 = vunpack.c.h.b16 %v148
  %v678 = vunpack.c.l.b16 %v149
  %v679 = vunpack.c.h.b16 %v149
  %v680 = vunpack.c.l.b16 %v150
  %v681 = vunpack.c.h.b16 %v150
  %v682 = vunpack.c.l.b16 %v151
  %v683 = vunpack.c.h.b16 %v151
  %v684 = vunpack.c.l.b16 %v152
  %v685 = vunpack.c.h.b16 %v152
  %v686 = vunpack.c.l.b16 %v153
  %v687 = vunpack.c.h.b16 %v153
  %v688 = vunpack.c.l.b16 %v154
  %v689 = vunpack.c.h.b16 %v154
  %v690 = vunpack.c.l.b16 %v155
  %v691 = vunpack.c.h.b16 %v155
  %v692 = vunpack.c.l.b16 %v156
  %v693 = vunpack.c.h.b16 %v156
  %v694 = vunpack.c.l.b16 %v157
  %v695 = vunpack.c.h.b16 %v157
  %v696 = vunpack.c.l.b16 %v158
  %v697 = vunpack.c.h.b16 %v158
  %v698 = vunpack.c.l.b16 %v159
  %v699 = vunpack.c.h.b16 %v159
  %v700 = vunpack.c.l.b16 %v160
  %v701 = vunpack.c.h.b16 %v160
  %v702 = vunpack.c.l.b16 %v161
  %v703 = vunpack.c.h.b16 %v161
  %v704 = vunpack.c.l.b16 %v162
  %v705 = vunpack.c.h.b16 %v162
  %v706 = vunpack.c.l.b16 %v163
  %v707 = vunpack.c.h.b16 %v163
  %v708 = vunpack.c.l.b16 %v164
  %v709 = vunpack.c.h.b16 %v164
  %v710 = vunpack.c.l.b16 %v165
  %v711 = vunpack.c.h.b16 %v165
  %v712 = vunpack.c.l.b16 %v166
  %v713 = vunpack.c.h.b16 %v166
  %v714 = vunpack.c.l.b16 %v167
  %v715 = vunpack.c.h.b16 %v167
  %v716 = vunpack.c.l.b16 %v168
  %v717 = vunpack.c.h.b16 %v168
  %v718 = vunpack.c.l.b16 %v169
  %v719 = vunpack.c.h.b16 %v169
  %v720 = vunpack.c.l.b16 %v170
  %v721 = vunpack.c.h.b16 %v170
  %v722 = vunpack.c.l.b16 %v171
  %v723 = vunpack.c.h.b16 %v171
  %v724 = vunpack.c.l.b16 %v172
  %v725 = vunpack.c.h.b16 %v172
  %v726 = vunpack.c.l.b16 %v173
  %v727 = vunpack.c.h.b16 %v173
  %v728 = vunpack.c.l.b16 %v174
  %v729 = vunpack.c.h.b16 %v174
  %v730 = vunpack.c.l.b16 %v175
  %v731 = vunpack.c.h.b16 %v175
  %v732 = vunpack.c.l.b16 %v176
  %v733 = vunpack.c.h.b16 %v176
  %v734 = vpack.c.b16 %v414, %v410
  %v735 = vpack.c.b16 %v415, %v411
  %v736 = vpack.c.b16 %v416, %v412
  %v737 = vpack.c.b16 %v417, %v413
  %v738 = vpack.c.b16 %v422, %v418
  %v739 = vpack.c.b16 %v423, %v419
  %v740 = vpack.c.b16 %v424, %v420
  %v741 = vpack.c.b16 %v425, %v421
  %v742 = vpack.c.b16 %v430, %v426
  %v743 = vpack.c.b16 %v431, %v427
  %v744 = vpack.c.b16 %v432, %v428
  %v745 = vpack.c.b16 %v433, %v429
  %v746 = vpack.c.b16 %v438, %v434
  %v747 = vpack.c.b16 %v439, %v435
  %v748 = vpack.c.b16 %v440, %v436
  %v749 = vpack.c.b16 %v441, %v437
  %v750 = vpack.c.b16 %v446, %v442
  %v751 = vpack.c.b16 %v447, %v443
  %v752 = vpack.c.b16 %v448, %v444
  %v753 = vpack.c.b16 %v449, %v445
  %v754 = vpack.c.b16 %v454, %v450
  %v755 = vpack.c.b16 %v455, %v451
  %v756 = vpack.c.b16 %v456, %v452
  %v757 = vpack.c.b16 %v457, %v453
  %v758 = vpack.c.b16 %v462, %v458
  %v759 = vpack.c.b16 %v463, %v459
  %v760 = vpack.c.b16 %v464, %v460
  %v761 = vpack.c.b16 %v465, %v461
  %v762 = vpack.c.b16 %v470, %v466
  %v763 = vpack.c.b16 %v471, %v467
  %v764 = vpack.c.b16 %v472, %v468
  %v765 = vpack.c.b16 %v473, %v469
  %v766 = vpack.c.b16 %v478, %v474
  %v767 = vpack.c.b16 %v479, %v475
  %v768 = vpack.c.b16 %v480, %v476
  %v769 = vpack.c.b16 %v481, %v477
  %v770 = vpack.c.b16 %v486, %v482
  %v771 = vpack.c.b16 %v487, %v483
  %v772 = vpack.c.b16 %v488, %v484
  %v773 = vpack.c.b16 %v489, %v485
  %v774 = vpack.c.b16 %v494, %v490
  %v775 = vpack.c.b16 %v495, %v491
  %v776 = vpack.c.b16 %v496, %v492
  %v777 = vpack.c.b16 %v497, %v493
  %v778 = vpack.c.b16 %v502, %v498
  %v779 = vpack.c.b16 %v503, %v499
  %v780 = vpack.c.b16 %v504, %v500
  %v781 = vpack.c.b16 %v505, %v501
  %v782 = vpack.c.b16 %v510, %v506
  %v783 = vpack.c.b16 %v511, %v507
  %v784 = vpack.c.b16 %v512, %v508
  %v785 = vpack.c.b16 %v513, %v509
  %v786 = vpack.c.b16 %v518, %v514
  %v787 = vpack.c.b16 %v519, %v515
  %v788 = vpack.c.b16 %v520, %v516
  %v789 = vpack.c.b16 %v521, %v517
  %v790 = vpack.c.b16 %v526, %v522
  %v791 = vpack.c.b16 %v527, %v523
  %v792 = vpack.c.b16 %v528, %v524
  %v793 = vpack.c.b16 %v529, %v525
  %v794 = vpack.c.b16 %v534, %v530
  %v795 = vpack.c.b16 %v535, %v531
  %v796 = vpack.c.b16 %v536, %v532
  %v797 = vpack.c.b16 %v537, %v533
  %v798 = vpack.c.b16 %v542, %v538
  %v799 = vpack.c.b16 %v543, %v539
  %v800 = vpack.c.b16 %v544, %v540
  %v801 = vpack.c.b16 %v545, %v541
  %v802 = vpack.c.b16 %v550, %v546
  %v803 = vpack.c.b16 %v551, %v547
  %v804 = vpack.c.b16 %v552, %v548
  %v805 = vpack.c.b16 %v553, %v549
  %v806 = vpack.c.b16 %v558, %v554
  %v807 = vpack.c.b16 %v559, %v555
  %v808 = vpack.c.b16 %v560, %v556
  %v809 = vpack.c.b16 %v561, %v557
  %v810 = vpack.c.b16 %v566, %v562
  %v811 = vpack.c.b16 %v567, %v563
  %v812 = vpack.c.b16 %v568, %v564
  %v813 = vpack.c.b16 %v569, %v565
  %v814 = vpack.c.b16 %v574, %v570
  %v815 = vpack.c.b16 %v575, %v571
  %v816 = vpack.c.b16 %v576, %v572
  %v817 = vpack.c.b16 %v577, %v573
  %v818 = vpack.c.b16 %v582, %v578
  %v819 = vpack.c.b16 %v583, %v579
  %v820 = vpack.c.b16 %v584, %v580
  %v821 = vpack.c.b16 %v585, %v581
  %v822 = vpack.c.b16 %v590, %v586
  %v823 = vpack.c.b16 %v591, %v587
  %v824 = vpack.c.b16 %v592, %v588
  %v825 = vpack.c.b16 %v593, %v589
  %v826 = vpack.c.b16 %v598, %v594
  %v827 = vpack.c.b16 %v599, %v595
  %v828 = vpack.c.b16 %v600, %v596
  %v829 = vpack.c.b16 %v601, %v597
  %v830 = vpack.c.b16 %v606, %v602
  %v831 = vpack.c.b16 %v607, %v603
  %v832 = vpack.c.b16 %v608, %v604
  %v833 = vpack.c.b16 %v609, %v605
  %v834 = vpack.c.b16 %v614, %v610
  %v835 = vpack.c.b16 %v615, %v611
  %v836 = vpack.c.b16 %v616, %v612
  %v837 = vpack.c.b16 %v617, %v613
  %v838 = vpack.c.b16 %v622, %v618
  %v839 = vpack.c.b16 %v623, %v619
  %v840 = vpack.c.b16 %v624, %v620
  %v841 = vpack.c.b16 %v625, %v621
  %v842 = vpack.c.b16 %v630, %v626
  %v843 = vpack.c.b16 %v631, %v627
  %v844 = vpack.c.b16 %v632, %v628
  %v845 = vpack.c.b16 %v633, %v629
  %v846 = vpack.c.b16 %v638, %v634
  %v847 = vpack.c.b16 %v639, %v635
  %v848 = vpack.c.b16 %v640, %v636
  %v849 = vpack.c.b16 %v641, %v637
  %v850 = vpack.c.b16 %v646, %v642
  %v851 = vpack.c.b16 %v647, %v643
  %v852 = vpack.c.b16 %v648, %v644
  %v853 = vpack.c.b16 %v649, %v645
  %v854 = vpack.c.b16 %v654, %v650
  %v855 = vpack.c.b16 %v655, %v651
  %v856 = vpack.c.b16 %v656, %v652
  %v857 = vpack.c.b16 %v657, %v653
  %v858 = vpack.c.b16 %v662, %v658
  %v859 = vpack.c.b16 %v663, %v659
  %v860 = vpack.c.b16 %v664, %v660
  %v861 = vpack.c.b16 %v665, %v661
  %v862 = vpack.c.b16 %v670, %v666
  %v863 = vpack.c.b16 %v671, %v667
  %v864 = vpack.c.b16 %v672, %v668
  %v865 = vpack.c.b16 %v673, %v669
  %v866 = vpack.c.b16 %v678, %v674
  %v867 = vpack.c.b16 %v679, %v675
  %v868 = vpack.c.b16 %v680, %v676
  %v869 = vpack.c.b16 %v681, %v677
  %v870 = vpack.c.b16 %v686, %v682
  %v871 = vpack.c.b16 %v687, %v683
  %v872 = vpack.c.b16 %v688, %v684
  %v873 = vpack.c.b16 %v689, %v685
  %v874 = vpack.c.b16 %v694, %v690
  %v875 = vpack.c.b16 %v695, %v691
  %v876 = vpack.c.b16 %v696, %v692
  %v877 = vpack.c.b16 %v697, %v693
  %v878 = vpack.c.b16 %v702, %v698
  %v879 = vpack.c.b16 %v703, %v699
  %v880 = vpack.c.b16 %v704, %v700
  %v881 = vpack.c.b16 %v705, %v701
  %v882 = vpack.c.b16 %v710, %v706
  %v883 = vpack.c.b16 %v711, %v707
  %v884 = vpack.c.b16 %v712, %v708
  %v885 = vpack.c.b16 %v713, %v709
  %v886 = vpack.c.b16 %v718, %v714
  %v887 = vpack.c.b16 %v719, %v715
  %v888 = vpack.c.b16 %v720, %v716
  %v889 = vpack.c.b16 %v721, %v717
  %v890 = vpack.c.b16 %v726, %v722
  %v891 = vpack.c.b16 %v727, %v723
  %v892 = vpack.c.b16 %v728, %v724
  %v893 = vpack.c.b16 %v729, %v725
  %v894 = vpack.c.b16 %v730, %v730
  %v895 = vpack.c.b16 %v731, %v731
  %v896 = vpack.c.b16 %v732, %v732
  %v897 = vpack.c.b16 %v733, %v733
  %v1126 = vunpack.c.l.b16 %v177
  %v1127 = vunpack.c.l.b16 %v178
  %v1128 = vunpack.c.l.b16 %v179
  %v1129 = vunpack.c.l.b16 %v180
  %v1130 = vunpack.c.l.b16 %v181
  %v1131 = vunpack.c.l.b16 %v182
  %v1132 = vunpack.c.l.b16 %v183
  %v1133 = vunpack.c.l.b16 %v184
  %v1134 = vunpack.c.l.b16 %v185
  %v1135 = vunpack.c.l.b16 %v186
  %v1136 = vunpack.c.l.b16 %v187
  %v1137 = vunpack.c.l.b16 %v188
  %v1138 = vunpack.c.l.b16 %v189
  %v1139 = vunpack.c.l.b16 %v190
  %v1140 = vunpack.c.l.b16 %v191
  %v1141 = vunpack.c.l.b16 %v192
  %v1142 = vunpack.c.l.b16 %v193
  %v1143 = vunpack.c.l.b16 %v194
  %v1144 = vunpack.c.l.b16 %v195
  %v1145 = vunpack.c.l.b16 %v196
  %v1146 = vunpack.c.l.b16 %v197
  %v1147 = vunpack.c.l.b16 %v198
  %v1148 = vunpack.c.l.b16 %v199
  %v1149 = vunpack.c.l.b16 %v200
  %v1150 = vunpack.c.l.b16 %v201
  %v1151 = vunpack.c.l.b16 %v202
  %v1152 = vunpack.c.l.b16 %v203
  %v1153 = vunpack.c.l.b16 %v204
  %v1154 = vunpack.c.l.b16 %v205
  %v1155 = vunpack.c.l.b16 %v206
  %v1156 = vunpack.c.l.b16 %v207
  %v1157 = vunpack.c.l.b16 %v208
  %v1158 = vunpack.c.l.b16 %v209
  %v1159 = vunpack.c.l.b16 %v210
  %v1160 = vunpack.c.l.b16 %v211
  %v1161 = vunpack.c.l.b16 %v212
  %v1162 = vunpack.c.l.b16 %v213
  %v1163 = vunpack.c.l.b16 %v214
  %v1164 = vunpack.c.l.b16 %v215
  %v1165 = vunpack.c.l.b16 %v216
  %v1166 = vunpack.c.l.b16 %v217
  %v1167 = vunpack.c.l.b16 %v218
  %v1168 = vunpack.c.l.b16 %v219
  %v1169 = vunpack.c.l.b16 %v220
  %v1170 = vunpack.c.l.b16 %v221
  %v1171 = vunpack.c.l.b16 %v222
  %v1172 = vunpack.c.l.b16 %v223
  %v1173 = vunpack.c.l.b16 %v224
  %v1174 = vunpack.c.l.b16 %v225
  %v1175 = vunpack.c.l.b16 %v226
  %v1176 = vunpack.c.l.b16 %v227
  %v1177 = vunpack.c.l.b16 %v228
  %v1178 = vunpack.c.l.b16 %v229
  %v1179 = vunpack.c.l.b16 %v230
  %v1180 = vunpack.c.l.b16 %v231
  %v1181 = vunpack.c.l.b16 %v232
  %v1182 = vunpack.c.l.b16 %v233
  %v1183 = vunpack.c.l.b16 %v234
  %v1184 = vunpack.c.l.b16 %v235
  %v1185 = vunpack.c.l.b16 %v236
  %v1186 = vunpack.c.l.b16 %v237
  %v1187 = vunpack.c.l.b16 %v238
  %v1188 = vunpack.c.l.b16 %v239
  %v1189 = vunpack.c.l.b16 %v240
  %v1190 = vpack.c.b16 %v1127, %v1126
  %v1191 = vpack.c.b16 %v1129, %v1128
  %v1192 = vpack.c.b16 %v1131, %v1130
  %v1193 = vpack.c.b16 %v1133, %v1132
  %v1194 = vpack.c.b16 %v1135, %v1134
  %v1195 = vpack.c.b16 %v1137, %v1136
  %v1196 = vpack.c.b16 %v1139, %v1138
  %v1197 = vpack.c.b16 %v1141, %v1140
  %v1198 = vpack.c.b16 %v1143, %v1142
  %v1199 = vpack.c.b16 %v1145, %v1144
  %v1200 = vpack.c.b16 %v1147, %v1146
  %v1201 = vpack.c.b16 %v1149, %v1148
  %v1202 = vpack.c.b16 %v1151, %v1150
  %v1203 = vpack.c.b16 %v1153, %v1152
  %v1204 = vpack.c.b16 %v1155, %v1154
  %v1205 = vpack.c.b16 %v1157, %v1156
  %v1206 = vpack.c.b16 %v1159, %v1158
  %v1207 = vpack.c.b16 %v1161, %v1160
  %v1208 = vpack.c.b16 %v1163, %v1162
  %v1209 = vpack.c.b16 %v1165, %v1164
  %v1210 = vpack.c.b16 %v1167, %v1166
  %v1211 = vpack.c.b16 %v1169, %v1168
  %v1212 = vpack.c.b16 %v1171, %v1170
  %v1213 = vpack.c.b16 %v1173, %v1172
  %v1214 = vpack.c.b16 %v1175, %v1174
  %v1215 = vpack.c.b16 %v1177, %v1176
  %v1216 = vpack.c.b16 %v1179, %v1178
  %v1217 = vpack.c.b16 %v1181, %v1180
  %v1218 = vpack.c.b16 %v1183, %v1182
  %v1219 = vpack.c.b16 %v1185, %v1184
  %v1220 = vpack.c.b16 %v1187, %v1186
  %v1221 = vpack.c.b16 %v1189, %v1188
  %1254 = vmatprep.subr.bf16.mxu0 0
  %1255 = vmatpush1.bf16.msra.mxu0 %v1197
  %1256 = vmatprep.subr.bf16.mxu0 0
  %1257 = vmatpush1.bf16.msra.mxu0 %v1196
  %1258 = vmatprep.subr.bf16.mxu0 0
  %1259 = vmatpush1.bf16.msra.mxu0 %v1195
  %1260 = vmatprep.subr.bf16.mxu0 0
  %1261 = vmatpush1.bf16.msra.mxu0 %v1194
  %1262 = vmatprep.subr.bf16.mxu0 0
  %1263 = vmatpush1.bf16.msra.mxu0 %v1193
  %1264 = vmatprep.subr.bf16.mxu0 0
  %1265 = vmatpush1.bf16.msra.mxu0 %v1192
  %1266 = vmatprep.subr.bf16.mxu0 0
  %1267 = vmatpush1.bf16.msra.mxu0 %v1191
  %1268 = vmatprep.subr.bf16.mxu0 0
  %1269 = vmatpush1.bf16.msra.mxu0 %v1190
  %1270 = vmatprep.subr.bf16.mxu0 0
  %1271 = vmatpush2.bf16.msra.mxu0 %v1205
  %1272 = vmatprep.subr.bf16.mxu0 0
  %1273 = vmatpush2.bf16.msra.mxu0 %v1204
  %1274 = vmatprep.subr.bf16.mxu0 0
  %1275 = vmatpush2.bf16.msra.mxu0 %v1203
  %1276 = vmatprep.subr.bf16.mxu0 0
  %1277 = vmatpush2.bf16.msra.mxu0 %v1202
  %1278 = vmatprep.subr.bf16.mxu0 0
  %1279 = vmatpush2.bf16.msra.mxu0 %v1201
  %1280 = vmatprep.subr.bf16.mxu0 0
  %1281 = vmatpush2.bf16.msra.mxu0 %v1200
  %1282 = vmatprep.subr.bf16.mxu0 0
  %1283 = vmatpush2.bf16.msra.mxu0 %v1199
  %1284 = vmatprep.subr.bf16.mxu0 0
  %1285 = vmatpush2.bf16.msra.mxu0 %v1198
  %1286 = vmatprep.mubr.bf16.mxu0 %v735
  %1287 = vmatmul.mubr.bf16.gmra.mxu0 %v734
  %v1288 = vpop.f32.mrf.mxu0
  %v1289 = vadd.f32 %v246, %v1288
  %v1290 = vpop.f32.mrf.mxu0
  %v1291 = vpop.f32.mrf.mxu0
  %v1292 = vadd.f32 %v246, %v1291
  %v1293 = vpop.f32.mrf.mxu0
  %1294 = vmatprep.mubr.bf16.mxu0 %v739
  %1295 = vmatmul.mubr.bf16.gmra.mxu0 %v738
  %v1296 = vpop.f32.mrf.mxu0
  %v1297 = vadd.f32 %v246, %v1296
  %v1298 = vpop.f32.mrf.mxu0
  %v1299 = vpop.f32.mrf.mxu0
  %v1300 = vadd.f32 %v246, %v1299
  %v1301 = vpop.f32.mrf.mxu0
  %1302 = vmatprep.mubr.bf16.mxu0 %v743
  %1303 = vmatmul.mubr.bf16.gmra.mxu0 %v742
  %v1304 = vpop.f32.mrf.mxu0
  %v1305 = vadd.f32 %v246, %v1304
  %v1306 = vpop.f32.mrf.mxu0
  %v1307 = vpop.f32.mrf.mxu0
  %v1308 = vadd.f32 %v246, %v1307
  %v1309 = vpop.f32.mrf.mxu0
  %1310 = vmatprep.mubr.bf16.mxu0 %v747
  %1311 = vmatmul.mubr.bf16.gmra.mxu0 %v746
  %v1312 = vpop.f32.mrf.mxu0
  %v1313 = vadd.f32 %v246, %v1312
  %v1314 = vpop.f32.mrf.mxu0
  %v1315 = vpop.f32.mrf.mxu0
  %v1316 = vadd.f32 %v246, %v1315
  %v1317 = vpop.f32.mrf.mxu0
  %1318 = vmatprep.mubr.bf16.mxu0 %v751
  %1319 = vmatmul.mubr.bf16.gmra.mxu0 %v750
  %v1320 = vpop.f32.mrf.mxu0
  %v1321 = vadd.f32 %v246, %v1320
  %v1322 = vpop.f32.mrf.mxu0
  %v1323 = vpop.f32.mrf.mxu0
  %v1324 = vadd.f32 %v246, %v1323
  %v1325 = vpop.f32.mrf.mxu0
  %1326 = vmatprep.mubr.bf16.mxu0 %v755
  %1327 = vmatmul.mubr.bf16.gmra.mxu0 %v754
  %v1328 = vpop.f32.mrf.mxu0
  %v1329 = vadd.f32 %v246, %v1328
  %v1330 = vpop.f32.mrf.mxu0
  %v1331 = vpop.f32.mrf.mxu0
  %v1332 = vadd.f32 %v246, %v1331
  %v1333 = vpop.f32.mrf.mxu0
  %1334 = vmatprep.mubr.bf16.mxu0 %v759
  %1335 = vmatmul.mubr.bf16.gmra.mxu0 %v758
  %v1336 = vpop.f32.mrf.mxu0
  %v1337 = vadd.f32 %v246, %v1336
  %v1338 = vpop.f32.mrf.mxu0
  %v1339 = vpop.f32.mrf.mxu0
  %v1340 = vadd.f32 %v246, %v1339
  %v1341 = vpop.f32.mrf.mxu0
  %1342 = vmatprep.mubr.bf16.mxu0 %v763
  %1343 = vmatmul.mubr.bf16.gmra.mxu0 %v762
  %v1344 = vpop.f32.mrf.mxu0
  %v1345 = vadd.f32 %v246, %v1344
  %v1346 = vpop.f32.mrf.mxu0
  %v1347 = vpop.f32.mrf.mxu0
  %v1348 = vadd.f32 %v246, %v1347
  %v1349 = vpop.f32.mrf.mxu0
  %1350 = vmatprep.mubr.bf16.mxu0 %v767
  %1351 = vmatmul.mubr.bf16.gmra.mxu0 %v766
  %v1352 = vpop.f32.mrf.mxu0
  %v1353 = vadd.f32 %v246, %v1352
  %v1354 = vpop.f32.mrf.mxu0
  %v1355 = vpop.f32.mrf.mxu0
  %v1356 = vadd.f32 %v246, %v1355
  %v1357 = vpop.f32.mrf.mxu0
  %1358 = vmatprep.mubr.bf16.mxu0 %v771
  %1359 = vmatmul.mubr.bf16.gmra.mxu0 %v770
  %v1360 = vpop.f32.mrf.mxu0
  %v1361 = vadd.f32 %v246, %v1360
  %v1362 = vpop.f32.mrf.mxu0
  %v1363 = vpop.f32.mrf.mxu0
  %v1364 = vadd.f32 %v246, %v1363
  %v1365 = vpop.f32.mrf.mxu0
  %1366 = vmatprep.mubr.bf16.mxu0 %v775
  %1367 = vmatmul.mubr.bf16.gmra.mxu0 %v774
  %v1368 = vpop.f32.mrf.mxu0
  %v1369 = vadd.f32 %v246, %v1368
  %v1370 = vpop.f32.mrf.mxu0
  %v1371 = vpop.f32.mrf.mxu0
  %v1372 = vadd.f32 %v246, %v1371
  %v1373 = vpop.f32.mrf.mxu0
  %1374 = vmatprep.mubr.bf16.mxu0 %v779
  %1375 = vmatmul.mubr.bf16.gmra.mxu0 %v778
  %v1376 = vpop.f32.mrf.mxu0
  %v1377 = vadd.f32 %v246, %v1376
  %v1378 = vpop.f32.mrf.mxu0
  %v1379 = vpop.f32.mrf.mxu0
  %v1380 = vadd.f32 %v246, %v1379
  %v1381 = vpop.f32.mrf.mxu0
  %1382 = vmatprep.mubr.bf16.mxu0 %v783
  %1383 = vmatmul.mubr.bf16.gmra.mxu0 %v782
  %v1384 = vpop.f32.mrf.mxu0
  %v1385 = vadd.f32 %v246, %v1384
  %v1386 = vpop.f32.mrf.mxu0
  %v1387 = vpop.f32.mrf.mxu0
  %v1388 = vadd.f32 %v246, %v1387
  %v1389 = vpop.f32.mrf.mxu0
  %1390 = vmatprep.mubr.bf16.mxu0 %v787
  %1391 = vmatmul.mubr.bf16.gmra.mxu0 %v786
  %v1392 = vpop.f32.mrf.mxu0
  %v1393 = vadd.f32 %v246, %v1392
  %v1394 = vpop.f32.mrf.mxu0
  %v1395 = vpop.f32.mrf.mxu0
  %v1396 = vadd.f32 %v246, %v1395
  %v1397 = vpop.f32.mrf.mxu0
  %1398 = vmatprep.mubr.bf16.mxu0 %v791
  %1399 = vmatmul.mubr.bf16.gmra.mxu0 %v790
  %v1400 = vpop.f32.mrf.mxu0
  %v1401 = vadd.f32 %v246, %v1400
  %v1402 = vpop.f32.mrf.mxu0
  %v1403 = vpop.f32.mrf.mxu0
  %v1404 = vadd.f32 %v246, %v1403
  %v1405 = vpop.f32.mrf.mxu0
  %1406 = vmatprep.mubr.bf16.mxu0 %v795
  %1407 = vmatmul.mubr.bf16.gmra.mxu0 %v794
  %v1408 = vpop.f32.mrf.mxu0
  %v1409 = vadd.f32 %v246, %v1408
  %v1410 = vpop.f32.mrf.mxu0
  %v1411 = vpop.f32.mrf.mxu0
  %v1412 = vadd.f32 %v246, %v1411
  %v1413 = vpop.f32.mrf.mxu0
  %1414 = vmatprep.mubr.bf16.mxu0 %v799
  %1415 = vmatmul.mubr.bf16.gmra.mxu0 %v798
  %v1416 = vpop.f32.mrf.mxu0
  %v1417 = vadd.f32 %v246, %v1416
  %v1418 = vpop.f32.mrf.mxu0
  %v1419 = vpop.f32.mrf.mxu0
  %v1420 = vadd.f32 %v246, %v1419
  %v1421 = vpop.f32.mrf.mxu0
  %1422 = vmatprep.mubr.bf16.mxu0 %v803
  %1423 = vmatmul.mubr.bf16.gmra.mxu0 %v802
  %v1424 = vpop.f32.mrf.mxu0
  %v1425 = vadd.f32 %v246, %v1424
  %v1426 = vpop.f32.mrf.mxu0
  %v1427 = vpop.f32.mrf.mxu0
  %v1428 = vadd.f32 %v246, %v1427
  %v1429 = vpop.f32.mrf.mxu0
  %1430 = vmatprep.mubr.bf16.mxu0 %v807
  %1431 = vmatmul.mubr.bf16.gmra.mxu0 %v806
  %v1432 = vpop.f32.mrf.mxu0
  %v1433 = vadd.f32 %v246, %v1432
  %v1434 = vpop.f32.mrf.mxu0
  %v1435 = vpop.f32.mrf.mxu0
  %v1436 = vadd.f32 %v246, %v1435
  %v1437 = vpop.f32.mrf.mxu0
  %1438 = vmatprep.mubr.bf16.mxu0 %v811
  %1439 = vmatmul.mubr.bf16.gmra.mxu0 %v810
  %v1440 = vpop.f32.mrf.mxu0
  %v1441 = vadd.f32 %v246, %v1440
  %v1442 = vpop.f32.mrf.mxu0
  %v1443 = vpop.f32.mrf.mxu0
  %v1444 = vadd.f32 %v246, %v1443
  %v1445 = vpop.f32.mrf.mxu0
  %1446 = vmatprep.mubr.bf16.mxu0 %v815
  %1447 = vmatmul.mubr.bf16.gmra.mxu0 %v814
  %v1448 = vpop.f32.mrf.mxu0
  %v1449 = vadd.f32 %v246, %v1448
  %v1450 = vpop.f32.mrf.mxu0
  %v1451 = vpop.f32.mrf.mxu0
  %v1452 = vadd.f32 %v246, %v1451
  %v1453 = vpop.f32.mrf.mxu0
  %1454 = vmatprep.mubr.bf16.mxu0 %v819
  %1455 = vmatmul.mubr.bf16.gmra.mxu0 %v818
  %v1456 = vpop.f32.mrf.mxu0
  %v1457 = vadd.f32 %v246, %v1456
  %v1458 = vpop.f32.mrf.mxu0
  %v1459 = vpop.f32.mrf.mxu0
  %v1460 = vadd.f32 %v246, %v1459
  %v1461 = vpop.f32.mrf.mxu0
  %1462 = vmatprep.mubr.bf16.mxu0 %v823
  %1463 = vmatmul.mubr.bf16.gmra.mxu0 %v822
  %v1464 = vpop.f32.mrf.mxu0
  %v1465 = vadd.f32 %v246, %v1464
  %v1466 = vpop.f32.mrf.mxu0
  %v1467 = vpop.f32.mrf.mxu0
  %v1468 = vadd.f32 %v246, %v1467
  %v1469 = vpop.f32.mrf.mxu0
  %1470 = vmatprep.mubr.bf16.mxu0 %v827
  %1471 = vmatmul.mubr.bf16.gmra.mxu0 %v826
  %v1472 = vpop.f32.mrf.mxu0
  %v1473 = vadd.f32 %v246, %v1472
  %v1474 = vpop.f32.mrf.mxu0
  %v1475 = vpop.f32.mrf.mxu0
  %v1476 = vadd.f32 %v246, %v1475
  %v1477 = vpop.f32.mrf.mxu0
  %1478 = vmatprep.mubr.bf16.mxu0 %v831
  %1479 = vmatmul.mubr.bf16.gmra.mxu0 %v830
  %v1480 = vpop.f32.mrf.mxu0
  %v1481 = vadd.f32 %v246, %v1480
  %v1482 = vpop.f32.mrf.mxu0
  %v1483 = vpop.f32.mrf.mxu0
  %v1484 = vadd.f32 %v246, %v1483
  %v1485 = vpop.f32.mrf.mxu0
  %1486 = vmatprep.mubr.bf16.mxu0 %v835
  %1487 = vmatmul.mubr.bf16.gmra.mxu0 %v834
  %v1488 = vpop.f32.mrf.mxu0
  %v1489 = vadd.f32 %v246, %v1488
  %v1490 = vpop.f32.mrf.mxu0
  %v1491 = vpop.f32.mrf.mxu0
  %v1492 = vadd.f32 %v246, %v1491
  %v1493 = vpop.f32.mrf.mxu0
  %1494 = vmatprep.mubr.bf16.mxu0 %v839
  %1495 = vmatmul.mubr.bf16.gmra.mxu0 %v838
  %v1496 = vpop.f32.mrf.mxu0
  %v1497 = vadd.f32 %v246, %v1496
  %v1498 = vpop.f32.mrf.mxu0
  %v1499 = vpop.f32.mrf.mxu0
  %v1500 = vadd.f32 %v246, %v1499
  %v1501 = vpop.f32.mrf.mxu0
  %1502 = vmatprep.mubr.bf16.mxu0 %v843
  %1503 = vmatmul.mubr.bf16.gmra.mxu0 %v842
  %v1504 = vpop.f32.mrf.mxu0
  %v1505 = vadd.f32 %v246, %v1504
  %v1506 = vpop.f32.mrf.mxu0
  %v1507 = vpop.f32.mrf.mxu0
  %v1508 = vadd.f32 %v246, %v1507
  %v1509 = vpop.f32.mrf.mxu0
  %1510 = vmatprep.mubr.bf16.mxu0 %v847
  %1511 = vmatmul.mubr.bf16.gmra.mxu0 %v846
  %v1512 = vpop.f32.mrf.mxu0
  %v1513 = vadd.f32 %v246, %v1512
  %v1514 = vpop.f32.mrf.mxu0
  %v1515 = vpop.f32.mrf.mxu0
  %v1516 = vadd.f32 %v246, %v1515
  %v1517 = vpop.f32.mrf.mxu0
  %1518 = vmatprep.mubr.bf16.mxu0 %v851
  %1519 = vmatmul.mubr.bf16.gmra.mxu0 %v850
  %v1520 = vpop.f32.mrf.mxu0
  %v1521 = vadd.f32 %v246, %v1520
  %v1522 = vpop.f32.mrf.mxu0
  %v1523 = vpop.f32.mrf.mxu0
  %v1524 = vadd.f32 %v246, %v1523
  %v1525 = vpop.f32.mrf.mxu0
  %1526 = vmatprep.mubr.bf16.mxu0 %v855
  %1527 = vmatmul.mubr.bf16.gmra.mxu0 %v854
  %v1528 = vpop.f32.mrf.mxu0
  %v1529 = vadd.f32 %v246, %v1528
  %v1530 = vpop.f32.mrf.mxu0
  %v1531 = vpop.f32.mrf.mxu0
  %v1532 = vadd.f32 %v246, %v1531
  %v1533 = vpop.f32.mrf.mxu0
  %1534 = vmatprep.mubr.bf16.mxu0 %v859
  %1535 = vmatmul.mubr.bf16.gmra.mxu0 %v858
  %v1536 = vpop.f32.mrf.mxu0
  %v1537 = vadd.f32 %v246, %v1536
  %v1538 = vpop.f32.mrf.mxu0
  %v1539 = vpop.f32.mrf.mxu0
  %v1540 = vadd.f32 %v246, %v1539
  %v1541 = vpop.f32.mrf.mxu0
  %1542 = vmatprep.mubr.bf16.mxu0 %v863
  %1543 = vmatmul.mubr.bf16.gmra.mxu0 %v862
  %v1544 = vpop.f32.mrf.mxu0
  %v1545 = vadd.f32 %v246, %v1544
  %v1546 = vpop.f32.mrf.mxu0
  %v1547 = vpop.f32.mrf.mxu0
  %v1548 = vadd.f32 %v246, %v1547
  %v1549 = vpop.f32.mrf.mxu0
  %1550 = vmatprep.mubr.bf16.mxu0 %v867
  %1551 = vmatmul.mubr.bf16.gmra.mxu0 %v866
  %v1552 = vpop.f32.mrf.mxu0
  %v1553 = vadd.f32 %v246, %v1552
  %v1554 = vpop.f32.mrf.mxu0
  %v1555 = vpop.f32.mrf.mxu0
  %v1556 = vadd.f32 %v246, %v1555
  %v1557 = vpop.f32.mrf.mxu0
  %1558 = vmatprep.mubr.bf16.mxu0 %v871
  %1559 = vmatmul.mubr.bf16.gmra.mxu0 %v870
  %v1560 = vpop.f32.mrf.mxu0
  %v1561 = vadd.f32 %v246, %v1560
  %v1562 = vpop.f32.mrf.mxu0
  %v1563 = vpop.f32.mrf.mxu0
  %v1564 = vadd.f32 %v246, %v1563
  %v1565 = vpop.f32.mrf.mxu0
  %1566 = vmatprep.mubr.bf16.mxu0 %v875
  %1567 = vmatmul.mubr.bf16.gmra.mxu0 %v874
  %v1568 = vpop.f32.mrf.mxu0
  %v1569 = vadd.f32 %v246, %v1568
  %v1570 = vpop.f32.mrf.mxu0
  %v1571 = vpop.f32.mrf.mxu0
  %v1572 = vadd.f32 %v246, %v1571
  %v1573 = vpop.f32.mrf.mxu0
  %1574 = vmatprep.mubr.bf16.mxu0 %v879
  %1575 = vmatmul.mubr.bf16.gmra.mxu0 %v878
  %v1576 = vpop.f32.mrf.mxu0
  %v1577 = vadd.f32 %v246, %v1576
  %v1578 = vpop.f32.mrf.mxu0
  %v1579 = vpop.f32.mrf.mxu0
  %v1580 = vadd.f32 %v246, %v1579
  %v1581 = vpop.f32.mrf.mxu0
  %1582 = vmatprep.mubr.bf16.mxu0 %v883
  %1583 = vmatmul.mubr.bf16.gmra.mxu0 %v882
  %v1584 = vpop.f32.mrf.mxu0
  %v1585 = vadd.f32 %v246, %v1584
  %v1586 = vpop.f32.mrf.mxu0
  %v1587 = vpop.f32.mrf.mxu0
  %v1588 = vadd.f32 %v246, %v1587
  %v1589 = vpop.f32.mrf.mxu0
  %1590 = vmatprep.mubr.bf16.mxu0 %v887
  %1591 = vmatmul.mubr.bf16.gmra.mxu0 %v886
  %v1592 = vpop.f32.mrf.mxu0
  %v1593 = vadd.f32 %v246, %v1592
  %v1594 = vpop.f32.mrf.mxu0
  %v1595 = vpop.f32.mrf.mxu0
  %v1596 = vadd.f32 %v246, %v1595
  %v1597 = vpop.f32.mrf.mxu0
  %1598 = vmatprep.mubr.bf16.mxu0 %v891
  %1599 = vmatmul.mubr.bf16.gmra.mxu0 %v890
  %v1600 = vpop.f32.mrf.mxu0
  %v1601 = vadd.f32 %v246, %v1600
  %v1602 = vpop.f32.mrf.mxu0
  %v1603 = vpop.f32.mrf.mxu0
  %v1604 = vadd.f32 %v246, %v1603
  %v1605 = vpop.f32.mrf.mxu0
  %1606 = vmatprep.mubr.bf16.mxu0 %v895
  %1607 = vmatmul.mubr.bf16.gmra.mxu0 %v894
  %v1608 = vpop.f32.mrf.mxu0
  %v1609 = vadd.f32 %v246, %v1608
  %v1610 = vpop.f32.mrf.mxu0
  %v1611 = vpop.f32.mrf.mxu0
  %v1612 = vpop.f32.mrf.mxu0
  %1613 = vdwg.mxu0
  %1614 = vmatprep.subr.bf16.mxu0 0
  %1615 = vmatpush1.bf16.msra.mxu0 %v1213
  %1616 = vmatprep.subr.bf16.mxu0 0
  %1617 = vmatpush1.bf16.msra.mxu0 %v1212
  %1618 = vmatprep.subr.bf16.mxu0 0
  %1619 = vmatpush1.bf16.msra.mxu0 %v1211
  %1620 = vmatprep.subr.bf16.mxu0 0
  %1621 = vmatpush1.bf16.msra.mxu0 %v1210
  %1622 = vmatprep.subr.bf16.mxu0 0
  %1623 = vmatpush1.bf16.msra.mxu0 %v1209
  %1624 = vmatprep.subr.bf16.mxu0 0
  %1625 = vmatpush1.bf16.msra.mxu0 %v1208
  %1626 = vmatprep.subr.bf16.mxu0 0
  %1627 = vmatpush1.bf16.msra.mxu0 %v1207
  %1628 = vmatprep.subr.bf16.mxu0 0
  %1629 = vmatpush1.bf16.msra.mxu0 %v1206
  %1630 = vmatprep.subr.bf16.mxu0 0
  %1631 = vmatpush2.bf16.msra.mxu0 %v1221
  %1632 = vmatprep.subr.bf16.mxu0 0
  %1633 = vmatpush2.bf16.msra.mxu0 %v1220
  %1634 = vmatprep.subr.bf16.mxu0 0
  %1635 = vmatpush2.bf16.msra.mxu0 %v1219
  %1636 = vmatprep.subr.bf16.mxu0 0
  %1637 = vmatpush2.bf16.msra.mxu0 %v1218
  %1638 = vmatprep.subr.bf16.mxu0 0
  %1639 = vmatpush2.bf16.msra.mxu0 %v1217
  %1640 = vmatprep.subr.bf16.mxu0 0
  %1641 = vmatpush2.bf16.msra.mxu0 %v1216
  %1642 = vmatprep.subr.bf16.mxu0 0
  %1643 = vmatpush2.bf16.msra.mxu0 %v1215
  %1644 = vmatprep.subr.bf16.mxu0 0
  %1645 = vmatpush2.bf16.msra.mxu0 %v1214
  %1646 = vmatprep.mubr.bf16.mxu0 %v737
  %1647 = vmatmul.mubr.bf16.gmra.mxu0 %v736
  %v1648 = vpop.f32.mrf.mxu0
  %v1649 = vadd.f32 %v1289, %v1648
  %v1650 = vpop.f32.mrf.mxu0
  %v1651 = vpop.f32.mrf.mxu0
  %v1652 = vadd.f32 %v1292, %v1651
  %v1653 = vpop.f32.mrf.mxu0
  %1654 = vmatprep.mubr.bf16.mxu0 %v741
  %1655 = vmatmul.mubr.bf16.gmra.mxu0 %v740
  %v1656 = vpop.f32.mrf.mxu0
  %v1657 = vadd.f32 %v1297, %v1656
  %v1658 = vpop.f32.mrf.mxu0
  %v1659 = vpop.f32.mrf.mxu0
  %v1660 = vadd.f32 %v1300, %v1659
  %v1661 = vpop.f32.mrf.mxu0
  %1662 = vmatprep.mubr.bf16.mxu0 %v745
  %1663 = vmatmul.mubr.bf16.gmra.mxu0 %v744
  %v1664 = vpop.f32.mrf.mxu0
  %v1665 = vadd.f32 %v1305, %v1664
  %v1666 = vpop.f32.mrf.mxu0
  %v1667 = vpop.f32.mrf.mxu0
  %v1668 = vadd.f32 %v1308, %v1667
  %v1669 = vpop.f32.mrf.mxu0
  %1670 = vmatprep.mubr.bf16.mxu0 %v749
  %1671 = vmatmul.mubr.bf16.gmra.mxu0 %v748
  %v1672 = vpop.f32.mrf.mxu0
  %v1673 = vadd.f32 %v1313, %v1672
  %v1674 = vpop.f32.mrf.mxu0
  %v1675 = vpop.f32.mrf.mxu0
  %v1676 = vadd.f32 %v1316, %v1675
  %v1677 = vpop.f32.mrf.mxu0
  %1678 = vmatprep.mubr.bf16.mxu0 %v753
  %1679 = vmatmul.mubr.bf16.gmra.mxu0 %v752
  %v1680 = vpop.f32.mrf.mxu0
  %v1681 = vadd.f32 %v1321, %v1680
  %v1682 = vpop.f32.mrf.mxu0
  %v1683 = vpop.f32.mrf.mxu0
  %v1684 = vadd.f32 %v1324, %v1683
  %v1685 = vpop.f32.mrf.mxu0
  %1686 = vmatprep.mubr.bf16.mxu0 %v757
  %1687 = vmatmul.mubr.bf16.gmra.mxu0 %v756
  %v1688 = vpop.f32.mrf.mxu0
  %v1689 = vadd.f32 %v1329, %v1688
  %v1690 = vpop.f32.mrf.mxu0
  %v1691 = vpop.f32.mrf.mxu0
  %v1692 = vadd.f32 %v1332, %v1691
  %v1693 = vpop.f32.mrf.mxu0
  %1694 = vmatprep.mubr.bf16.mxu0 %v761
  %1695 = vmatmul.mubr.bf16.gmra.mxu0 %v760
  %v1696 = vpop.f32.mrf.mxu0
  %v1697 = vadd.f32 %v1337, %v1696
  %v1698 = vpop.f32.mrf.mxu0
  %v1699 = vpop.f32.mrf.mxu0
  %v1700 = vadd.f32 %v1340, %v1699
  %v1701 = vpop.f32.mrf.mxu0
  %1702 = vmatprep.mubr.bf16.mxu0 %v765
  %1703 = vmatmul.mubr.bf16.gmra.mxu0 %v764
  %v1704 = vpop.f32.mrf.mxu0
  %v1705 = vadd.f32 %v1345, %v1704
  %v1706 = vpop.f32.mrf.mxu0
  %v1707 = vpop.f32.mrf.mxu0
  %v1708 = vadd.f32 %v1348, %v1707
  %v1709 = vpop.f32.mrf.mxu0
  %1710 = vmatprep.mubr.bf16.mxu0 %v769
  %1711 = vmatmul.mubr.bf16.gmra.mxu0 %v768
  %v1712 = vpop.f32.mrf.mxu0
  %v1713 = vadd.f32 %v1353, %v1712
  %v1714 = vpop.f32.mrf.mxu0
  %v1715 = vpop.f32.mrf.mxu0
  %v1716 = vadd.f32 %v1356, %v1715
  %v1717 = vpop.f32.mrf.mxu0
  %1718 = vmatprep.mubr.bf16.mxu0 %v773
  %1719 = vmatmul.mubr.bf16.gmra.mxu0 %v772
  %v1720 = vpop.f32.mrf.mxu0
  %v1721 = vadd.f32 %v1361, %v1720
  %v1722 = vpop.f32.mrf.mxu0
  %v1723 = vpop.f32.mrf.mxu0
  %v1724 = vadd.f32 %v1364, %v1723
  %v1725 = vpop.f32.mrf.mxu0
  %1726 = vmatprep.mubr.bf16.mxu0 %v777
  %1727 = vmatmul.mubr.bf16.gmra.mxu0 %v776
  %v1728 = vpop.f32.mrf.mxu0
  %v1729 = vadd.f32 %v1369, %v1728
  %v1730 = vpop.f32.mrf.mxu0
  %v1731 = vpop.f32.mrf.mxu0
  %v1732 = vadd.f32 %v1372, %v1731
  %v1733 = vpop.f32.mrf.mxu0
  %1734 = vmatprep.mubr.bf16.mxu0 %v781
  %1735 = vmatmul.mubr.bf16.gmra.mxu0 %v780
  %v1736 = vpop.f32.mrf.mxu0
  %v1737 = vadd.f32 %v1377, %v1736
  %v1738 = vpop.f32.mrf.mxu0
  %v1739 = vpop.f32.mrf.mxu0
  %v1740 = vadd.f32 %v1380, %v1739
  %v1741 = vpop.f32.mrf.mxu0
  %1742 = vmatprep.mubr.bf16.mxu0 %v785
  %1743 = vmatmul.mubr.bf16.gmra.mxu0 %v784
  %v1744 = vpop.f32.mrf.mxu0
  %v1745 = vadd.f32 %v1385, %v1744
  %v1746 = vpop.f32.mrf.mxu0
  %v1747 = vpop.f32.mrf.mxu0
  %v1748 = vadd.f32 %v1388, %v1747
  %v1749 = vpop.f32.mrf.mxu0
  %1750 = vmatprep.mubr.bf16.mxu0 %v789
  %1751 = vmatmul.mubr.bf16.gmra.mxu0 %v788
  %v1752 = vpop.f32.mrf.mxu0
  %v1753 = vadd.f32 %v1393, %v1752
  %v1754 = vpop.f32.mrf.mxu0
  %v1755 = vpop.f32.mrf.mxu0
  %v1756 = vadd.f32 %v1396, %v1755
  %v1757 = vpop.f32.mrf.mxu0
  %1758 = vmatprep.mubr.bf16.mxu0 %v793
  %1759 = vmatmul.mubr.bf16.gmra.mxu0 %v792
  %v1760 = vpop.f32.mrf.mxu0
  %v1761 = vadd.f32 %v1401, %v1760
  %v1762 = vpop.f32.mrf.mxu0
  %v1763 = vpop.f32.mrf.mxu0
  %v1764 = vadd.f32 %v1404, %v1763
  %v1765 = vpop.f32.mrf.mxu0
  %1766 = vmatprep.mubr.bf16.mxu0 %v797
  %1767 = vmatmul.mubr.bf16.gmra.mxu0 %v796
  %v1768 = vpop.f32.mrf.mxu0
  %v1769 = vadd.f32 %v1409, %v1768
  %v1770 = vpop.f32.mrf.mxu0
  %v1771 = vpop.f32.mrf.mxu0
  %v1772 = vadd.f32 %v1412, %v1771
  %v1773 = vpop.f32.mrf.mxu0
  %1774 = vmatprep.mubr.bf16.mxu0 %v801
  %1775 = vmatmul.mubr.bf16.gmra.mxu0 %v800
  %v1776 = vpop.f32.mrf.mxu0
  %v1777 = vadd.f32 %v1417, %v1776
  %v1778 = vpop.f32.mrf.mxu0
  %v1779 = vpop.f32.mrf.mxu0
  %v1780 = vadd.f32 %v1420, %v1779
  %v1781 = vpop.f32.mrf.mxu0
  %1782 = vmatprep.mubr.bf16.mxu0 %v805
  %1783 = vmatmul.mubr.bf16.gmra.mxu0 %v804
  %v1784 = vpop.f32.mrf.mxu0
  %v1785 = vadd.f32 %v1425, %v1784
  %v1786 = vpop.f32.mrf.mxu0
  %v1787 = vpop.f32.mrf.mxu0
  %v1788 = vadd.f32 %v1428, %v1787
  %v1789 = vpop.f32.mrf.mxu0
  %1790 = vmatprep.mubr.bf16.mxu0 %v809
  %1791 = vmatmul.mubr.bf16.gmra.mxu0 %v808
  %v1792 = vpop.f32.mrf.mxu0
  %v1793 = vadd.f32 %v1433, %v1792
  %v1794 = vpop.f32.mrf.mxu0
  %v1795 = vpop.f32.mrf.mxu0
  %v1796 = vadd.f32 %v1436, %v1795
  %v1797 = vpop.f32.mrf.mxu0
  %1798 = vmatprep.mubr.bf16.mxu0 %v813
  %1799 = vmatmul.mubr.bf16.gmra.mxu0 %v812
  %v1800 = vpop.f32.mrf.mxu0
  %v1801 = vadd.f32 %v1441, %v1800
  %v1802 = vpop.f32.mrf.mxu0
  %v1803 = vpop.f32.mrf.mxu0
  %v1804 = vadd.f32 %v1444, %v1803
  %v1805 = vpop.f32.mrf.mxu0
  %1806 = vmatprep.mubr.bf16.mxu0 %v817
  %1807 = vmatmul.mubr.bf16.gmra.mxu0 %v816
  %v1808 = vpop.f32.mrf.mxu0
  %v1809 = vadd.f32 %v1449, %v1808
  %v1810 = vpop.f32.mrf.mxu0
  %v1811 = vpop.f32.mrf.mxu0
  %v1812 = vadd.f32 %v1452, %v1811
  %v1813 = vpop.f32.mrf.mxu0
  %1814 = vmatprep.mubr.bf16.mxu0 %v821
  %1815 = vmatmul.mubr.bf16.gmra.mxu0 %v820
  %v1816 = vpop.f32.mrf.mxu0
  %v1817 = vadd.f32 %v1457, %v1816
  %v1818 = vpop.f32.mrf.mxu0
  %v1819 = vpop.f32.mrf.mxu0
  %v1820 = vadd.f32 %v1460, %v1819
  %v1821 = vpop.f32.mrf.mxu0
  %1822 = vmatprep.mubr.bf16.mxu0 %v825
  %1823 = vmatmul.mubr.bf16.gmra.mxu0 %v824
  %v1824 = vpop.f32.mrf.mxu0
  %v1825 = vadd.f32 %v1465, %v1824
  %v1826 = vpop.f32.mrf.mxu0
  %v1827 = vpop.f32.mrf.mxu0
  %v1828 = vadd.f32 %v1468, %v1827
  %v1829 = vpop.f32.mrf.mxu0
  %1830 = vmatprep.mubr.bf16.mxu0 %v829
  %1831 = vmatmul.mubr.bf16.gmra.mxu0 %v828
  %v1832 = vpop.f32.mrf.mxu0
  %v1833 = vadd.f32 %v1473, %v1832
  %v1834 = vpop.f32.mrf.mxu0
  %v1835 = vpop.f32.mrf.mxu0
  %v1836 = vadd.f32 %v1476, %v1835
  %v1837 = vpop.f32.mrf.mxu0
  %1838 = vmatprep.mubr.bf16.mxu0 %v833
  %1839 = vmatmul.mubr.bf16.gmra.mxu0 %v832
  %v1840 = vpop.f32.mrf.mxu0
  %v1841 = vadd.f32 %v1481, %v1840
  %v1842 = vpop.f32.mrf.mxu0
  %v1843 = vpop.f32.mrf.mxu0
  %v1844 = vadd.f32 %v1484, %v1843
  %v1845 = vpop.f32.mrf.mxu0
  %1846 = vmatprep.mubr.bf16.mxu0 %v837
  %1847 = vmatmul.mubr.bf16.gmra.mxu0 %v836
  %v1848 = vpop.f32.mrf.mxu0
  %v1849 = vadd.f32 %v1489, %v1848
  %v1850 = vpop.f32.mrf.mxu0
  %v1851 = vpop.f32.mrf.mxu0
  %v1852 = vadd.f32 %v1492, %v1851
  %v1853 = vpop.f32.mrf.mxu0
  %1854 = vmatprep.mubr.bf16.mxu0 %v841
  %1855 = vmatmul.mubr.bf16.gmra.mxu0 %v840
  %v1856 = vpop.f32.mrf.mxu0
  %v1857 = vadd.f32 %v1497, %v1856
  %v1858 = vpop.f32.mrf.mxu0
  %v1859 = vpop.f32.mrf.mxu0
  %v1860 = vadd.f32 %v1500, %v1859
  %v1861 = vpop.f32.mrf.mxu0
  %1862 = vmatprep.mubr.bf16.mxu0 %v845
  %1863 = vmatmul.mubr.bf16.gmra.mxu0 %v844
  %v1864 = vpop.f32.mrf.mxu0
  %v1865 = vadd.f32 %v1505, %v1864
  %v1866 = vpop.f32.mrf.mxu0
  %v1867 = vpop.f32.mrf.mxu0
  %v1868 = vadd.f32 %v1508, %v1867
  %v1869 = vpop.f32.mrf.mxu0
  %1870 = vmatprep.mubr.bf16.mxu0 %v849
  %1871 = vmatmul.mubr.bf16.gmra.mxu0 %v848
  %v1872 = vpop.f32.mrf.mxu0
  %v1873 = vadd.f32 %v1513, %v1872
  %v1874 = vpop.f32.mrf.mxu0
  %v1875 = vpop.f32.mrf.mxu0
  %v1876 = vadd.f32 %v1516, %v1875
  %v1877 = vpop.f32.mrf.mxu0
  %1878 = vmatprep.mubr.bf16.mxu0 %v853
  %1879 = vmatmul.mubr.bf16.gmra.mxu0 %v852
  %v1880 = vpop.f32.mrf.mxu0
  %v1881 = vadd.f32 %v1521, %v1880
  %v1882 = vpop.f32.mrf.mxu0
  %v1883 = vpop.f32.mrf.mxu0
  %v1884 = vadd.f32 %v1524, %v1883
  %v1885 = vpop.f32.mrf.mxu0
  %1886 = vmatprep.mubr.bf16.mxu0 %v857
  %1887 = vmatmul.mubr.bf16.gmra.mxu0 %v856
  %v1888 = vpop.f32.mrf.mxu0
  %v1889 = vadd.f32 %v1529, %v1888
  %v1890 = vpop.f32.mrf.mxu0
  %v1891 = vpop.f32.mrf.mxu0
  %v1892 = vadd.f32 %v1532, %v1891
  %v1893 = vpop.f32.mrf.mxu0
  %1894 = vmatprep.mubr.bf16.mxu0 %v861
  %1895 = vmatmul.mubr.bf16.gmra.mxu0 %v860
  %v1896 = vpop.f32.mrf.mxu0
  %v1897 = vadd.f32 %v1537, %v1896
  %v1898 = vpop.f32.mrf.mxu0
  %v1899 = vpop.f32.mrf.mxu0
  %v1900 = vadd.f32 %v1540, %v1899
  %v1901 = vpop.f32.mrf.mxu0
  %1902 = vmatprep.mubr.bf16.mxu0 %v865
  %1903 = vmatmul.mubr.bf16.gmra.mxu0 %v864
  %v1904 = vpop.f32.mrf.mxu0
  %v1905 = vadd.f32 %v1545, %v1904
  %v1906 = vpop.f32.mrf.mxu0
  %v1907 = vpop.f32.mrf.mxu0
  %v1908 = vadd.f32 %v1548, %v1907
  %v1909 = vpop.f32.mrf.mxu0
  %1910 = vmatprep.mubr.bf16.mxu0 %v869
  %1911 = vmatmul.mubr.bf16.gmra.mxu0 %v868
  %v1912 = vpop.f32.mrf.mxu0
  %v1913 = vadd.f32 %v1553, %v1912
  %v1914 = vpop.f32.mrf.mxu0
  %v1915 = vpop.f32.mrf.mxu0
  %v1916 = vadd.f32 %v1556, %v1915
  %v1917 = vpop.f32.mrf.mxu0
  %1918 = vmatprep.mubr.bf16.mxu0 %v873
  %1919 = vmatmul.mubr.bf16.gmra.mxu0 %v872
  %v1920 = vpop.f32.mrf.mxu0
  %v1921 = vadd.f32 %v1561, %v1920
  %v1922 = vpop.f32.mrf.mxu0
  %v1923 = vpop.f32.mrf.mxu0
  %v1924 = vadd.f32 %v1564, %v1923
  %v1925 = vpop.f32.mrf.mxu0
  %1926 = vmatprep.mubr.bf16.mxu0 %v877
  %1927 = vmatmul.mubr.bf16.gmra.mxu0 %v876
  %v1928 = vpop.f32.mrf.mxu0
  %v1929 = vadd.f32 %v1569, %v1928
  %v1930 = vpop.f32.mrf.mxu0
  %v1931 = vpop.f32.mrf.mxu0
  %v1932 = vadd.f32 %v1572, %v1931
  %v1933 = vpop.f32.mrf.mxu0
  %1934 = vmatprep.mubr.bf16.mxu0 %v881
  %1935 = vmatmul.mubr.bf16.gmra.mxu0 %v880
  %v1936 = vpop.f32.mrf.mxu0
  %v1937 = vadd.f32 %v1577, %v1936
  %v1938 = vpop.f32.mrf.mxu0
  %v1939 = vpop.f32.mrf.mxu0
  %v1940 = vadd.f32 %v1580, %v1939
  %v1941 = vpop.f32.mrf.mxu0
  %1942 = vmatprep.mubr.bf16.mxu0 %v885
  %1943 = vmatmul.mubr.bf16.gmra.mxu0 %v884
  %v1944 = vpop.f32.mrf.mxu0
  %v1945 = vadd.f32 %v1585, %v1944
  %v1946 = vpop.f32.mrf.mxu0
  %v1947 = vpop.f32.mrf.mxu0
  %v1948 = vadd.f32 %v1588, %v1947
  %v1949 = vpop.f32.mrf.mxu0
  %1950 = vmatprep.mubr.bf16.mxu0 %v889
  %1951 = vmatmul.mubr.bf16.gmra.mxu0 %v888
  %v1952 = vpop.f32.mrf.mxu0
  %v1953 = vadd.f32 %v1593, %v1952
  %v1954 = vpop.f32.mrf.mxu0
  %v1955 = vpop.f32.mrf.mxu0
  %v1956 = vadd.f32 %v1596, %v1955
  %v1957 = vpop.f32.mrf.mxu0
  %1958 = vmatprep.mubr.bf16.mxu0 %v893
  %1959 = vmatmul.mubr.bf16.gmra.mxu0 %v892
  %v1960 = vpop.f32.mrf.mxu0
  %v1961 = vadd.f32 %v1601, %v1960
  %v1962 = vpop.f32.mrf.mxu0
  %v1963 = vpop.f32.mrf.mxu0
  %v1964 = vadd.f32 %v1604, %v1963
  %v1965 = vpop.f32.mrf.mxu0
  %1966 = vmatprep.mubr.bf16.mxu0 %v897
  %1967 = vmatmul.mubr.bf16.gmra.mxu0 %v896
  %v1968 = vpop.f32.mrf.mxu0
  %v1969 = vadd.f32 %v1609, %v1968
  %v1970 = vpop.f32.mrf.mxu0
  %v1971 = vpop.f32.mrf.mxu0
  %v1972 = vpop.f32.mrf.mxu0
  %1973 = vdwg.mxu0
  %v1974 = vmax.f32 %v1649, 0.0
  %v1975 = vmax.f32 %v1652, 0.0
  %v1976 = vmax.f32 %v1657, 0.0
  %v1977 = vmax.f32 %v1660, 0.0
  %v1978 = vmax.f32 %v1665, 0.0
  %v1979 = vmax.f32 %v1668, 0.0
  %v1980 = vmax.f32 %v1673, 0.0
  %v1981 = vmax.f32 %v1676, 0.0
  %v1982 = vmax.f32 %v1681, 0.0
  %v1983 = vmax.f32 %v1684, 0.0
  %v1984 = vmax.f32 %v1689, 0.0
  %v1985 = vmax.f32 %v1692, 0.0
  %v1986 = vmax.f32 %v1697, 0.0
  %v1987 = vmax.f32 %v1700, 0.0
  %v1988 = vmax.f32 %v1705, 0.0
  %v1989 = vmax.f32 %v1708, 0.0
  %v1990 = vmax.f32 %v1713, 0.0
  %v1991 = vmax.f32 %v1716, 0.0
  %v1992 = vmax.f32 %v1721, 0.0
  %v1993 = vmax.f32 %v1724, 0.0
  %v1994 = vmax.f32 %v1729, 0.0
  %v1995 = vmax.f32 %v1732, 0.0
  %v1996 = vmax.f32 %v1737, 0.0
  %v1997 = vmax.f32 %v1740, 0.0
  %v1998 = vmax.f32 %v1745, 0.0
  %v1999 = vmax.f32 %v1748, 0.0
  %v2000 = vmax.f32 %v1753, 0.0
  %v2001 = vmax.f32 %v1756, 0.0
  %v2002 = vmax.f32 %v1761, 0.0
  %v2003 = vmax.f32 %v1764, 0.0
  %v2004 = vmax.f32 %v1769, 0.0
  %v2005 = vmax.f32 %v1772, 0.0
  %v2006 = vmax.f32 %v1777, 0.0
  %v2007 = vmax.f32 %v1780, 0.0
  %v2008 = vmax.f32 %v1785, 0.0
  %v2009 = vmax.f32 %v1788, 0.0
  %v2010 = vmax.f32 %v1793, 0.0
  %v2011 = vmax.f32 %v1796, 0.0
  %v2012 = vmax.f32 %v1801, 0.0
  %v2013 = vmax.f32 %v1804, 0.0
  %v2014 = vmax.f32 %v1809, 0.0
  %v2015 = vmax.f32 %v1812, 0.0
  %v2016 = vmax.f32 %v1817, 0.0
  %v2017 = vmax.f32 %v1820, 0.0
  %v2018 = vmax.f32 %v1825, 0.0
  %v2019 = vmax.f32 %v1828, 0.0
  %v2020 = vmax.f32 %v1833, 0.0
  %v2021 = vmax.f32 %v1836, 0.0
  %v2022 = vmax.f32 %v1841, 0.0
  %v2023 = vmax.f32 %v1844, 0.0
  %v2024 = vmax.f32 %v1849, 0.0
  %v2025 = vmax.f32 %v1852, 0.0
  %v2026 = vmax.f32 %v1857, 0.0
  %v2027 = vmax.f32 %v1860, 0.0
  %v2028 = vmax.f32 %v1865, 0.0
  %v2029 = vmax.f32 %v1868, 0.0
  %v2030 = vmax.f32 %v1873, 0.0
  %v2031 = vmax.f32 %v1876, 0.0
  %v2032 = vmax.f32 %v1881, 0.0
  %v2033 = vmax.f32 %v1884, 0.0
  %v2034 = vmax.f32 %v1889, 0.0
  %v2035 = vmax.f32 %v1892, 0.0
  %v2036 = vmax.f32 %v1897, 0.0
  %v2037 = vmax.f32 %v1900, 0.0
  %v2038 = vmax.f32 %v1905, 0.0
  %v2039 = vmax.f32 %v1908, 0.0
  %v2040 = vmax.f32 %v1913, 0.0
  %v2041 = vmax.f32 %v1916, 0.0
  %v2042 = vmax.f32 %v1921, 0.0
  %v2043 = vmax.f32 %v1924, 0.0
  %v2044 = vmax.f32 %v1929, 0.0
  %v2045 = vmax.f32 %v1932, 0.0
  %v2046 = vmax.f32 %v1937, 0.0
  %v2047 = vmax.f32 %v1940, 0.0
  %v2048 = vmax.f32 %v1945, 0.0
  %v2049 = vmax.f32 %v1948, 0.0
  %v2050 = vmax.f32 %v1953, 0.0
  %v2051 = vmax.f32 %v1956, 0.0
  %v2052 = vmax.f32 %v1961, 0.0
  %v2053 = vmax.f32 %v1964, 0.0
  %v2054 = vmax.f32 %v1969, 0.0
  %2055 = vst [vmem:[%s3] sm:$0xff] %v1974
  %2056 = vst [vmem:[%s3 + $0x8] sm:$0xff] %v1975
  %2057 = vst [vmem:[%s3 + $0x10] sm:$0xff] %v1976
  %2058 = vst [vmem:[%s3 + $0x18] sm:$0xff] %v1977
  %2059 = vst [vmem:[%s3 + $0x20] sm:$0xff] %v1978
  %2060 = vst [vmem:[%s3 + $0x28] sm:$0xff] %v1979
  %2061 = vst [vmem:[%s3 + $0x30] sm:$0xff] %v1980
  %2062 = vst [vmem:[%s3 + $0x38] sm:$0xff] %v1981
  %2063 = vst [vmem:[%s3 + $0x40] sm:$0xff] %v1982
  %2064 = vst [vmem:[%s3 + $0x48] sm:$0xff] %v1983
  %2065 = vst [vmem:[%s3 + $0x50] sm:$0xff] %v1984
  %2066 = vst [vmem:[%s3 + $0x58] sm:$0xff] %v1985
  %2067 = vst [vmem:[%s3 + $0x60] sm:$0xff] %v1986
  %2068 = vst [vmem:[%s3 + $0x68] sm:$0xff] %v1987
  %2069 = vst [vmem:[%s3 + $0x70] sm:$0xff] %v1988
  %2070 = vst [vmem:[%s3 + $0x78] sm:$0xff] %v1989
  %2071 = vst [vmem:[%s3 + $0x80] sm:$0xff] %v1990
  %2072 = vst [vmem:[%s3 + $0x88] sm:$0xff] %v1991
  %2073 = vst [vmem:[%s3 + $0x90] sm:$0xff] %v1992
  %2074 = vst [vmem:[%s3 + $0x98] sm:$0xff] %v1993
  %2075 = vst [vmem:[%s3 + $0xa0] sm:$0xff] %v1994
  %2076 = vst [vmem:[%s3 + $0xa8] sm:$0xff] %v1995
  %2077 = vst [vmem:[%s3 + $0xb0] sm:$0xff] %v1996
  %2078 = vst [vmem:[%s3 + $0xb8] sm:$0xff] %v1997
  %2079 = vst [vmem:[%s3 + $0xc0] sm:$0xff] %v1998
  %2080 = vst [vmem:[%s3 + $0xc8] sm:$0xff] %v1999
  %2081 = vst [vmem:[%s3 + $0xd0] sm:$0xff] %v2000
  %2082 = vst [vmem:[%s3 + $0xd8] sm:$0xff] %v2001
  %2083 = vst [vmem:[%s3 + $0xe0] sm:$0xff] %v2002
  %2084 = vst [vmem:[%s3 + $0xe8] sm:$0xff] %v2003
  %2085 = vst [vmem:[%s3 + $0xf0] sm:$0xff] %v2004
  %2086 = vst [vmem:[%s3 + $0xf8] sm:$0xff] %v2005
  %2087 = vst [vmem:[%s3 + $0x100] sm:$0xff] %v2006
  %2088 = vst [vmem:[%s3 + $0x108] sm:$0xff] %v2007
  %2089 = vst [vmem:[%s3 + $0x110] sm:$0xff] %v2008
  %2090 = vst [vmem:[%s3 + $0x118] sm:$0xff] %v2009
  %2091 = vst [vmem:[%s3 + $0x120] sm:$0xff] %v2010
  %2092 = vst [vmem:[%s3 + $0x128] sm:$0xff] %v2011
  %2093 = vst [vmem:[%s3 + $0x130] sm:$0xff] %v2012
  %2094 = vst [vmem:[%s3 + $0x138] sm:$0xff] %v2013
  %2095 = vst [vmem:[%s3 + $0x140] sm:$0xff] %v2014
  %2096 = vst [vmem:[%s3 + $0x148] sm:$0xff] %v2015
  %2097 = vst [vmem:[%s3 + $0x150] sm:$0xff] %v2016
  %2098 = vst [vmem:[%s3 + $0x158] sm:$0xff] %v2017
  %2099 = vst [vmem:[%s3 + $0x160] sm:$0xff] %v2018
  %2100 = vst [vmem:[%s3 + $0x168] sm:$0xff] %v2019
  %2101 = vst [vmem:[%s3 + $0x170] sm:$0xff] %v2020
  %2102 = vst [vmem:[%s3 + $0x178] sm:$0xff] %v2021
  %2103 = vst [vmem:[%s3 + $0x180] sm:$0xff] %v2022
  %2104 = vst [vmem:[%s3 + $0x188] sm:$0xff] %v2023
  %2105 = vst [vmem:[%s3 + $0x190] sm:$0xff] %v2024
  %2106 = vst [vmem:[%s3 + $0x198] sm:$0xff] %v2025
  %2107 = vst [vmem:[%s3 + $0x1a0] sm:$0xff] %v2026
  %2108 = vst [vmem:[%s3 + $0x1a8] sm:$0xff] %v2027
  %2109 = vst [vmem:[%s3 + $0x1b0] sm:$0xff] %v2028
  %2110 = vst [vmem:[%s3 + $0x1b8] sm:$0xff] %v2029
  %2111 = vst [vmem:[%s3 + $0x1c0] sm:$0xff] %v2030
  %2112 = vst [vmem:[%s3 + $0x1c8] sm:$0xff] %v2031
  %2113 = vst [vmem:[%s3 + $0x1d0] sm:$0xff] %v2032
  %2114 = vst [vmem:[%s3 + $0x1d8] sm:$0xff] %v2033
  %2115 = vst [vmem:[%s3 + $0x1e0] sm:$0xff] %v2034
  %2116 = vst [vmem:[%s3 + $0x1e8] sm:$0xff] %v2035
  %2117 = vst [vmem:[%s3 + $0x1f0] sm:$0xff] %v2036
  %2118 = vst [vmem:[%s3 + $0x1f8] sm:$0xff] %v2037
  %2119 = vst [vmem:[%s3 + $0x200] sm:$0xff] %v2038
  %2120 = vst [vmem:[%s3 + $0x208] sm:$0xff] %v2039
  %2121 = vst [vmem:[%s3 + $0x210] sm:$0xff] %v2040
  %2122 = vst [vmem:[%s3 + $0x218] sm:$0xff] %v2041
  %2123 = vst [vmem:[%s3 + $0x220] sm:$0xff] %v2042
  %2124 = vst [vmem:[%s3 + $0x228] sm:$0xff] %v2043
  %2125 = vst [vmem:[%s3 + $0x230] sm:$0xff] %v2044
  %2126 = vst [vmem:[%s3 + $0x238] sm:$0xff] %v2045
  %2127 = vst [vmem:[%s3 + $0x240] sm:$0xff] %v2046
  %2128 = vst [vmem:[%s3 + $0x248] sm:$0xff] %v2047
  %2129 = vst [vmem:[%s3 + $0x250] sm:$0xff] %v2048
  %2130 = vst [vmem:[%s3 + $0x258] sm:$0xff] %v2049
  %2131 = vst [vmem:[%s3 + $0x260] sm:$0xff] %v2050
  %2132 = vst [vmem:[%s3 + $0x268] sm:$0xff] %v2051
  %2133 = vst [vmem:[%s3 + $0x270] sm:$0xff] %v2052
  %2134 = vst [vmem:[%s3 + $0x278] sm:$0xff] %v2053
  %2135 = vst [vmem:[%s3 + $0x280] sm:$0xff] %v2054
  // Predicated region
  $region14: #{net_forward.5} parent=0 // pred_check
    _
  $region15: #{net_forward.5} parent=0 // pred_check_branch
    %2137 = sbr.rel (0) target = $region17
  $region16: #{net_forward.5} parent=0 // pred_region
    _
  $region17: #{net_forward.5} parent=0 // pred_fallthru
    _
  // Predicated region
  $region18: #{net_forward.5} parent=0 // pred_check
    _
  $region19: #{net_forward.5} parent=0 // pred_check_branch
    %2139 = sbr.rel (0) target = $region21
  $region20: #{net_forward.5} parent=0 // pred_region
    _
  $region21: #{net_forward.5} parent=0 // pred_fallthru
    _

// kernel: net_forward.6
$region0: #{net_forward.6}
  #allocation0 [shape = 'u32[]', space=smem, size = 0x4, offset = 0x4, fixed_abs, tag = 'smem constant byte address 0x4 - core index']
  #allocation1 [shape = 'u32[144,128]{1,0:T(1,128)}', space=vmem, size = 0x12000, scoped, tag = 'internal scratch']
  %s0 = inlined_call_operand.vmem [shape: bf16[512,640], index: 0, kind: input, shape index: {}]
  %s1 = inlined_call_operand.vmem [shape: bf16[640,128], index: 1, kind: input, shape index: {}]
  %s2 = inlined_call_operand.vmem [shape: f32[1,128], index: 2, kind: input, shape index: {}]
  %s3 = inlined_call_operand.vmem [shape: f32[512,128], index: 3, kind: output, shape index: {}]
  %s4 = sld [smem:[#allocation0]]
  $region22: #{net_forward.6} parent=0
    _
  %s6 = ssub.s32 1, %s4
  %s7 = scalar_select 0, %s6, %s4
  // Predicated region
  $region2: #{net_forward.6} parent=0 // pred_check
    _
  $region3: #{net_forward.6} parent=0 // pred_check_branch
    %9 = sbr.rel (0) target = $region5
  $region4: #{net_forward.6} parent=0 // pred_region
    _
  $region5: #{net_forward.6} parent=0 // pred_fallthru
    _
  // Predicated region
  $region6: #{net_forward.6} parent=0 // pred_check
    _
  $region7: #{net_forward.6} parent=0 // pred_check_branch
    %11 = sbr.rel (0) target = $region9
  $region8: #{net_forward.6} parent=0 // pred_region
    _
  $region9: #{net_forward.6} parent=0 // pred_fallthru
    _
  // Predicated region
  $region10: #{net_forward.6} parent=0 // pred_check
    _
  $region11: #{net_forward.6} parent=0 // pred_check_branch
    %13 = sbr.rel (0) target = $region13
  $region12: #{net_forward.6} parent=0 // pred_region
    _
  $region13: #{net_forward.6} parent=0 // pred_fallthru
    _
  %v15 = vld [vmem:[%s0] sm:$0xff]
  %v16 = vld [vmem:[%s0 + $0x8] sm:$0xff]
  %v17 = vld [vmem:[%s0 + $0x10] sm:$0xf]
  %v18 = vld [vmem:[%s0 + $0x14] sm:$0xff]
  %v19 = vld [vmem:[%s0 + $0x1c] sm:$0xff]
  %v20 = vld [vmem:[%s0 + $0x24] sm:$0xf]
  %v21 = vld [vmem:[%s0 + $0x28] sm:$0xff]
  %v22 = vld [vmem:[%s0 + $0x30] sm:$0xff]
  %v23 = vld [vmem:[%s0 + $0x38] sm:$0xf]
  %v24 = vld [vmem:[%s0 + $0x3c] sm:$0xff]
  %v25 = vld [vmem:[%s0 + $0x44] sm:$0xff]
  %v26 = vld [vmem:[%s0 + $0x4c] sm:$0xf]
  %v27 = vld [vmem:[%s0 + $0x50] sm:$0xff]
  %v28 = vld [vmem:[%s0 + $0x58] sm:$0xff]
  %v29 = vld [vmem:[%s0 + $0x60] sm:$0xf]
  %v30 = vld [vmem:[%s0 + $0x64] sm:$0xff]
  %v31 = vld [vmem:[%s0 + $0x6c] sm:$0xff]
  %v32 = vld [vmem:[%s0 + $0x74] sm:$0xf]
  %v33 = vld [vmem:[%s0 + $0x78] sm:$0xff]
  %v34 = vld [vmem:[%s0 + $0x80] sm:$0xff]
  %v35 = vld [vmem:[%s0 + $0x88] sm:$0xf]
  %v36 = vld [vmem:[%s0 + $0x8c] sm:$0xff]
  %v37 = vld [vmem:[%s0 + $0x94] sm:$0xff]
  %v38 = vld [vmem:[%s0 + $0x9c] sm:$0xf]
  %v39 = vld [vmem:[%s0 + $0xa0] sm:$0xff]
  %v40 = vld [vmem:[%s0 + $0xa8] sm:$0xff]
  %v41 = vld [vmem:[%s0 + $0xb0] sm:$0xf]
  %v42 = vld [vmem:[%s0 + $0xb4] sm:$0xff]
  %v43 = vld [vmem:[%s0 + $0xbc] sm:$0xff]
  %v44 = vld [vmem:[%s0 + $0xc4] sm:$0xf]
  %v45 = vld [vmem:[%s0 + $0xc8] sm:$0xff]
  %v46 = vld [vmem:[%s0 + $0xd0] sm:$0xff]
  %v47 = vld [vmem:[%s0 + $0xd8] sm:$0xf]
  %v48 = vld [vmem:[%s0 + $0xdc] sm:$0xff]
  %v49 = vld [vmem:[%s0 + $0xe4] sm:$0xff]
  %v50 = vld [vmem:[%s0 + $0xec] sm:$0xf]
  %v51 = vld [vmem:[%s0 + $0xf0] sm:$0xff]
  %v52 = vld [vmem:[%s0 + $0xf8] sm:$0xff]
  %v53 = vld [vmem:[%s0 + $0x100] sm:$0xf]
  %v54 = vld [vmem:[%s0 + $0x104] sm:$0xff]
  %v55 = vld [vmem:[%s0 + $0x10c] sm:$0xff]
  %v56 = vld [vmem:[%s0 + $0x114] sm:$0xf]
  %v57 = vld [vmem:[%s0 + $0x118] sm:$0xff]
  %v58 = vld [vmem:[%s0 + $0x120] sm:$0xff]
  %v59 = vld [vmem:[%s0 + $0x128] sm:$0xf]
  %v60 = vld [vmem:[%s0 + $0x12c] sm:$0xff]
  %v61 = vld [vmem:[%s0 + $0x134] sm:$0xff]
  %v62 = vld [vmem:[%s0 + $0x13c] sm:$0xf]
  %v63 = vld [vmem:[%s0 + $0x140] sm:$0xff]
  %v64 = vld [vmem:[%s0 + $0x148] sm:$0xff]
  %v65 = vld [vmem:[%s0 + $0x150] sm:$0xf]
  %v66 = vld [vmem:[%s0 + $0x154] sm:$0xff]
  %v67 = vld [vmem:[%s0 + $0x15c] sm:$0xff]
  %v68 = vld [vmem:[%s0 + $0x164] sm:$0xf]
  %v69 = vld [vmem:[%s0 + $0x168] sm:$0xff]
  %v70 = vld [vmem:[%s0 + $0x170] sm:$0xff]
  %v71 = vld [vmem:[%s0 + $0x178] sm:$0xf]
  %v72 = vld [vmem:[%s0 + $0x17c] sm:$0xff]
  %v73 = vld [vmem:[%s0 + $0x184] sm:$0xff]
  %v74 = vld [vmem:[%s0 + $0x18c] sm:$0xf]
  %v75 = vld [vmem:[%s0 + $0x190] sm:$0xff]
  %v76 = vld [vmem:[%s0 + $0x198] sm:$0xff]
  %v77 = vld [vmem:[%s0 + $0x1a0] sm:$0xf]
  %v78 = vld [vmem:[%s0 + $0x1a4] sm:$0xff]
  %v79 = vld [vmem:[%s0 + $0x1ac] sm:$0xff]
  %v80 = vld [vmem:[%s0 + $0x1b4] sm:$0xf]
  %v81 = vld [vmem:[%s0 + $0x1b8] sm:$0xff]
  %v82 = vld [vmem:[%s0 + $0x1c0] sm:$0xff]
  %v83 = vld [vmem:[%s0 + $0x1c8] sm:$0xf]
  %v84 = vld [vmem:[%s0 + $0x1cc] sm:$0xff]
  %v85 = vld [vmem:[%s0 + $0x1d4] sm:$0xff]
  %v86 = vld [vmem:[%s0 + $0x1dc] sm:$0xf]
  %v87 = vld [vmem:[%s0 + $0x1e0] sm:$0xff]
  %v88 = vld [vmem:[%s0 + $0x1e8] sm:$0xff]
  %v89 = vld [vmem:[%s0 + $0x1f0] sm:$0xf]
  %v90 = vld [vmem:[%s0 + $0x1f4] sm:$0xff]
  %v91 = vld [vmem:[%s0 + $0x1fc] sm:$0xff]
  %v92 = vld [vmem:[%s0 + $0x204] sm:$0xf]
  %v93 = vld [vmem:[%s0 + $0x208] sm:$0xff]
  %v94 = vld [vmem:[%s0 + $0x210] sm:$0xff]
  %v95 = vld [vmem:[%s0 + $0x218] sm:$0xf]
  %v96 = vld [vmem:[%s0 + $0x21c] sm:$0xff]
  %v97 = vld [vmem:[%s0 + $0x224] sm:$0xff]
  %v98 = vld [vmem:[%s0 + $0x22c] sm:$0xf]
  %v99 = vld [vmem:[%s0 + $0x230] sm:$0xff]
  %v100 = vld [vmem:[%s0 + $0x238] sm:$0xff]
  %v101 = vld [vmem:[%s0 + $0x240] sm:$0xf]
  %v102 = vld [vmem:[%s0 + $0x244] sm:$0xff]
  %v103 = vld [vmem:[%s0 + $0x24c] sm:$0xff]
  %v104 = vld [vmem:[%s0 + $0x254] sm:$0xf]
  %v105 = vld [vmem:[%s0 + $0x258] sm:$0xff]
  %v106 = vld [vmem:[%s0 + $0x260] sm:$0xff]
  %v107 = vld [vmem:[%s0 + $0x268] sm:$0xf]
  %v108 = vld [vmem:[%s0 + $0x26c] sm:$0xff]
  %v109 = vld [vmem:[%s0 + $0x274] sm:$0xff]
  %v110 = vld [vmem:[%s0 + $0x27c] sm:$0xf]
  %v111 = vld [vmem:[%s0 + $0x280] sm:$0xff]
  %v112 = vld [vmem:[%s0 + $0x288] sm:$0xff]
  %v113 = vld [vmem:[%s0 + $0x290] sm:$0xf]
  %v114 = vld [vmem:[%s0 + $0x294] sm:$0xff]
  %v115 = vld [vmem:[%s0 + $0x29c] sm:$0xff]
  %v116 = vld [vmem:[%s0 + $0x2a4] sm:$0xf]
  %v117 = vld [vmem:[%s0 + $0x2a8] sm:$0xff]
  %v118 = vld [vmem:[%s0 + $0x2b0] sm:$0xff]
  %v119 = vld [vmem:[%s0 + $0x2b8] sm:$0xf]
  %v120 = vld [vmem:[%s0 + $0x2bc] sm:$0xff]
  %v121 = vld [vmem:[%s0 + $0x2c4] sm:$0xff]
  %v122 = vld [vmem:[%s0 + $0x2cc] sm:$0xf]
  %v123 = vld [vmem:[%s0 + $0x2d0] sm:$0xff]
  %v124 = vld [vmem:[%s0 + $0x2d8] sm:$0xff]
  %v125 = vld [vmem:[%s0 + $0x2e0] sm:$0xf]
  %v126 = vld [vmem:[%s0 + $0x2e4] sm:$0xff]
  %v127 = vld [vmem:[%s0 + $0x2ec] sm:$0xff]
  %v128 = vld [vmem:[%s0 + $0x2f4] sm:$0xf]
  %v129 = vld [vmem:[%s0 + $0x2f8] sm:$0xff]
  %v130 = vld [vmem:[%s0 + $0x300] sm:$0xff]
  %v131 = vld [vmem:[%s0 + $0x308] sm:$0xf]
  %v132 = vld [vmem:[%s0 + $0x30c] sm:$0xff]
  %v133 = vld [vmem:[%s0 + $0x314] sm:$0xff]
  %v134 = vld [vmem:[%s0 + $0x31c] sm:$0xf]
  %v135 = vld [vmem:[%s0 + $0x320] sm:$0xff]
  %v136 = vld [vmem:[%s0 + $0x328] sm:$0xff]
  %v137 = vld [vmem:[%s0 + $0x330] sm:$0xf]
  %v138 = vld [vmem:[%s0 + $0x334] sm:$0xff]
  %v139 = vld [vmem:[%s0 + $0x33c] sm:$0xff]
  %v140 = vld [vmem:[%s0 + $0x344] sm:$0xf]
  %v141 = vld [vmem:[%s0 + $0x348] sm:$0xff]
  %v142 = vld [vmem:[%s0 + $0x350] sm:$0xff]
  %v143 = vld [vmem:[%s0 + $0x358] sm:$0xf]
  %v144 = vld [vmem:[%s0 + $0x35c] sm:$0xff]
  %v145 = vld [vmem:[%s0 + $0x364] sm:$0xff]
  %v146 = vld [vmem:[%s0 + $0x36c] sm:$0xf]
  %v147 = vld [vmem:[%s0 + $0x370] sm:$0xff]
  %v148 = vld [vmem:[%s0 + $0x378] sm:$0xff]
  %v149 = vld [vmem:[%s0 + $0x380] sm:$0xf]
  %v150 = vld [vmem:[%s0 + $0x384] sm:$0xff]
  %v151 = vld [vmem:[%s0 + $0x38c] sm:$0xff]
  %v152 = vld [vmem:[%s0 + $0x394] sm:$0xf]
  %v153 = vld [vmem:[%s0 + $0x398] sm:$0xff]
  %v154 = vld [vmem:[%s0 + $0x3a0] sm:$0xff]
  %v155 = vld [vmem:[%s0 + $0x3a8] sm:$0xf]
  %v156 = vld [vmem:[%s0 + $0x3ac] sm:$0xff]
  %v157 = vld [vmem:[%s0 + $0x3b4] sm:$0xff]
  %v158 = vld [vmem:[%s0 + $0x3bc] sm:$0xf]
  %v159 = vld [vmem:[%s0 + $0x3c0] sm:$0xff]
  %v160 = vld [vmem:[%s0 + $0x3c8] sm:$0xff]
  %v161 = vld [vmem:[%s0 + $0x3d0] sm:$0xf]
  %v162 = vld [vmem:[%s0 + $0x3d4] sm:$0xff]
  %v163 = vld [vmem:[%s0 + $0x3dc] sm:$0xff]
  %v164 = vld [vmem:[%s0 + $0x3e4] sm:$0xf]
  %v165 = vld [vmem:[%s0 + $0x3e8] sm:$0xff]
  %v166 = vld [vmem:[%s0 + $0x3f0] sm:$0xff]
  %v167 = vld [vmem:[%s0 + $0x3f8] sm:$0xf]
  %v168 = vld [vmem:[%s0 + $0x3fc] sm:$0xff]
  %v169 = vld [vmem:[%s0 + $0x404] sm:$0xff]
  %v170 = vld [vmem:[%s0 + $0x40c] sm:$0xf]
  %v171 = vld [vmem:[%s0 + $0x410] sm:$0xff]
  %v172 = vld [vmem:[%s0 + $0x418] sm:$0xff]
  %v173 = vld [vmem:[%s0 + $0x420] sm:$0xf]
  %v174 = vld [vmem:[%s0 + $0x424] sm:$0xff]
  %v175 = vld [vmem:[%s0 + $0x42c] sm:$0xff]
  %v176 = vld [vmem:[%s0 + $0x434] sm:$0xf]
  %v177 = vld [vmem:[%s0 + $0x438] sm:$0xff]
  %v178 = vld [vmem:[%s0 + $0x440] sm:$0xff]
  %v179 = vld [vmem:[%s0 + $0x448] sm:$0xf]
  %v180 = vld [vmem:[%s0 + $0x44c] sm:$0xff]
  %v181 = vld [vmem:[%s0 + $0x454] sm:$0xff]
  %v182 = vld [vmem:[%s0 + $0x45c] sm:$0xf]
  %v183 = vld [vmem:[%s0 + $0x460] sm:$0xff]
  %v184 = vld [vmem:[%s0 + $0x468] sm:$0xff]
  %v185 = vld [vmem:[%s0 + $0x470] sm:$0xf]
  %v186 = vld [vmem:[%s0 + $0x474] sm:$0xff]
  %v187 = vld [vmem:[%s0 + $0x47c] sm:$0xff]
  %v188 = vld [vmem:[%s0 + $0x484] sm:$0xf]
  %v189 = vld [vmem:[%s0 + $0x488] sm:$0xff]
  %v190 = vld [vmem:[%s0 + $0x490] sm:$0xff]
  %v191 = vld [vmem:[%s0 + $0x498] sm:$0xf]
  %v192 = vld [vmem:[%s0 + $0x49c] sm:$0xff]
  %v193 = vld [vmem:[%s0 + $0x4a4] sm:$0xff]
  %v194 = vld [vmem:[%s0 + $0x4ac] sm:$0xf]
  %v195 = vld [vmem:[%s0 + $0x4b0] sm:$0xff]
  %v196 = vld [vmem:[%s0 + $0x4b8] sm:$0xff]
  %v197 = vld [vmem:[%s0 + $0x4c0] sm:$0xf]
  %v198 = vld [vmem:[%s0 + $0x4c4] sm:$0xff]
  %v199 = vld [vmem:[%s0 + $0x4cc] sm:$0xff]
  %v200 = vld [vmem:[%s0 + $0x4d4] sm:$0xf]
  %v201 = vld [vmem:[%s0 + $0x4d8] sm:$0xff]
  %v202 = vld [vmem:[%s0 + $0x4e0] sm:$0xff]
  %v203 = vld [vmem:[%s0 + $0x4e8] sm:$0xf]
  %v204 = vld [vmem:[%s0 + $0x4ec] sm:$0xff]
  %v205 = vld [vmem:[%s0 + $0x4f4] sm:$0xff]
  %v206 = vld [vmem:[%s0 + $0x4fc] sm:$0xf]
  %v207 = vld [vmem:[%s1] sm:$0xf]
  %v208 = vld [vmem:[%s1 + $0x4] sm:$0xf]
  %v209 = vld [vmem:[%s1 + $0x8] sm:$0xf]
  %v210 = vld [vmem:[%s1 + $0xc] sm:$0xf]
  %v211 = vld [vmem:[%s1 + $0x10] sm:$0xf]
  %v212 = vld [vmem:[%s1 + $0x14] sm:$0xf]
  %v213 = vld [vmem:[%s1 + $0x18] sm:$0xf]
  %v214 = vld [vmem:[%s1 + $0x1c] sm:$0xf]
  %v215 = vld [vmem:[%s1 + $0x20] sm:$0xf]
  %v216 = vld [vmem:[%s1 + $0x24] sm:$0xf]
  %v217 = vld [vmem:[%s1 + $0x28] sm:$0xf]
  %v218 = vld [vmem:[%s1 + $0x2c] sm:$0xf]
  %v219 = vld [vmem:[%s1 + $0x30] sm:$0xf]
  %v220 = vld [vmem:[%s1 + $0x34] sm:$0xf]
  %v221 = vld [vmem:[%s1 + $0x38] sm:$0xf]
  %v222 = vld [vmem:[%s1 + $0x3c] sm:$0xf]
  %v223 = vld [vmem:[%s1 + $0x40] sm:$0xf]
  %v224 = vld [vmem:[%s1 + $0x44] sm:$0xf]
  %v225 = vld [vmem:[%s1 + $0x48] sm:$0xf]
  %v226 = vld [vmem:[%s1 + $0x4c] sm:$0xf]
  %v227 = vld [vmem:[%s1 + $0x50] sm:$0xf]
  %v228 = vld [vmem:[%s1 + $0x54] sm:$0xf]
  %v229 = vld [vmem:[%s1 + $0x58] sm:$0xf]
  %v230 = vld [vmem:[%s1 + $0x5c] sm:$0xf]
  %v231 = vld [vmem:[%s1 + $0x60] sm:$0xf]
  %v232 = vld [vmem:[%s1 + $0x64] sm:$0xf]
  %v233 = vld [vmem:[%s1 + $0x68] sm:$0xf]
  %v234 = vld [vmem:[%s1 + $0x6c] sm:$0xf]
  %v235 = vld [vmem:[%s1 + $0x70] sm:$0xf]
  %v236 = vld [vmem:[%s1 + $0x74] sm:$0xf]
  %v237 = vld [vmem:[%s1 + $0x78] sm:$0xf]
  %v238 = vld [vmem:[%s1 + $0x7c] sm:$0xf]
  %v239 = vld [vmem:[%s1 + $0x80] sm:$0xf]
  %v240 = vld [vmem:[%s1 + $0x84] sm:$0xf]
  %v241 = vld [vmem:[%s1 + $0x88] sm:$0xf]
  %v242 = vld [vmem:[%s1 + $0x8c] sm:$0xf]
  %v243 = vld [vmem:[%s1 + $0x90] sm:$0xf]
  %v244 = vld [vmem:[%s1 + $0x94] sm:$0xf]
  %v245 = vld [vmem:[%s1 + $0x98] sm:$0xf]
  %v246 = vld [vmem:[%s1 + $0x9c] sm:$0xf]
  %v247 = vld [vmem:[%s1 + $0xa0] sm:$0xf]
  %v248 = vld [vmem:[%s1 + $0xa4] sm:$0xf]
  %v249 = vld [vmem:[%s1 + $0xa8] sm:$0xf]
  %v250 = vld [vmem:[%s1 + $0xac] sm:$0xf]
  %v251 = vld [vmem:[%s1 + $0xb0] sm:$0xf]
  %v252 = vld [vmem:[%s1 + $0xb4] sm:$0xf]
  %v253 = vld [vmem:[%s1 + $0xb8] sm:$0xf]
  %v254 = vld [vmem:[%s1 + $0xbc] sm:$0xf]
  %v255 = vld [vmem:[%s1 + $0xc0] sm:$0xf]
  %v256 = vld [vmem:[%s1 + $0xc4] sm:$0xf]
  %v257 = vld [vmem:[%s1 + $0xc8] sm:$0xf]
  %v258 = vld [vmem:[%s1 + $0xcc] sm:$0xf]
  %v259 = vld [vmem:[%s1 + $0xd0] sm:$0xf]
  %v260 = vld [vmem:[%s1 + $0xd4] sm:$0xf]
  %v261 = vld [vmem:[%s1 + $0xd8] sm:$0xf]
  %v262 = vld [vmem:[%s1 + $0xdc] sm:$0xf]
  %v263 = vld [vmem:[%s1 + $0xe0] sm:$0xf]
  %v264 = vld [vmem:[%s1 + $0xe4] sm:$0xf]
  %v265 = vld [vmem:[%s1 + $0xe8] sm:$0xf]
  %v266 = vld [vmem:[%s1 + $0xec] sm:$0xf]
  %v267 = vld [vmem:[%s1 + $0xf0] sm:$0xf]
  %v268 = vld [vmem:[%s1 + $0xf4] sm:$0xf]
  %v269 = vld [vmem:[%s1 + $0xf8] sm:$0xf]
  %v270 = vld [vmem:[%s1 + $0xfc] sm:$0xf]
  %v271 = vld [vmem:[%s1 + $0x100] sm:$0xf]
  %v272 = vld [vmem:[%s1 + $0x104] sm:$0xf]
  %v273 = vld [vmem:[%s1 + $0x108] sm:$0xf]
  %v274 = vld [vmem:[%s1 + $0x10c] sm:$0xf]
  %v275 = vld [vmem:[%s1 + $0x110] sm:$0xf]
  %v276 = vld [vmem:[%s1 + $0x114] sm:$0xf]
  %v277 = vld [vmem:[%s1 + $0x118] sm:$0xf]
  %v278 = vld [vmem:[%s1 + $0x11c] sm:$0xf]
  %v279 = vld [vmem:[%s1 + $0x120] sm:$0xf]
  %v280 = vld [vmem:[%s1 + $0x124] sm:$0xf]
  %v281 = vld [vmem:[%s1 + $0x128] sm:$0xf]
  %v282 = vld [vmem:[%s1 + $0x12c] sm:$0xf]
  %v283 = vld [vmem:[%s1 + $0x130] sm:$0xf]
  %v284 = vld [vmem:[%s1 + $0x134] sm:$0xf]
  %v285 = vld [vmem:[%s1 + $0x138] sm:$0xf]
  %v286 = vld [vmem:[%s1 + $0x13c] sm:$0xf]
  %v287 = vld [vmem:[%s2] sm:$0x1]
  %v289 = vlaneseq
  %v290 = vshrl.u32 %v289, 7
  %v291 = vsub.s32 0, %v290
  %v292 = vrot.slane %v287, %v291
  %v486 = vunpack.c.l.b16 %v15
  %v487 = vunpack.c.h.b16 %v15
  %v488 = vunpack.c.l.b16 %v16
  %v489 = vunpack.c.h.b16 %v16
  %v490 = vunpack.c.l.b16 %v17
  %v491 = vunpack.c.l.b16 %v18
  %v492 = vunpack.c.h.b16 %v18
  %v493 = vunpack.c.l.b16 %v19
  %v494 = vunpack.c.h.b16 %v19
  %v495 = vunpack.c.l.b16 %v20
  %v496 = vunpack.c.l.b16 %v21
  %v497 = vunpack.c.h.b16 %v21
  %v498 = vunpack.c.l.b16 %v22
  %v499 = vunpack.c.h.b16 %v22
  %v500 = vunpack.c.l.b16 %v23
  %v501 = vunpack.c.l.b16 %v24
  %v502 = vunpack.c.h.b16 %v24
  %v503 = vunpack.c.l.b16 %v25
  %v504 = vunpack.c.h.b16 %v25
  %v505 = vunpack.c.l.b16 %v26
  %v506 = vunpack.c.l.b16 %v27
  %v507 = vunpack.c.h.b16 %v27
  %v508 = vunpack.c.l.b16 %v28
  %v509 = vunpack.c.h.b16 %v28
  %v510 = vunpack.c.l.b16 %v29
  %v511 = vunpack.c.l.b16 %v30
  %v512 = vunpack.c.h.b16 %v30
  %v513 = vunpack.c.l.b16 %v31
  %v514 = vunpack.c.h.b16 %v31
  %v515 = vunpack.c.l.b16 %v32
  %v516 = vunpack.c.l.b16 %v33
  %v517 = vunpack.c.h.b16 %v33
  %v518 = vunpack.c.l.b16 %v34
  %v519 = vunpack.c.h.b16 %v34
  %v520 = vunpack.c.l.b16 %v35
  %v521 = vunpack.c.l.b16 %v36
  %v522 = vunpack.c.h.b16 %v36
  %v523 = vunpack.c.l.b16 %v37
  %v524 = vunpack.c.h.b16 %v37
  %v525 = vunpack.c.l.b16 %v38
  %v526 = vunpack.c.l.b16 %v39
  %v527 = vunpack.c.h.b16 %v39
  %v528 = vunpack.c.l.b16 %v40
  %v529 = vunpack.c.h.b16 %v40
  %v530 = vunpack.c.l.b16 %v41
  %v531 = vunpack.c.l.b16 %v42
  %v532 = vunpack.c.h.b16 %v42
  %v533 = vunpack.c.l.b16 %v43
  %v534 = vunpack.c.h.b16 %v43
  %v535 = vunpack.c.l.b16 %v44
  %v536 = vunpack.c.l.b16 %v45
  %v537 = vunpack.c.h.b16 %v45
  %v538 = vunpack.c.l.b16 %v46
  %v539 = vunpack.c.h.b16 %v46
  %v540 = vunpack.c.l.b16 %v47
  %v541 = vunpack.c.l.b16 %v48
  %v542 = vunpack.c.h.b16 %v48
  %v543 = vunpack.c.l.b16 %v49
  %v544 = vunpack.c.h.b16 %v49
  %v545 = vunpack.c.l.b16 %v50
  %v546 = vunpack.c.l.b16 %v51
  %v547 = vunpack.c.h.b16 %v51
  %v548 = vunpack.c.l.b16 %v52
  %v549 = vunpack.c.h.b16 %v52
  %v550 = vunpack.c.l.b16 %v53
  %v551 = vunpack.c.l.b16 %v54
  %v552 = vunpack.c.h.b16 %v54
  %v553 = vunpack.c.l.b16 %v55
  %v554 = vunpack.c.h.b16 %v55
  %v555 = vunpack.c.l.b16 %v56
  %v556 = vunpack.c.l.b16 %v57
  %v557 = vunpack.c.h.b16 %v57
  %v558 = vunpack.c.l.b16 %v58
  %v559 = vunpack.c.h.b16 %v58
  %v560 = vunpack.c.l.b16 %v59
  %v561 = vunpack.c.l.b16 %v60
  %v562 = vunpack.c.h.b16 %v60
  %v563 = vunpack.c.l.b16 %v61
  %v564 = vunpack.c.h.b16 %v61
  %v565 = vunpack.c.l.b16 %v62
  %v566 = vunpack.c.l.b16 %v63
  %v567 = vunpack.c.h.b16 %v63
  %v568 = vunpack.c.l.b16 %v64
  %v569 = vunpack.c.h.b16 %v64
  %v570 = vunpack.c.l.b16 %v65
  %v571 = vunpack.c.l.b16 %v66
  %v572 = vunpack.c.h.b16 %v66
  %v573 = vunpack.c.l.b16 %v67
  %v574 = vunpack.c.h.b16 %v67
  %v575 = vunpack.c.l.b16 %v68
  %v576 = vunpack.c.l.b16 %v69
  %v577 = vunpack.c.h.b16 %v69
  %v578 = vunpack.c.l.b16 %v70
  %v579 = vunpack.c.h.b16 %v70
  %v580 = vunpack.c.l.b16 %v71
  %v581 = vunpack.c.l.b16 %v72
  %v582 = vunpack.c.h.b16 %v72
  %v583 = vunpack.c.l.b16 %v73
  %v584 = vunpack.c.h.b16 %v73
  %v585 = vunpack.c.l.b16 %v74
  %v586 = vunpack.c.l.b16 %v75
  %v587 = vunpack.c.h.b16 %v75
  %v588 = vunpack.c.l.b16 %v76
  %v589 = vunpack.c.h.b16 %v76
  %v590 = vunpack.c.l.b16 %v77
  %v591 = vunpack.c.l.b16 %v78
  %v592 = vunpack.c.h.b16 %v78
  %v593 = vunpack.c.l.b16 %v79
  %v594 = vunpack.c.h.b16 %v79
  %v595 = vunpack.c.l.b16 %v80
  %v596 = vunpack.c.l.b16 %v81
  %v597 = vunpack.c.h.b16 %v81
  %v598 = vunpack.c.l.b16 %v82
  %v599 = vunpack.c.h.b16 %v82
  %v600 = vunpack.c.l.b16 %v83
  %v601 = vunpack.c.l.b16 %v84
  %v602 = vunpack.c.h.b16 %v84
  %v603 = vunpack.c.l.b16 %v85
  %v604 = vunpack.c.h.b16 %v85
  %v605 = vunpack.c.l.b16 %v86
  %v606 = vunpack.c.l.b16 %v87
  %v607 = vunpack.c.h.b16 %v87
  %v608 = vunpack.c.l.b16 %v88
  %v609 = vunpack.c.h.b16 %v88
  %v610 = vunpack.c.l.b16 %v89
  %v611 = vunpack.c.l.b16 %v90
  %v612 = vunpack.c.h.b16 %v90
  %v613 = vunpack.c.l.b16 %v91
  %v614 = vunpack.c.h.b16 %v91
  %v615 = vunpack.c.l.b16 %v92
  %v616 = vunpack.c.l.b16 %v93
  %v617 = vunpack.c.h.b16 %v93
  %v618 = vunpack.c.l.b16 %v94
  %v619 = vunpack.c.h.b16 %v94
  %v620 = vunpack.c.l.b16 %v95
  %v621 = vunpack.c.l.b16 %v96
  %v622 = vunpack.c.h.b16 %v96
  %v623 = vunpack.c.l.b16 %v97
  %v624 = vunpack.c.h.b16 %v97
  %v625 = vunpack.c.l.b16 %v98
  %v626 = vunpack.c.l.b16 %v99
  %v627 = vunpack.c.h.b16 %v99
  %v628 = vunpack.c.l.b16 %v100
  %v629 = vunpack.c.h.b16 %v100
  %v630 = vunpack.c.l.b16 %v101
  %v631 = vunpack.c.l.b16 %v102
  %v632 = vunpack.c.h.b16 %v102
  %v633 = vunpack.c.l.b16 %v103
  %v634 = vunpack.c.h.b16 %v103
  %v635 = vunpack.c.l.b16 %v104
  %v636 = vunpack.c.l.b16 %v105
  %v637 = vunpack.c.h.b16 %v105
  %v638 = vunpack.c.l.b16 %v106
  %v639 = vunpack.c.h.b16 %v106
  %v640 = vunpack.c.l.b16 %v107
  %v641 = vunpack.c.l.b16 %v108
  %v642 = vunpack.c.h.b16 %v108
  %v643 = vunpack.c.l.b16 %v109
  %v644 = vunpack.c.h.b16 %v109
  %v645 = vunpack.c.l.b16 %v110
  %v646 = vunpack.c.l.b16 %v111
  %v647 = vunpack.c.h.b16 %v111
  %v648 = vunpack.c.l.b16 %v112
  %v649 = vunpack.c.h.b16 %v112
  %v650 = vunpack.c.l.b16 %v113
  %v651 = vunpack.c.l.b16 %v114
  %v652 = vunpack.c.h.b16 %v114
  %v653 = vunpack.c.l.b16 %v115
  %v654 = vunpack.c.h.b16 %v115
  %v655 = vunpack.c.l.b16 %v116
  %v656 = vunpack.c.l.b16 %v117
  %v657 = vunpack.c.h.b16 %v117
  %v658 = vunpack.c.l.b16 %v118
  %v659 = vunpack.c.h.b16 %v118
  %v660 = vunpack.c.l.b16 %v119
  %v661 = vunpack.c.l.b16 %v120
  %v662 = vunpack.c.h.b16 %v120
  %v663 = vunpack.c.l.b16 %v121
  %v664 = vunpack.c.h.b16 %v121
  %v665 = vunpack.c.l.b16 %v122
  %v666 = vunpack.c.l.b16 %v123
  %v667 = vunpack.c.h.b16 %v123
  %v668 = vunpack.c.l.b16 %v124
  %v669 = vunpack.c.h.b16 %v124
  %v670 = vunpack.c.l.b16 %v125
  %v671 = vunpack.c.l.b16 %v126
  %v672 = vunpack.c.h.b16 %v126
  %v673 = vunpack.c.l.b16 %v127
  %v674 = vunpack.c.h.b16 %v127
  %v675 = vunpack.c.l.b16 %v128
  %v676 = vunpack.c.l.b16 %v129
  %v677 = vunpack.c.h.b16 %v129
  %v678 = vunpack.c.l.b16 %v130
  %v679 = vunpack.c.h.b16 %v130
  %v680 = vunpack.c.l.b16 %v131
  %v681 = vunpack.c.l.b16 %v132
  %v682 = vunpack.c.h.b16 %v132
  %v683 = vunpack.c.l.b16 %v133
  %v684 = vunpack.c.h.b16 %v133
  %v685 = vunpack.c.l.b16 %v134
  %v686 = vunpack.c.l.b16 %v135
  %v687 = vunpack.c.h.b16 %v135
  %v688 = vunpack.c.l.b16 %v136
  %v689 = vunpack.c.h.b16 %v136
  %v690 = vunpack.c.l.b16 %v137
  %v691 = vunpack.c.l.b16 %v138
  %v692 = vunpack.c.h.b16 %v138
  %v693 = vunpack.c.l.b16 %v139
  %v694 = vunpack.c.h.b16 %v139
  %v695 = vunpack.c.l.b16 %v140
  %v696 = vunpack.c.l.b16 %v141
  %v697 = vunpack.c.h.b16 %v141
  %v698 = vunpack.c.l.b16 %v142
  %v699 = vunpack.c.h.b16 %v142
  %v700 = vunpack.c.l.b16 %v143
  %v701 = vunpack.c.l.b16 %v144
  %v702 = vunpack.c.h.b16 %v144
  %v703 = vunpack.c.l.b16 %v145
  %v704 = vunpack.c.h.b16 %v145
  %v705 = vunpack.c.l.b16 %v146
  %v706 = vunpack.c.l.b16 %v147
  %v707 = vunpack.c.h.b16 %v147
  %v708 = vunpack.c.l.b16 %v148
  %v709 = vunpack.c.h.b16 %v148
  %v710 = vunpack.c.l.b16 %v149
  %v711 = vunpack.c.l.b16 %v150
  %v712 = vunpack.c.h.b16 %v150
  %v713 = vunpack.c.l.b16 %v151
  %v714 = vunpack.c.h.b16 %v151
  %v715 = vunpack.c.l.b16 %v152
  %v716 = vunpack.c.l.b16 %v153
  %v717 = vunpack.c.h.b16 %v153
  %v718 = vunpack.c.l.b16 %v154
  %v719 = vunpack.c.h.b16 %v154
  %v720 = vunpack.c.l.b16 %v155
  %v721 = vunpack.c.l.b16 %v156
  %v722 = vunpack.c.h.b16 %v156
  %v723 = vunpack.c.l.b16 %v157
  %v724 = vunpack.c.h.b16 %v157
  %v725 = vunpack.c.l.b16 %v158
  %v726 = vunpack.c.l.b16 %v159
  %v727 = vunpack.c.h.b16 %v159
  %v728 = vunpack.c.l.b16 %v160
  %v729 = vunpack.c.h.b16 %v160
  %v730 = vunpack.c.l.b16 %v161
  %v731 = vunpack.c.l.b16 %v162
  %v732 = vunpack.c.h.b16 %v162
  %v733 = vunpack.c.l.b16 %v163
  %v734 = vunpack.c.h.b16 %v163
  %v735 = vunpack.c.l.b16 %v164
  %v736 = vunpack.c.l.b16 %v165
  %v737 = vunpack.c.h.b16 %v165
  %v738 = vunpack.c.l.b16 %v166
  %v739 = vunpack.c.h.b16 %v166
  %v740 = vunpack.c.l.b16 %v167
  %v741 = vunpack.c.l.b16 %v168
  %v742 = vunpack.c.h.b16 %v168
  %v743 = vunpack.c.l.b16 %v169
  %v744 = vunpack.c.h.b16 %v169
  %v745 = vunpack.c.l.b16 %v170
  %v746 = vunpack.c.l.b16 %v171
  %v747 = vunpack.c.h.b16 %v171
  %v748 = vunpack.c.l.b16 %v172
  %v749 = vunpack.c.h.b16 %v172
  %v750 = vunpack.c.l.b16 %v173
  %v751 = vunpack.c.l.b16 %v174
  %v752 = vunpack.c.h.b16 %v174
  %v753 = vunpack.c.l.b16 %v175
  %v754 = vunpack.c.h.b16 %v175
  %v755 = vunpack.c.l.b16 %v176
  %v756 = vunpack.c.l.b16 %v177
  %v757 = vunpack.c.h.b16 %v177
  %v758 = vunpack.c.l.b16 %v178
  %v759 = vunpack.c.h.b16 %v178
  %v760 = vunpack.c.l.b16 %v179
  %v761 = vunpack.c.l.b16 %v180
  %v762 = vunpack.c.h.b16 %v180
  %v763 = vunpack.c.l.b16 %v181
  %v764 = vunpack.c.h.b16 %v181
  %v765 = vunpack.c.l.b16 %v182
  %v766 = vunpack.c.l.b16 %v183
  %v767 = vunpack.c.h.b16 %v183
  %v768 = vunpack.c.l.b16 %v184
  %v769 = vunpack.c.h.b16 %v184
  %v770 = vunpack.c.l.b16 %v185
  %v771 = vunpack.c.l.b16 %v186
  %v772 = vunpack.c.h.b16 %v186
  %v773 = vunpack.c.l.b16 %v187
  %v774 = vunpack.c.h.b16 %v187
  %v775 = vunpack.c.l.b16 %v188
  %v776 = vunpack.c.l.b16 %v189
  %v777 = vunpack.c.h.b16 %v189
  %v778 = vunpack.c.l.b16 %v190
  %v779 = vunpack.c.h.b16 %v190
  %v780 = vunpack.c.l.b16 %v191
  %v781 = vunpack.c.l.b16 %v192
  %v782 = vunpack.c.h.b16 %v192
  %v783 = vunpack.c.l.b16 %v193
  %v784 = vunpack.c.h.b16 %v193
  %v785 = vunpack.c.l.b16 %v194
  %v786 = vunpack.c.l.b16 %v195
  %v787 = vunpack.c.h.b16 %v195
  %v788 = vunpack.c.l.b16 %v196
  %v789 = vunpack.c.h.b16 %v196
  %v790 = vunpack.c.l.b16 %v197
  %v791 = vunpack.c.l.b16 %v198
  %v792 = vunpack.c.h.b16 %v198
  %v793 = vunpack.c.l.b16 %v199
  %v794 = vunpack.c.h.b16 %v199
  %v795 = vunpack.c.l.b16 %v200
  %v796 = vunpack.c.l.b16 %v201
  %v797 = vunpack.c.h.b16 %v201
  %v798 = vunpack.c.l.b16 %v202
  %v799 = vunpack.c.h.b16 %v202
  %v800 = vunpack.c.l.b16 %v203
  %v801 = vunpack.c.l.b16 %v204
  %v802 = vunpack.c.h.b16 %v204
  %v803 = vunpack.c.l.b16 %v205
  %v804 = vunpack.c.h.b16 %v205
  %v805 = vunpack.c.l.b16 %v206
  %v806 = vpack.c.b16 %v491, %v486
  %v807 = vpack.c.b16 %v492, %v487
  %v808 = vpack.c.b16 %v493, %v488
  %v809 = vpack.c.b16 %v494, %v489
  %v810 = vpack.c.b16 %v495, %v490
  %v811 = vpack.c.b16 %v501, %v496
  %v812 = vpack.c.b16 %v502, %v497
  %v813 = vpack.c.b16 %v503, %v498
  %v814 = vpack.c.b16 %v504, %v499
  %v815 = vpack.c.b16 %v505, %v500
  %v816 = vpack.c.b16 %v511, %v506
  %v817 = vpack.c.b16 %v512, %v507
  %v818 = vpack.c.b16 %v513, %v508
  %v819 = vpack.c.b16 %v514, %v509
  %v820 = vpack.c.b16 %v515, %v510
  %v821 = vpack.c.b16 %v521, %v516
  %v822 = vpack.c.b16 %v522, %v517
  %v823 = vpack.c.b16 %v523, %v518
  %v824 = vpack.c.b16 %v524, %v519
  %v825 = vpack.c.b16 %v525, %v520
  %v826 = vpack.c.b16 %v531, %v526
  %v827 = vpack.c.b16 %v532, %v527
  %v828 = vpack.c.b16 %v533, %v528
  %v829 = vpack.c.b16 %v534, %v529
  %v830 = vpack.c.b16 %v535, %v530
  %v831 = vpack.c.b16 %v541, %v536
  %v832 = vpack.c.b16 %v542, %v537
  %v833 = vpack.c.b16 %v543, %v538
  %v834 = vpack.c.b16 %v544, %v539
  %v835 = vpack.c.b16 %v545, %v540
  %v836 = vpack.c.b16 %v551, %v546
  %v837 = vpack.c.b16 %v552, %v547
  %v838 = vpack.c.b16 %v553, %v548
  %v839 = vpack.c.b16 %v554, %v549
  %v840 = vpack.c.b16 %v555, %v550
  %v841 = vpack.c.b16 %v561, %v556
  %v842 = vpack.c.b16 %v562, %v557
  %v843 = vpack.c.b16 %v563, %v558
  %v844 = vpack.c.b16 %v564, %v559
  %v845 = vpack.c.b16 %v565, %v560
  %v846 = vpack.c.b16 %v571, %v566
  %v847 = vpack.c.b16 %v572, %v567
  %v848 = vpack.c.b16 %v573, %v568
  %v849 = vpack.c.b16 %v574, %v569
  %v850 = vpack.c.b16 %v575, %v570
  %v851 = vpack.c.b16 %v581, %v576
  %v852 = vpack.c.b16 %v582, %v577
  %v853 = vpack.c.b16 %v583, %v578
  %v854 = vpack.c.b16 %v584, %v579
  %v855 = vpack.c.b16 %v585, %v580
  %v856 = vpack.c.b16 %v591, %v586
  %v857 = vpack.c.b16 %v592, %v587
  %v858 = vpack.c.b16 %v593, %v588
  %v859 = vpack.c.b16 %v594, %v589
  %v860 = vpack.c.b16 %v595, %v590
  %v861 = vpack.c.b16 %v601, %v596
  %v862 = vpack.c.b16 %v602, %v597
  %v863 = vpack.c.b16 %v603, %v598
  %v864 = vpack.c.b16 %v604, %v599
  %v865 = vpack.c.b16 %v605, %v600
  %v866 = vpack.c.b16 %v611, %v606
  %v867 = vpack.c.b16 %v612, %v607
  %v868 = vpack.c.b16 %v613, %v608
  %v869 = vpack.c.b16 %v614, %v609
  %v870 = vpack.c.b16 %v615, %v610
  %v871 = vpack.c.b16 %v621, %v616
  %v872 = vpack.c.b16 %v622, %v617
  %v873 = vpack.c.b16 %v623, %v618
  %v874 = vpack.c.b16 %v624, %v619
  %v875 = vpack.c.b16 %v625, %v620
  %v876 = vpack.c.b16 %v631, %v626
  %v877 = vpack.c.b16 %v632, %v627
  %v878 = vpack.c.b16 %v633, %v628
  %v879 = vpack.c.b16 %v634, %v629
  %v880 = vpack.c.b16 %v635, %v630
  %v881 = vpack.c.b16 %v641, %v636
  %v882 = vpack.c.b16 %v642, %v637
  %v883 = vpack.c.b16 %v643, %v638
  %v884 = vpack.c.b16 %v644, %v639
  %v885 = vpack.c.b16 %v645, %v640
  %v886 = vpack.c.b16 %v651, %v646
  %v887 = vpack.c.b16 %v652, %v647
  %v888 = vpack.c.b16 %v653, %v648
  %v889 = vpack.c.b16 %v654, %v649
  %v890 = vpack.c.b16 %v655, %v650
  %v891 = vpack.c.b16 %v661, %v656
  %v892 = vpack.c.b16 %v662, %v657
  %v893 = vpack.c.b16 %v663, %v658
  %v894 = vpack.c.b16 %v664, %v659
  %v895 = vpack.c.b16 %v665, %v660
  %v896 = vpack.c.b16 %v671, %v666
  %v897 = vpack.c.b16 %v672, %v667
  %v898 = vpack.c.b16 %v673, %v668
  %v899 = vpack.c.b16 %v674, %v669
  %v900 = vpack.c.b16 %v675, %v670
  %v901 = vpack.c.b16 %v681, %v676
  %v902 = vpack.c.b16 %v682, %v677
  %v903 = vpack.c.b16 %v683, %v678
  %v904 = vpack.c.b16 %v684, %v679
  %v905 = vpack.c.b16 %v685, %v680
  %v906 = vpack.c.b16 %v691, %v686
  %v907 = vpack.c.b16 %v692, %v687
  %v908 = vpack.c.b16 %v693, %v688
  %v909 = vpack.c.b16 %v694, %v689
  %v910 = vpack.c.b16 %v695, %v690
  %v911 = vpack.c.b16 %v701, %v696
  %v912 = vpack.c.b16 %v702, %v697
  %v913 = vpack.c.b16 %v703, %v698
  %v914 = vpack.c.b16 %v704, %v699
  %v915 = vpack.c.b16 %v705, %v700
  %v916 = vpack.c.b16 %v711, %v706
  %v917 = vpack.c.b16 %v712, %v707
  %v918 = vpack.c.b16 %v713, %v708
  %v919 = vpack.c.b16 %v714, %v709
  %v920 = vpack.c.b16 %v715, %v710
  %v921 = vpack.c.b16 %v721, %v716
  %v922 = vpack.c.b16 %v722, %v717
  %v923 = vpack.c.b16 %v723, %v718
  %v924 = vpack.c.b16 %v724, %v719
  %v925 = vpack.c.b16 %v725, %v720
  %v926 = vpack.c.b16 %v731, %v726
  %v927 = vpack.c.b16 %v732, %v727
  %v928 = vpack.c.b16 %v733, %v728
  %v929 = vpack.c.b16 %v734, %v729
  %v930 = vpack.c.b16 %v735, %v730
  %v931 = vpack.c.b16 %v741, %v736
  %v932 = vpack.c.b16 %v742, %v737
  %v933 = vpack.c.b16 %v743, %v738
  %v934 = vpack.c.b16 %v744, %v739
  %v935 = vpack.c.b16 %v745, %v740
  %v936 = vpack.c.b16 %v751, %v746
  %v937 = vpack.c.b16 %v752, %v747
  %v938 = vpack.c.b16 %v753, %v748
  %v939 = vpack.c.b16 %v754, %v749
  %v940 = vpack.c.b16 %v755, %v750
  %v941 = vpack.c.b16 %v761, %v756
  %v942 = vpack.c.b16 %v762, %v757
  %v943 = vpack.c.b16 %v763, %v758
  %v944 = vpack.c.b16 %v764, %v759
  %v945 = vpack.c.b16 %v765, %v760
  %v946 = vpack.c.b16 %v771, %v766
  %v947 = vpack.c.b16 %v772, %v767
  %v948 = vpack.c.b16 %v773, %v768
  %v949 = vpack.c.b16 %v774, %v769
  %v950 = vpack.c.b16 %v775, %v770
  %v951 = vpack.c.b16 %v781, %v776
  %v952 = vpack.c.b16 %v782, %v777
  %v953 = vpack.c.b16 %v783, %v778
  %v954 = vpack.c.b16 %v784, %v779
  %v955 = vpack.c.b16 %v785, %v780
  %v956 = vpack.c.b16 %v791, %v786
  %v957 = vpack.c.b16 %v792, %v787
  %v958 = vpack.c.b16 %v793, %v788
  %v959 = vpack.c.b16 %v794, %v789
  %v960 = vpack.c.b16 %v795, %v790
  %v961 = vpack.c.b16 %v801, %v796
  %v962 = vpack.c.b16 %v802, %v797
  %v963 = vpack.c.b16 %v803, %v798
  %v964 = vpack.c.b16 %v804, %v799
  %v965 = vpack.c.b16 %v805, %v800
  %v1206 = vunpack.c.l.b16 %v207
  %v1207 = vunpack.c.l.b16 %v208
  %v1208 = vunpack.c.l.b16 %v209
  %v1209 = vunpack.c.l.b16 %v210
  %v1210 = vunpack.c.l.b16 %v211
  %v1211 = vunpack.c.l.b16 %v212
  %v1212 = vunpack.c.l.b16 %v213
  %v1213 = vunpack.c.l.b16 %v214
  %v1214 = vunpack.c.l.b16 %v215
  %v1215 = vunpack.c.l.b16 %v216
  %v1216 = vunpack.c.l.b16 %v217
  %v1217 = vunpack.c.l.b16 %v218
  %v1218 = vunpack.c.l.b16 %v219
  %v1219 = vunpack.c.l.b16 %v220
  %v1220 = vunpack.c.l.b16 %v221
  %v1221 = vunpack.c.l.b16 %v222
  %v1222 = vunpack.c.l.b16 %v223
  %v1223 = vunpack.c.l.b16 %v224
  %v1224 = vunpack.c.l.b16 %v225
  %v1225 = vunpack.c.l.b16 %v226
  %v1226 = vunpack.c.l.b16 %v227
  %v1227 = vunpack.c.l.b16 %v228
  %v1228 = vunpack.c.l.b16 %v229
  %v1229 = vunpack.c.l.b16 %v230
  %v1230 = vunpack.c.l.b16 %v231
  %v1231 = vunpack.c.l.b16 %v232
  %v1232 = vunpack.c.l.b16 %v233
  %v1233 = vunpack.c.l.b16 %v234
  %v1234 = vunpack.c.l.b16 %v235
  %v1235 = vunpack.c.l.b16 %v236
  %v1236 = vunpack.c.l.b16 %v237
  %v1237 = vunpack.c.l.b16 %v238
  %v1238 = vunpack.c.l.b16 %v239
  %v1239 = vunpack.c.l.b16 %v240
  %v1240 = vunpack.c.l.b16 %v241
  %v1241 = vunpack.c.l.b16 %v242
  %v1242 = vunpack.c.l.b16 %v243
  %v1243 = vunpack.c.l.b16 %v244
  %v1244 = vunpack.c.l.b16 %v245
  %v1245 = vunpack.c.l.b16 %v246
  %v1246 = vunpack.c.l.b16 %v247
  %v1247 = vunpack.c.l.b16 %v248
  %v1248 = vunpack.c.l.b16 %v249
  %v1249 = vunpack.c.l.b16 %v250
  %v1250 = vunpack.c.l.b16 %v251
  %v1251 = vunpack.c.l.b16 %v252
  %v1252 = vunpack.c.l.b16 %v253
  %v1253 = vunpack.c.l.b16 %v254
  %v1254 = vunpack.c.l.b16 %v255
  %v1255 = vunpack.c.l.b16 %v256
  %v1256 = vunpack.c.l.b16 %v257
  %v1257 = vunpack.c.l.b16 %v258
  %v1258 = vunpack.c.l.b16 %v259
  %v1259 = vunpack.c.l.b16 %v260
  %v1260 = vunpack.c.l.b16 %v261
  %v1261 = vunpack.c.l.b16 %v262
  %v1262 = vunpack.c.l.b16 %v263
  %v1263 = vunpack.c.l.b16 %v264
  %v1264 = vunpack.c.l.b16 %v265
  %v1265 = vunpack.c.l.b16 %v266
  %v1266 = vunpack.c.l.b16 %v267
  %v1267 = vunpack.c.l.b16 %v268
  %v1268 = vunpack.c.l.b16 %v269
  %v1269 = vunpack.c.l.b16 %v270
  %v1270 = vunpack.c.l.b16 %v271
  %v1271 = vunpack.c.l.b16 %v272
  %v1272 = vunpack.c.l.b16 %v273
  %v1273 = vunpack.c.l.b16 %v274
  %v1274 = vunpack.c.l.b16 %v275
  %v1275 = vunpack.c.l.b16 %v276
  %v1276 = vunpack.c.l.b16 %v277
  %v1277 = vunpack.c.l.b16 %v278
  %v1278 = vunpack.c.l.b16 %v279
  %v1279 = vunpack.c.l.b16 %v280
  %v1280 = vunpack.c.l.b16 %v281
  %v1281 = vunpack.c.l.b16 %v282
  %v1282 = vunpack.c.l.b16 %v283
  %v1283 = vunpack.c.l.b16 %v284
  %v1284 = vunpack.c.l.b16 %v285
  %v1285 = vunpack.c.l.b16 %v286
  %v1286 = vpack.c.b16 %v1207, %v1206
  %v1287 = vpack.c.b16 %v1209, %v1208
  %v1288 = vpack.c.b16 %v1211, %v1210
  %v1289 = vpack.c.b16 %v1213, %v1212
  %v1290 = vpack.c.b16 %v1215, %v1214
  %v1291 = vpack.c.b16 %v1217, %v1216
  %v1292 = vpack.c.b16 %v1219, %v1218
  %v1293 = vpack.c.b16 %v1221, %v1220
  %v1294 = vpack.c.b16 %v1223, %v1222
  %v1295 = vpack.c.b16 %v1225, %v1224
  %v1296 = vpack.c.b16 %v1227, %v1226
  %v1297 = vpack.c.b16 %v1229, %v1228
  %v1298 = vpack.c.b16 %v1231, %v1230
  %v1299 = vpack.c.b16 %v1233, %v1232
  %v1300 = vpack.c.b16 %v1235, %v1234
  %v1301 = vpack.c.b16 %v1237, %v1236
  %v1302 = vpack.c.b16 %v1239, %v1238
  %v1303 = vpack.c.b16 %v1241, %v1240
  %v1304 = vpack.c.b16 %v1243, %v1242
  %v1305 = vpack.c.b16 %v1245, %v1244
  %v1306 = vpack.c.b16 %v1247, %v1246
  %v1307 = vpack.c.b16 %v1249, %v1248
  %v1308 = vpack.c.b16 %v1251, %v1250
  %v1309 = vpack.c.b16 %v1253, %v1252
  %v1310 = vpack.c.b16 %v1255, %v1254
  %v1311 = vpack.c.b16 %v1257, %v1256
  %v1312 = vpack.c.b16 %v1259, %v1258
  %v1313 = vpack.c.b16 %v1261, %v1260
  %v1314 = vpack.c.b16 %v1263, %v1262
  %v1315 = vpack.c.b16 %v1265, %v1264
  %v1316 = vpack.c.b16 %v1267, %v1266
  %v1317 = vpack.c.b16 %v1269, %v1268
  %v1318 = vpack.c.b16 %v1271, %v1270
  %v1319 = vpack.c.b16 %v1273, %v1272
  %v1320 = vpack.c.b16 %v1275, %v1274
  %v1321 = vpack.c.b16 %v1277, %v1276
  %v1322 = vpack.c.b16 %v1279, %v1278
  %v1323 = vpack.c.b16 %v1281, %v1280
  %v1324 = vpack.c.b16 %v1283, %v1282
  %v1325 = vpack.c.b16 %v1285, %v1284
  %1366 = vmatprep.subr.bf16.mxu0 0
  %1367 = vmatpush1.bf16.msra.mxu0 %v1293
  %1368 = vmatprep.subr.bf16.mxu0 0
  %1369 = vmatpush1.bf16.msra.mxu0 %v1292
  %1370 = vmatprep.subr.bf16.mxu0 0
  %1371 = vmatpush1.bf16.msra.mxu0 %v1291
  %1372 = vmatprep.subr.bf16.mxu0 0
  %1373 = vmatpush1.bf16.msra.mxu0 %v1290
  %1374 = vmatprep.subr.bf16.mxu0 0
  %1375 = vmatpush1.bf16.msra.mxu0 %v1289
  %1376 = vmatprep.subr.bf16.mxu0 0
  %1377 = vmatpush1.bf16.msra.mxu0 %v1288
  %1378 = vmatprep.subr.bf16.mxu0 0
  %1379 = vmatpush1.bf16.msra.mxu0 %v1287
  %1380 = vmatprep.subr.bf16.mxu0 0
  %1381 = vmatpush1.bf16.msra.mxu0 %v1286
  %1382 = vmatprep.subr.bf16.mxu0 0
  %1383 = vmatpush2.bf16.msra.mxu0 %v1301
  %1384 = vmatprep.subr.bf16.mxu0 0
  %1385 = vmatpush2.bf16.msra.mxu0 %v1300
  %1386 = vmatprep.subr.bf16.mxu0 0
  %1387 = vmatpush2.bf16.msra.mxu0 %v1299
  %1388 = vmatprep.subr.bf16.mxu0 0
  %1389 = vmatpush2.bf16.msra.mxu0 %v1298
  %1390 = vmatprep.subr.bf16.mxu0 0
  %1391 = vmatpush2.bf16.msra.mxu0 %v1297
  %1392 = vmatprep.subr.bf16.mxu0 0
  %1393 = vmatpush2.bf16.msra.mxu0 %v1296
  %1394 = vmatprep.subr.bf16.mxu0 0
  %1395 = vmatpush2.bf16.msra.mxu0 %v1295
  %1396 = vmatprep.subr.bf16.mxu0 0
  %1397 = vmatpush2.bf16.msra.mxu0 %v1294
  %1398 = vmatprep.mubr.bf16.mxu0 %v807
  %1399 = vmatmul.mubr.bf16.gmra.mxu0 %v806
  %v1400 = vpop.f32.mrf.mxu0
  %v1401 = vadd.f32 %v292, %v1400
  %v1402 = vpop.f32.mrf.mxu0
  %v1403 = vpop.f32.mrf.mxu0
  %v1404 = vadd.f32 %v292, %v1403
  %v1405 = vpop.f32.mrf.mxu0
  %1406 = vmatprep.mubr.bf16.mxu0 %v812
  %1407 = vmatmul.mubr.bf16.gmra.mxu0 %v811
  %v1408 = vpop.f32.mrf.mxu0
  %v1409 = vadd.f32 %v292, %v1408
  %v1410 = vpop.f32.mrf.mxu0
  %v1411 = vpop.f32.mrf.mxu0
  %v1412 = vadd.f32 %v292, %v1411
  %v1413 = vpop.f32.mrf.mxu0
  %1414 = vmatprep.mubr.bf16.mxu0 %v817
  %1415 = vmatmul.mubr.bf16.gmra.mxu0 %v816
  %v1416 = vpop.f32.mrf.mxu0
  %v1417 = vadd.f32 %v292, %v1416
  %v1418 = vpop.f32.mrf.mxu0
  %v1419 = vpop.f32.mrf.mxu0
  %v1420 = vadd.f32 %v292, %v1419
  %v1421 = vpop.f32.mrf.mxu0
  %1422 = vmatprep.mubr.bf16.mxu0 %v822
  %1423 = vmatmul.mubr.bf16.gmra.mxu0 %v821
  %v1424 = vpop.f32.mrf.mxu0
  %v1425 = vadd.f32 %v292, %v1424
  %v1426 = vpop.f32.mrf.mxu0
  %v1427 = vpop.f32.mrf.mxu0
  %v1428 = vadd.f32 %v292, %v1427
  %v1429 = vpop.f32.mrf.mxu0
  %1430 = vmatprep.mubr.bf16.mxu0 %v827
  %1431 = vmatmul.mubr.bf16.gmra.mxu0 %v826
  %v1432 = vpop.f32.mrf.mxu0
  %v1433 = vadd.f32 %v292, %v1432
  %v1434 = vpop.f32.mrf.mxu0
  %v1435 = vpop.f32.mrf.mxu0
  %v1436 = vadd.f32 %v292, %v1435
  %v1437 = vpop.f32.mrf.mxu0
  %1438 = vmatprep.mubr.bf16.mxu0 %v832
  %1439 = vmatmul.mubr.bf16.gmra.mxu0 %v831
  %v1440 = vpop.f32.mrf.mxu0
  %v1441 = vadd.f32 %v292, %v1440
  %v1442 = vpop.f32.mrf.mxu0
  %v1443 = vpop.f32.mrf.mxu0
  %v1444 = vadd.f32 %v292, %v1443
  %v1445 = vpop.f32.mrf.mxu0
  %1446 = vmatprep.mubr.bf16.mxu0 %v837
  %1447 = vmatmul.mubr.bf16.gmra.mxu0 %v836
  %v1448 = vpop.f32.mrf.mxu0
  %v1449 = vadd.f32 %v292, %v1448
  %v1450 = vpop.f32.mrf.mxu0
  %v1451 = vpop.f32.mrf.mxu0
  %v1452 = vadd.f32 %v292, %v1451
  %v1453 = vpop.f32.mrf.mxu0
  %1454 = vmatprep.mubr.bf16.mxu0 %v842
  %1455 = vmatmul.mubr.bf16.gmra.mxu0 %v841
  %v1456 = vpop.f32.mrf.mxu0
  %v1457 = vadd.f32 %v292, %v1456
  %v1458 = vpop.f32.mrf.mxu0
  %v1459 = vpop.f32.mrf.mxu0
  %v1460 = vadd.f32 %v292, %v1459
  %v1461 = vpop.f32.mrf.mxu0
  %1462 = vmatprep.mubr.bf16.mxu0 %v847
  %1463 = vmatmul.mubr.bf16.gmra.mxu0 %v846
  %v1464 = vpop.f32.mrf.mxu0
  %v1465 = vadd.f32 %v292, %v1464
  %v1466 = vpop.f32.mrf.mxu0
  %v1467 = vpop.f32.mrf.mxu0
  %v1468 = vadd.f32 %v292, %v1467
  %v1469 = vpop.f32.mrf.mxu0
  %1470 = vmatprep.mubr.bf16.mxu0 %v852
  %1471 = vmatmul.mubr.bf16.gmra.mxu0 %v851
  %v1472 = vpop.f32.mrf.mxu0
  %v1473 = vadd.f32 %v292, %v1472
  %v1474 = vpop.f32.mrf.mxu0
  %v1475 = vpop.f32.mrf.mxu0
  %v1476 = vadd.f32 %v292, %v1475
  %v1477 = vpop.f32.mrf.mxu0
  %1478 = vmatprep.mubr.bf16.mxu0 %v857
  %1479 = vmatmul.mubr.bf16.gmra.mxu0 %v856
  %v1480 = vpop.f32.mrf.mxu0
  %v1481 = vadd.f32 %v292, %v1480
  %v1482 = vpop.f32.mrf.mxu0
  %v1483 = vpop.f32.mrf.mxu0
  %v1484 = vadd.f32 %v292, %v1483
  %v1485 = vpop.f32.mrf.mxu0
  %1486 = vmatprep.mubr.bf16.mxu0 %v862
  %1487 = vmatmul.mubr.bf16.gmra.mxu0 %v861
  %v1488 = vpop.f32.mrf.mxu0
  %v1489 = vadd.f32 %v292, %v1488
  %v1490 = vpop.f32.mrf.mxu0
  %v1491 = vpop.f32.mrf.mxu0
  %v1492 = vadd.f32 %v292, %v1491
  %v1493 = vpop.f32.mrf.mxu0
  %1494 = vmatprep.mubr.bf16.mxu0 %v867
  %1495 = vmatmul.mubr.bf16.gmra.mxu0 %v866
  %v1496 = vpop.f32.mrf.mxu0
  %v1497 = vadd.f32 %v292, %v1496
  %v1498 = vpop.f32.mrf.mxu0
  %v1499 = vpop.f32.mrf.mxu0
  %v1500 = vadd.f32 %v292, %v1499
  %v1501 = vpop.f32.mrf.mxu0
  %1502 = vmatprep.mubr.bf16.mxu0 %v872
  %1503 = vmatmul.mubr.bf16.gmra.mxu0 %v871
  %v1504 = vpop.f32.mrf.mxu0
  %v1505 = vadd.f32 %v292, %v1504
  %v1506 = vpop.f32.mrf.mxu0
  %v1507 = vpop.f32.mrf.mxu0
  %v1508 = vadd.f32 %v292, %v1507
  %v1509 = vpop.f32.mrf.mxu0
  %1510 = vmatprep.mubr.bf16.mxu0 %v877
  %1511 = vmatmul.mubr.bf16.gmra.mxu0 %v876
  %v1512 = vpop.f32.mrf.mxu0
  %v1513 = vadd.f32 %v292, %v1512
  %v1514 = vpop.f32.mrf.mxu0
  %v1515 = vpop.f32.mrf.mxu0
  %v1516 = vadd.f32 %v292, %v1515
  %v1517 = vpop.f32.mrf.mxu0
  %1518 = vmatprep.mubr.bf16.mxu0 %v882
  %1519 = vmatmul.mubr.bf16.gmra.mxu0 %v881
  %v1520 = vpop.f32.mrf.mxu0
  %v1521 = vadd.f32 %v292, %v1520
  %v1522 = vpop.f32.mrf.mxu0
  %v1523 = vpop.f32.mrf.mxu0
  %v1524 = vadd.f32 %v292, %v1523
  %v1525 = vpop.f32.mrf.mxu0
  %1526 = vmatprep.mubr.bf16.mxu0 %v887
  %1527 = vmatmul.mubr.bf16.gmra.mxu0 %v886
  %v1528 = vpop.f32.mrf.mxu0
  %v1529 = vadd.f32 %v292, %v1528
  %v1530 = vpop.f32.mrf.mxu0
  %v1531 = vpop.f32.mrf.mxu0
  %v1532 = vadd.f32 %v292, %v1531
  %v1533 = vpop.f32.mrf.mxu0
  %1534 = vmatprep.mubr.bf16.mxu0 %v892
  %1535 = vmatmul.mubr.bf16.gmra.mxu0 %v891
  %v1536 = vpop.f32.mrf.mxu0
  %v1537 = vadd.f32 %v292, %v1536
  %v1538 = vpop.f32.mrf.mxu0
  %v1539 = vpop.f32.mrf.mxu0
  %v1540 = vadd.f32 %v292, %v1539
  %v1541 = vpop.f32.mrf.mxu0
  %1542 = vmatprep.mubr.bf16.mxu0 %v897
  %1543 = vmatmul.mubr.bf16.gmra.mxu0 %v896
  %v1544 = vpop.f32.mrf.mxu0
  %v1545 = vadd.f32 %v292, %v1544
  %v1546 = vpop.f32.mrf.mxu0
  %v1547 = vpop.f32.mrf.mxu0
  %v1548 = vadd.f32 %v292, %v1547
  %v1549 = vpop.f32.mrf.mxu0
  %1550 = vmatprep.mubr.bf16.mxu0 %v902
  %1551 = vmatmul.mubr.bf16.gmra.mxu0 %v901
  %v1552 = vpop.f32.mrf.mxu0
  %v1553 = vadd.f32 %v292, %v1552
  %v1554 = vpop.f32.mrf.mxu0
  %v1555 = vpop.f32.mrf.mxu0
  %v1556 = vadd.f32 %v292, %v1555
  %v1557 = vpop.f32.mrf.mxu0
  %1558 = vmatprep.mubr.bf16.mxu0 %v907
  %1559 = vmatmul.mubr.bf16.gmra.mxu0 %v906
  %v1560 = vpop.f32.mrf.mxu0
  %v1561 = vadd.f32 %v292, %v1560
  %v1562 = vpop.f32.mrf.mxu0
  %v1563 = vpop.f32.mrf.mxu0
  %v1564 = vadd.f32 %v292, %v1563
  %v1565 = vpop.f32.mrf.mxu0
  %1566 = vmatprep.mubr.bf16.mxu0 %v912
  %1567 = vmatmul.mubr.bf16.gmra.mxu0 %v911
  %v1568 = vpop.f32.mrf.mxu0
  %v1569 = vadd.f32 %v292, %v1568
  %v1570 = vpop.f32.mrf.mxu0
  %v1571 = vpop.f32.mrf.mxu0
  %v1572 = vadd.f32 %v292, %v1571
  %v1573 = vpop.f32.mrf.mxu0
  %1574 = vmatprep.mubr.bf16.mxu0 %v917
  %1575 = vmatmul.mubr.bf16.gmra.mxu0 %v916
  %v1576 = vpop.f32.mrf.mxu0
  %v1577 = vadd.f32 %v292, %v1576
  %v1578 = vpop.f32.mrf.mxu0
  %v1579 = vpop.f32.mrf.mxu0
  %v1580 = vadd.f32 %v292, %v1579
  %v1581 = vpop.f32.mrf.mxu0
  %1582 = vmatprep.mubr.bf16.mxu0 %v922
  %1583 = vmatmul.mubr.bf16.gmra.mxu0 %v921
  %v1584 = vpop.f32.mrf.mxu0
  %v1585 = vadd.f32 %v292, %v1584
  %v1586 = vpop.f32.mrf.mxu0
  %v1587 = vpop.f32.mrf.mxu0
  %v1588 = vadd.f32 %v292, %v1587
  %v1589 = vpop.f32.mrf.mxu0
  %1590 = vmatprep.mubr.bf16.mxu0 %v927
  %1591 = vmatmul.mubr.bf16.gmra.mxu0 %v926
  %v1592 = vpop.f32.mrf.mxu0
  %v1593 = vadd.f32 %v292, %v1592
  %v1594 = vpop.f32.mrf.mxu0
  %v1595 = vpop.f32.mrf.mxu0
  %v1596 = vadd.f32 %v292, %v1595
  %v1597 = vpop.f32.mrf.mxu0
  %1598 = vmatprep.mubr.bf16.mxu0 %v932
  %1599 = vmatmul.mubr.bf16.gmra.mxu0 %v931
  %v1600 = vpop.f32.mrf.mxu0
  %v1601 = vadd.f32 %v292, %v1600
  %v1602 = vpop.f32.mrf.mxu0
  %v1603 = vpop.f32.mrf.mxu0
  %v1604 = vadd.f32 %v292, %v1603
  %v1605 = vpop.f32.mrf.mxu0
  %1606 = vmatprep.mubr.bf16.mxu0 %v937
  %1607 = vmatmul.mubr.bf16.gmra.mxu0 %v936
  %v1608 = vpop.f32.mrf.mxu0
  %v1609 = vadd.f32 %v292, %v1608
  %v1610 = vpop.f32.mrf.mxu0
  %v1611 = vpop.f32.mrf.mxu0
  %v1612 = vadd.f32 %v292, %v1611
  %v1613 = vpop.f32.mrf.mxu0
  %1614 = vmatprep.mubr.bf16.mxu0 %v942
  %1615 = vmatmul.mubr.bf16.gmra.mxu0 %v941
  %v1616 = vpop.f32.mrf.mxu0
  %v1617 = vadd.f32 %v292, %v1616
  %v1618 = vpop.f32.mrf.mxu0
  %v1619 = vpop.f32.mrf.mxu0
  %v1620 = vadd.f32 %v292, %v1619
  %v1621 = vpop.f32.mrf.mxu0
  %1622 = vmatprep.mubr.bf16.mxu0 %v947
  %1623 = vmatmul.mubr.bf16.gmra.mxu0 %v946
  %v1624 = vpop.f32.mrf.mxu0
  %v1625 = vadd.f32 %v292, %v1624
  %v1626 = vpop.f32.mrf.mxu0
  %v1627 = vpop.f32.mrf.mxu0
  %v1628 = vadd.f32 %v292, %v1627
  %v1629 = vpop.f32.mrf.mxu0
  %1630 = vmatprep.mubr.bf16.mxu0 %v952
  %1631 = vmatmul.mubr.bf16.gmra.mxu0 %v951
  %v1632 = vpop.f32.mrf.mxu0
  %v1633 = vadd.f32 %v292, %v1632
  %v1634 = vpop.f32.mrf.mxu0
  %v1635 = vpop.f32.mrf.mxu0
  %v1636 = vadd.f32 %v292, %v1635
  %v1637 = vpop.f32.mrf.mxu0
  %1638 = vmatprep.mubr.bf16.mxu0 %v957
  %1639 = vmatmul.mubr.bf16.gmra.mxu0 %v956
  %v1640 = vpop.f32.mrf.mxu0
  %v1641 = vadd.f32 %v292, %v1640
  %v1642 = vpop.f32.mrf.mxu0
  %v1643 = vpop.f32.mrf.mxu0
  %v1644 = vadd.f32 %v292, %v1643
  %v1645 = vpop.f32.mrf.mxu0
  %1646 = vmatprep.mubr.bf16.mxu0 %v962
  %1647 = vmatmul.mubr.bf16.gmra.mxu0 %v961
  %v1648 = vpop.f32.mrf.mxu0
  %v1649 = vadd.f32 %v292, %v1648
  %v1650 = vpop.f32.mrf.mxu0
  %v1651 = vpop.f32.mrf.mxu0
  %v1652 = vadd.f32 %v292, %v1651
  %v1653 = vpop.f32.mrf.mxu0
  %1654 = vdwg.mxu0
  %1655 = vmatprep.subr.bf16.mxu0 0
  %1656 = vmatpush1.bf16.msra.mxu0 %v1309
  %1657 = vmatprep.subr.bf16.mxu0 0
  %1658 = vmatpush1.bf16.msra.mxu0 %v1308
  %1659 = vmatprep.subr.bf16.mxu0 0
  %1660 = vmatpush1.bf16.msra.mxu0 %v1307
  %1661 = vmatprep.subr.bf16.mxu0 0
  %1662 = vmatpush1.bf16.msra.mxu0 %v1306
  %1663 = vmatprep.subr.bf16.mxu0 0
  %1664 = vmatpush1.bf16.msra.mxu0 %v1305
  %1665 = vmatprep.subr.bf16.mxu0 0
  %1666 = vmatpush1.bf16.msra.mxu0 %v1304
  %1667 = vmatprep.subr.bf16.mxu0 0
  %1668 = vmatpush1.bf16.msra.mxu0 %v1303
  %1669 = vmatprep.subr.bf16.mxu0 0
  %1670 = vmatpush1.bf16.msra.mxu0 %v1302
  %1671 = vmatprep.subr.bf16.mxu0 0
  %1672 = vmatpush2.bf16.msra.mxu0 %v1317
  %1673 = vmatprep.subr.bf16.mxu0 0
  %1674 = vmatpush2.bf16.msra.mxu0 %v1316
  %1675 = vmatprep.subr.bf16.mxu0 0
  %1676 = vmatpush2.bf16.msra.mxu0 %v1315
  %1677 = vmatprep.subr.bf16.mxu0 0
  %1678 = vmatpush2.bf16.msra.mxu0 %v1314
  %1679 = vmatprep.subr.bf16.mxu0 0
  %1680 = vmatpush2.bf16.msra.mxu0 %v1313
  %1681 = vmatprep.subr.bf16.mxu0 0
  %1682 = vmatpush2.bf16.msra.mxu0 %v1312
  %1683 = vmatprep.subr.bf16.mxu0 0
  %1684 = vmatpush2.bf16.msra.mxu0 %v1311
  %1685 = vmatprep.subr.bf16.mxu0 0
  %1686 = vmatpush2.bf16.msra.mxu0 %v1310
  %1687 = vmatprep.mubr.bf16.mxu0 %v809
  %1688 = vmatmul.mubr.bf16.gmra.mxu0 %v808
  %v1689 = vpop.f32.mrf.mxu0
  %v1690 = vadd.f32 %v1401, %v1689
  %v1691 = vpop.f32.mrf.mxu0
  %v1692 = vpop.f32.mrf.mxu0
  %v1693 = vadd.f32 %v1404, %v1692
  %v1694 = vpop.f32.mrf.mxu0
  %1695 = vmatprep.mubr.bf16.mxu0 %v814
  %1696 = vmatmul.mubr.bf16.gmra.mxu0 %v813
  %v1697 = vpop.f32.mrf.mxu0
  %v1698 = vadd.f32 %v1409, %v1697
  %v1699 = vpop.f32.mrf.mxu0
  %v1700 = vpop.f32.mrf.mxu0
  %v1701 = vadd.f32 %v1412, %v1700
  %v1702 = vpop.f32.mrf.mxu0
  %1703 = vmatprep.mubr.bf16.mxu0 %v819
  %1704 = vmatmul.mubr.bf16.gmra.mxu0 %v818
  %v1705 = vpop.f32.mrf.mxu0
  %v1706 = vadd.f32 %v1417, %v1705
  %v1707 = vpop.f32.mrf.mxu0
  %v1708 = vpop.f32.mrf.mxu0
  %v1709 = vadd.f32 %v1420, %v1708
  %v1710 = vpop.f32.mrf.mxu0
  %1711 = vmatprep.mubr.bf16.mxu0 %v824
  %1712 = vmatmul.mubr.bf16.gmra.mxu0 %v823
  %v1713 = vpop.f32.mrf.mxu0
  %v1714 = vadd.f32 %v1425, %v1713
  %v1715 = vpop.f32.mrf.mxu0
  %v1716 = vpop.f32.mrf.mxu0
  %v1717 = vadd.f32 %v1428, %v1716
  %v1718 = vpop.f32.mrf.mxu0
  %1719 = vmatprep.mubr.bf16.mxu0 %v829
  %1720 = vmatmul.mubr.bf16.gmra.mxu0 %v828
  %v1721 = vpop.f32.mrf.mxu0
  %v1722 = vadd.f32 %v1433, %v1721
  %v1723 = vpop.f32.mrf.mxu0
  %v1724 = vpop.f32.mrf.mxu0
  %v1725 = vadd.f32 %v1436, %v1724
  %v1726 = vpop.f32.mrf.mxu0
  %1727 = vmatprep.mubr.bf16.mxu0 %v834
  %1728 = vmatmul.mubr.bf16.gmra.mxu0 %v833
  %v1729 = vpop.f32.mrf.mxu0
  %v1730 = vadd.f32 %v1441, %v1729
  %v1731 = vpop.f32.mrf.mxu0
  %v1732 = vpop.f32.mrf.mxu0
  %v1733 = vadd.f32 %v1444, %v1732
  %v1734 = vpop.f32.mrf.mxu0
  %1735 = vmatprep.mubr.bf16.mxu0 %v839
  %1736 = vmatmul.mubr.bf16.gmra.mxu0 %v838
  %v1737 = vpop.f32.mrf.mxu0
  %v1738 = vadd.f32 %v1449, %v1737
  %v1739 = vpop.f32.mrf.mxu0
  %v1740 = vpop.f32.mrf.mxu0
  %v1741 = vadd.f32 %v1452, %v1740
  %v1742 = vpop.f32.mrf.mxu0
  %1743 = vmatprep.mubr.bf16.mxu0 %v844
  %1744 = vmatmul.mubr.bf16.gmra.mxu0 %v843
  %v1745 = vpop.f32.mrf.mxu0
  %v1746 = vadd.f32 %v1457, %v1745
  %v1747 = vpop.f32.mrf.mxu0
  %v1748 = vpop.f32.mrf.mxu0
  %v1749 = vadd.f32 %v1460, %v1748
  %v1750 = vpop.f32.mrf.mxu0
  %1751 = vmatprep.mubr.bf16.mxu0 %v849
  %1752 = vmatmul.mubr.bf16.gmra.mxu0 %v848
  %v1753 = vpop.f32.mrf.mxu0
  %v1754 = vadd.f32 %v1465, %v1753
  %v1755 = vpop.f32.mrf.mxu0
  %v1756 = vpop.f32.mrf.mxu0
  %v1757 = vadd.f32 %v1468, %v1756
  %v1758 = vpop.f32.mrf.mxu0
  %1759 = vmatprep.mubr.bf16.mxu0 %v854
  %1760 = vmatmul.mubr.bf16.gmra.mxu0 %v853
  %v1761 = vpop.f32.mrf.mxu0
  %v1762 = vadd.f32 %v1473, %v1761
  %v1763 = vpop.f32.mrf.mxu0
  %v1764 = vpop.f32.mrf.mxu0
  %v1765 = vadd.f32 %v1476, %v1764
  %v1766 = vpop.f32.mrf.mxu0
  %1767 = vmatprep.mubr.bf16.mxu0 %v859
  %1768 = vmatmul.mubr.bf16.gmra.mxu0 %v858
  %v1769 = vpop.f32.mrf.mxu0
  %v1770 = vadd.f32 %v1481, %v1769
  %v1771 = vpop.f32.mrf.mxu0
  %v1772 = vpop.f32.mrf.mxu0
  %v1773 = vadd.f32 %v1484, %v1772
  %v1774 = vpop.f32.mrf.mxu0
  %1775 = vmatprep.mubr.bf16.mxu0 %v864
  %1776 = vmatmul.mubr.bf16.gmra.mxu0 %v863
  %v1777 = vpop.f32.mrf.mxu0
  %v1778 = vadd.f32 %v1489, %v1777
  %v1779 = vpop.f32.mrf.mxu0
  %v1780 = vpop.f32.mrf.mxu0
  %v1781 = vadd.f32 %v1492, %v1780
  %v1782 = vpop.f32.mrf.mxu0
  %1783 = vmatprep.mubr.bf16.mxu0 %v869
  %1784 = vmatmul.mubr.bf16.gmra.mxu0 %v868
  %v1785 = vpop.f32.mrf.mxu0
  %v1786 = vadd.f32 %v1497, %v1785
  %v1787 = vpop.f32.mrf.mxu0
  %v1788 = vpop.f32.mrf.mxu0
  %v1789 = vadd.f32 %v1500, %v1788
  %v1790 = vpop.f32.mrf.mxu0
  %1791 = vmatprep.mubr.bf16.mxu0 %v874
  %1792 = vmatmul.mubr.bf16.gmra.mxu0 %v873
  %v1793 = vpop.f32.mrf.mxu0
  %v1794 = vadd.f32 %v1505, %v1793
  %v1795 = vpop.f32.mrf.mxu0
  %v1796 = vpop.f32.mrf.mxu0
  %v1797 = vadd.f32 %v1508, %v1796
  %v1798 = vpop.f32.mrf.mxu0
  %1799 = vmatprep.mubr.bf16.mxu0 %v879
  %1800 = vmatmul.mubr.bf16.gmra.mxu0 %v878
  %v1801 = vpop.f32.mrf.mxu0
  %v1802 = vadd.f32 %v1513, %v1801
  %v1803 = vpop.f32.mrf.mxu0
  %v1804 = vpop.f32.mrf.mxu0
  %v1805 = vadd.f32 %v1516, %v1804
  %v1806 = vpop.f32.mrf.mxu0
  %1807 = vmatprep.mubr.bf16.mxu0 %v884
  %1808 = vmatmul.mubr.bf16.gmra.mxu0 %v883
  %v1809 = vpop.f32.mrf.mxu0
  %v1810 = vadd.f32 %v1521, %v1809
  %v1811 = vpop.f32.mrf.mxu0
  %v1812 = vpop.f32.mrf.mxu0
  %v1813 = vadd.f32 %v1524, %v1812
  %v1814 = vpop.f32.mrf.mxu0
  %1815 = vmatprep.mubr.bf16.mxu0 %v889
  %1816 = vmatmul.mubr.bf16.gmra.mxu0 %v888
  %v1817 = vpop.f32.mrf.mxu0
  %v1818 = vadd.f32 %v1529, %v1817
  %v1819 = vpop.f32.mrf.mxu0
  %v1820 = vpop.f32.mrf.mxu0
  %v1821 = vadd.f32 %v1532, %v1820
  %v1822 = vpop.f32.mrf.mxu0
  %1823 = vmatprep.mubr.bf16.mxu0 %v894
  %1824 = vmatmul.mubr.bf16.gmra.mxu0 %v893
  %v1825 = vpop.f32.mrf.mxu0
  %v1826 = vadd.f32 %v1537, %v1825
  %v1827 = vpop.f32.mrf.mxu0
  %v1828 = vpop.f32.mrf.mxu0
  %v1829 = vadd.f32 %v1540, %v1828
  %v1830 = vpop.f32.mrf.mxu0
  %1831 = vmatprep.mubr.bf16.mxu0 %v899
  %1832 = vmatmul.mubr.bf16.gmra.mxu0 %v898
  %v1833 = vpop.f32.mrf.mxu0
  %v1834 = vadd.f32 %v1545, %v1833
  %v1835 = vpop.f32.mrf.mxu0
  %v1836 = vpop.f32.mrf.mxu0
  %v1837 = vadd.f32 %v1548, %v1836
  %v1838 = vpop.f32.mrf.mxu0
  %1839 = vmatprep.mubr.bf16.mxu0 %v904
  %1840 = vmatmul.mubr.bf16.gmra.mxu0 %v903
  %v1841 = vpop.f32.mrf.mxu0
  %v1842 = vadd.f32 %v1553, %v1841
  %v1843 = vpop.f32.mrf.mxu0
  %v1844 = vpop.f32.mrf.mxu0
  %v1845 = vadd.f32 %v1556, %v1844
  %v1846 = vpop.f32.mrf.mxu0
  %1847 = vmatprep.mubr.bf16.mxu0 %v909
  %1848 = vmatmul.mubr.bf16.gmra.mxu0 %v908
  %v1849 = vpop.f32.mrf.mxu0
  %v1850 = vadd.f32 %v1561, %v1849
  %v1851 = vpop.f32.mrf.mxu0
  %v1852 = vpop.f32.mrf.mxu0
  %v1853 = vadd.f32 %v1564, %v1852
  %v1854 = vpop.f32.mrf.mxu0
  %1855 = vmatprep.mubr.bf16.mxu0 %v914
  %1856 = vmatmul.mubr.bf16.gmra.mxu0 %v913
  %v1857 = vpop.f32.mrf.mxu0
  %v1858 = vadd.f32 %v1569, %v1857
  %v1859 = vpop.f32.mrf.mxu0
  %v1860 = vpop.f32.mrf.mxu0
  %v1861 = vadd.f32 %v1572, %v1860
  %v1862 = vpop.f32.mrf.mxu0
  %1863 = vmatprep.mubr.bf16.mxu0 %v919
  %1864 = vmatmul.mubr.bf16.gmra.mxu0 %v918
  %v1865 = vpop.f32.mrf.mxu0
  %v1866 = vadd.f32 %v1577, %v1865
  %v1867 = vpop.f32.mrf.mxu0
  %v1868 = vpop.f32.mrf.mxu0
  %v1869 = vadd.f32 %v1580, %v1868
  %v1870 = vpop.f32.mrf.mxu0
  %1871 = vmatprep.mubr.bf16.mxu0 %v924
  %1872 = vmatmul.mubr.bf16.gmra.mxu0 %v923
  %v1873 = vpop.f32.mrf.mxu0
  %v1874 = vadd.f32 %v1585, %v1873
  %v1875 = vpop.f32.mrf.mxu0
  %v1876 = vpop.f32.mrf.mxu0
  %v1877 = vadd.f32 %v1588, %v1876
  %v1878 = vpop.f32.mrf.mxu0
  %1879 = vmatprep.mubr.bf16.mxu0 %v929
  %1880 = vmatmul.mubr.bf16.gmra.mxu0 %v928
  %v1881 = vpop.f32.mrf.mxu0
  %v1882 = vadd.f32 %v1593, %v1881
  %v1883 = vpop.f32.mrf.mxu0
  %v1884 = vpop.f32.mrf.mxu0
  %v1885 = vadd.f32 %v1596, %v1884
  %v1886 = vpop.f32.mrf.mxu0
  %1887 = vmatprep.mubr.bf16.mxu0 %v934
  %1888 = vmatmul.mubr.bf16.gmra.mxu0 %v933
  %v1889 = vpop.f32.mrf.mxu0
  %v1890 = vadd.f32 %v1601, %v1889
  %v1891 = vpop.f32.mrf.mxu0
  %v1892 = vpop.f32.mrf.mxu0
  %v1893 = vadd.f32 %v1604, %v1892
  %v1894 = vpop.f32.mrf.mxu0
  %1895 = vmatprep.mubr.bf16.mxu0 %v939
  %1896 = vmatmul.mubr.bf16.gmra.mxu0 %v938
  %v1897 = vpop.f32.mrf.mxu0
  %v1898 = vadd.f32 %v1609, %v1897
  %v1899 = vpop.f32.mrf.mxu0
  %v1900 = vpop.f32.mrf.mxu0
  %v1901 = vadd.f32 %v1612, %v1900
  %v1902 = vpop.f32.mrf.mxu0
  %1903 = vmatprep.mubr.bf16.mxu0 %v944
  %1904 = vmatmul.mubr.bf16.gmra.mxu0 %v943
  %v1905 = vpop.f32.mrf.mxu0
  %v1906 = vadd.f32 %v1617, %v1905
  %v1907 = vpop.f32.mrf.mxu0
  %v1908 = vpop.f32.mrf.mxu0
  %v1909 = vadd.f32 %v1620, %v1908
  %v1910 = vpop.f32.mrf.mxu0
  %1911 = vmatprep.mubr.bf16.mxu0 %v949
  %1912 = vmatmul.mubr.bf16.gmra.mxu0 %v948
  %v1913 = vpop.f32.mrf.mxu0
  %v1914 = vadd.f32 %v1625, %v1913
  %v1915 = vpop.f32.mrf.mxu0
  %v1916 = vpop.f32.mrf.mxu0
  %v1917 = vadd.f32 %v1628, %v1916
  %v1918 = vpop.f32.mrf.mxu0
  %1919 = vmatprep.mubr.bf16.mxu0 %v954
  %1920 = vmatmul.mubr.bf16.gmra.mxu0 %v953
  %v1921 = vpop.f32.mrf.mxu0
  %v1922 = vadd.f32 %v1633, %v1921
  %v1923 = vpop.f32.mrf.mxu0
  %v1924 = vpop.f32.mrf.mxu0
  %v1925 = vadd.f32 %v1636, %v1924
  %v1926 = vpop.f32.mrf.mxu0
  %1927 = vmatprep.mubr.bf16.mxu0 %v959
  %1928 = vmatmul.mubr.bf16.gmra.mxu0 %v958
  %v1929 = vpop.f32.mrf.mxu0
  %v1930 = vadd.f32 %v1641, %v1929
  %v1931 = vpop.f32.mrf.mxu0
  %v1932 = vpop.f32.mrf.mxu0
  %v1933 = vadd.f32 %v1644, %v1932
  %v1934 = vpop.f32.mrf.mxu0
  %1935 = vmatprep.mubr.bf16.mxu0 %v964
  %1936 = vmatmul.mubr.bf16.gmra.mxu0 %v963
  %v1937 = vpop.f32.mrf.mxu0
  %v1938 = vadd.f32 %v1649, %v1937
  %v1939 = vpop.f32.mrf.mxu0
  %v1940 = vpop.f32.mrf.mxu0
  %v1941 = vadd.f32 %v1652, %v1940
  %v1942 = vpop.f32.mrf.mxu0
  %1943 = vdwg.mxu0
  %1944 = vmatprep.subr.bf16.mxu0 0
  %1945 = vmatpush1.bf16.msra.mxu0 %v1325
  %1946 = vmatprep.subr.bf16.mxu0 0
  %1947 = vmatpush1.bf16.msra.mxu0 %v1324
  %1948 = vmatprep.subr.bf16.mxu0 0
  %1949 = vmatpush1.bf16.msra.mxu0 %v1323
  %1950 = vmatprep.subr.bf16.mxu0 0
  %1951 = vmatpush1.bf16.msra.mxu0 %v1322
  %1952 = vmatprep.subr.bf16.mxu0 0
  %1953 = vmatpush1.bf16.msra.mxu0 %v1321
  %1954 = vmatprep.subr.bf16.mxu0 0
  %1955 = vmatpush1.bf16.msra.mxu0 %v1320
  %1956 = vmatprep.subr.bf16.mxu0 0
  %1957 = vmatpush1.bf16.msra.mxu0 %v1319
  %1958 = vmatprep.subr.bf16.mxu0 0
  %1959 = vmatpush1.bf16.msra.mxu0 %v1318
  %1960 = vmatprep.subr.bf16.mxu0 0
  %1961 = vmatpush2.bf16.msra.mxu0 0
  %1962 = vmatprep.subr.bf16.mxu0 0
  %1963 = vmatpush2.bf16.msra.mxu0 0
  %1964 = vmatprep.subr.bf16.mxu0 0
  %1965 = vmatpush2.bf16.msra.mxu0 0
  %1966 = vmatprep.subr.bf16.mxu0 0
  %1967 = vmatpush2.bf16.msra.mxu0 0
  %1968 = vmatprep.subr.bf16.mxu0 0
  %1969 = vmatpush2.bf16.msra.mxu0 0
  %1970 = vmatprep.subr.bf16.mxu0 0
  %1971 = vmatpush2.bf16.msra.mxu0 0
  %1972 = vmatprep.subr.bf16.mxu0 0
  %1973 = vmatpush2.bf16.msra.mxu0 0
  %1974 = vmatprep.subr.bf16.mxu0 0
  %1975 = vmatpush2.bf16.msra.mxu0 0
  %1976 = vmatprep.mubr.bf16.mxu0 0
  %1977 = vmatmul.mubr.bf16.gmra.mxu0 %v810
  %v1978 = vpop.f32.mrf.mxu0
  %v1979 = vadd.f32 %v1690, %v1978
  %v1980 = vpop.f32.mrf.mxu0
  %v1981 = vpop.f32.mrf.mxu0
  %v1982 = vadd.f32 %v1693, %v1981
  %v1983 = vpop.f32.mrf.mxu0
  %1984 = vmatprep.mubr.bf16.mxu0 0
  %1985 = vmatmul.mubr.bf16.gmra.mxu0 %v815
  %v1986 = vpop.f32.mrf.mxu0
  %v1987 = vadd.f32 %v1698, %v1986
  %v1988 = vpop.f32.mrf.mxu0
  %v1989 = vpop.f32.mrf.mxu0
  %v1990 = vadd.f32 %v1701, %v1989
  %v1991 = vpop.f32.mrf.mxu0
  %1992 = vmatprep.mubr.bf16.mxu0 0
  %1993 = vmatmul.mubr.bf16.gmra.mxu0 %v820
  %v1994 = vpop.f32.mrf.mxu0
  %v1995 = vadd.f32 %v1706, %v1994
  %v1996 = vpop.f32.mrf.mxu0
  %v1997 = vpop.f32.mrf.mxu0
  %v1998 = vadd.f32 %v1709, %v1997
  %v1999 = vpop.f32.mrf.mxu0
  %2000 = vmatprep.mubr.bf16.mxu0 0
  %2001 = vmatmul.mubr.bf16.gmra.mxu0 %v825
  %v2002 = vpop.f32.mrf.mxu0
  %v2003 = vadd.f32 %v1714, %v2002
  %v2004 = vpop.f32.mrf.mxu0
  %v2005 = vpop.f32.mrf.mxu0
  %v2006 = vadd.f32 %v1717, %v2005
  %v2007 = vpop.f32.mrf.mxu0
  %2008 = vmatprep.mubr.bf16.mxu0 0
  %2009 = vmatmul.mubr.bf16.gmra.mxu0 %v830
  %v2010 = vpop.f32.mrf.mxu0
  %v2011 = vadd.f32 %v1722, %v2010
  %v2012 = vpop.f32.mrf.mxu0
  %v2013 = vpop.f32.mrf.mxu0
  %v2014 = vadd.f32 %v1725, %v2013
  %v2015 = vpop.f32.mrf.mxu0
  %2016 = vmatprep.mubr.bf16.mxu0 0
  %2017 = vmatmul.mubr.bf16.gmra.mxu0 %v835
  %v2018 = vpop.f32.mrf.mxu0
  %v2019 = vadd.f32 %v1730, %v2018
  %v2020 = vpop.f32.mrf.mxu0
  %v2021 = vpop.f32.mrf.mxu0
  %v2022 = vadd.f32 %v1733, %v2021
  %v2023 = vpop.f32.mrf.mxu0
  %2024 = vmatprep.mubr.bf16.mxu0 0
  %2025 = vmatmul.mubr.bf16.gmra.mxu0 %v840
  %v2026 = vpop.f32.mrf.mxu0
  %v2027 = vadd.f32 %v1738, %v2026
  %v2028 = vpop.f32.mrf.mxu0
  %v2029 = vpop.f32.mrf.mxu0
  %v2030 = vadd.f32 %v1741, %v2029
  %v2031 = vpop.f32.mrf.mxu0
  %2032 = vmatprep.mubr.bf16.mxu0 0
  %2033 = vmatmul.mubr.bf16.gmra.mxu0 %v845
  %v2034 = vpop.f32.mrf.mxu0
  %v2035 = vadd.f32 %v1746, %v2034
  %v2036 = vpop.f32.mrf.mxu0
  %v2037 = vpop.f32.mrf.mxu0
  %v2038 = vadd.f32 %v1749, %v2037
  %v2039 = vpop.f32.mrf.mxu0
  %2040 = vmatprep.mubr.bf16.mxu0 0
  %2041 = vmatmul.mubr.bf16.gmra.mxu0 %v850
  %v2042 = vpop.f32.mrf.mxu0
  %v2043 = vadd.f32 %v1754, %v2042
  %v2044 = vpop.f32.mrf.mxu0
  %v2045 = vpop.f32.mrf.mxu0
  %v2046 = vadd.f32 %v1757, %v2045
  %v2047 = vpop.f32.mrf.mxu0
  %2048 = vmatprep.mubr.bf16.mxu0 0
  %2049 = vmatmul.mubr.bf16.gmra.mxu0 %v855
  %v2050 = vpop.f32.mrf.mxu0
  %v2051 = vadd.f32 %v1762, %v2050
  %v2052 = vpop.f32.mrf.mxu0
  %v2053 = vpop.f32.mrf.mxu0
  %v2054 = vadd.f32 %v1765, %v2053
  %v2055 = vpop.f32.mrf.mxu0
  %2056 = vmatprep.mubr.bf16.mxu0 0
  %2057 = vmatmul.mubr.bf16.gmra.mxu0 %v860
  %v2058 = vpop.f32.mrf.mxu0
  %v2059 = vadd.f32 %v1770, %v2058
  %v2060 = vpop.f32.mrf.mxu0
  %v2061 = vpop.f32.mrf.mxu0
  %v2062 = vadd.f32 %v1773, %v2061
  %v2063 = vpop.f32.mrf.mxu0
  %2064 = vmatprep.mubr.bf16.mxu0 0
  %2065 = vmatmul.mubr.bf16.gmra.mxu0 %v865
  %v2066 = vpop.f32.mrf.mxu0
  %v2067 = vadd.f32 %v1778, %v2066
  %v2068 = vpop.f32.mrf.mxu0
  %v2069 = vpop.f32.mrf.mxu0
  %v2070 = vadd.f32 %v1781, %v2069
  %v2071 = vpop.f32.mrf.mxu0
  %2072 = vmatprep.mubr.bf16.mxu0 0
  %2073 = vmatmul.mubr.bf16.gmra.mxu0 %v870
  %v2074 = vpop.f32.mrf.mxu0
  %v2075 = vadd.f32 %v1786, %v2074
  %v2076 = vpop.f32.mrf.mxu0
  %v2077 = vpop.f32.mrf.mxu0
  %v2078 = vadd.f32 %v1789, %v2077
  %v2079 = vpop.f32.mrf.mxu0
  %2080 = vmatprep.mubr.bf16.mxu0 0
  %2081 = vmatmul.mubr.bf16.gmra.mxu0 %v875
  %v2082 = vpop.f32.mrf.mxu0
  %v2083 = vadd.f32 %v1794, %v2082
  %v2084 = vpop.f32.mrf.mxu0
  %v2085 = vpop.f32.mrf.mxu0
  %v2086 = vadd.f32 %v1797, %v2085
  %v2087 = vpop.f32.mrf.mxu0
  %2088 = vmatprep.mubr.bf16.mxu0 0
  %2089 = vmatmul.mubr.bf16.gmra.mxu0 %v880
  %v2090 = vpop.f32.mrf.mxu0
  %v2091 = vadd.f32 %v1802, %v2090
  %v2092 = vpop.f32.mrf.mxu0
  %v2093 = vpop.f32.mrf.mxu0
  %v2094 = vadd.f32 %v1805, %v2093
  %v2095 = vpop.f32.mrf.mxu0
  %2096 = vmatprep.mubr.bf16.mxu0 0
  %2097 = vmatmul.mubr.bf16.gmra.mxu0 %v885
  %v2098 = vpop.f32.mrf.mxu0
  %v2099 = vadd.f32 %v1810, %v2098
  %v2100 = vpop.f32.mrf.mxu0
  %v2101 = vpop.f32.mrf.mxu0
  %v2102 = vadd.f32 %v1813, %v2101
  %v2103 = vpop.f32.mrf.mxu0
  %2104 = vmatprep.mubr.bf16.mxu0 0
  %2105 = vmatmul.mubr.bf16.gmra.mxu0 %v890
  %v2106 = vpop.f32.mrf.mxu0
  %v2107 = vadd.f32 %v1818, %v2106
  %v2108 = vpop.f32.mrf.mxu0
  %v2109 = vpop.f32.mrf.mxu0
  %v2110 = vadd.f32 %v1821, %v2109
  %v2111 = vpop.f32.mrf.mxu0
  %2112 = vmatprep.mubr.bf16.mxu0 0
  %2113 = vmatmul.mubr.bf16.gmra.mxu0 %v895
  %v2114 = vpop.f32.mrf.mxu0
  %v2115 = vadd.f32 %v1826, %v2114
  %v2116 = vpop.f32.mrf.mxu0
  %v2117 = vpop.f32.mrf.mxu0
  %v2118 = vadd.f32 %v1829, %v2117
  %v2119 = vpop.f32.mrf.mxu0
  %2120 = vmatprep.mubr.bf16.mxu0 0
  %2121 = vmatmul.mubr.bf16.gmra.mxu0 %v900
  %v2122 = vpop.f32.mrf.mxu0
  %v2123 = vadd.f32 %v1834, %v2122
  %v2124 = vpop.f32.mrf.mxu0
  %v2125 = vpop.f32.mrf.mxu0
  %v2126 = vadd.f32 %v1837, %v2125
  %v2127 = vpop.f32.mrf.mxu0
  %2128 = vmatprep.mubr.bf16.mxu0 0
  %2129 = vmatmul.mubr.bf16.gmra.mxu0 %v905
  %v2130 = vpop.f32.mrf.mxu0
  %v2131 = vadd.f32 %v1842, %v2130
  %v2132 = vpop.f32.mrf.mxu0
  %v2133 = vpop.f32.mrf.mxu0
  %v2134 = vadd.f32 %v1845, %v2133
  %v2135 = vpop.f32.mrf.mxu0
  %2136 = vmatprep.mubr.bf16.mxu0 0
  %2137 = vmatmul.mubr.bf16.gmra.mxu0 %v910
  %v2138 = vpop.f32.mrf.mxu0
  %v2139 = vadd.f32 %v1850, %v2138
  %v2140 = vpop.f32.mrf.mxu0
  %v2141 = vpop.f32.mrf.mxu0
  %v2142 = vadd.f32 %v1853, %v2141
  %v2143 = vpop.f32.mrf.mxu0
  %2144 = vmatprep.mubr.bf16.mxu0 0
  %2145 = vmatmul.mubr.bf16.gmra.mxu0 %v915
  %v2146 = vpop.f32.mrf.mxu0
  %v2147 = vadd.f32 %v1858, %v2146
  %v2148 = vpop.f32.mrf.mxu0
  %v2149 = vpop.f32.mrf.mxu0
  %v2150 = vadd.f32 %v1861, %v2149
  %v2151 = vpop.f32.mrf.mxu0
  %2152 = vmatprep.mubr.bf16.mxu0 0
  %2153 = vmatmul.mubr.bf16.gmra.mxu0 %v920
  %v2154 = vpop.f32.mrf.mxu0
  %v2155 = vadd.f32 %v1866, %v2154
  %v2156 = vpop.f32.mrf.mxu0
  %v2157 = vpop.f32.mrf.mxu0
  %v2158 = vadd.f32 %v1869, %v2157
  %v2159 = vpop.f32.mrf.mxu0
  %2160 = vmatprep.mubr.bf16.mxu0 0
  %2161 = vmatmul.mubr.bf16.gmra.mxu0 %v925
  %v2162 = vpop.f32.mrf.mxu0
  %v2163 = vadd.f32 %v1874, %v2162
  %v2164 = vpop.f32.mrf.mxu0
  %v2165 = vpop.f32.mrf.mxu0
  %v2166 = vadd.f32 %v1877, %v2165
  %v2167 = vpop.f32.mrf.mxu0
  %2168 = vmatprep.mubr.bf16.mxu0 0
  %2169 = vmatmul.mubr.bf16.gmra.mxu0 %v930
  %v2170 = vpop.f32.mrf.mxu0
  %v2171 = vadd.f32 %v1882, %v2170
  %v2172 = vpop.f32.mrf.mxu0
  %v2173 = vpop.f32.mrf.mxu0
  %v2174 = vadd.f32 %v1885, %v2173
  %v2175 = vpop.f32.mrf.mxu0
  %2176 = vmatprep.mubr.bf16.mxu0 0
  %2177 = vmatmul.mubr.bf16.gmra.mxu0 %v935
  %v2178 = vpop.f32.mrf.mxu0
  %v2179 = vadd.f32 %v1890, %v2178
  %v2180 = vpop.f32.mrf.mxu0
  %v2181 = vpop.f32.mrf.mxu0
  %v2182 = vadd.f32 %v1893, %v2181
  %v2183 = vpop.f32.mrf.mxu0
  %2184 = vmatprep.mubr.bf16.mxu0 0
  %2185 = vmatmul.mubr.bf16.gmra.mxu0 %v940
  %v2186 = vpop.f32.mrf.mxu0
  %v2187 = vadd.f32 %v1898, %v2186
  %v2188 = vpop.f32.mrf.mxu0
  %v2189 = vpop.f32.mrf.mxu0
  %v2190 = vadd.f32 %v1901, %v2189
  %v2191 = vpop.f32.mrf.mxu0
  %2192 = vmatprep.mubr.bf16.mxu0 0
  %2193 = vmatmul.mubr.bf16.gmra.mxu0 %v945
  %v2194 = vpop.f32.mrf.mxu0
  %v2195 = vadd.f32 %v1906, %v2194
  %v2196 = vpop.f32.mrf.mxu0
  %v2197 = vpop.f32.mrf.mxu0
  %v2198 = vadd.f32 %v1909, %v2197
  %v2199 = vpop.f32.mrf.mxu0
  %2200 = vmatprep.mubr.bf16.mxu0 0
  %2201 = vmatmul.mubr.bf16.gmra.mxu0 %v950
  %v2202 = vpop.f32.mrf.mxu0
  %v2203 = vadd.f32 %v1914, %v2202
  %v2204 = vpop.f32.mrf.mxu0
  %v2205 = vpop.f32.mrf.mxu0
  %v2206 = vadd.f32 %v1917, %v2205
  %v2207 = vpop.f32.mrf.mxu0
  %2208 = vmatprep.mubr.bf16.mxu0 0
  %2209 = vmatmul.mubr.bf16.gmra.mxu0 %v955
  %v2210 = vpop.f32.mrf.mxu0
  %v2211 = vadd.f32 %v1922, %v2210
  %v2212 = vpop.f32.mrf.mxu0
  %v2213 = vpop.f32.mrf.mxu0
  %v2214 = vadd.f32 %v1925, %v2213
  %v2215 = vpop.f32.mrf.mxu0
  %2216 = vmatprep.mubr.bf16.mxu0 0
  %2217 = vmatmul.mubr.bf16.gmra.mxu0 %v960
  %v2218 = vpop.f32.mrf.mxu0
  %v2219 = vadd.f32 %v1930, %v2218
  %v2220 = vpop.f32.mrf.mxu0
  %v2221 = vpop.f32.mrf.mxu0
  %v2222 = vadd.f32 %v1933, %v2221
  %v2223 = vpop.f32.mrf.mxu0
  %2224 = vmatprep.mubr.bf16.mxu0 0
  %2225 = vmatmul.mubr.bf16.gmra.mxu0 %v965
  %v2226 = vpop.f32.mrf.mxu0
  %v2227 = vadd.f32 %v1938, %v2226
  %v2228 = vpop.f32.mrf.mxu0
  %v2229 = vpop.f32.mrf.mxu0
  %v2230 = vadd.f32 %v1941, %v2229
  %v2231 = vpop.f32.mrf.mxu0
  %2232 = vdwg.mxu0
  %v2233 = vmax.f32 %v1979, 0.0
  %v2234 = vmax.f32 %v1982, 0.0
  %v2235 = vmax.f32 %v1987, 0.0
  %v2236 = vmax.f32 %v1990, 0.0
  %v2237 = vmax.f32 %v1995, 0.0
  %v2238 = vmax.f32 %v1998, 0.0
  %v2239 = vmax.f32 %v2003, 0.0
  %v2240 = vmax.f32 %v2006, 0.0
  %v2241 = vmax.f32 %v2011, 0.0
  %v2242 = vmax.f32 %v2014, 0.0
  %v2243 = vmax.f32 %v2019, 0.0
  %v2244 = vmax.f32 %v2022, 0.0
  %v2245 = vmax.f32 %v2027, 0.0
  %v2246 = vmax.f32 %v2030, 0.0
  %v2247 = vmax.f32 %v2035, 0.0
  %v2248 = vmax.f32 %v2038, 0.0
  %v2249 = vmax.f32 %v2043, 0.0
  %v2250 = vmax.f32 %v2046, 0.0
  %v2251 = vmax.f32 %v2051, 0.0
  %v2252 = vmax.f32 %v2054, 0.0
  %v2253 = vmax.f32 %v2059, 0.0
  %v2254 = vmax.f32 %v2062, 0.0
  %v2255 = vmax.f32 %v2067, 0.0
  %v2256 = vmax.f32 %v2070, 0.0
  %v2257 = vmax.f32 %v2075, 0.0
  %v2258 = vmax.f32 %v2078, 0.0
  %v2259 = vmax.f32 %v2083, 0.0
  %v2260 = vmax.f32 %v2086, 0.0
  %v2261 = vmax.f32 %v2091, 0.0
  %v2262 = vmax.f32 %v2094, 0.0
  %v2263 = vmax.f32 %v2099, 0.0
  %v2264 = vmax.f32 %v2102, 0.0
  %v2265 = vmax.f32 %v2107, 0.0
  %v2266 = vmax.f32 %v2110, 0.0
  %v2267 = vmax.f32 %v2115, 0.0
  %v2268 = vmax.f32 %v2118, 0.0
  %v2269 = vmax.f32 %v2123, 0.0
  %v2270 = vmax.f32 %v2126, 0.0
  %v2271 = vmax.f32 %v2131, 0.0
  %v2272 = vmax.f32 %v2134, 0.0
  %v2273 = vmax.f32 %v2139, 0.0
  %v2274 = vmax.f32 %v2142, 0.0
  %v2275 = vmax.f32 %v2147, 0.0
  %v2276 = vmax.f32 %v2150, 0.0
  %v2277 = vmax.f32 %v2155, 0.0
  %v2278 = vmax.f32 %v2158, 0.0
  %v2279 = vmax.f32 %v2163, 0.0
  %v2280 = vmax.f32 %v2166, 0.0
  %v2281 = vmax.f32 %v2171, 0.0
  %v2282 = vmax.f32 %v2174, 0.0
  %v2283 = vmax.f32 %v2179, 0.0
  %v2284 = vmax.f32 %v2182, 0.0
  %v2285 = vmax.f32 %v2187, 0.0
  %v2286 = vmax.f32 %v2190, 0.0
  %v2287 = vmax.f32 %v2195, 0.0
  %v2288 = vmax.f32 %v2198, 0.0
  %v2289 = vmax.f32 %v2203, 0.0
  %v2290 = vmax.f32 %v2206, 0.0
  %v2291 = vmax.f32 %v2211, 0.0
  %v2292 = vmax.f32 %v2214, 0.0
  %v2293 = vmax.f32 %v2219, 0.0
  %v2294 = vmax.f32 %v2222, 0.0
  %v2295 = vmax.f32 %v2227, 0.0
  %v2296 = vmax.f32 %v2230, 0.0
  %2297 = vst [vmem:[%s3] sm:$0xff] %v2233
  %2298 = vst [vmem:[%s3 + $0x8] sm:$0xff] %v2234
  %2299 = vst [vmem:[%s3 + $0x10] sm:$0xff] %v2235
  %2300 = vst [vmem:[%s3 + $0x18] sm:$0xff] %v2236
  %2301 = vst [vmem:[%s3 + $0x20] sm:$0xff] %v2237
  %2302 = vst [vmem:[%s3 + $0x28] sm:$0xff] %v2238
  %2303 = vst [vmem:[%s3 + $0x30] sm:$0xff] %v2239
  %2304 = vst [vmem:[%s3 + $0x38] sm:$0xff] %v2240
  %2305 = vst [vmem:[%s3 + $0x40] sm:$0xff] %v2241
  %2306 = vst [vmem:[%s3 + $0x48] sm:$0xff] %v2242
  %2307 = vst [vmem:[%s3 + $0x50] sm:$0xff] %v2243
  %2308 = vst [vmem:[%s3 + $0x58] sm:$0xff] %v2244
  %2309 = vst [vmem:[%s3 + $0x60] sm:$0xff] %v2245
  %2310 = vst [vmem:[%s3 + $0x68] sm:$0xff] %v2246
  %2311 = vst [vmem:[%s3 + $0x70] sm:$0xff] %v2247
  %2312 = vst [vmem:[%s3 + $0x78] sm:$0xff] %v2248
  %2313 = vst [vmem:[%s3 + $0x80] sm:$0xff] %v2249
  %2314 = vst [vmem:[%s3 + $0x88] sm:$0xff] %v2250
  %2315 = vst [vmem:[%s3 + $0x90] sm:$0xff] %v2251
  %2316 = vst [vmem:[%s3 + $0x98] sm:$0xff] %v2252
  %2317 = vst [vmem:[%s3 + $0xa0] sm:$0xff] %v2253
  %2318 = vst [vmem:[%s3 + $0xa8] sm:$0xff] %v2254
  %2319 = vst [vmem:[%s3 + $0xb0] sm:$0xff] %v2255
  %2320 = vst [vmem:[%s3 + $0xb8] sm:$0xff] %v2256
  %2321 = vst [vmem:[%s3 + $0xc0] sm:$0xff] %v2257
  %2322 = vst [vmem:[%s3 + $0xc8] sm:$0xff] %v2258
  %2323 = vst [vmem:[%s3 + $0xd0] sm:$0xff] %v2259
  %2324 = vst [vmem:[%s3 + $0xd8] sm:$0xff] %v2260
  %2325 = vst [vmem:[%s3 + $0xe0] sm:$0xff] %v2261
  %2326 = vst [vmem:[%s3 + $0xe8] sm:$0xff] %v2262
  %2327 = vst [vmem:[%s3 + $0xf0] sm:$0xff] %v2263
  %2328 = vst [vmem:[%s3 + $0xf8] sm:$0xff] %v2264
  %2329 = vst [vmem:[%s3 + $0x100] sm:$0xff] %v2265
  %2330 = vst [vmem:[%s3 + $0x108] sm:$0xff] %v2266
  %2331 = vst [vmem:[%s3 + $0x110] sm:$0xff] %v2267
  %2332 = vst [vmem:[%s3 + $0x118] sm:$0xff] %v2268
  %2333 = vst [vmem:[%s3 + $0x120] sm:$0xff] %v2269
  %2334 = vst [vmem:[%s3 + $0x128] sm:$0xff] %v2270
  %2335 = vst [vmem:[%s3 + $0x130] sm:$0xff] %v2271
  %2336 = vst [vmem:[%s3 + $0x138] sm:$0xff] %v2272
  %2337 = vst [vmem:[%s3 + $0x140] sm:$0xff] %v2273
  %2338 = vst [vmem:[%s3 + $0x148] sm:$0xff] %v2274
  %2339 = vst [vmem:[%s3 + $0x150] sm:$0xff] %v2275
  %2340 = vst [vmem:[%s3 + $0x158] sm:$0xff] %v2276
  %2341 = vst [vmem:[%s3 + $0x160] sm:$0xff] %v2277
  %2342 = vst [vmem:[%s3 + $0x168] sm:$0xff] %v2278
  %2343 = vst [vmem:[%s3 + $0x170] sm:$0xff] %v2279
  %2344 = vst [vmem:[%s3 + $0x178] sm:$0xff] %v2280
  %2345 = vst [vmem:[%s3 + $0x180] sm:$0xff] %v2281
  %2346 = vst [vmem:[%s3 + $0x188] sm:$0xff] %v2282
  %2347 = vst [vmem:[%s3 + $0x190] sm:$0xff] %v2283
  %2348 = vst [vmem:[%s3 + $0x198] sm:$0xff] %v2284
  %2349 = vst [vmem:[%s3 + $0x1a0] sm:$0xff] %v2285
  %2350 = vst [vmem:[%s3 + $0x1a8] sm:$0xff] %v2286
  %2351 = vst [vmem:[%s3 + $0x1b0] sm:$0xff] %v2287
  %2352 = vst [vmem:[%s3 + $0x1b8] sm:$0xff] %v2288
  %2353 = vst [vmem:[%s3 + $0x1c0] sm:$0xff] %v2289
  %2354 = vst [vmem:[%s3 + $0x1c8] sm:$0xff] %v2290
  %2355 = vst [vmem:[%s3 + $0x1d0] sm:$0xff] %v2291
  %2356 = vst [vmem:[%s3 + $0x1d8] sm:$0xff] %v2292
  %2357 = vst [vmem:[%s3 + $0x1e0] sm:$0xff] %v2293
  %2358 = vst [vmem:[%s3 + $0x1e8] sm:$0xff] %v2294
  %2359 = vst [vmem:[%s3 + $0x1f0] sm:$0xff] %v2295
  %2360 = vst [vmem:[%s3 + $0x1f8] sm:$0xff] %v2296
  // Predicated region
  $region14: #{net_forward.6} parent=0 // pred_check
    _
  $region15: #{net_forward.6} parent=0 // pred_check_branch
    %2362 = sbr.rel (0) target = $region17
  $region16: #{net_forward.6} parent=0 // pred_region
    _
  $region17: #{net_forward.6} parent=0 // pred_fallthru
    _
  // Predicated region
  $region18: #{net_forward.6} parent=0 // pred_check
    _
  $region19: #{net_forward.6} parent=0 // pred_check_branch
    %2364 = sbr.rel (0) target = $region21
  $region20: #{net_forward.6} parent=0 // pred_region
    _
  $region21: #{net_forward.6} parent=0 // pred_fallthru
    _

// kernel: net_forward.7
$region0: #{net_forward.7}
  #allocation0 [shape = 'u32[]', space=smem, size = 0x4, offset = 0x4, fixed_abs, tag = 'smem constant byte address 0x4 - core index']
  #allocation1 [shape = 'u32[144,128]{1,0:T(1,128)}', space=vmem, size = 0x12000, scoped, tag = 'internal scratch']
  #allocation2 [shape = 'f32[8,512]{1,0:T(8,128)}', space=vmem, size = 0x4000, scoped, tag = 'scratch operand']
  %s0 = inlined_call_operand.vmem [shape: bf16[8,16384], index: 0, kind: input, shape index: {}]
  %s1 = inlined_call_operand.vmem [shape: bf16[16384,512], index: 1, kind: input, shape index: {}]
  %s2 = inlined_call_operand.vmem [shape: f32[1,512], index: 2, kind: input, shape index: {}]
  %s3 = inlined_call_operand.vmem [shape: f32[512,128], index: 3, kind: input, shape index: {}]
  %s4 = inlined_call_operand.vmem [shape: f32[1,128], index: 4, kind: input, shape index: {}]
  %s5 = inlined_call_operand.vmem [shape: f32[8,128], index: 5, kind: output, shape index: {}]
  %s6 = sld [smem:[#allocation0]]
  $region61: #{net_forward.7} parent=0
    _
  %s8 = ssub.s32 1, %s6
  %s9 = scalar_select 0, %s8, %s6
  loop: start=0, step=1, limit=6
  $region2: #{net_forward.7} parent=0 // loop_pre_header
    _
  $region3: #{net_forward.7} parent=0 // loop_header
    %s11 = sphi 0, %s15
    %p12 = scmp.ge.s32.totalorder %s11, 6
    %s18 = sphi 0, %s30
    %s19 = sphi 0, %s26
    %s20 = sphi 0, %s18
    %s21 = sphi 0, %s19
    %s22 = sphi 0, %s20
    %s23 = sphi 0, %s21
    %s35 = sphi 0, %s37
    %s38 = sphi 0, %s35
    %s39 = sphi 0, %s38
    %s55 = sphi 0, %s39
    %s61 = sphi 0, %s63
    %s64 = sphi 0, %s61
    %s65 = sphi 0, %s64
    %s81 = sphi 0, %s65
    %s85 = sphi 0, %s85
    %s87 = sphi 0, %s85
    %s88 = sphi 0, %s87
    %s102 = sphi 0, %s88
    %s106 = sphi 0, %s106
    %s108 = sphi 0, %s106
    %s109 = sphi 0, %s108
    %s123 = sphi 0, %s109
    %s127 = sphi 0, %s127
    %s129 = sphi 0, %s127
    %s130 = sphi 0, %s129
    %s144 = sphi 0, %s130
    %s150 = sphi 0, %s152
    %s153 = sphi 0, %s150
    %s154 = sphi 0, %s153
    %s170 = sphi 0, %s154
  $region4: #{net_forward.7} parent=0 // loop_header_branch
    %14 = sbr.rel (%p12) target = $region8
  $region5: #{net_forward.7} parent=0 // loop_body
    %s16 = ssub.s32 %s11, 1
    %s17 = ssub.s32 %s11, 2
    %s24 = sadd.s32 1, %s19
    %p25 = scmp.ge.s32.totalorder %s24, 4
    %s26 = scalar_select %p25, 0, %s24
    %s27 = sadd.s32 1, %s18
    %s28 = scalar_select %p25, %s27, %s18
    %p29 = scmp.ge.s32.totalorder %s28, 1
    %s30 = scalar_select %p29, 0, %s28
    %s31 = ssub.s32 %s18, %s30
    %s32 = ssub.s32 %s19, %s26
    %s33 = sor.u32 %s31, %s32
    %p34 = scmp.eq.s32.totalorder %s33, 0
    %s36 = sadd.s32 %s35, 1
    %s37 = scalar_select %p34, %s35, %s36
    %p40 = pneg %p34
    %p41 = scmp.eq.s32.totalorder %s11, 3
    %p42 = por %p40, %p41
    %p43 = scmp.ne.s32.totalorder %s35, %s38
    %p44 = scmp.eq.s32.totalorder %s11, 0
    %p45 = por %p43, %p44
    %p46 = scmp.ne.s32.totalorder %s35, %s38
    %p47 = scmp.eq.s32.totalorder %s16, 3
    %p48 = por %p46, %p47
    %p49 = scmp.ne.s32.totalorder %s38, %s39
    %p50 = scmp.eq.s32.totalorder %s16, 0
    %p51 = por %p49, %p50
    %p52 = scmp.ne.s32.totalorder %s38, %s39
    %p53 = scmp.eq.s32.totalorder %s17, 3
    %p54 = por %p52, %p53
    %p56 = scmp.ne.s32.totalorder %s39, %s55
    %p57 = scmp.eq.s32.totalorder %s17, 0
    %p58 = por %p56, %p57
    %s59 = ssub.s32 %s19, %s26
    %p60 = scmp.eq.s32.totalorder %s59, 0
    %s62 = sadd.s32 %s61, 1
    %s63 = scalar_select %p60, %s61, %s62
    %p66 = pneg %p60
    %p67 = scmp.eq.s32.totalorder %s11, 3
    %p68 = por %p66, %p67
    %p69 = scmp.ne.s32.totalorder %s61, %s64
    %p70 = scmp.eq.s32.totalorder %s11, 0
    %p71 = por %p69, %p70
    %p72 = scmp.ne.s32.totalorder %s61, %s64
    %p73 = scmp.eq.s32.totalorder %s16, 3
    %p74 = por %p72, %p73
    %p75 = scmp.ne.s32.totalorder %s64, %s65
    %p76 = scmp.eq.s32.totalorder %s16, 0
    %p77 = por %p75, %p76
    %p78 = scmp.ne.s32.totalorder %s64, %s65
    %p79 = scmp.eq.s32.totalorder %s17, 3
    %p80 = por %p78, %p79
    %p82 = scmp.ne.s32.totalorder %s65, %s81
    %p83 = scmp.eq.s32.totalorder %s17, 0
    %p84 = por %p82, %p83
    %s86 = sadd.s32 %s85, 1
    %p89 = scmp.eq.s32.totalorder %s11, 3
    %p90 = scmp.ne.s32.totalorder %s85, %s87
    %p91 = scmp.eq.s32.totalorder %s11, 0
    %p92 = por %p90, %p91
    %p93 = scmp.ne.s32.totalorder %s85, %s87
    %p94 = scmp.eq.s32.totalorder %s16, 3
    %p95 = por %p93, %p94
    %p96 = scmp.ne.s32.totalorder %s87, %s88
    %p97 = scmp.eq.s32.totalorder %s16, 0
    %p98 = por %p96, %p97
    %p99 = scmp.ne.s32.totalorder %s87, %s88
    %p100 = scmp.eq.s32.totalorder %s17, 3
    %p101 = por %p99, %p100
    %p103 = scmp.ne.s32.totalorder %s88, %s102
    %p104 = scmp.eq.s32.totalorder %s17, 0
    %p105 = por %p103, %p104
    %s107 = sadd.s32 %s106, 1
    %p110 = scmp.eq.s32.totalorder %s11, 3
    %p111 = scmp.ne.s32.totalorder %s106, %s108
    %p112 = scmp.eq.s32.totalorder %s11, 0
    %p113 = por %p111, %p112
    %p114 = scmp.ne.s32.totalorder %s106, %s108
    %p115 = scmp.eq.s32.totalorder %s16, 3
    %p116 = por %p114, %p115
    %p117 = scmp.ne.s32.totalorder %s108, %s109
    %p118 = scmp.eq.s32.totalorder %s16, 0
    %p119 = por %p117, %p118
    %p120 = scmp.ne.s32.totalorder %s108, %s109
    %p121 = scmp.eq.s32.totalorder %s17, 3
    %p122 = por %p120, %p121
    %p124 = scmp.ne.s32.totalorder %s109, %s123
    %p125 = scmp.eq.s32.totalorder %s17, 0
    %p126 = por %p124, %p125
    %s128 = sadd.s32 %s127, 1
    %p131 = scmp.eq.s32.totalorder %s11, 3
    %p132 = scmp.ne.s32.totalorder %s127, %s129
    %p133 = scmp.eq.s32.totalorder %s11, 0
    %p134 = por %p132, %p133
    %p135 = scmp.ne.s32.totalorder %s127, %s129
    %p136 = scmp.eq.s32.totalorder %s16, 3
    %p137 = por %p135, %p136
    %p138 = scmp.ne.s32.totalorder %s129, %s130
    %p139 = scmp.eq.s32.totalorder %s16, 0
    %p140 = por %p138, %p139
    %p141 = scmp.ne.s32.totalorder %s129, %s130
    %p142 = scmp.eq.s32.totalorder %s17, 3
    %p143 = por %p141, %p142
    %p145 = scmp.ne.s32.totalorder %s130, %s144
    %p146 = scmp.eq.s32.totalorder %s17, 0
    %p147 = por %p145, %p146
    %s148 = ssub.s32 %s18, %s30
    %p149 = scmp.eq.s32.totalorder %s148, 0
    %s151 = sadd.s32 %s150, 1
    %s152 = scalar_select %p149, %s150, %s151
    %p155 = pneg %p149
    %p156 = scmp.eq.s32.totalorder %s11, 3
    %p157 = por %p155, %p156
    %p158 = scmp.ne.s32.totalorder %s150, %s153
    %p159 = scmp.eq.s32.totalorder %s11, 0
    %p160 = por %p158, %p159
    %p161 = scmp.ne.s32.totalorder %s150, %s153
    %p162 = scmp.eq.s32.totalorder %s16, 3
    %p163 = por %p161, %p162
    %p164 = scmp.ne.s32.totalorder %s153, %s154
    %p165 = scmp.eq.s32.totalorder %s16, 0
    %p166 = por %p164, %p165
    %p167 = scmp.ne.s32.totalorder %s153, %s154
    %p168 = scmp.eq.s32.totalorder %s17, 3
    %p169 = por %p167, %p168
    %p171 = scmp.ne.s32.totalorder %s154, %s170
    %p172 = scmp.eq.s32.totalorder %s17, 0
    %p173 = por %p171, %p172
    %p174 = scmp.le.s32.totalorder 1, %s11
    %p175 = scmp.lt.s32.totalorder %s11, 5
    %p176 = pnand %p174, %p175
    %p177 = pneg %p176
    // Predicated region
    $region9: #{net_forward.7} parent=5 // pred_check
      _
    $region10: #{net_forward.7} parent=5 // pred_check_branch
      %179 = sbr.rel (%p176) target = $region12
    $region11: #{net_forward.7} parent=5 // pred_region
      %s180 = ssub.s32 %s11, 1
      // Predicated region
      $region13: #{net_forward.7} parent=11 // pred_check
        %p181 = pneg %p98
      $region14: #{net_forward.7} parent=11 // pred_check_branch
        %183 = sbr.rel (%p181) target = $region16
      $region15: #{net_forward.7} parent=11 // pred_region
        _
      $region16: #{net_forward.7} parent=11 // pred_fallthru
        _
      // Predicated region
      $region17: #{net_forward.7} parent=11 // pred_check
        %p184 = pneg %p119
      $region18: #{net_forward.7} parent=11 // pred_check_branch
        %186 = sbr.rel (%p184) target = $region20
      $region19: #{net_forward.7} parent=11 // pred_region
        _
      $region20: #{net_forward.7} parent=11 // pred_fallthru
        _
      // Predicated region
      $region21: #{net_forward.7} parent=11 // pred_check
        %p187 = pneg %p140
      $region22: #{net_forward.7} parent=11 // pred_check_branch
        %189 = sbr.rel (%p187) target = $region24
      $region23: #{net_forward.7} parent=11 // pred_region
        _
      $region24: #{net_forward.7} parent=11 // pred_fallthru
        _
    $region12: #{net_forward.7} parent=5 // pred_fallthru
      _
    %p190 = scmp.lt.s32.totalorder %s11, 4
    // Predicated region
    $region25: #{net_forward.7} parent=5 // pred_check
      %p191 = pneg %p190
    $region26: #{net_forward.7} parent=5 // pred_check_branch
      %193 = sbr.rel (%p191) target = $region28
    $region27: #{net_forward.7} parent=5 // pred_region
      // Predicated region
      $region29: #{net_forward.7} parent=27 // pred_check
        %p194 = pneg %p45
      $region30: #{net_forward.7} parent=27 // pred_check_branch
        %196 = sbr.rel (%p194) target = $region32
      $region31: #{net_forward.7} parent=27 // pred_region
        %s197 = smul.u32 32, %s19
        %p198 = scmp.lt.s32.totalorder %s18, 0
        %s199 = scalar_select %p198, %s18, 0
        %p200 = scmp.lt.s32.totalorder %s197, 127
        %s201 = scalar_select %p200, %s197, 127
        %s202 = smul.addr %s199, 128
        %s203 = sadd.s32 %s201, %s202
        %s204 = smul.addr %s203, 4
        %s205 = scalar_lea.vmem %s0, %s204
        %s206 = smul.u32 32, %s19
      $region32: #{net_forward.7} parent=27 // pred_fallthru
        _
      // Predicated region
      $region33: #{net_forward.7} parent=27 // pred_check
        %p207 = pneg %p71
      $region34: #{net_forward.7} parent=27 // pred_check_branch
        %209 = sbr.rel (%p207) target = $region36
      $region35: #{net_forward.7} parent=27 // pred_region
        %s210 = smul.u32 512, %s19
        %p211 = scmp.lt.s32.totalorder %s210, 2047
        %s212 = scalar_select %p211, %s210, 2047
        %s213 = smul.addr %s212, 4
        %s214 = smul.addr %s213, 4
        %s215 = scalar_lea.vmem %s1, %s214
        %s216 = smul.u32 512, %s19
      $region36: #{net_forward.7} parent=27 // pred_fallthru
        _
    $region28: #{net_forward.7} parent=5 // pred_fallthru
      _
    %p217 = scmp.le.s32.totalorder 1, %s11
    %p218 = scmp.lt.s32.totalorder %s11, 5
    %p219 = pnand %p217, %p218
    %p220 = pneg %p219
    // Predicated region
    $region37: #{net_forward.7} parent=5 // pred_check
      _
    $region38: #{net_forward.7} parent=5 // pred_check_branch
      %222 = sbr.rel (%p219) target = $region40
    $region39: #{net_forward.7} parent=5 // pred_region
      %s223 = ssub.s32 %s11, 1
      %s224 = smul.u32 32, %s21
      %p225 = scmp.lt.s32.totalorder %s20, 0
      %s226 = scalar_select %p225, %s20, 0
      %p227 = scmp.lt.s32.totalorder %s224, 127
      %s228 = scalar_select %p227, %s224, 127
      %s229 = smul.addr %s226, 128
      %s230 = sadd.s32 %s228, %s229
      %s231 = smul.addr %s230, 4
      %s232 = scalar_lea.vmem %s0, %s231
      %p233 = pneg %p51
      %p234 = pneg %p48
      %s235 = smul.u32 512, %s21
      %p236 = scmp.lt.s32.totalorder %s235, 2047
      %s237 = scalar_select %p236, %s235, 2047
      %s238 = smul.addr %s237, 4
      %s239 = smul.addr %s238, 4
      %s240 = scalar_lea.vmem %s1, %s239
      %p241 = pneg %p77
      %p242 = pneg %p74
      %p243 = pneg %p98
      %p244 = pneg %p95
      %p245 = pneg %p119
      %p246 = pneg %p116
      %p247 = pneg %p140
      %p248 = pneg %p137
      %p249 = pneg %p166
      %p250 = pneg %p163
      %p251 = scmp.lt.s32.totalorder %s20, 0
      %s252 = scalar_select %p251, %s20, 0
      %s253 = smul.addr %s252, 8
      %s254 = scalar_lea.vmem %s5, %s253
      %s255 = smul.u32 32, %s21
      %p256 = scmp.lt.s32.totalorder %s20, 0
      %s257 = scalar_select %p256, %s20, 0
      %p258 = scmp.lt.s32.totalorder %s255, 127
      %s259 = scalar_select %p258, %s255, 127
      %s260 = smul.addr %s257, 128
      %s261 = sadd.s32 %s259, %s260
      %s262 = smul.addr %s261, 4
      %s263 = scalar_lea.vmem %s0, %s262
      %s264 = smul.u32 32, %s21
      %s265 = smul.u32 512, %s21
      %p266 = scmp.lt.s32.totalorder %s265, 2047
      %s267 = scalar_select %p266, %s265, 2047
      %s268 = smul.addr %s267, 4
      %s269 = smul.addr %s268, 4
      %s270 = scalar_lea.vmem %s1, %s269
      %s271 = smul.u32 512, %s21
      %p272 = scmp.lt.s32.totalorder %s20, 0
      %s273 = scalar_select %p272, %s20, 0
      %s274 = smul.addr %s273, 8
      %s275 = scalar_lea.vmem %s5, %s274
      %p276 = scmp.eq.s32.totalorder %s21, 0
      // Predicated region
      $region41: #{net_forward.7} parent=39 // pred_check
        %p277 = pneg %p276
      $region42: #{net_forward.7} parent=39 // pred_check_branch
        %279 = sbr.rel (%p277) target = $region44
      $region43: #{net_forward.7} parent=39 // pred_region
        %280 = vst [vmem:[#allocation2] sm:$0xff] 0.0
        %281 = vst [vmem:[#allocation2 + $0x8] sm:$0xff] 0.0
        %282 = vst [vmem:[#allocation2 + $0x10] sm:$0xff] 0.0
        %283 = vst [vmem:[#allocation2 + $0x18] sm:$0xff] 0.0
      $region44: #{net_forward.7} parent=39 // pred_fallthru
        _
      %v284 = vld [vmem:[#allocation2] sm:$0xff]
      %v285 = vld [vmem:[#allocation2 + $0x8] sm:$0xff]
      %v286 = vld [vmem:[#allocation2 + $0x10] sm:$0xff]
      %v287 = vld [vmem:[#allocation2 + $0x18] sm:$0xff]
      %v288 = vld [vmem:[%s263] sm:$0xff]
      %v289 = vld [vmem:[%s263 + $0x8] sm:$0xff]
      %v290 = vld [vmem:[%s263 + $0x10] sm:$0xff]
      %v291 = vld [vmem:[%s263 + $0x18] sm:$0xff]
      %v292 = vld [vmem:[%s263 + $0x20] sm:$0xff]
      %v293 = vld [vmem:[%s263 + $0x28] sm:$0xff]
      %v294 = vld [vmem:[%s263 + $0x30] sm:$0xff]
      %v295 = vld [vmem:[%s263 + $0x38] sm:$0xff]
      %v296 = vld [vmem:[%s263 + $0x40] sm:$0xff]
      %v297 = vld [vmem:[%s263 + $0x48] sm:$0xff]
      %v298 = vld [vmem:[%s263 + $0x50] sm:$0xff]
      %v299 = vld [vmem:[%s263 + $0x58] sm:$0xff]
      %v300 = vld [vmem:[%s263 + $0x60] sm:$0xff]
      %v301 = vld [vmem:[%s263 + $0x68] sm:$0xff]
      %v302 = vld [vmem:[%s263 + $0x70] sm:$0xff]
      %v303 = vld [vmem:[%s263 + $0x78] sm:$0xff]
      %v304 = vld [vmem:[%s270] sm:$0xff]
      %v305 = vld [vmem:[%s270 + $0x8] sm:$0xff]
      %v306 = vld [vmem:[%s270 + $0x10] sm:$0xff]
      %v307 = vld [vmem:[%s270 + $0x18] sm:$0xff]
      %v308 = vld [vmem:[%s270 + $0x20] sm:$0xff]
      %v309 = vld [vmem:[%s270 + $0x28] sm:$0xff]
      %v310 = vld [vmem:[%s270 + $0x30] sm:$0xff]
      %v311 = vld [vmem:[%s270 + $0x38] sm:$0xff]
      %v312 = vld [vmem:[%s270 + $0x40] sm:$0xff]
      %v313 = vld [vmem:[%s270 + $0x48] sm:$0xff]
      %v314 = vld [vmem:[%s270 + $0x50] sm:$0xff]
      %v315 = vld [vmem:[%s270 + $0x58] sm:$0xff]
      %v316 = vld [vmem:[%s270 + $0x60] sm:$0xff]
      %v317 = vld [vmem:[%s270 + $0x68] sm:$0xff]
      %v318 = vld [vmem:[%s270 + $0x70] sm:$0xff]
      %v319 = vld [vmem:[%s270 + $0x78] sm:$0xff]
      %v320 = vld [vmem:[%s270 + $0x80] sm:$0xff]
      %v321 = vld [vmem:[%s270 + $0x88] sm:$0xff]
      %v322 = vld [vmem:[%s270 + $0x90] sm:$0xff]
      %v323 = vld [vmem:[%s270 + $0x98] sm:$0xff]
      %v324 = vld [vmem:[%s270 + $0xa0] sm:$0xff]
      %v325 = vld [vmem:[%s270 + $0xa8] sm:$0xff]
      %v326 = vld [vmem:[%s270 + $0xb0] sm:$0xff]
      %v327 = vld [vmem:[%s270 + $0xb8] sm:$0xff]
      %v328 = vld [vmem:[%s270 + $0xc0] sm:$0xff]
      %v329 = vld [vmem:[%s270 + $0xc8] sm:$0xff]
      %v330 = vld [vmem:[%s270 + $0xd0] sm:$0xff]
      %v331 = vld [vmem:[%s270 + $0xd8] sm:$0xff]
      %v332 = vld [vmem:[%s270 + $0xe0] sm:$0xff]
      %v333 = vld [vmem:[%s270 + $0xe8] sm:$0xff]
      %v334 = vld [vmem:[%s270 + $0xf0] sm:$0xff]
      %v335 = vld [vmem:[%s270 + $0xf8] sm:$0xff]
      %v336 = vld [vmem:[%s270 + $0x100] sm:$0xff]
      %v337 = vld [vmem:[%s270 + $0x108] sm:$0xff]
      %v338 = vld [vmem:[%s270 + $0x110] sm:$0xff]
      %v339 = vld [vmem:[%s270 + $0x118] sm:$0xff]
      %v340 = vld [vmem:[%s270 + $0x120] sm:$0xff]
      %v341 = vld [vmem:[%s270 + $0x128] sm:$0xff]
      %v342 = vld [vmem:[%s270 + $0x130] sm:$0xff]
      %v343 = vld [vmem:[%s270 + $0x138] sm:$0xff]
      %v344 = vld [vmem:[%s270 + $0x140] sm:$0xff]
      %v345 = vld [vmem:[%s270 + $0x148] sm:$0xff]
      %v346 = vld [vmem:[%s270 + $0x150] sm:$0xff]
      %v347 = vld [vmem:[%s270 + $0x158] sm:$0xff]
      %v348 = vld [vmem:[%s270 + $0x160] sm:$0xff]
      %v349 = vld [vmem:[%s270 + $0x168] sm:$0xff]
      %v350 = vld [vmem:[%s270 + $0x170] sm:$0xff]
      %v351 = vld [vmem:[%s270 + $0x178] sm:$0xff]
      %v352 = vld [vmem:[%s270 + $0x180] sm:$0xff]
      %v353 = vld [vmem:[%s270 + $0x188] sm:$0xff]
      %v354 = vld [vmem:[%s270 + $0x190] sm:$0xff]
      %v355 = vld [vmem:[%s270 + $0x198] sm:$0xff]
      %v356 = vld [vmem:[%s270 + $0x1a0] sm:$0xff]
      %v357 = vld [vmem:[%s270 + $0x1a8] sm:$0xff]
      %v358 = vld [vmem:[%s270 + $0x1b0] sm:$0xff]
      %v359 = vld [vmem:[%s270 + $0x1b8] sm:$0xff]
      %v360 = vld [vmem:[%s270 + $0x1c0] sm:$0xff]
      %v361 = vld [vmem:[%s270 + $0x1c8] sm:$0xff]
      %v362 = vld [vmem:[%s270 + $0x1d0] sm:$0xff]
      %v363 = vld [vmem:[%s270 + $0x1d8] sm:$0xff]
      %v364 = vld [vmem:[%s270 + $0x1e0] sm:$0xff]
      %v365 = vld [vmem:[%s270 + $0x1e8] sm:$0xff]
      %v366 = vld [vmem:[%s270 + $0x1f0] sm:$0xff]
      %v367 = vld [vmem:[%s270 + $0x1f8] sm:$0xff]
      %v368 = vld [vmem:[%s270 + $0x200] sm:$0xff]
      %v369 = vld [vmem:[%s270 + $0x208] sm:$0xff]
      %v370 = vld [vmem:[%s270 + $0x210] sm:$0xff]
      %v371 = vld [vmem:[%s270 + $0x218] sm:$0xff]
      %v372 = vld [vmem:[%s270 + $0x220] sm:$0xff]
      %v373 = vld [vmem:[%s270 + $0x228] sm:$0xff]
      %v374 = vld [vmem:[%s270 + $0x230] sm:$0xff]
      %v375 = vld [vmem:[%s270 + $0x238] sm:$0xff]
      %v376 = vld [vmem:[%s270 + $0x240] sm:$0xff]
      %v377 = vld [vmem:[%s270 + $0x248] sm:$0xff]
      %v378 = vld [vmem:[%s270 + $0x250] sm:$0xff]
      %v379 = vld [vmem:[%s270 + $0x258] sm:$0xff]
      %v380 = vld [vmem:[%s270 + $0x260] sm:$0xff]
      %v381 = vld [vmem:[%s270 + $0x268] sm:$0xff]
      %v382 = vld [vmem:[%s270 + $0x270] sm:$0xff]
      %v383 = vld [vmem:[%s270 + $0x278] sm:$0xff]
      %v384 = vld [vmem:[%s270 + $0x280] sm:$0xff]
      %v385 = vld [vmem:[%s270 + $0x288] sm:$0xff]
      %v386 = vld [vmem:[%s270 + $0x290] sm:$0xff]
      %v387 = vld [vmem:[%s270 + $0x298] sm:$0xff]
      %v388 = vld [vmem:[%s270 + $0x2a0] sm:$0xff]
      %v389 = vld [vmem:[%s270 + $0x2a8] sm:$0xff]
      %v390 = vld [vmem:[%s270 + $0x2b0] sm:$0xff]
      %v391 = vld [vmem:[%s270 + $0x2b8] sm:$0xff]
      %v392 = vld [vmem:[%s270 + $0x2c0] sm:$0xff]
      %v393 = vld [vmem:[%s270 + $0x2c8] sm:$0xff]
      %v394 = vld [vmem:[%s270 + $0x2d0] sm:$0xff]
      %v395 = vld [vmem:[%s270 + $0x2d8] sm:$0xff]
      %v396 = vld [vmem:[%s270 + $0x2e0] sm:$0xff]
      %v397 = vld [vmem:[%s270 + $0x2e8] sm:$0xff]
      %v398 = vld [vmem:[%s270 + $0x2f0] sm:$0xff]
      %v399 = vld [vmem:[%s270 + $0x2f8] sm:$0xff]
      %v400 = vld [vmem:[%s270 + $0x300] sm:$0xff]
      %v401 = vld [vmem:[%s270 + $0x308] sm:$0xff]
      %v402 = vld [vmem:[%s270 + $0x310] sm:$0xff]
      %v403 = vld [vmem:[%s270 + $0x318] sm:$0xff]
      %v404 = vld [vmem:[%s270 + $0x320] sm:$0xff]
      %v405 = vld [vmem:[%s270 + $0x328] sm:$0xff]
      %v406 = vld [vmem:[%s270 + $0x330] sm:$0xff]
      %v407 = vld [vmem:[%s270 + $0x338] sm:$0xff]
      %v408 = vld [vmem:[%s270 + $0x340] sm:$0xff]
      %v409 = vld [vmem:[%s270 + $0x348] sm:$0xff]
      %v410 = vld [vmem:[%s270 + $0x350] sm:$0xff]
      %v411 = vld [vmem:[%s270 + $0x358] sm:$0xff]
      %v412 = vld [vmem:[%s270 + $0x360] sm:$0xff]
      %v413 = vld [vmem:[%s270 + $0x368] sm:$0xff]
      %v414 = vld [vmem:[%s270 + $0x370] sm:$0xff]
      %v415 = vld [vmem:[%s270 + $0x378] sm:$0xff]
      %v416 = vld [vmem:[%s270 + $0x380] sm:$0xff]
      %v417 = vld [vmem:[%s270 + $0x388] sm:$0xff]
      %v418 = vld [vmem:[%s270 + $0x390] sm:$0xff]
      %v419 = vld [vmem:[%s270 + $0x398] sm:$0xff]
      %v420 = vld [vmem:[%s270 + $0x3a0] sm:$0xff]
      %v421 = vld [vmem:[%s270 + $0x3a8] sm:$0xff]
      %v422 = vld [vmem:[%s270 + $0x3b0] sm:$0xff]
      %v423 = vld [vmem:[%s270 + $0x3b8] sm:$0xff]
      %v424 = vld [vmem:[%s270 + $0x3c0] sm:$0xff]
      %v425 = vld [vmem:[%s270 + $0x3c8] sm:$0xff]
      %v426 = vld [vmem:[%s270 + $0x3d0] sm:$0xff]
      %v427 = vld [vmem:[%s270 + $0x3d8] sm:$0xff]
      %v428 = vld [vmem:[%s270 + $0x3e0] sm:$0xff]
      %v429 = vld [vmem:[%s270 + $0x3e8] sm:$0xff]
      %v430 = vld [vmem:[%s270 + $0x3f0] sm:$0xff]
      %v431 = vld [vmem:[%s270 + $0x3f8] sm:$0xff]
      %v432 = vld [vmem:[%s270 + $0x400] sm:$0xff]
      %v433 = vld [vmem:[%s270 + $0x408] sm:$0xff]
      %v434 = vld [vmem:[%s270 + $0x410] sm:$0xff]
      %v435 = vld [vmem:[%s270 + $0x418] sm:$0xff]
      %v436 = vld [vmem:[%s270 + $0x420] sm:$0xff]
      %v437 = vld [vmem:[%s270 + $0x428] sm:$0xff]
      %v438 = vld [vmem:[%s270 + $0x430] sm:$0xff]
      %v439 = vld [vmem:[%s270 + $0x438] sm:$0xff]
      %v440 = vld [vmem:[%s270 + $0x440] sm:$0xff]
      %v441 = vld [vmem:[%s270 + $0x448] sm:$0xff]
      %v442 = vld [vmem:[%s270 + $0x450] sm:$0xff]
      %v443 = vld [vmem:[%s270 + $0x458] sm:$0xff]
      %v444 = vld [vmem:[%s270 + $0x460] sm:$0xff]
      %v445 = vld [vmem:[%s270 + $0x468] sm:$0xff]
      %v446 = vld [vmem:[%s270 + $0x470] sm:$0xff]
      %v447 = vld [vmem:[%s270 + $0x478] sm:$0xff]
      %v448 = vld [vmem:[%s270 + $0x480] sm:$0xff]
      %v449 = vld [vmem:[%s270 + $0x488] sm:$0xff]
      %v450 = vld [vmem:[%s270 + $0x490] sm:$0xff]
      %v451 = vld [vmem:[%s270 + $0x498] sm:$0xff]
      %v452 = vld [vmem:[%s270 + $0x4a0] sm:$0xff]
      %v453 = vld [vmem:[%s270 + $0x4a8] sm:$0xff]
      %v454 = vld [vmem:[%s270 + $0x4b0] sm:$0xff]
      %v455 = vld [vmem:[%s270 + $0x4b8] sm:$0xff]
      %v456 = vld [vmem:[%s270 + $0x4c0] sm:$0xff]
      %v457 = vld [vmem:[%s270 + $0x4c8] sm:$0xff]
      %v458 = vld [vmem:[%s270 + $0x4d0] sm:$0xff]
      %v459 = vld [vmem:[%s270 + $0x4d8] sm:$0xff]
      %v460 = vld [vmem:[%s270 + $0x4e0] sm:$0xff]
      %v461 = vld [vmem:[%s270 + $0x4e8] sm:$0xff]
      %v462 = vld [vmem:[%s270 + $0x4f0] sm:$0xff]
      %v463 = vld [vmem:[%s270 + $0x4f8] sm:$0xff]
      %v464 = vld [vmem:[%s270 + $0x500] sm:$0xff]
      %v465 = vld [vmem:[%s270 + $0x508] sm:$0xff]
      %v466 = vld [vmem:[%s270 + $0x510] sm:$0xff]
      %v467 = vld [vmem:[%s270 + $0x518] sm:$0xff]
      %v468 = vld [vmem:[%s270 + $0x520] sm:$0xff]
      %v469 = vld [vmem:[%s270 + $0x528] sm:$0xff]
      %v470 = vld [vmem:[%s270 + $0x530] sm:$0xff]
      %v471 = vld [vmem:[%s270 + $0x538] sm:$0xff]
      %v472 = vld [vmem:[%s270 + $0x540] sm:$0xff]
      %v473 = vld [vmem:[%s270 + $0x548] sm:$0xff]
      %v474 = vld [vmem:[%s270 + $0x550] sm:$0xff]
      %v475 = vld [vmem:[%s270 + $0x558] sm:$0xff]
      %v476 = vld [vmem:[%s270 + $0x560] sm:$0xff]
      %v477 = vld [vmem:[%s270 + $0x568] sm:$0xff]
      %v478 = vld [vmem:[%s270 + $0x570] sm:$0xff]
      %v479 = vld [vmem:[%s270 + $0x578] sm:$0xff]
      %v480 = vld [vmem:[%s270 + $0x580] sm:$0xff]
      %v481 = vld [vmem:[%s270 + $0x588] sm:$0xff]
      %v482 = vld [vmem:[%s270 + $0x590] sm:$0xff]
      %v483 = vld [vmem:[%s270 + $0x598] sm:$0xff]
      %v484 = vld [vmem:[%s270 + $0x5a0] sm:$0xff]
      %v485 = vld [vmem:[%s270 + $0x5a8] sm:$0xff]
      %v486 = vld [vmem:[%s270 + $0x5b0] sm:$0xff]
      %v487 = vld [vmem:[%s270 + $0x5b8] sm:$0xff]
      %v488 = vld [vmem:[%s270 + $0x5c0] sm:$0xff]
      %v489 = vld [vmem:[%s270 + $0x5c8] sm:$0xff]
      %v490 = vld [vmem:[%s270 + $0x5d0] sm:$0xff]
      %v491 = vld [vmem:[%s270 + $0x5d8] sm:$0xff]
      %v492 = vld [vmem:[%s270 + $0x5e0] sm:$0xff]
      %v493 = vld [vmem:[%s270 + $0x5e8] sm:$0xff]
      %v494 = vld [vmem:[%s270 + $0x5f0] sm:$0xff]
      %v495 = vld [vmem:[%s270 + $0x5f8] sm:$0xff]
      %v496 = vld [vmem:[%s270 + $0x600] sm:$0xff]
      %v497 = vld [vmem:[%s270 + $0x608] sm:$0xff]
      %v498 = vld [vmem:[%s270 + $0x610] sm:$0xff]
      %v499 = vld [vmem:[%s270 + $0x618] sm:$0xff]
      %v500 = vld [vmem:[%s270 + $0x620] sm:$0xff]
      %v501 = vld [vmem:[%s270 + $0x628] sm:$0xff]
      %v502 = vld [vmem:[%s270 + $0x630] sm:$0xff]
      %v503 = vld [vmem:[%s270 + $0x638] sm:$0xff]
      %v504 = vld [vmem:[%s270 + $0x640] sm:$0xff]
      %v505 = vld [vmem:[%s270 + $0x648] sm:$0xff]
      %v506 = vld [vmem:[%s270 + $0x650] sm:$0xff]
      %v507 = vld [vmem:[%s270 + $0x658] sm:$0xff]
      %v508 = vld [vmem:[%s270 + $0x660] sm:$0xff]
      %v509 = vld [vmem:[%s270 + $0x668] sm:$0xff]
      %v510 = vld [vmem:[%s270 + $0x670] sm:$0xff]
      %v511 = vld [vmem:[%s270 + $0x678] sm:$0xff]
      %v512 = vld [vmem:[%s270 + $0x680] sm:$0xff]
      %v513 = vld [vmem:[%s270 + $0x688] sm:$0xff]
      %v514 = vld [vmem:[%s270 + $0x690] sm:$0xff]
      %v515 = vld [vmem:[%s270 + $0x698] sm:$0xff]
      %v516 = vld [vmem:[%s270 + $0x6a0] sm:$0xff]
      %v517 = vld [vmem:[%s270 + $0x6a8] sm:$0xff]
      %v518 = vld [vmem:[%s270 + $0x6b0] sm:$0xff]
      %v519 = vld [vmem:[%s270 + $0x6b8] sm:$0xff]
      %v520 = vld [vmem:[%s270 + $0x6c0] sm:$0xff]
      %v521 = vld [vmem:[%s270 + $0x6c8] sm:$0xff]
      %v522 = vld [vmem:[%s270 + $0x6d0] sm:$0xff]
      %v523 = vld [vmem:[%s270 + $0x6d8] sm:$0xff]
      %v524 = vld [vmem:[%s270 + $0x6e0] sm:$0xff]
      %v525 = vld [vmem:[%s270 + $0x6e8] sm:$0xff]
      %v526 = vld [vmem:[%s270 + $0x6f0] sm:$0xff]
      %v527 = vld [vmem:[%s270 + $0x6f8] sm:$0xff]
      %v528 = vld [vmem:[%s270 + $0x700] sm:$0xff]
      %v529 = vld [vmem:[%s270 + $0x708] sm:$0xff]
      %v530 = vld [vmem:[%s270 + $0x710] sm:$0xff]
      %v531 = vld [vmem:[%s270 + $0x718] sm:$0xff]
      %v532 = vld [vmem:[%s270 + $0x720] sm:$0xff]
      %v533 = vld [vmem:[%s270 + $0x728] sm:$0xff]
      %v534 = vld [vmem:[%s270 + $0x730] sm:$0xff]
      %v535 = vld [vmem:[%s270 + $0x738] sm:$0xff]
      %v536 = vld [vmem:[%s270 + $0x740] sm:$0xff]
      %v537 = vld [vmem:[%s270 + $0x748] sm:$0xff]
      %v538 = vld [vmem:[%s270 + $0x750] sm:$0xff]
      %v539 = vld [vmem:[%s270 + $0x758] sm:$0xff]
      %v540 = vld [vmem:[%s270 + $0x760] sm:$0xff]
      %v541 = vld [vmem:[%s270 + $0x768] sm:$0xff]
      %v542 = vld [vmem:[%s270 + $0x770] sm:$0xff]
      %v543 = vld [vmem:[%s270 + $0x778] sm:$0xff]
      %v544 = vld [vmem:[%s270 + $0x780] sm:$0xff]
      %v545 = vld [vmem:[%s270 + $0x788] sm:$0xff]
      %v546 = vld [vmem:[%s270 + $0x790] sm:$0xff]
      %v547 = vld [vmem:[%s270 + $0x798] sm:$0xff]
      %v548 = vld [vmem:[%s270 + $0x7a0] sm:$0xff]
      %v549 = vld [vmem:[%s270 + $0x7a8] sm:$0xff]
      %v550 = vld [vmem:[%s270 + $0x7b0] sm:$0xff]
      %v551 = vld [vmem:[%s270 + $0x7b8] sm:$0xff]
      %v552 = vld [vmem:[%s270 + $0x7c0] sm:$0xff]
      %v553 = vld [vmem:[%s270 + $0x7c8] sm:$0xff]
      %v554 = vld [vmem:[%s270 + $0x7d0] sm:$0xff]
      %v555 = vld [vmem:[%s270 + $0x7d8] sm:$0xff]
      %v556 = vld [vmem:[%s270 + $0x7e0] sm:$0xff]
      %v557 = vld [vmem:[%s270 + $0x7e8] sm:$0xff]
      %v558 = vld [vmem:[%s270 + $0x7f0] sm:$0xff]
      %v559 = vld [vmem:[%s270 + $0x7f8] sm:$0xff]
      %v560 = vld [vmem:[%s270 + $0x800] sm:$0xff]
      %v561 = vld [vmem:[%s270 + $0x808] sm:$0xff]
      %v562 = vld [vmem:[%s270 + $0x810] sm:$0xff]
      %v563 = vld [vmem:[%s270 + $0x818] sm:$0xff]
      %v564 = vld [vmem:[%s270 + $0x820] sm:$0xff]
      %v565 = vld [vmem:[%s270 + $0x828] sm:$0xff]
      %v566 = vld [vmem:[%s270 + $0x830] sm:$0xff]
      %v567 = vld [vmem:[%s270 + $0x838] sm:$0xff]
      %v568 = vld [vmem:[%s270 + $0x840] sm:$0xff]
      %v569 = vld [vmem:[%s270 + $0x848] sm:$0xff]
      %v570 = vld [vmem:[%s270 + $0x850] sm:$0xff]
      %v571 = vld [vmem:[%s270 + $0x858] sm:$0xff]
      %v572 = vld [vmem:[%s270 + $0x860] sm:$0xff]
      %v573 = vld [vmem:[%s270 + $0x868] sm:$0xff]
      %v574 = vld [vmem:[%s270 + $0x870] sm:$0xff]
      %v575 = vld [vmem:[%s270 + $0x878] sm:$0xff]
      %v576 = vld [vmem:[%s270 + $0x880] sm:$0xff]
      %v577 = vld [vmem:[%s270 + $0x888] sm:$0xff]
      %v578 = vld [vmem:[%s270 + $0x890] sm:$0xff]
      %v579 = vld [vmem:[%s270 + $0x898] sm:$0xff]
      %v580 = vld [vmem:[%s270 + $0x8a0] sm:$0xff]
      %v581 = vld [vmem:[%s270 + $0x8a8] sm:$0xff]
      %v582 = vld [vmem:[%s270 + $0x8b0] sm:$0xff]
      %v583 = vld [vmem:[%s270 + $0x8b8] sm:$0xff]
      %v584 = vld [vmem:[%s270 + $0x8c0] sm:$0xff]
      %v585 = vld [vmem:[%s270 + $0x8c8] sm:$0xff]
      %v586 = vld [vmem:[%s270 + $0x8d0] sm:$0xff]
      %v587 = vld [vmem:[%s270 + $0x8d8] sm:$0xff]
      %v588 = vld [vmem:[%s270 + $0x8e0] sm:$0xff]
      %v589 = vld [vmem:[%s270 + $0x8e8] sm:$0xff]
      %v590 = vld [vmem:[%s270 + $0x8f0] sm:$0xff]
      %v591 = vld [vmem:[%s270 + $0x8f8] sm:$0xff]
      %v592 = vld [vmem:[%s270 + $0x900] sm:$0xff]
      %v593 = vld [vmem:[%s270 + $0x908] sm:$0xff]
      %v594 = vld [vmem:[%s270 + $0x910] sm:$0xff]
      %v595 = vld [vmem:[%s270 + $0x918] sm:$0xff]
      %v596 = vld [vmem:[%s270 + $0x920] sm:$0xff]
      %v597 = vld [vmem:[%s270 + $0x928] sm:$0xff]
      %v598 = vld [vmem:[%s270 + $0x930] sm:$0xff]
      %v599 = vld [vmem:[%s270 + $0x938] sm:$0xff]
      %v600 = vld [vmem:[%s270 + $0x940] sm:$0xff]
      %v601 = vld [vmem:[%s270 + $0x948] sm:$0xff]
      %v602 = vld [vmem:[%s270 + $0x950] sm:$0xff]
      %v603 = vld [vmem:[%s270 + $0x958] sm:$0xff]
      %v604 = vld [vmem:[%s270 + $0x960] sm:$0xff]
      %v605 = vld [vmem:[%s270 + $0x968] sm:$0xff]
      %v606 = vld [vmem:[%s270 + $0x970] sm:$0xff]
      %v607 = vld [vmem:[%s270 + $0x978] sm:$0xff]
      %v608 = vld [vmem:[%s270 + $0x980] sm:$0xff]
      %v609 = vld [vmem:[%s270 + $0x988] sm:$0xff]
      %v610 = vld [vmem:[%s270 + $0x990] sm:$0xff]
      %v611 = vld [vmem:[%s270 + $0x998] sm:$0xff]
      %v612 = vld [vmem:[%s270 + $0x9a0] sm:$0xff]
      %v613 = vld [vmem:[%s270 + $0x9a8] sm:$0xff]
      %v614 = vld [vmem:[%s270 + $0x9b0] sm:$0xff]
      %v615 = vld [vmem:[%s270 + $0x9b8] sm:$0xff]
      %v616 = vld [vmem:[%s270 + $0x9c0] sm:$0xff]
      %v617 = vld [vmem:[%s270 + $0x9c8] sm:$0xff]
      %v618 = vld [vmem:[%s270 + $0x9d0] sm:$0xff]
      %v619 = vld [vmem:[%s270 + $0x9d8] sm:$0xff]
      %v620 = vld [vmem:[%s270 + $0x9e0] sm:$0xff]
      %v621 = vld [vmem:[%s270 + $0x9e8] sm:$0xff]
      %v622 = vld [vmem:[%s270 + $0x9f0] sm:$0xff]
      %v623 = vld [vmem:[%s270 + $0x9f8] sm:$0xff]
      %v624 = vld [vmem:[%s270 + $0xa00] sm:$0xff]
      %v625 = vld [vmem:[%s270 + $0xa08] sm:$0xff]
      %v626 = vld [vmem:[%s270 + $0xa10] sm:$0xff]
      %v627 = vld [vmem:[%s270 + $0xa18] sm:$0xff]
      %v628 = vld [vmem:[%s270 + $0xa20] sm:$0xff]
      %v629 = vld [vmem:[%s270 + $0xa28] sm:$0xff]
      %v630 = vld [vmem:[%s270 + $0xa30] sm:$0xff]
      %v631 = vld [vmem:[%s270 + $0xa38] sm:$0xff]
      %v632 = vld [vmem:[%s270 + $0xa40] sm:$0xff]
      %v633 = vld [vmem:[%s270 + $0xa48] sm:$0xff]
      %v634 = vld [vmem:[%s270 + $0xa50] sm:$0xff]
      %v635 = vld [vmem:[%s270 + $0xa58] sm:$0xff]
      %v636 = vld [vmem:[%s270 + $0xa60] sm:$0xff]
      %v637 = vld [vmem:[%s270 + $0xa68] sm:$0xff]
      %v638 = vld [vmem:[%s270 + $0xa70] sm:$0xff]
      %v639 = vld [vmem:[%s270 + $0xa78] sm:$0xff]
      %v640 = vld [vmem:[%s270 + $0xa80] sm:$0xff]
      %v641 = vld [vmem:[%s270 + $0xa88] sm:$0xff]
      %v642 = vld [vmem:[%s270 + $0xa90] sm:$0xff]
      %v643 = vld [vmem:[%s270 + $0xa98] sm:$0xff]
      %v644 = vld [vmem:[%s270 + $0xaa0] sm:$0xff]
      %v645 = vld [vmem:[%s270 + $0xaa8] sm:$0xff]
      %v646 = vld [vmem:[%s270 + $0xab0] sm:$0xff]
      %v647 = vld [vmem:[%s270 + $0xab8] sm:$0xff]
      %v648 = vld [vmem:[%s270 + $0xac0] sm:$0xff]
      %v649 = vld [vmem:[%s270 + $0xac8] sm:$0xff]
      %v650 = vld [vmem:[%s270 + $0xad0] sm:$0xff]
      %v651 = vld [vmem:[%s270 + $0xad8] sm:$0xff]
      %v652 = vld [vmem:[%s270 + $0xae0] sm:$0xff]
      %v653 = vld [vmem:[%s270 + $0xae8] sm:$0xff]
      %v654 = vld [vmem:[%s270 + $0xaf0] sm:$0xff]
      %v655 = vld [vmem:[%s270 + $0xaf8] sm:$0xff]
      %v656 = vld [vmem:[%s270 + $0xb00] sm:$0xff]
      %v657 = vld [vmem:[%s270 + $0xb08] sm:$0xff]
      %v658 = vld [vmem:[%s270 + $0xb10] sm:$0xff]
      %v659 = vld [vmem:[%s270 + $0xb18] sm:$0xff]
      %v660 = vld [vmem:[%s270 + $0xb20] sm:$0xff]
      %v661 = vld [vmem:[%s270 + $0xb28] sm:$0xff]
      %v662 = vld [vmem:[%s270 + $0xb30] sm:$0xff]
      %v663 = vld [vmem:[%s270 + $0xb38] sm:$0xff]
      %v664 = vld [vmem:[%s270 + $0xb40] sm:$0xff]
      %v665 = vld [vmem:[%s270 + $0xb48] sm:$0xff]
      %v666 = vld [vmem:[%s270 + $0xb50] sm:$0xff]
      %v667 = vld [vmem:[%s270 + $0xb58] sm:$0xff]
      %v668 = vld [vmem:[%s270 + $0xb60] sm:$0xff]
      %v669 = vld [vmem:[%s270 + $0xb68] sm:$0xff]
      %v670 = vld [vmem:[%s270 + $0xb70] sm:$0xff]
      %v671 = vld [vmem:[%s270 + $0xb78] sm:$0xff]
      %v672 = vld [vmem:[%s270 + $0xb80] sm:$0xff]
      %v673 = vld [vmem:[%s270 + $0xb88] sm:$0xff]
      %v674 = vld [vmem:[%s270 + $0xb90] sm:$0xff]
      %v675 = vld [vmem:[%s270 + $0xb98] sm:$0xff]
      %v676 = vld [vmem:[%s270 + $0xba0] sm:$0xff]
      %v677 = vld [vmem:[%s270 + $0xba8] sm:$0xff]
      %v678 = vld [vmem:[%s270 + $0xbb0] sm:$0xff]
      %v679 = vld [vmem:[%s270 + $0xbb8] sm:$0xff]
      %v680 = vld [vmem:[%s270 + $0xbc0] sm:$0xff]
      %v681 = vld [vmem:[%s270 + $0xbc8] sm:$0xff]
      %v682 = vld [vmem:[%s270 + $0xbd0] sm:$0xff]
      %v683 = vld [vmem:[%s270 + $0xbd8] sm:$0xff]
      %v684 = vld [vmem:[%s270 + $0xbe0] sm:$0xff]
      %v685 = vld [vmem:[%s270 + $0xbe8] sm:$0xff]
      %v686 = vld [vmem:[%s270 + $0xbf0] sm:$0xff]
      %v687 = vld [vmem:[%s270 + $0xbf8] sm:$0xff]
      %v688 = vld [vmem:[%s270 + $0xc00] sm:$0xff]
      %v689 = vld [vmem:[%s270 + $0xc08] sm:$0xff]
      %v690 = vld [vmem:[%s270 + $0xc10] sm:$0xff]
      %v691 = vld [vmem:[%s270 + $0xc18] sm:$0xff]
      %v692 = vld [vmem:[%s270 + $0xc20] sm:$0xff]
      %v693 = vld [vmem:[%s270 + $0xc28] sm:$0xff]
      %v694 = vld [vmem:[%s270 + $0xc30] sm:$0xff]
      %v695 = vld [vmem:[%s270 + $0xc38] sm:$0xff]
      %v696 = vld [vmem:[%s270 + $0xc40] sm:$0xff]
      %v697 = vld [vmem:[%s270 + $0xc48] sm:$0xff]
      %v698 = vld [vmem:[%s270 + $0xc50] sm:$0xff]
      %v699 = vld [vmem:[%s270 + $0xc58] sm:$0xff]
      %v700 = vld [vmem:[%s270 + $0xc60] sm:$0xff]
      %v701 = vld [vmem:[%s270 + $0xc68] sm:$0xff]
      %v702 = vld [vmem:[%s270 + $0xc70] sm:$0xff]
      %v703 = vld [vmem:[%s270 + $0xc78] sm:$0xff]
      %v704 = vld [vmem:[%s270 + $0xc80] sm:$0xff]
      %v705 = vld [vmem:[%s270 + $0xc88] sm:$0xff]
      %v706 = vld [vmem:[%s270 + $0xc90] sm:$0xff]
      %v707 = vld [vmem:[%s270 + $0xc98] sm:$0xff]
      %v708 = vld [vmem:[%s270 + $0xca0] sm:$0xff]
      %v709 = vld [vmem:[%s270 + $0xca8] sm:$0xff]
      %v710 = vld [vmem:[%s270 + $0xcb0] sm:$0xff]
      %v711 = vld [vmem:[%s270 + $0xcb8] sm:$0xff]
      %v712 = vld [vmem:[%s270 + $0xcc0] sm:$0xff]
      %v713 = vld [vmem:[%s270 + $0xcc8] sm:$0xff]
      %v714 = vld [vmem:[%s270 + $0xcd0] sm:$0xff]
      %v715 = vld [vmem:[%s270 + $0xcd8] sm:$0xff]
      %v716 = vld [vmem:[%s270 + $0xce0] sm:$0xff]
      %v717 = vld [vmem:[%s270 + $0xce8] sm:$0xff]
      %v718 = vld [vmem:[%s270 + $0xcf0] sm:$0xff]
      %v719 = vld [vmem:[%s270 + $0xcf8] sm:$0xff]
      %v720 = vld [vmem:[%s270 + $0xd00] sm:$0xff]
      %v721 = vld [vmem:[%s270 + $0xd08] sm:$0xff]
      %v722 = vld [vmem:[%s270 + $0xd10] sm:$0xff]
      %v723 = vld [vmem:[%s270 + $0xd18] sm:$0xff]
      %v724 = vld [vmem:[%s270 + $0xd20] sm:$0xff]
      %v725 = vld [vmem:[%s270 + $0xd28] sm:$0xff]
      %v726 = vld [vmem:[%s270 + $0xd30] sm:$0xff]
      %v727 = vld [vmem:[%s270 + $0xd38] sm:$0xff]
      %v728 = vld [vmem:[%s270 + $0xd40] sm:$0xff]
      %v729 = vld [vmem:[%s270 + $0xd48] sm:$0xff]
      %v730 = vld [vmem:[%s270 + $0xd50] sm:$0xff]
      %v731 = vld [vmem:[%s270 + $0xd58] sm:$0xff]
      %v732 = vld [vmem:[%s270 + $0xd60] sm:$0xff]
      %v733 = vld [vmem:[%s270 + $0xd68] sm:$0xff]
      %v734 = vld [vmem:[%s270 + $0xd70] sm:$0xff]
      %v735 = vld [vmem:[%s270 + $0xd78] sm:$0xff]
      %v736 = vld [vmem:[%s270 + $0xd80] sm:$0xff]
      %v737 = vld [vmem:[%s270 + $0xd88] sm:$0xff]
      %v738 = vld [vmem:[%s270 + $0xd90] sm:$0xff]
      %v739 = vld [vmem:[%s270 + $0xd98] sm:$0xff]
      %v740 = vld [vmem:[%s270 + $0xda0] sm:$0xff]
      %v741 = vld [vmem:[%s270 + $0xda8] sm:$0xff]
      %v742 = vld [vmem:[%s270 + $0xdb0] sm:$0xff]
      %v743 = vld [vmem:[%s270 + $0xdb8] sm:$0xff]
      %v744 = vld [vmem:[%s270 + $0xdc0] sm:$0xff]
      %v745 = vld [vmem:[%s270 + $0xdc8] sm:$0xff]
      %v746 = vld [vmem:[%s270 + $0xdd0] sm:$0xff]
      %v747 = vld [vmem:[%s270 + $0xdd8] sm:$0xff]
      %v748 = vld [vmem:[%s270 + $0xde0] sm:$0xff]
      %v749 = vld [vmem:[%s270 + $0xde8] sm:$0xff]
      %v750 = vld [vmem:[%s270 + $0xdf0] sm:$0xff]
      %v751 = vld [vmem:[%s270 + $0xdf8] sm:$0xff]
      %v752 = vld [vmem:[%s270 + $0xe00] sm:$0xff]
      %v753 = vld [vmem:[%s270 + $0xe08] sm:$0xff]
      %v754 = vld [vmem:[%s270 + $0xe10] sm:$0xff]
      %v755 = vld [vmem:[%s270 + $0xe18] sm:$0xff]
      %v756 = vld [vmem:[%s270 + $0xe20] sm:$0xff]
      %v757 = vld [vmem:[%s270 + $0xe28] sm:$0xff]
      %v758 = vld [vmem:[%s270 + $0xe30] sm:$0xff]
      %v759 = vld [vmem:[%s270 + $0xe38] sm:$0xff]
      %v760 = vld [vmem:[%s270 + $0xe40] sm:$0xff]
      %v761 = vld [vmem:[%s270 + $0xe48] sm:$0xff]
      %v762 = vld [vmem:[%s270 + $0xe50] sm:$0xff]
      %v763 = vld [vmem:[%s270 + $0xe58] sm:$0xff]
      %v764 = vld [vmem:[%s270 + $0xe60] sm:$0xff]
      %v765 = vld [vmem:[%s270 + $0xe68] sm:$0xff]
      %v766 = vld [vmem:[%s270 + $0xe70] sm:$0xff]
      %v767 = vld [vmem:[%s270 + $0xe78] sm:$0xff]
      %v768 = vld [vmem:[%s270 + $0xe80] sm:$0xff]
      %v769 = vld [vmem:[%s270 + $0xe88] sm:$0xff]
      %v770 = vld [vmem:[%s270 + $0xe90] sm:$0xff]
      %v771 = vld [vmem:[%s270 + $0xe98] sm:$0xff]
      %v772 = vld [vmem:[%s270 + $0xea0] sm:$0xff]
      %v773 = vld [vmem:[%s270 + $0xea8] sm:$0xff]
      %v774 = vld [vmem:[%s270 + $0xeb0] sm:$0xff]
      %v775 = vld [vmem:[%s270 + $0xeb8] sm:$0xff]
      %v776 = vld [vmem:[%s270 + $0xec0] sm:$0xff]
      %v777 = vld [vmem:[%s270 + $0xec8] sm:$0xff]
      %v778 = vld [vmem:[%s270 + $0xed0] sm:$0xff]
      %v779 = vld [vmem:[%s270 + $0xed8] sm:$0xff]
      %v780 = vld [vmem:[%s270 + $0xee0] sm:$0xff]
      %v781 = vld [vmem:[%s270 + $0xee8] sm:$0xff]
      %v782 = vld [vmem:[%s270 + $0xef0] sm:$0xff]
      %v783 = vld [vmem:[%s270 + $0xef8] sm:$0xff]
      %v784 = vld [vmem:[%s270 + $0xf00] sm:$0xff]
      %v785 = vld [vmem:[%s270 + $0xf08] sm:$0xff]
      %v786 = vld [vmem:[%s270 + $0xf10] sm:$0xff]
      %v787 = vld [vmem:[%s270 + $0xf18] sm:$0xff]
      %v788 = vld [vmem:[%s270 + $0xf20] sm:$0xff]
      %v789 = vld [vmem:[%s270 + $0xf28] sm:$0xff]
      %v790 = vld [vmem:[%s270 + $0xf30] sm:$0xff]
      %v791 = vld [vmem:[%s270 + $0xf38] sm:$0xff]
      %v792 = vld [vmem:[%s270 + $0xf40] sm:$0xff]
      %v793 = vld [vmem:[%s270 + $0xf48] sm:$0xff]
      %v794 = vld [vmem:[%s270 + $0xf50] sm:$0xff]
      %v795 = vld [vmem:[%s270 + $0xf58] sm:$0xff]
      %v796 = vld [vmem:[%s270 + $0xf60] sm:$0xff]
      %v797 = vld [vmem:[%s270 + $0xf68] sm:$0xff]
      %v798 = vld [vmem:[%s270 + $0xf70] sm:$0xff]
      %v799 = vld [vmem:[%s270 + $0xf78] sm:$0xff]
      %v800 = vld [vmem:[%s270 + $0xf80] sm:$0xff]
      %v801 = vld [vmem:[%s270 + $0xf88] sm:$0xff]
      %v802 = vld [vmem:[%s270 + $0xf90] sm:$0xff]
      %v803 = vld [vmem:[%s270 + $0xf98] sm:$0xff]
      %v804 = vld [vmem:[%s270 + $0xfa0] sm:$0xff]
      %v805 = vld [vmem:[%s270 + $0xfa8] sm:$0xff]
      %v806 = vld [vmem:[%s270 + $0xfb0] sm:$0xff]
      %v807 = vld [vmem:[%s270 + $0xfb8] sm:$0xff]
      %v808 = vld [vmem:[%s270 + $0xfc0] sm:$0xff]
      %v809 = vld [vmem:[%s270 + $0xfc8] sm:$0xff]
      %v810 = vld [vmem:[%s270 + $0xfd0] sm:$0xff]
      %v811 = vld [vmem:[%s270 + $0xfd8] sm:$0xff]
      %v812 = vld [vmem:[%s270 + $0xfe0] sm:$0xff]
      %v813 = vld [vmem:[%s270 + $0xfe8] sm:$0xff]
      %v814 = vld [vmem:[%s270 + $0xff0] sm:$0xff]
      %v815 = vld [vmem:[%s270 + $0xff8] sm:$0xff]
      %v816 = vld [vmem:[%s270 + $0x1000] sm:$0xff]
      %v817 = vld [vmem:[%s270 + $0x1008] sm:$0xff]
      %v818 = vld [vmem:[%s270 + $0x1010] sm:$0xff]
      %v819 = vld [vmem:[%s270 + $0x1018] sm:$0xff]
      %v820 = vld [vmem:[%s270 + $0x1020] sm:$0xff]
      %v821 = vld [vmem:[%s270 + $0x1028] sm:$0xff]
      %v822 = vld [vmem:[%s270 + $0x1030] sm:$0xff]
      %v823 = vld [vmem:[%s270 + $0x1038] sm:$0xff]
      %v824 = vld [vmem:[%s270 + $0x1040] sm:$0xff]
      %v825 = vld [vmem:[%s270 + $0x1048] sm:$0xff]
      %v826 = vld [vmem:[%s270 + $0x1050] sm:$0xff]
      %v827 = vld [vmem:[%s270 + $0x1058] sm:$0xff]
      %v828 = vld [vmem:[%s270 + $0x1060] sm:$0xff]
      %v829 = vld [vmem:[%s270 + $0x1068] sm:$0xff]
      %v830 = vld [vmem:[%s270 + $0x1070] sm:$0xff]
      %v831 = vld [vmem:[%s270 + $0x1078] sm:$0xff]
      %v832 = vld [vmem:[%s270 + $0x1080] sm:$0xff]
      %v833 = vld [vmem:[%s270 + $0x1088] sm:$0xff]
      %v834 = vld [vmem:[%s270 + $0x1090] sm:$0xff]
      %v835 = vld [vmem:[%s270 + $0x1098] sm:$0xff]
      %v836 = vld [vmem:[%s270 + $0x10a0] sm:$0xff]
      %v837 = vld [vmem:[%s270 + $0x10a8] sm:$0xff]
      %v838 = vld [vmem:[%s270 + $0x10b0] sm:$0xff]
      %v839 = vld [vmem:[%s270 + $0x10b8] sm:$0xff]
      %v840 = vld [vmem:[%s270 + $0x10c0] sm:$0xff]
      %v841 = vld [vmem:[%s270 + $0x10c8] sm:$0xff]
      %v842 = vld [vmem:[%s270 + $0x10d0] sm:$0xff]
      %v843 = vld [vmem:[%s270 + $0x10d8] sm:$0xff]
      %v844 = vld [vmem:[%s270 + $0x10e0] sm:$0xff]
      %v845 = vld [vmem:[%s270 + $0x10e8] sm:$0xff]
      %v846 = vld [vmem:[%s270 + $0x10f0] sm:$0xff]
      %v847 = vld [vmem:[%s270 + $0x10f8] sm:$0xff]
      %v848 = vld [vmem:[%s270 + $0x1100] sm:$0xff]
      %v849 = vld [vmem:[%s270 + $0x1108] sm:$0xff]
      %v850 = vld [vmem:[%s270 + $0x1110] sm:$0xff]
      %v851 = vld [vmem:[%s270 + $0x1118] sm:$0xff]
      %v852 = vld [vmem:[%s270 + $0x1120] sm:$0xff]
      %v853 = vld [vmem:[%s270 + $0x1128] sm:$0xff]
      %v854 = vld [vmem:[%s270 + $0x1130] sm:$0xff]
      %v855 = vld [vmem:[%s270 + $0x1138] sm:$0xff]
      %v856 = vld [vmem:[%s270 + $0x1140] sm:$0xff]
      %v857 = vld [vmem:[%s270 + $0x1148] sm:$0xff]
      %v858 = vld [vmem:[%s270 + $0x1150] sm:$0xff]
      %v859 = vld [vmem:[%s270 + $0x1158] sm:$0xff]
      %v860 = vld [vmem:[%s270 + $0x1160] sm:$0xff]
      %v861 = vld [vmem:[%s270 + $0x1168] sm:$0xff]
      %v862 = vld [vmem:[%s270 + $0x1170] sm:$0xff]
      %v863 = vld [vmem:[%s270 + $0x1178] sm:$0xff]
      %v864 = vld [vmem:[%s270 + $0x1180] sm:$0xff]
      %v865 = vld [vmem:[%s270 + $0x1188] sm:$0xff]
      %v866 = vld [vmem:[%s270 + $0x1190] sm:$0xff]
      %v867 = vld [vmem:[%s270 + $0x1198] sm:$0xff]
      %v868 = vld [vmem:[%s270 + $0x11a0] sm:$0xff]
      %v869 = vld [vmem:[%s270 + $0x11a8] sm:$0xff]
      %v870 = vld [vmem:[%s270 + $0x11b0] sm:$0xff]
      %v871 = vld [vmem:[%s270 + $0x11b8] sm:$0xff]
      %v872 = vld [vmem:[%s270 + $0x11c0] sm:$0xff]
      %v873 = vld [vmem:[%s270 + $0x11c8] sm:$0xff]
      %v874 = vld [vmem:[%s270 + $0x11d0] sm:$0xff]
      %v875 = vld [vmem:[%s270 + $0x11d8] sm:$0xff]
      %v876 = vld [vmem:[%s270 + $0x11e0] sm:$0xff]
      %v877 = vld [vmem:[%s270 + $0x11e8] sm:$0xff]
      %v878 = vld [vmem:[%s270 + $0x11f0] sm:$0xff]
      %v879 = vld [vmem:[%s270 + $0x11f8] sm:$0xff]
      %v880 = vld [vmem:[%s270 + $0x1200] sm:$0xff]
      %v881 = vld [vmem:[%s270 + $0x1208] sm:$0xff]
      %v882 = vld [vmem:[%s270 + $0x1210] sm:$0xff]
      %v883 = vld [vmem:[%s270 + $0x1218] sm:$0xff]
      %v884 = vld [vmem:[%s270 + $0x1220] sm:$0xff]
      %v885 = vld [vmem:[%s270 + $0x1228] sm:$0xff]
      %v886 = vld [vmem:[%s270 + $0x1230] sm:$0xff]
      %v887 = vld [vmem:[%s270 + $0x1238] sm:$0xff]
      %v888 = vld [vmem:[%s270 + $0x1240] sm:$0xff]
      %v889 = vld [vmem:[%s270 + $0x1248] sm:$0xff]
      %v890 = vld [vmem:[%s270 + $0x1250] sm:$0xff]
      %v891 = vld [vmem:[%s270 + $0x1258] sm:$0xff]
      %v892 = vld [vmem:[%s270 + $0x1260] sm:$0xff]
      %v893 = vld [vmem:[%s270 + $0x1268] sm:$0xff]
      %v894 = vld [vmem:[%s270 + $0x1270] sm:$0xff]
      %v895 = vld [vmem:[%s270 + $0x1278] sm:$0xff]
      %v896 = vld [vmem:[%s270 + $0x1280] sm:$0xff]
      %v897 = vld [vmem:[%s270 + $0x1288] sm:$0xff]
      %v898 = vld [vmem:[%s270 + $0x1290] sm:$0xff]
      %v899 = vld [vmem:[%s270 + $0x1298] sm:$0xff]
      %v900 = vld [vmem:[%s270 + $0x12a0] sm:$0xff]
      %v901 = vld [vmem:[%s270 + $0x12a8] sm:$0xff]
      %v902 = vld [vmem:[%s270 + $0x12b0] sm:$0xff]
      %v903 = vld [vmem:[%s270 + $0x12b8] sm:$0xff]
      %v904 = vld [vmem:[%s270 + $0x12c0] sm:$0xff]
      %v905 = vld [vmem:[%s270 + $0x12c8] sm:$0xff]
      %v906 = vld [vmem:[%s270 + $0x12d0] sm:$0xff]
      %v907 = vld [vmem:[%s270 + $0x12d8] sm:$0xff]
      %v908 = vld [vmem:[%s270 + $0x12e0] sm:$0xff]
      %v909 = vld [vmem:[%s270 + $0x12e8] sm:$0xff]
      %v910 = vld [vmem:[%s270 + $0x12f0] sm:$0xff]
      %v911 = vld [vmem:[%s270 + $0x12f8] sm:$0xff]
      %v912 = vld [vmem:[%s270 + $0x1300] sm:$0xff]
      %v913 = vld [vmem:[%s270 + $0x1308] sm:$0xff]
      %v914 = vld [vmem:[%s270 + $0x1310] sm:$0xff]
      %v915 = vld [vmem:[%s270 + $0x1318] sm:$0xff]
      %v916 = vld [vmem:[%s270 + $0x1320] sm:$0xff]
      %v917 = vld [vmem:[%s270 + $0x1328] sm:$0xff]
      %v918 = vld [vmem:[%s270 + $0x1330] sm:$0xff]
      %v919 = vld [vmem:[%s270 + $0x1338] sm:$0xff]
      %v920 = vld [vmem:[%s270 + $0x1340] sm:$0xff]
      %v921 = vld [vmem:[%s270 + $0x1348] sm:$0xff]
      %v922 = vld [vmem:[%s270 + $0x1350] sm:$0xff]
      %v923 = vld [vmem:[%s270 + $0x1358] sm:$0xff]
      %v924 = vld [vmem:[%s270 + $0x1360] sm:$0xff]
      %v925 = vld [vmem:[%s270 + $0x1368] sm:$0xff]
      %v926 = vld [vmem:[%s270 + $0x1370] sm:$0xff]
      %v927 = vld [vmem:[%s270 + $0x1378] sm:$0xff]
      %v928 = vld [vmem:[%s270 + $0x1380] sm:$0xff]
      %v929 = vld [vmem:[%s270 + $0x1388] sm:$0xff]
      %v930 = vld [vmem:[%s270 + $0x1390] sm:$0xff]
      %v931 = vld [vmem:[%s270 + $0x1398] sm:$0xff]
      %v932 = vld [vmem:[%s270 + $0x13a0] sm:$0xff]
      %v933 = vld [vmem:[%s270 + $0x13a8] sm:$0xff]
      %v934 = vld [vmem:[%s270 + $0x13b0] sm:$0xff]
      %v935 = vld [vmem:[%s270 + $0x13b8] sm:$0xff]
      %v936 = vld [vmem:[%s270 + $0x13c0] sm:$0xff]
      %v937 = vld [vmem:[%s270 + $0x13c8] sm:$0xff]
      %v938 = vld [vmem:[%s270 + $0x13d0] sm:$0xff]
      %v939 = vld [vmem:[%s270 + $0x13d8] sm:$0xff]
      %v940 = vld [vmem:[%s270 + $0x13e0] sm:$0xff]
      %v941 = vld [vmem:[%s270 + $0x13e8] sm:$0xff]
      %v942 = vld [vmem:[%s270 + $0x13f0] sm:$0xff]
      %v943 = vld [vmem:[%s270 + $0x13f8] sm:$0xff]
      %v944 = vld [vmem:[%s270 + $0x1400] sm:$0xff]
      %v945 = vld [vmem:[%s270 + $0x1408] sm:$0xff]
      %v946 = vld [vmem:[%s270 + $0x1410] sm:$0xff]
      %v947 = vld [vmem:[%s270 + $0x1418] sm:$0xff]
      %v948 = vld [vmem:[%s270 + $0x1420] sm:$0xff]
      %v949 = vld [vmem:[%s270 + $0x1428] sm:$0xff]
      %v950 = vld [vmem:[%s270 + $0x1430] sm:$0xff]
      %v951 = vld [vmem:[%s270 + $0x1438] sm:$0xff]
      %v952 = vld [vmem:[%s270 + $0x1440] sm:$0xff]
      %v953 = vld [vmem:[%s270 + $0x1448] sm:$0xff]
      %v954 = vld [vmem:[%s270 + $0x1450] sm:$0xff]
      %v955 = vld [vmem:[%s270 + $0x1458] sm:$0xff]
      %v956 = vld [vmem:[%s270 + $0x1460] sm:$0xff]
      %v957 = vld [vmem:[%s270 + $0x1468] sm:$0xff]
      %v958 = vld [vmem:[%s270 + $0x1470] sm:$0xff]
      %v959 = vld [vmem:[%s270 + $0x1478] sm:$0xff]
      %v960 = vld [vmem:[%s270 + $0x1480] sm:$0xff]
      %v961 = vld [vmem:[%s270 + $0x1488] sm:$0xff]
      %v962 = vld [vmem:[%s270 + $0x1490] sm:$0xff]
      %v963 = vld [vmem:[%s270 + $0x1498] sm:$0xff]
      %v964 = vld [vmem:[%s270 + $0x14a0] sm:$0xff]
      %v965 = vld [vmem:[%s270 + $0x14a8] sm:$0xff]
      %v966 = vld [vmem:[%s270 + $0x14b0] sm:$0xff]
      %v967 = vld [vmem:[%s270 + $0x14b8] sm:$0xff]
      %v968 = vld [vmem:[%s270 + $0x14c0] sm:$0xff]
      %v969 = vld [vmem:[%s270 + $0x14c8] sm:$0xff]
      %v970 = vld [vmem:[%s270 + $0x14d0] sm:$0xff]
      %v971 = vld [vmem:[%s270 + $0x14d8] sm:$0xff]
      %v972 = vld [vmem:[%s270 + $0x14e0] sm:$0xff]
      %v973 = vld [vmem:[%s270 + $0x14e8] sm:$0xff]
      %v974 = vld [vmem:[%s270 + $0x14f0] sm:$0xff]
      %v975 = vld [vmem:[%s270 + $0x14f8] sm:$0xff]
      %v976 = vld [vmem:[%s270 + $0x1500] sm:$0xff]
      %v977 = vld [vmem:[%s270 + $0x1508] sm:$0xff]
      %v978 = vld [vmem:[%s270 + $0x1510] sm:$0xff]
      %v979 = vld [vmem:[%s270 + $0x1518] sm:$0xff]
      %v980 = vld [vmem:[%s270 + $0x1520] sm:$0xff]
      %v981 = vld [vmem:[%s270 + $0x1528] sm:$0xff]
      %v982 = vld [vmem:[%s270 + $0x1530] sm:$0xff]
      %v983 = vld [vmem:[%s270 + $0x1538] sm:$0xff]
      %v984 = vld [vmem:[%s270 + $0x1540] sm:$0xff]
      %v985 = vld [vmem:[%s270 + $0x1548] sm:$0xff]
      %v986 = vld [vmem:[%s270 + $0x1550] sm:$0xff]
      %v987 = vld [vmem:[%s270 + $0x1558] sm:$0xff]
      %v988 = vld [vmem:[%s270 + $0x1560] sm:$0xff]
      %v989 = vld [vmem:[%s270 + $0x1568] sm:$0xff]
      %v990 = vld [vmem:[%s270 + $0x1570] sm:$0xff]
      %v991 = vld [vmem:[%s270 + $0x1578] sm:$0xff]
      %v992 = vld [vmem:[%s270 + $0x1580] sm:$0xff]
      %v993 = vld [vmem:[%s270 + $0x1588] sm:$0xff]
      %v994 = vld [vmem:[%s270 + $0x1590] sm:$0xff]
      %v995 = vld [vmem:[%s270 + $0x1598] sm:$0xff]
      %v996 = vld [vmem:[%s270 + $0x15a0] sm:$0xff]
      %v997 = vld [vmem:[%s270 + $0x15a8] sm:$0xff]
      %v998 = vld [vmem:[%s270 + $0x15b0] sm:$0xff]
      %v999 = vld [vmem:[%s270 + $0x15b8] sm:$0xff]
      %v1000 = vld [vmem:[%s270 + $0x15c0] sm:$0xff]
      %v1001 = vld [vmem:[%s270 + $0x15c8] sm:$0xff]
      %v1002 = vld [vmem:[%s270 + $0x15d0] sm:$0xff]
      %v1003 = vld [vmem:[%s270 + $0x15d8] sm:$0xff]
      %v1004 = vld [vmem:[%s270 + $0x15e0] sm:$0xff]
      %v1005 = vld [vmem:[%s270 + $0x15e8] sm:$0xff]
      %v1006 = vld [vmem:[%s270 + $0x15f0] sm:$0xff]
      %v1007 = vld [vmem:[%s270 + $0x15f8] sm:$0xff]
      %v1008 = vld [vmem:[%s270 + $0x1600] sm:$0xff]
      %v1009 = vld [vmem:[%s270 + $0x1608] sm:$0xff]
      %v1010 = vld [vmem:[%s270 + $0x1610] sm:$0xff]
      %v1011 = vld [vmem:[%s270 + $0x1618] sm:$0xff]
      %v1012 = vld [vmem:[%s270 + $0x1620] sm:$0xff]
      %v1013 = vld [vmem:[%s270 + $0x1628] sm:$0xff]
      %v1014 = vld [vmem:[%s270 + $0x1630] sm:$0xff]
      %v1015 = vld [vmem:[%s270 + $0x1638] sm:$0xff]
      %v1016 = vld [vmem:[%s270 + $0x1640] sm:$0xff]
      %v1017 = vld [vmem:[%s270 + $0x1648] sm:$0xff]
      %v1018 = vld [vmem:[%s270 + $0x1650] sm:$0xff]
      %v1019 = vld [vmem:[%s270 + $0x1658] sm:$0xff]
      %v1020 = vld [vmem:[%s270 + $0x1660] sm:$0xff]
      %v1021 = vld [vmem:[%s270 + $0x1668] sm:$0xff]
      %v1022 = vld [vmem:[%s270 + $0x1670] sm:$0xff]
      %v1023 = vld [vmem:[%s270 + $0x1678] sm:$0xff]
      %v1024 = vld [vmem:[%s270 + $0x1680] sm:$0xff]
      %v1025 = vld [vmem:[%s270 + $0x1688] sm:$0xff]
      %v1026 = vld [vmem:[%s270 + $0x1690] sm:$0xff]
      %v1027 = vld [vmem:[%s270 + $0x1698] sm:$0xff]
      %v1028 = vld [vmem:[%s270 + $0x16a0] sm:$0xff]
      %v1029 = vld [vmem:[%s270 + $0x16a8] sm:$0xff]
      %v1030 = vld [vmem:[%s270 + $0x16b0] sm:$0xff]
      %v1031 = vld [vmem:[%s270 + $0x16b8] sm:$0xff]
      %v1032 = vld [vmem:[%s270 + $0x16c0] sm:$0xff]
      %v1033 = vld [vmem:[%s270 + $0x16c8] sm:$0xff]
      %v1034 = vld [vmem:[%s270 + $0x16d0] sm:$0xff]
      %v1035 = vld [vmem:[%s270 + $0x16d8] sm:$0xff]
      %v1036 = vld [vmem:[%s270 + $0x16e0] sm:$0xff]
      %v1037 = vld [vmem:[%s270 + $0x16e8] sm:$0xff]
      %v1038 = vld [vmem:[%s270 + $0x16f0] sm:$0xff]
      %v1039 = vld [vmem:[%s270 + $0x16f8] sm:$0xff]
      %v1040 = vld [vmem:[%s270 + $0x1700] sm:$0xff]
      %v1041 = vld [vmem:[%s270 + $0x1708] sm:$0xff]
      %v1042 = vld [vmem:[%s270 + $0x1710] sm:$0xff]
      %v1043 = vld [vmem:[%s270 + $0x1718] sm:$0xff]
      %v1044 = vld [vmem:[%s270 + $0x1720] sm:$0xff]
      %v1045 = vld [vmem:[%s270 + $0x1728] sm:$0xff]
      %v1046 = vld [vmem:[%s270 + $0x1730] sm:$0xff]
      %v1047 = vld [vmem:[%s270 + $0x1738] sm:$0xff]
      %v1048 = vld [vmem:[%s270 + $0x1740] sm:$0xff]
      %v1049 = vld [vmem:[%s270 + $0x1748] sm:$0xff]
      %v1050 = vld [vmem:[%s270 + $0x1750] sm:$0xff]
      %v1051 = vld [vmem:[%s270 + $0x1758] sm:$0xff]
      %v1052 = vld [vmem:[%s270 + $0x1760] sm:$0xff]
      %v1053 = vld [vmem:[%s270 + $0x1768] sm:$0xff]
      %v1054 = vld [vmem:[%s270 + $0x1770] sm:$0xff]
      %v1055 = vld [vmem:[%s270 + $0x1778] sm:$0xff]
      %v1056 = vld [vmem:[%s270 + $0x1780] sm:$0xff]
      %v1057 = vld [vmem:[%s270 + $0x1788] sm:$0xff]
      %v1058 = vld [vmem:[%s270 + $0x1790] sm:$0xff]
      %v1059 = vld [vmem:[%s270 + $0x1798] sm:$0xff]
      %v1060 = vld [vmem:[%s270 + $0x17a0] sm:$0xff]
      %v1061 = vld [vmem:[%s270 + $0x17a8] sm:$0xff]
      %v1062 = vld [vmem:[%s270 + $0x17b0] sm:$0xff]
      %v1063 = vld [vmem:[%s270 + $0x17b8] sm:$0xff]
      %v1064 = vld [vmem:[%s270 + $0x17c0] sm:$0xff]
      %v1065 = vld [vmem:[%s270 + $0x17c8] sm:$0xff]
      %v1066 = vld [vmem:[%s270 + $0x17d0] sm:$0xff]
      %v1067 = vld [vmem:[%s270 + $0x17d8] sm:$0xff]
      %v1068 = vld [vmem:[%s270 + $0x17e0] sm:$0xff]
      %v1069 = vld [vmem:[%s270 + $0x17e8] sm:$0xff]
      %v1070 = vld [vmem:[%s270 + $0x17f0] sm:$0xff]
      %v1071 = vld [vmem:[%s270 + $0x17f8] sm:$0xff]
      %v1072 = vld [vmem:[%s270 + $0x1800] sm:$0xff]
      %v1073 = vld [vmem:[%s270 + $0x1808] sm:$0xff]
      %v1074 = vld [vmem:[%s270 + $0x1810] sm:$0xff]
      %v1075 = vld [vmem:[%s270 + $0x1818] sm:$0xff]
      %v1076 = vld [vmem:[%s270 + $0x1820] sm:$0xff]
      %v1077 = vld [vmem:[%s270 + $0x1828] sm:$0xff]
      %v1078 = vld [vmem:[%s270 + $0x1830] sm:$0xff]
      %v1079 = vld [vmem:[%s270 + $0x1838] sm:$0xff]
      %v1080 = vld [vmem:[%s270 + $0x1840] sm:$0xff]
      %v1081 = vld [vmem:[%s270 + $0x1848] sm:$0xff]
      %v1082 = vld [vmem:[%s270 + $0x1850] sm:$0xff]
      %v1083 = vld [vmem:[%s270 + $0x1858] sm:$0xff]
      %v1084 = vld [vmem:[%s270 + $0x1860] sm:$0xff]
      %v1085 = vld [vmem:[%s270 + $0x1868] sm:$0xff]
      %v1086 = vld [vmem:[%s270 + $0x1870] sm:$0xff]
      %v1087 = vld [vmem:[%s270 + $0x1878] sm:$0xff]
      %v1088 = vld [vmem:[%s270 + $0x1880] sm:$0xff]
      %v1089 = vld [vmem:[%s270 + $0x1888] sm:$0xff]
      %v1090 = vld [vmem:[%s270 + $0x1890] sm:$0xff]
      %v1091 = vld [vmem:[%s270 + $0x1898] sm:$0xff]
      %v1092 = vld [vmem:[%s270 + $0x18a0] sm:$0xff]
      %v1093 = vld [vmem:[%s270 + $0x18a8] sm:$0xff]
      %v1094 = vld [vmem:[%s270 + $0x18b0] sm:$0xff]
      %v1095 = vld [vmem:[%s270 + $0x18b8] sm:$0xff]
      %v1096 = vld [vmem:[%s270 + $0x18c0] sm:$0xff]
      %v1097 = vld [vmem:[%s270 + $0x18c8] sm:$0xff]
      %v1098 = vld [vmem:[%s270 + $0x18d0] sm:$0xff]
      %v1099 = vld [vmem:[%s270 + $0x18d8] sm:$0xff]
      %v1100 = vld [vmem:[%s270 + $0x18e0] sm:$0xff]
      %v1101 = vld [vmem:[%s270 + $0x18e8] sm:$0xff]
      %v1102 = vld [vmem:[%s270 + $0x18f0] sm:$0xff]
      %v1103 = vld [vmem:[%s270 + $0x18f8] sm:$0xff]
      %v1104 = vld [vmem:[%s270 + $0x1900] sm:$0xff]
      %v1105 = vld [vmem:[%s270 + $0x1908] sm:$0xff]
      %v1106 = vld [vmem:[%s270 + $0x1910] sm:$0xff]
      %v1107 = vld [vmem:[%s270 + $0x1918] sm:$0xff]
      %v1108 = vld [vmem:[%s270 + $0x1920] sm:$0xff]
      %v1109 = vld [vmem:[%s270 + $0x1928] sm:$0xff]
      %v1110 = vld [vmem:[%s270 + $0x1930] sm:$0xff]
      %v1111 = vld [vmem:[%s270 + $0x1938] sm:$0xff]
      %v1112 = vld [vmem:[%s270 + $0x1940] sm:$0xff]
      %v1113 = vld [vmem:[%s270 + $0x1948] sm:$0xff]
      %v1114 = vld [vmem:[%s270 + $0x1950] sm:$0xff]
      %v1115 = vld [vmem:[%s270 + $0x1958] sm:$0xff]
      %v1116 = vld [vmem:[%s270 + $0x1960] sm:$0xff]
      %v1117 = vld [vmem:[%s270 + $0x1968] sm:$0xff]
      %v1118 = vld [vmem:[%s270 + $0x1970] sm:$0xff]
      %v1119 = vld [vmem:[%s270 + $0x1978] sm:$0xff]
      %v1120 = vld [vmem:[%s270 + $0x1980] sm:$0xff]
      %v1121 = vld [vmem:[%s270 + $0x1988] sm:$0xff]
      %v1122 = vld [vmem:[%s270 + $0x1990] sm:$0xff]
      %v1123 = vld [vmem:[%s270 + $0x1998] sm:$0xff]
      %v1124 = vld [vmem:[%s270 + $0x19a0] sm:$0xff]
      %v1125 = vld [vmem:[%s270 + $0x19a8] sm:$0xff]
      %v1126 = vld [vmem:[%s270 + $0x19b0] sm:$0xff]
      %v1127 = vld [vmem:[%s270 + $0x19b8] sm:$0xff]
      %v1128 = vld [vmem:[%s270 + $0x19c0] sm:$0xff]
      %v1129 = vld [vmem:[%s270 + $0x19c8] sm:$0xff]
      %v1130 = vld [vmem:[%s270 + $0x19d0] sm:$0xff]
      %v1131 = vld [vmem:[%s270 + $0x19d8] sm:$0xff]
      %v1132 = vld [vmem:[%s270 + $0x19e0] sm:$0xff]
      %v1133 = vld [vmem:[%s270 + $0x19e8] sm:$0xff]
      %v1134 = vld [vmem:[%s270 + $0x19f0] sm:$0xff]
      %v1135 = vld [vmem:[%s270 + $0x19f8] sm:$0xff]
      %v1136 = vld [vmem:[%s270 + $0x1a00] sm:$0xff]
      %v1137 = vld [vmem:[%s270 + $0x1a08] sm:$0xff]
      %v1138 = vld [vmem:[%s270 + $0x1a10] sm:$0xff]
      %v1139 = vld [vmem:[%s270 + $0x1a18] sm:$0xff]
      %v1140 = vld [vmem:[%s270 + $0x1a20] sm:$0xff]
      %v1141 = vld [vmem:[%s270 + $0x1a28] sm:$0xff]
      %v1142 = vld [vmem:[%s270 + $0x1a30] sm:$0xff]
      %v1143 = vld [vmem:[%s270 + $0x1a38] sm:$0xff]
      %v1144 = vld [vmem:[%s270 + $0x1a40] sm:$0xff]
      %v1145 = vld [vmem:[%s270 + $0x1a48] sm:$0xff]
      %v1146 = vld [vmem:[%s270 + $0x1a50] sm:$0xff]
      %v1147 = vld [vmem:[%s270 + $0x1a58] sm:$0xff]
      %v1148 = vld [vmem:[%s270 + $0x1a60] sm:$0xff]
      %v1149 = vld [vmem:[%s270 + $0x1a68] sm:$0xff]
      %v1150 = vld [vmem:[%s270 + $0x1a70] sm:$0xff]
      %v1151 = vld [vmem:[%s270 + $0x1a78] sm:$0xff]
      %v1152 = vld [vmem:[%s270 + $0x1a80] sm:$0xff]
      %v1153 = vld [vmem:[%s270 + $0x1a88] sm:$0xff]
      %v1154 = vld [vmem:[%s270 + $0x1a90] sm:$0xff]
      %v1155 = vld [vmem:[%s270 + $0x1a98] sm:$0xff]
      %v1156 = vld [vmem:[%s270 + $0x1aa0] sm:$0xff]
      %v1157 = vld [vmem:[%s270 + $0x1aa8] sm:$0xff]
      %v1158 = vld [vmem:[%s270 + $0x1ab0] sm:$0xff]
      %v1159 = vld [vmem:[%s270 + $0x1ab8] sm:$0xff]
      %v1160 = vld [vmem:[%s270 + $0x1ac0] sm:$0xff]
      %v1161 = vld [vmem:[%s270 + $0x1ac8] sm:$0xff]
      %v1162 = vld [vmem:[%s270 + $0x1ad0] sm:$0xff]
      %v1163 = vld [vmem:[%s270 + $0x1ad8] sm:$0xff]
      %v1164 = vld [vmem:[%s270 + $0x1ae0] sm:$0xff]
      %v1165 = vld [vmem:[%s270 + $0x1ae8] sm:$0xff]
      %v1166 = vld [vmem:[%s270 + $0x1af0] sm:$0xff]
      %v1167 = vld [vmem:[%s270 + $0x1af8] sm:$0xff]
      %v1168 = vld [vmem:[%s270 + $0x1b00] sm:$0xff]
      %v1169 = vld [vmem:[%s270 + $0x1b08] sm:$0xff]
      %v1170 = vld [vmem:[%s270 + $0x1b10] sm:$0xff]
      %v1171 = vld [vmem:[%s270 + $0x1b18] sm:$0xff]
      %v1172 = vld [vmem:[%s270 + $0x1b20] sm:$0xff]
      %v1173 = vld [vmem:[%s270 + $0x1b28] sm:$0xff]
      %v1174 = vld [vmem:[%s270 + $0x1b30] sm:$0xff]
      %v1175 = vld [vmem:[%s270 + $0x1b38] sm:$0xff]
      %v1176 = vld [vmem:[%s270 + $0x1b40] sm:$0xff]
      %v1177 = vld [vmem:[%s270 + $0x1b48] sm:$0xff]
      %v1178 = vld [vmem:[%s270 + $0x1b50] sm:$0xff]
      %v1179 = vld [vmem:[%s270 + $0x1b58] sm:$0xff]
      %v1180 = vld [vmem:[%s270 + $0x1b60] sm:$0xff]
      %v1181 = vld [vmem:[%s270 + $0x1b68] sm:$0xff]
      %v1182 = vld [vmem:[%s270 + $0x1b70] sm:$0xff]
      %v1183 = vld [vmem:[%s270 + $0x1b78] sm:$0xff]
      %v1184 = vld [vmem:[%s270 + $0x1b80] sm:$0xff]
      %v1185 = vld [vmem:[%s270 + $0x1b88] sm:$0xff]
      %v1186 = vld [vmem:[%s270 + $0x1b90] sm:$0xff]
      %v1187 = vld [vmem:[%s270 + $0x1b98] sm:$0xff]
      %v1188 = vld [vmem:[%s270 + $0x1ba0] sm:$0xff]
      %v1189 = vld [vmem:[%s270 + $0x1ba8] sm:$0xff]
      %v1190 = vld [vmem:[%s270 + $0x1bb0] sm:$0xff]
      %v1191 = vld [vmem:[%s270 + $0x1bb8] sm:$0xff]
      %v1192 = vld [vmem:[%s270 + $0x1bc0] sm:$0xff]
      %v1193 = vld [vmem:[%s270 + $0x1bc8] sm:$0xff]
      %v1194 = vld [vmem:[%s270 + $0x1bd0] sm:$0xff]
      %v1195 = vld [vmem:[%s270 + $0x1bd8] sm:$0xff]
      %v1196 = vld [vmem:[%s270 + $0x1be0] sm:$0xff]
      %v1197 = vld [vmem:[%s270 + $0x1be8] sm:$0xff]
      %v1198 = vld [vmem:[%s270 + $0x1bf0] sm:$0xff]
      %v1199 = vld [vmem:[%s270 + $0x1bf8] sm:$0xff]
      %v1200 = vld [vmem:[%s270 + $0x1c00] sm:$0xff]
      %v1201 = vld [vmem:[%s270 + $0x1c08] sm:$0xff]
      %v1202 = vld [vmem:[%s270 + $0x1c10] sm:$0xff]
      %v1203 = vld [vmem:[%s270 + $0x1c18] sm:$0xff]
      %v1204 = vld [vmem:[%s270 + $0x1c20] sm:$0xff]
      %v1205 = vld [vmem:[%s270 + $0x1c28] sm:$0xff]
      %v1206 = vld [vmem:[%s270 + $0x1c30] sm:$0xff]
      %v1207 = vld [vmem:[%s270 + $0x1c38] sm:$0xff]
      %v1208 = vld [vmem:[%s270 + $0x1c40] sm:$0xff]
      %v1209 = vld [vmem:[%s270 + $0x1c48] sm:$0xff]
      %v1210 = vld [vmem:[%s270 + $0x1c50] sm:$0xff]
      %v1211 = vld [vmem:[%s270 + $0x1c58] sm:$0xff]
      %v1212 = vld [vmem:[%s270 + $0x1c60] sm:$0xff]
      %v1213 = vld [vmem:[%s270 + $0x1c68] sm:$0xff]
      %v1214 = vld [vmem:[%s270 + $0x1c70] sm:$0xff]
      %v1215 = vld [vmem:[%s270 + $0x1c78] sm:$0xff]
      %v1216 = vld [vmem:[%s270 + $0x1c80] sm:$0xff]
      %v1217 = vld [vmem:[%s270 + $0x1c88] sm:$0xff]
      %v1218 = vld [vmem:[%s270 + $0x1c90] sm:$0xff]
      %v1219 = vld [vmem:[%s270 + $0x1c98] sm:$0xff]
      %v1220 = vld [vmem:[%s270 + $0x1ca0] sm:$0xff]
      %v1221 = vld [vmem:[%s270 + $0x1ca8] sm:$0xff]
      %v1222 = vld [vmem:[%s270 + $0x1cb0] sm:$0xff]
      %v1223 = vld [vmem:[%s270 + $0x1cb8] sm:$0xff]
      %v1224 = vld [vmem:[%s270 + $0x1cc0] sm:$0xff]
      %v1225 = vld [vmem:[%s270 + $0x1cc8] sm:$0xff]
      %v1226 = vld [vmem:[%s270 + $0x1cd0] sm:$0xff]
      %v1227 = vld [vmem:[%s270 + $0x1cd8] sm:$0xff]
      %v1228 = vld [vmem:[%s270 + $0x1ce0] sm:$0xff]
      %v1229 = vld [vmem:[%s270 + $0x1ce8] sm:$0xff]
      %v1230 = vld [vmem:[%s270 + $0x1cf0] sm:$0xff]
      %v1231 = vld [vmem:[%s270 + $0x1cf8] sm:$0xff]
      %v1232 = vld [vmem:[%s270 + $0x1d00] sm:$0xff]
      %v1233 = vld [vmem:[%s270 + $0x1d08] sm:$0xff]
      %v1234 = vld [vmem:[%s270 + $0x1d10] sm:$0xff]
      %v1235 = vld [vmem:[%s270 + $0x1d18] sm:$0xff]
      %v1236 = vld [vmem:[%s270 + $0x1d20] sm:$0xff]
      %v1237 = vld [vmem:[%s270 + $0x1d28] sm:$0xff]
      %v1238 = vld [vmem:[%s270 + $0x1d30] sm:$0xff]
      %v1239 = vld [vmem:[%s270 + $0x1d38] sm:$0xff]
      %v1240 = vld [vmem:[%s270 + $0x1d40] sm:$0xff]
      %v1241 = vld [vmem:[%s270 + $0x1d48] sm:$0xff]
      %v1242 = vld [vmem:[%s270 + $0x1d50] sm:$0xff]
      %v1243 = vld [vmem:[%s270 + $0x1d58] sm:$0xff]
      %v1244 = vld [vmem:[%s270 + $0x1d60] sm:$0xff]
      %v1245 = vld [vmem:[%s270 + $0x1d68] sm:$0xff]
      %v1246 = vld [vmem:[%s270 + $0x1d70] sm:$0xff]
      %v1247 = vld [vmem:[%s270 + $0x1d78] sm:$0xff]
      %v1248 = vld [vmem:[%s270 + $0x1d80] sm:$0xff]
      %v1249 = vld [vmem:[%s270 + $0x1d88] sm:$0xff]
      %v1250 = vld [vmem:[%s270 + $0x1d90] sm:$0xff]
      %v1251 = vld [vmem:[%s270 + $0x1d98] sm:$0xff]
      %v1252 = vld [vmem:[%s270 + $0x1da0] sm:$0xff]
      %v1253 = vld [vmem:[%s270 + $0x1da8] sm:$0xff]
      %v1254 = vld [vmem:[%s270 + $0x1db0] sm:$0xff]
      %v1255 = vld [vmem:[%s270 + $0x1db8] sm:$0xff]
      %v1256 = vld [vmem:[%s270 + $0x1dc0] sm:$0xff]
      %v1257 = vld [vmem:[%s270 + $0x1dc8] sm:$0xff]
      %v1258 = vld [vmem:[%s270 + $0x1dd0] sm:$0xff]
      %v1259 = vld [vmem:[%s270 + $0x1dd8] sm:$0xff]
      %v1260 = vld [vmem:[%s270 + $0x1de0] sm:$0xff]
      %v1261 = vld [vmem:[%s270 + $0x1de8] sm:$0xff]
      %v1262 = vld [vmem:[%s270 + $0x1df0] sm:$0xff]
      %v1263 = vld [vmem:[%s270 + $0x1df8] sm:$0xff]
      %v1264 = vld [vmem:[%s270 + $0x1e00] sm:$0xff]
      %v1265 = vld [vmem:[%s270 + $0x1e08] sm:$0xff]
      %v1266 = vld [vmem:[%s270 + $0x1e10] sm:$0xff]
      %v1267 = vld [vmem:[%s270 + $0x1e18] sm:$0xff]
      %v1268 = vld [vmem:[%s270 + $0x1e20] sm:$0xff]
      %v1269 = vld [vmem:[%s270 + $0x1e28] sm:$0xff]
      %v1270 = vld [vmem:[%s270 + $0x1e30] sm:$0xff]
      %v1271 = vld [vmem:[%s270 + $0x1e38] sm:$0xff]
      %v1272 = vld [vmem:[%s270 + $0x1e40] sm:$0xff]
      %v1273 = vld [vmem:[%s270 + $0x1e48] sm:$0xff]
      %v1274 = vld [vmem:[%s270 + $0x1e50] sm:$0xff]
      %v1275 = vld [vmem:[%s270 + $0x1e58] sm:$0xff]
      %v1276 = vld [vmem:[%s270 + $0x1e60] sm:$0xff]
      %v1277 = vld [vmem:[%s270 + $0x1e68] sm:$0xff]
      %v1278 = vld [vmem:[%s270 + $0x1e70] sm:$0xff]
      %v1279 = vld [vmem:[%s270 + $0x1e78] sm:$0xff]
      %v1280 = vld [vmem:[%s270 + $0x1e80] sm:$0xff]
      %v1281 = vld [vmem:[%s270 + $0x1e88] sm:$0xff]
      %v1282 = vld [vmem:[%s270 + $0x1e90] sm:$0xff]
      %v1283 = vld [vmem:[%s270 + $0x1e98] sm:$0xff]
      %v1284 = vld [vmem:[%s270 + $0x1ea0] sm:$0xff]
      %v1285 = vld [vmem:[%s270 + $0x1ea8] sm:$0xff]
      %v1286 = vld [vmem:[%s270 + $0x1eb0] sm:$0xff]
      %v1287 = vld [vmem:[%s270 + $0x1eb8] sm:$0xff]
      %v1288 = vld [vmem:[%s270 + $0x1ec0] sm:$0xff]
      %v1289 = vld [vmem:[%s270 + $0x1ec8] sm:$0xff]
      %v1290 = vld [vmem:[%s270 + $0x1ed0] sm:$0xff]
      %v1291 = vld [vmem:[%s270 + $0x1ed8] sm:$0xff]
      %v1292 = vld [vmem:[%s270 + $0x1ee0] sm:$0xff]
      %v1293 = vld [vmem:[%s270 + $0x1ee8] sm:$0xff]
      %v1294 = vld [vmem:[%s270 + $0x1ef0] sm:$0xff]
      %v1295 = vld [vmem:[%s270 + $0x1ef8] sm:$0xff]
      %v1296 = vld [vmem:[%s270 + $0x1f00] sm:$0xff]
      %v1297 = vld [vmem:[%s270 + $0x1f08] sm:$0xff]
      %v1298 = vld [vmem:[%s270 + $0x1f10] sm:$0xff]
      %v1299 = vld [vmem:[%s270 + $0x1f18] sm:$0xff]
      %v1300 = vld [vmem:[%s270 + $0x1f20] sm:$0xff]
      %v1301 = vld [vmem:[%s270 + $0x1f28] sm:$0xff]
      %v1302 = vld [vmem:[%s270 + $0x1f30] sm:$0xff]
      %v1303 = vld [vmem:[%s270 + $0x1f38] sm:$0xff]
      %v1304 = vld [vmem:[%s270 + $0x1f40] sm:$0xff]
      %v1305 = vld [vmem:[%s270 + $0x1f48] sm:$0xff]
      %v1306 = vld [vmem:[%s270 + $0x1f50] sm:$0xff]
      %v1307 = vld [vmem:[%s270 + $0x1f58] sm:$0xff]
      %v1308 = vld [vmem:[%s270 + $0x1f60] sm:$0xff]
      %v1309 = vld [vmem:[%s270 + $0x1f68] sm:$0xff]
      %v1310 = vld [vmem:[%s270 + $0x1f70] sm:$0xff]
      %v1311 = vld [vmem:[%s270 + $0x1f78] sm:$0xff]
      %v1312 = vld [vmem:[%s270 + $0x1f80] sm:$0xff]
      %v1313 = vld [vmem:[%s270 + $0x1f88] sm:$0xff]
      %v1314 = vld [vmem:[%s270 + $0x1f90] sm:$0xff]
      %v1315 = vld [vmem:[%s270 + $0x1f98] sm:$0xff]
      %v1316 = vld [vmem:[%s270 + $0x1fa0] sm:$0xff]
      %v1317 = vld [vmem:[%s270 + $0x1fa8] sm:$0xff]
      %v1318 = vld [vmem:[%s270 + $0x1fb0] sm:$0xff]
      %v1319 = vld [vmem:[%s270 + $0x1fb8] sm:$0xff]
      %v1320 = vld [vmem:[%s270 + $0x1fc0] sm:$0xff]
      %v1321 = vld [vmem:[%s270 + $0x1fc8] sm:$0xff]
      %v1322 = vld [vmem:[%s270 + $0x1fd0] sm:$0xff]
      %v1323 = vld [vmem:[%s270 + $0x1fd8] sm:$0xff]
      %v1324 = vld [vmem:[%s270 + $0x1fe0] sm:$0xff]
      %v1325 = vld [vmem:[%s270 + $0x1fe8] sm:$0xff]
      %v1326 = vld [vmem:[%s270 + $0x1ff0] sm:$0xff]
      %v1327 = vld [vmem:[%s270 + $0x1ff8] sm:$0xff]
      %v1344 = vunpack.c.l.b16 %v288
      %v1345 = vunpack.c.h.b16 %v288
      %v1346 = vunpack.c.l.b16 %v289
      %v1347 = vunpack.c.h.b16 %v289
      %v1348 = vunpack.c.l.b16 %v290
      %v1349 = vunpack.c.h.b16 %v290
      %v1350 = vunpack.c.l.b16 %v291
      %v1351 = vunpack.c.h.b16 %v291
      %v1352 = vunpack.c.l.b16 %v292
      %v1353 = vunpack.c.h.b16 %v292
      %v1354 = vunpack.c.l.b16 %v293
      %v1355 = vunpack.c.h.b16 %v293
      %v1356 = vunpack.c.l.b16 %v294
      %v1357 = vunpack.c.h.b16 %v294
      %v1358 = vunpack.c.l.b16 %v295
      %v1359 = vunpack.c.h.b16 %v295
      %v1360 = vunpack.c.l.b16 %v296
      %v1361 = vunpack.c.h.b16 %v296
      %v1362 = vunpack.c.l.b16 %v297
      %v1363 = vunpack.c.h.b16 %v297
      %v1364 = vunpack.c.l.b16 %v298
      %v1365 = vunpack.c.h.b16 %v298
      %v1366 = vunpack.c.l.b16 %v299
      %v1367 = vunpack.c.h.b16 %v299
      %v1368 = vunpack.c.l.b16 %v300
      %v1369 = vunpack.c.h.b16 %v300
      %v1370 = vunpack.c.l.b16 %v301
      %v1371 = vunpack.c.h.b16 %v301
      %v1372 = vunpack.c.l.b16 %v302
      %v1373 = vunpack.c.h.b16 %v302
      %v1374 = vunpack.c.l.b16 %v303
      %v1375 = vunpack.c.h.b16 %v303
      %v1376 = vpack.c.b16 %v1344, %v1344
      %v1377 = vpack.c.b16 %v1345, %v1345
      %v1378 = vpack.c.b16 %v1346, %v1346
      %v1379 = vpack.c.b16 %v1347, %v1347
      %v1380 = vpack.c.b16 %v1348, %v1348
      %v1381 = vpack.c.b16 %v1349, %v1349
      %v1382 = vpack.c.b16 %v1350, %v1350
      %v1383 = vpack.c.b16 %v1351, %v1351
      %v1384 = vpack.c.b16 %v1352, %v1352
      %v1385 = vpack.c.b16 %v1353, %v1353
      %v1386 = vpack.c.b16 %v1354, %v1354
      %v1387 = vpack.c.b16 %v1355, %v1355
      %v1388 = vpack.c.b16 %v1356, %v1356
      %v1389 = vpack.c.b16 %v1357, %v1357
      %v1390 = vpack.c.b16 %v1358, %v1358
      %v1391 = vpack.c.b16 %v1359, %v1359
      %v1392 = vpack.c.b16 %v1360, %v1360
      %v1393 = vpack.c.b16 %v1361, %v1361
      %v1394 = vpack.c.b16 %v1362, %v1362
      %v1395 = vpack.c.b16 %v1363, %v1363
      %v1396 = vpack.c.b16 %v1364, %v1364
      %v1397 = vpack.c.b16 %v1365, %v1365
      %v1398 = vpack.c.b16 %v1366, %v1366
      %v1399 = vpack.c.b16 %v1367, %v1367
      %v1400 = vpack.c.b16 %v1368, %v1368
      %v1401 = vpack.c.b16 %v1369, %v1369
      %v1402 = vpack.c.b16 %v1370, %v1370
      %v1403 = vpack.c.b16 %v1371, %v1371
      %v1404 = vpack.c.b16 %v1372, %v1372
      %v1405 = vpack.c.b16 %v1373, %v1373
      %v1406 = vpack.c.b16 %v1374, %v1374
      %v1407 = vpack.c.b16 %v1375, %v1375
      %v2464 = vunpack.c.l.b16 %v304
      %v2465 = vunpack.c.h.b16 %v304
      %v2466 = vunpack.c.l.b16 %v305
      %v2467 = vunpack.c.h.b16 %v305
      %v2468 = vunpack.c.l.b16 %v306
      %v2469 = vunpack.c.h.b16 %v306
      %v2470 = vunpack.c.l.b16 %v307
      %v2471 = vunpack.c.h.b16 %v307
      %v2472 = vunpack.c.l.b16 %v308
      %v2473 = vunpack.c.h.b16 %v308
      %v2474 = vunpack.c.l.b16 %v309
      %v2475 = vunpack.c.h.b16 %v309
      %v2476 = vunpack.c.l.b16 %v310
      %v2477 = vunpack.c.h.b16 %v310
      %v2478 = vunpack.c.l.b16 %v311
      %v2479 = vunpack.c.h.b16 %v311
      %v2480 = vunpack.c.l.b16 %v312
      %v2481 = vunpack.c.h.b16 %v312
      %v2482 = vunpack.c.l.b16 %v313
      %v2483 = vunpack.c.h.b16 %v313
      %v2484 = vunpack.c.l.b16 %v314
      %v2485 = vunpack.c.h.b16 %v314
      %v2486 = vunpack.c.l.b16 %v315
      %v2487 = vunpack.c.h.b16 %v315
      %v2488 = vunpack.c.l.b16 %v316
      %v2489 = vunpack.c.h.b16 %v316
      %v2490 = vunpack.c.l.b16 %v317
      %v2491 = vunpack.c.h.b16 %v317
      %v2492 = vunpack.c.l.b16 %v318
      %v2493 = vunpack.c.h.b16 %v318
      %v2494 = vunpack.c.l.b16 %v319
      %v2495 = vunpack.c.h.b16 %v319
      %v2496 = vunpack.c.l.b16 %v320
      %v2497 = vunpack.c.h.b16 %v320
      %v2498 = vunpack.c.l.b16 %v321
      %v2499 = vunpack.c.h.b16 %v321
      %v2500 = vunpack.c.l.b16 %v322
      %v2501 = vunpack.c.h.b16 %v322
      %v2502 = vunpack.c.l.b16 %v323
      %v2503 = vunpack.c.h.b16 %v323
      %v2504 = vunpack.c.l.b16 %v324
      %v2505 = vunpack.c.h.b16 %v324
      %v2506 = vunpack.c.l.b16 %v325
      %v2507 = vunpack.c.h.b16 %v325
      %v2508 = vunpack.c.l.b16 %v326
      %v2509 = vunpack.c.h.b16 %v326
      %v2510 = vunpack.c.l.b16 %v327
      %v2511 = vunpack.c.h.b16 %v327
      %v2512 = vunpack.c.l.b16 %v328
      %v2513 = vunpack.c.h.b16 %v328
      %v2514 = vunpack.c.l.b16 %v329
      %v2515 = vunpack.c.h.b16 %v329
      %v2516 = vunpack.c.l.b16 %v330
      %v2517 = vunpack.c.h.b16 %v330
      %v2518 = vunpack.c.l.b16 %v331
      %v2519 = vunpack.c.h.b16 %v331
      %v2520 = vunpack.c.l.b16 %v332
      %v2521 = vunpack.c.h.b16 %v332
      %v2522 = vunpack.c.l.b16 %v333
      %v2523 = vunpack.c.h.b16 %v333
      %v2524 = vunpack.c.l.b16 %v334
      %v2525 = vunpack.c.h.b16 %v334
      %v2526 = vunpack.c.l.b16 %v335
      %v2527 = vunpack.c.h.b16 %v335
      %v2528 = vunpack.c.l.b16 %v336
      %v2529 = vunpack.c.h.b16 %v336
      %v2530 = vunpack.c.l.b16 %v337
      %v2531 = vunpack.c.h.b16 %v337
      %v2532 = vunpack.c.l.b16 %v338
      %v2533 = vunpack.c.h.b16 %v338
      %v2534 = vunpack.c.l.b16 %v339
      %v2535 = vunpack.c.h.b16 %v339
      %v2536 = vunpack.c.l.b16 %v340
      %v2537 = vunpack.c.h.b16 %v340
      %v2538 = vunpack.c.l.b16 %v341
      %v2539 = vunpack.c.h.b16 %v341
      %v2540 = vunpack.c.l.b16 %v342
      %v2541 = vunpack.c.h.b16 %v342
      %v2542 = vunpack.c.l.b16 %v343
      %v2543 = vunpack.c.h.b16 %v343
      %v2544 = vunpack.c.l.b16 %v344
      %v2545 = vunpack.c.h.b16 %v344
      %v2546 = vunpack.c.l.b16 %v345
      %v2547 = vunpack.c.h.b16 %v345
      %v2548 = vunpack.c.l.b16 %v346
      %v2549 = vunpack.c.h.b16 %v346
      %v2550 = vunpack.c.l.b16 %v347
      %v2551 = vunpack.c.h.b16 %v347
      %v2552 = vunpack.c.l.b16 %v348
      %v2553 = vunpack.c.h.b16 %v348
      %v2554 = vunpack.c.l.b16 %v349
      %v2555 = vunpack.c.h.b16 %v349
      %v2556 = vunpack.c.l.b16 %v350
      %v2557 = vunpack.c.h.b16 %v350
      %v2558 = vunpack.c.l.b16 %v351
      %v2559 = vunpack.c.h.b16 %v351
      %v2560 = vunpack.c.l.b16 %v352
      %v2561 = vunpack.c.h.b16 %v352
      %v2562 = vunpack.c.l.b16 %v353
      %v2563 = vunpack.c.h.b16 %v353
      %v2564 = vunpack.c.l.b16 %v354
      %v2565 = vunpack.c.h.b16 %v354
      %v2566 = vunpack.c.l.b16 %v355
      %v2567 = vunpack.c.h.b16 %v355
      %v2568 = vunpack.c.l.b16 %v356
      %v2569 = vunpack.c.h.b16 %v356
      %v2570 = vunpack.c.l.b16 %v357
      %v2571 = vunpack.c.h.b16 %v357
      %v2572 = vunpack.c.l.b16 %v358
      %v2573 = vunpack.c.h.b16 %v358
      %v2574 = vunpack.c.l.b16 %v359
      %v2575 = vunpack.c.h.b16 %v359
      %v2576 = vunpack.c.l.b16 %v360
      %v2577 = vunpack.c.h.b16 %v360
      %v2578 = vunpack.c.l.b16 %v361
      %v2579 = vunpack.c.h.b16 %v361
      %v2580 = vunpack.c.l.b16 %v362
      %v2581 = vunpack.c.h.b16 %v362
      %v2582 = vunpack.c.l.b16 %v363
      %v2583 = vunpack.c.h.b16 %v363
      %v2584 = vunpack.c.l.b16 %v364
      %v2585 = vunpack.c.h.b16 %v364
      %v2586 = vunpack.c.l.b16 %v365
      %v2587 = vunpack.c.h.b16 %v365
      %v2588 = vunpack.c.l.b16 %v366
      %v2589 = vunpack.c.h.b16 %v366
      %v2590 = vunpack.c.l.b16 %v367
      %v2591 = vunpack.c.h.b16 %v367
      %v2592 = vunpack.c.l.b16 %v368
      %v2593 = vunpack.c.h.b16 %v368
      %v2594 = vunpack.c.l.b16 %v369
      %v2595 = vunpack.c.h.b16 %v369
      %v2596 = vunpack.c.l.b16 %v370
      %v2597 = vunpack.c.h.b16 %v370
      %v2598 = vunpack.c.l.b16 %v371
      %v2599 = vunpack.c.h.b16 %v371
      %v2600 = vunpack.c.l.b16 %v372
      %v2601 = vunpack.c.h.b16 %v372
      %v2602 = vunpack.c.l.b16 %v373
      %v2603 = vunpack.c.h.b16 %v373
      %v2604 = vunpack.c.l.b16 %v374
      %v2605 = vunpack.c.h.b16 %v374
      %v2606 = vunpack.c.l.b16 %v375
      %v2607 = vunpack.c.h.b16 %v375
      %v2608 = vunpack.c.l.b16 %v376
      %v2609 = vunpack.c.h.b16 %v376
      %v2610 = vunpack.c.l.b16 %v377
      %v2611 = vunpack.c.h.b16 %v377
      %v2612 = vunpack.c.l.b16 %v378
      %v2613 = vunpack.c.h.b16 %v378
      %v2614 = vunpack.c.l.b16 %v379
      %v2615 = vunpack.c.h.b16 %v379
      %v2616 = vunpack.c.l.b16 %v380
      %v2617 = vunpack.c.h.b16 %v380
      %v2618 = vunpack.c.l.b16 %v381
      %v2619 = vunpack.c.h.b16 %v381
      %v2620 = vunpack.c.l.b16 %v382
      %v2621 = vunpack.c.h.b16 %v382
      %v2622 = vunpack.c.l.b16 %v383
      %v2623 = vunpack.c.h.b16 %v383
      %v2624 = vunpack.c.l.b16 %v384
      %v2625 = vunpack.c.h.b16 %v384
      %v2626 = vunpack.c.l.b16 %v385
      %v2627 = vunpack.c.h.b16 %v385
      %v2628 = vunpack.c.l.b16 %v386
      %v2629 = vunpack.c.h.b16 %v386
      %v2630 = vunpack.c.l.b16 %v387
      %v2631 = vunpack.c.h.b16 %v387
      %v2632 = vunpack.c.l.b16 %v388
      %v2633 = vunpack.c.h.b16 %v388
      %v2634 = vunpack.c.l.b16 %v389
      %v2635 = vunpack.c.h.b16 %v389
      %v2636 = vunpack.c.l.b16 %v390
      %v2637 = vunpack.c.h.b16 %v390
      %v2638 = vunpack.c.l.b16 %v391
      %v2639 = vunpack.c.h.b16 %v391
      %v2640 = vunpack.c.l.b16 %v392
      %v2641 = vunpack.c.h.b16 %v392
      %v2642 = vunpack.c.l.b16 %v393
      %v2643 = vunpack.c.h.b16 %v393
      %v2644 = vunpack.c.l.b16 %v394
      %v2645 = vunpack.c.h.b16 %v394
      %v2646 = vunpack.c.l.b16 %v395
      %v2647 = vunpack.c.h.b16 %v395
      %v2648 = vunpack.c.l.b16 %v396
      %v2649 = vunpack.c.h.b16 %v396
      %v2650 = vunpack.c.l.b16 %v397
      %v2651 = vunpack.c.h.b16 %v397
      %v2652 = vunpack.c.l.b16 %v398
      %v2653 = vunpack.c.h.b16 %v398
      %v2654 = vunpack.c.l.b16 %v399
      %v2655 = vunpack.c.h.b16 %v399
      %v2656 = vunpack.c.l.b16 %v400
      %v2657 = vunpack.c.h.b16 %v400
      %v2658 = vunpack.c.l.b16 %v401
      %v2659 = vunpack.c.h.b16 %v401
      %v2660 = vunpack.c.l.b16 %v402
      %v2661 = vunpack.c.h.b16 %v402
      %v2662 = vunpack.c.l.b16 %v403
      %v2663 = vunpack.c.h.b16 %v403
      %v2664 = vunpack.c.l.b16 %v404
      %v2665 = vunpack.c.h.b16 %v404
      %v2666 = vunpack.c.l.b16 %v405
      %v2667 = vunpack.c.h.b16 %v405
      %v2668 = vunpack.c.l.b16 %v406
      %v2669 = vunpack.c.h.b16 %v406
      %v2670 = vunpack.c.l.b16 %v407
      %v2671 = vunpack.c.h.b16 %v407
      %v2672 = vunpack.c.l.b16 %v408
      %v2673 = vunpack.c.h.b16 %v408
      %v2674 = vunpack.c.l.b16 %v409
      %v2675 = vunpack.c.h.b16 %v409
      %v2676 = vunpack.c.l.b16 %v410
      %v2677 = vunpack.c.h.b16 %v410
      %v2678 = vunpack.c.l.b16 %v411
      %v2679 = vunpack.c.h.b16 %v411
      %v2680 = vunpack.c.l.b16 %v412
      %v2681 = vunpack.c.h.b16 %v412
      %v2682 = vunpack.c.l.b16 %v413
      %v2683 = vunpack.c.h.b16 %v413
      %v2684 = vunpack.c.l.b16 %v414
      %v2685 = vunpack.c.h.b16 %v414
      %v2686 = vunpack.c.l.b16 %v415
      %v2687 = vunpack.c.h.b16 %v415
      %v2688 = vunpack.c.l.b16 %v416
      %v2689 = vunpack.c.h.b16 %v416
      %v2690 = vunpack.c.l.b16 %v417
      %v2691 = vunpack.c.h.b16 %v417
      %v2692 = vunpack.c.l.b16 %v418
      %v2693 = vunpack.c.h.b16 %v418
      %v2694 = vunpack.c.l.b16 %v419
      %v2695 = vunpack.c.h.b16 %v419
      %v2696 = vunpack.c.l.b16 %v420
      %v2697 = vunpack.c.h.b16 %v420
      %v2698 = vunpack.c.l.b16 %v421
      %v2699 = vunpack.c.h.b16 %v421
      %v2700 = vunpack.c.l.b16 %v422
      %v2701 = vunpack.c.h.b16 %v422
      %v2702 = vunpack.c.l.b16 %v423
      %v2703 = vunpack.c.h.b16 %v423
      %v2704 = vunpack.c.l.b16 %v424
      %v2705 = vunpack.c.h.b16 %v424
      %v2706 = vunpack.c.l.b16 %v425
      %v2707 = vunpack.c.h.b16 %v425
      %v2708 = vunpack.c.l.b16 %v426
      %v2709 = vunpack.c.h.b16 %v426
      %v2710 = vunpack.c.l.b16 %v427
      %v2711 = vunpack.c.h.b16 %v427
      %v2712 = vunpack.c.l.b16 %v428
      %v2713 = vunpack.c.h.b16 %v428
      %v2714 = vunpack.c.l.b16 %v429
      %v2715 = vunpack.c.h.b16 %v429
      %v2716 = vunpack.c.l.b16 %v430
      %v2717 = vunpack.c.h.b16 %v430
      %v2718 = vunpack.c.l.b16 %v431
      %v2719 = vunpack.c.h.b16 %v431
      %v2720 = vunpack.c.l.b16 %v432
      %v2721 = vunpack.c.h.b16 %v432
      %v2722 = vunpack.c.l.b16 %v433
      %v2723 = vunpack.c.h.b16 %v433
      %v2724 = vunpack.c.l.b16 %v434
      %v2725 = vunpack.c.h.b16 %v434
      %v2726 = vunpack.c.l.b16 %v435
      %v2727 = vunpack.c.h.b16 %v435
      %v2728 = vunpack.c.l.b16 %v436
      %v2729 = vunpack.c.h.b16 %v436
      %v2730 = vunpack.c.l.b16 %v437
      %v2731 = vunpack.c.h.b16 %v437
      %v2732 = vunpack.c.l.b16 %v438
      %v2733 = vunpack.c.h.b16 %v438
      %v2734 = vunpack.c.l.b16 %v439
      %v2735 = vunpack.c.h.b16 %v439
      %v2736 = vunpack.c.l.b16 %v440
      %v2737 = vunpack.c.h.b16 %v440
      %v2738 = vunpack.c.l.b16 %v441
      %v2739 = vunpack.c.h.b16 %v441
      %v2740 = vunpack.c.l.b16 %v442
      %v2741 = vunpack.c.h.b16 %v442
      %v2742 = vunpack.c.l.b16 %v443
      %v2743 = vunpack.c.h.b16 %v443
      %v2744 = vunpack.c.l.b16 %v444
      %v2745 = vunpack.c.h.b16 %v444
      %v2746 = vunpack.c.l.b16 %v445
      %v2747 = vunpack.c.h.b16 %v445
      %v2748 = vunpack.c.l.b16 %v446
      %v2749 = vunpack.c.h.b16 %v446
      %v2750 = vunpack.c.l.b16 %v447
      %v2751 = vunpack.c.h.b16 %v447
      %v2752 = vunpack.c.l.b16 %v448
      %v2753 = vunpack.c.h.b16 %v448
      %v2754 = vunpack.c.l.b16 %v449
      %v2755 = vunpack.c.h.b16 %v449
      %v2756 = vunpack.c.l.b16 %v450
      %v2757 = vunpack.c.h.b16 %v450
      %v2758 = vunpack.c.l.b16 %v451
      %v2759 = vunpack.c.h.b16 %v451
      %v2760 = vunpack.c.l.b16 %v452
      %v2761 = vunpack.c.h.b16 %v452
      %v2762 = vunpack.c.l.b16 %v453
      %v2763 = vunpack.c.h.b16 %v453
      %v2764 = vunpack.c.l.b16 %v454
      %v2765 = vunpack.c.h.b16 %v454
      %v2766 = vunpack.c.l.b16 %v455
      %v2767 = vunpack.c.h.b16 %v455
      %v2768 = vunpack.c.l.b16 %v456
      %v2769 = vunpack.c.h.b16 %v456
      %v2770 = vunpack.c.l.b16 %v457
      %v2771 = vunpack.c.h.b16 %v457
      %v2772 = vunpack.c.l.b16 %v458
      %v2773 = vunpack.c.h.b16 %v458
      %v2774 = vunpack.c.l.b16 %v459
      %v2775 = vunpack.c.h.b16 %v459
      %v2776 = vunpack.c.l.b16 %v460
      %v2777 = vunpack.c.h.b16 %v460
      %v2778 = vunpack.c.l.b16 %v461
      %v2779 = vunpack.c.h.b16 %v461
      %v2780 = vunpack.c.l.b16 %v462
      %v2781 = vunpack.c.h.b16 %v462
      %v2782 = vunpack.c.l.b16 %v463
      %v2783 = vunpack.c.h.b16 %v463
      %v2784 = vunpack.c.l.b16 %v464
      %v2785 = vunpack.c.h.b16 %v464
      %v2786 = vunpack.c.l.b16 %v465
      %v2787 = vunpack.c.h.b16 %v465
      %v2788 = vunpack.c.l.b16 %v466
      %v2789 = vunpack.c.h.b16 %v466
      %v2790 = vunpack.c.l.b16 %v467
      %v2791 = vunpack.c.h.b16 %v467
      %v2792 = vunpack.c.l.b16 %v468
      %v2793 = vunpack.c.h.b16 %v468
      %v2794 = vunpack.c.l.b16 %v469
      %v2795 = vunpack.c.h.b16 %v469
      %v2796 = vunpack.c.l.b16 %v470
      %v2797 = vunpack.c.h.b16 %v470
      %v2798 = vunpack.c.l.b16 %v471
      %v2799 = vunpack.c.h.b16 %v471
      %v2800 = vunpack.c.l.b16 %v472
      %v2801 = vunpack.c.h.b16 %v472
      %v2802 = vunpack.c.l.b16 %v473
      %v2803 = vunpack.c.h.b16 %v473
      %v2804 = vunpack.c.l.b16 %v474
      %v2805 = vunpack.c.h.b16 %v474
      %v2806 = vunpack.c.l.b16 %v475
      %v2807 = vunpack.c.h.b16 %v475
      %v2808 = vunpack.c.l.b16 %v476
      %v2809 = vunpack.c.h.b16 %v476
      %v2810 = vunpack.c.l.b16 %v477
      %v2811 = vunpack.c.h.b16 %v477
      %v2812 = vunpack.c.l.b16 %v478
      %v2813 = vunpack.c.h.b16 %v478
      %v2814 = vunpack.c.l.b16 %v479
      %v2815 = vunpack.c.h.b16 %v479
      %v2816 = vunpack.c.l.b16 %v480
      %v2817 = vunpack.c.h.b16 %v480
      %v2818 = vunpack.c.l.b16 %v481
      %v2819 = vunpack.c.h.b16 %v481
      %v2820 = vunpack.c.l.b16 %v482
      %v2821 = vunpack.c.h.b16 %v482
      %v2822 = vunpack.c.l.b16 %v483
      %v2823 = vunpack.c.h.b16 %v483
      %v2824 = vunpack.c.l.b16 %v484
      %v2825 = vunpack.c.h.b16 %v484
      %v2826 = vunpack.c.l.b16 %v485
      %v2827 = vunpack.c.h.b16 %v485
      %v2828 = vunpack.c.l.b16 %v486
      %v2829 = vunpack.c.h.b16 %v486
      %v2830 = vunpack.c.l.b16 %v487
      %v2831 = vunpack.c.h.b16 %v487
      %v2832 = vunpack.c.l.b16 %v488
      %v2833 = vunpack.c.h.b16 %v488
      %v2834 = vunpack.c.l.b16 %v489
      %v2835 = vunpack.c.h.b16 %v489
      %v2836 = vunpack.c.l.b16 %v490
      %v2837 = vunpack.c.h.b16 %v490
      %v2838 = vunpack.c.l.b16 %v491
      %v2839 = vunpack.c.h.b16 %v491
      %v2840 = vunpack.c.l.b16 %v492
      %v2841 = vunpack.c.h.b16 %v492
      %v2842 = vunpack.c.l.b16 %v493
      %v2843 = vunpack.c.h.b16 %v493
      %v2844 = vunpack.c.l.b16 %v494
      %v2845 = vunpack.c.h.b16 %v494
      %v2846 = vunpack.c.l.b16 %v495
      %v2847 = vunpack.c.h.b16 %v495
      %v2848 = vunpack.c.l.b16 %v496
      %v2849 = vunpack.c.h.b16 %v496
      %v2850 = vunpack.c.l.b16 %v497
      %v2851 = vunpack.c.h.b16 %v497
      %v2852 = vunpack.c.l.b16 %v498
      %v2853 = vunpack.c.h.b16 %v498
      %v2854 = vunpack.c.l.b16 %v499
      %v2855 = vunpack.c.h.b16 %v499
      %v2856 = vunpack.c.l.b16 %v500
      %v2857 = vunpack.c.h.b16 %v500
      %v2858 = vunpack.c.l.b16 %v501
      %v2859 = vunpack.c.h.b16 %v501
      %v2860 = vunpack.c.l.b16 %v502
      %v2861 = vunpack.c.h.b16 %v502
      %v2862 = vunpack.c.l.b16 %v503
      %v2863 = vunpack.c.h.b16 %v503
      %v2864 = vunpack.c.l.b16 %v504
      %v2865 = vunpack.c.h.b16 %v504
      %v2866 = vunpack.c.l.b16 %v505
      %v2867 = vunpack.c.h.b16 %v505
      %v2868 = vunpack.c.l.b16 %v506
      %v2869 = vunpack.c.h.b16 %v506
      %v2870 = vunpack.c.l.b16 %v507
      %v2871 = vunpack.c.h.b16 %v507
      %v2872 = vunpack.c.l.b16 %v508
      %v2873 = vunpack.c.h.b16 %v508
      %v2874 = vunpack.c.l.b16 %v509
      %v2875 = vunpack.c.h.b16 %v509
      %v2876 = vunpack.c.l.b16 %v510
      %v2877 = vunpack.c.h.b16 %v510
      %v2878 = vunpack.c.l.b16 %v511
      %v2879 = vunpack.c.h.b16 %v511
      %v2880 = vunpack.c.l.b16 %v512
      %v2881 = vunpack.c.h.b16 %v512
      %v2882 = vunpack.c.l.b16 %v513
      %v2883 = vunpack.c.h.b16 %v513
      %v2884 = vunpack.c.l.b16 %v514
      %v2885 = vunpack.c.h.b16 %v514
      %v2886 = vunpack.c.l.b16 %v515
      %v2887 = vunpack.c.h.b16 %v515
      %v2888 = vunpack.c.l.b16 %v516
      %v2889 = vunpack.c.h.b16 %v516
      %v2890 = vunpack.c.l.b16 %v517
      %v2891 = vunpack.c.h.b16 %v517
      %v2892 = vunpack.c.l.b16 %v518
      %v2893 = vunpack.c.h.b16 %v518
      %v2894 = vunpack.c.l.b16 %v519
      %v2895 = vunpack.c.h.b16 %v519
      %v2896 = vunpack.c.l.b16 %v520
      %v2897 = vunpack.c.h.b16 %v520
      %v2898 = vunpack.c.l.b16 %v521
      %v2899 = vunpack.c.h.b16 %v521
      %v2900 = vunpack.c.l.b16 %v522
      %v2901 = vunpack.c.h.b16 %v522
      %v2902 = vunpack.c.l.b16 %v523
      %v2903 = vunpack.c.h.b16 %v523
      %v2904 = vunpack.c.l.b16 %v524
      %v2905 = vunpack.c.h.b16 %v524
      %v2906 = vunpack.c.l.b16 %v525
      %v2907 = vunpack.c.h.b16 %v525
      %v2908 = vunpack.c.l.b16 %v526
      %v2909 = vunpack.c.h.b16 %v526
      %v2910 = vunpack.c.l.b16 %v527
      %v2911 = vunpack.c.h.b16 %v527
      %v2912 = vunpack.c.l.b16 %v528
      %v2913 = vunpack.c.h.b16 %v528
      %v2914 = vunpack.c.l.b16 %v529
      %v2915 = vunpack.c.h.b16 %v529
      %v2916 = vunpack.c.l.b16 %v530
      %v2917 = vunpack.c.h.b16 %v530
      %v2918 = vunpack.c.l.b16 %v531
      %v2919 = vunpack.c.h.b16 %v531
      %v2920 = vunpack.c.l.b16 %v532
      %v2921 = vunpack.c.h.b16 %v532
      %v2922 = vunpack.c.l.b16 %v533
      %v2923 = vunpack.c.h.b16 %v533
      %v2924 = vunpack.c.l.b16 %v534
      %v2925 = vunpack.c.h.b16 %v534
      %v2926 = vunpack.c.l.b16 %v535
      %v2927 = vunpack.c.h.b16 %v535
      %v2928 = vunpack.c.l.b16 %v536
      %v2929 = vunpack.c.h.b16 %v536
      %v2930 = vunpack.c.l.b16 %v537
      %v2931 = vunpack.c.h.b16 %v537
      %v2932 = vunpack.c.l.b16 %v538
      %v2933 = vunpack.c.h.b16 %v538
      %v2934 = vunpack.c.l.b16 %v539
      %v2935 = vunpack.c.h.b16 %v539
      %v2936 = vunpack.c.l.b16 %v540
      %v2937 = vunpack.c.h.b16 %v540
      %v2938 = vunpack.c.l.b16 %v541
      %v2939 = vunpack.c.h.b16 %v541
      %v2940 = vunpack.c.l.b16 %v542
      %v2941 = vunpack.c.h.b16 %v542
      %v2942 = vunpack.c.l.b16 %v543
      %v2943 = vunpack.c.h.b16 %v543
      %v2944 = vunpack.c.l.b16 %v544
      %v2945 = vunpack.c.h.b16 %v544
      %v2946 = vunpack.c.l.b16 %v545
      %v2947 = vunpack.c.h.b16 %v545
      %v2948 = vunpack.c.l.b16 %v546
      %v2949 = vunpack.c.h.b16 %v546
      %v2950 = vunpack.c.l.b16 %v547
      %v2951 = vunpack.c.h.b16 %v547
      %v2952 = vunpack.c.l.b16 %v548
      %v2953 = vunpack.c.h.b16 %v548
      %v2954 = vunpack.c.l.b16 %v549
      %v2955 = vunpack.c.h.b16 %v549
      %v2956 = vunpack.c.l.b16 %v550
      %v2957 = vunpack.c.h.b16 %v550
      %v2958 = vunpack.c.l.b16 %v551
      %v2959 = vunpack.c.h.b16 %v551
      %v2960 = vunpack.c.l.b16 %v552
      %v2961 = vunpack.c.h.b16 %v552
      %v2962 = vunpack.c.l.b16 %v553
      %v2963 = vunpack.c.h.b16 %v553
      %v2964 = vunpack.c.l.b16 %v554
      %v2965 = vunpack.c.h.b16 %v554
      %v2966 = vunpack.c.l.b16 %v555
      %v2967 = vunpack.c.h.b16 %v555
      %v2968 = vunpack.c.l.b16 %v556
      %v2969 = vunpack.c.h.b16 %v556
      %v2970 = vunpack.c.l.b16 %v557
      %v2971 = vunpack.c.h.b16 %v557
      %v2972 = vunpack.c.l.b16 %v558
      %v2973 = vunpack.c.h.b16 %v558
      %v2974 = vunpack.c.l.b16 %v559
      %v2975 = vunpack.c.h.b16 %v559
      %v2976 = vunpack.c.l.b16 %v560
      %v2977 = vunpack.c.h.b16 %v560
      %v2978 = vunpack.c.l.b16 %v561
      %v2979 = vunpack.c.h.b16 %v561
      %v2980 = vunpack.c.l.b16 %v562
      %v2981 = vunpack.c.h.b16 %v562
      %v2982 = vunpack.c.l.b16 %v563
      %v2983 = vunpack.c.h.b16 %v563
      %v2984 = vunpack.c.l.b16 %v564
      %v2985 = vunpack.c.h.b16 %v564
      %v2986 = vunpack.c.l.b16 %v565
      %v2987 = vunpack.c.h.b16 %v565
      %v2988 = vunpack.c.l.b16 %v566
      %v2989 = vunpack.c.h.b16 %v566
      %v2990 = vunpack.c.l.b16 %v567
      %v2991 = vunpack.c.h.b16 %v567
      %v2992 = vunpack.c.l.b16 %v568
      %v2993 = vunpack.c.h.b16 %v568
      %v2994 = vunpack.c.l.b16 %v569
      %v2995 = vunpack.c.h.b16 %v569
      %v2996 = vunpack.c.l.b16 %v570
      %v2997 = vunpack.c.h.b16 %v570
      %v2998 = vunpack.c.l.b16 %v571
      %v2999 = vunpack.c.h.b16 %v571
      %v3000 = vunpack.c.l.b16 %v572
      %v3001 = vunpack.c.h.b16 %v572
      %v3002 = vunpack.c.l.b16 %v573
      %v3003 = vunpack.c.h.b16 %v573
      %v3004 = vunpack.c.l.b16 %v574
      %v3005 = vunpack.c.h.b16 %v574
      %v3006 = vunpack.c.l.b16 %v575
      %v3007 = vunpack.c.h.b16 %v575
      %v3008 = vunpack.c.l.b16 %v576
      %v3009 = vunpack.c.h.b16 %v576
      %v3010 = vunpack.c.l.b16 %v577
      %v3011 = vunpack.c.h.b16 %v577
      %v3012 = vunpack.c.l.b16 %v578
      %v3013 = vunpack.c.h.b16 %v578
      %v3014 = vunpack.c.l.b16 %v579
      %v3015 = vunpack.c.h.b16 %v579
      %v3016 = vunpack.c.l.b16 %v580
      %v3017 = vunpack.c.h.b16 %v580
      %v3018 = vunpack.c.l.b16 %v581
      %v3019 = vunpack.c.h.b16 %v581
      %v3020 = vunpack.c.l.b16 %v582
      %v3021 = vunpack.c.h.b16 %v582
      %v3022 = vunpack.c.l.b16 %v583
      %v3023 = vunpack.c.h.b16 %v583
      %v3024 = vunpack.c.l.b16 %v584
      %v3025 = vunpack.c.h.b16 %v584
      %v3026 = vunpack.c.l.b16 %v585
      %v3027 = vunpack.c.h.b16 %v585
      %v3028 = vunpack.c.l.b16 %v586
      %v3029 = vunpack.c.h.b16 %v586
      %v3030 = vunpack.c.l.b16 %v587
      %v3031 = vunpack.c.h.b16 %v587
      %v3032 = vunpack.c.l.b16 %v588
      %v3033 = vunpack.c.h.b16 %v588
      %v3034 = vunpack.c.l.b16 %v589
      %v3035 = vunpack.c.h.b16 %v589
      %v3036 = vunpack.c.l.b16 %v590
      %v3037 = vunpack.c.h.b16 %v590
      %v3038 = vunpack.c.l.b16 %v591
      %v3039 = vunpack.c.h.b16 %v591
      %v3040 = vunpack.c.l.b16 %v592
      %v3041 = vunpack.c.h.b16 %v592
      %v3042 = vunpack.c.l.b16 %v593
      %v3043 = vunpack.c.h.b16 %v593
      %v3044 = vunpack.c.l.b16 %v594
      %v3045 = vunpack.c.h.b16 %v594
      %v3046 = vunpack.c.l.b16 %v595
      %v3047 = vunpack.c.h.b16 %v595
      %v3048 = vunpack.c.l.b16 %v596
      %v3049 = vunpack.c.h.b16 %v596
      %v3050 = vunpack.c.l.b16 %v597
      %v3051 = vunpack.c.h.b16 %v597
      %v3052 = vunpack.c.l.b16 %v598
      %v3053 = vunpack.c.h.b16 %v598
      %v3054 = vunpack.c.l.b16 %v599
      %v3055 = vunpack.c.h.b16 %v599
      %v3056 = vunpack.c.l.b16 %v600
      %v3057 = vunpack.c.h.b16 %v600
      %v3058 = vunpack.c.l.b16 %v601
      %v3059 = vunpack.c.h.b16 %v601
      %v3060 = vunpack.c.l.b16 %v602
      %v3061 = vunpack.c.h.b16 %v602
      %v3062 = vunpack.c.l.b16 %v603
      %v3063 = vunpack.c.h.b16 %v603
      %v3064 = vunpack.c.l.b16 %v604
      %v3065 = vunpack.c.h.b16 %v604
      %v3066 = vunpack.c.l.b16 %v605
      %v3067 = vunpack.c.h.b16 %v605
      %v3068 = vunpack.c.l.b16 %v606
      %v3069 = vunpack.c.h.b16 %v606
      %v3070 = vunpack.c.l.b16 %v607
      %v3071 = vunpack.c.h.b16 %v607
      %v3072 = vunpack.c.l.b16 %v608
      %v3073 = vunpack.c.h.b16 %v608
      %v3074 = vunpack.c.l.b16 %v609
      %v3075 = vunpack.c.h.b16 %v609
      %v3076 = vunpack.c.l.b16 %v610
      %v3077 = vunpack.c.h.b16 %v610
      %v3078 = vunpack.c.l.b16 %v611
      %v3079 = vunpack.c.h.b16 %v611
      %v3080 = vunpack.c.l.b16 %v612
      %v3081 = vunpack.c.h.b16 %v612
      %v3082 = vunpack.c.l.b16 %v613
      %v3083 = vunpack.c.h.b16 %v613
      %v3084 = vunpack.c.l.b16 %v614
      %v3085 = vunpack.c.h.b16 %v614
      %v3086 = vunpack.c.l.b16 %v615
      %v3087 = vunpack.c.h.b16 %v615
      %v3088 = vunpack.c.l.b16 %v616
      %v3089 = vunpack.c.h.b16 %v616
      %v3090 = vunpack.c.l.b16 %v617
      %v3091 = vunpack.c.h.b16 %v617
      %v3092 = vunpack.c.l.b16 %v618
      %v3093 = vunpack.c.h.b16 %v618
      %v3094 = vunpack.c.l.b16 %v619
      %v3095 = vunpack.c.h.b16 %v619
      %v3096 = vunpack.c.l.b16 %v620
      %v3097 = vunpack.c.h.b16 %v620
      %v3098 = vunpack.c.l.b16 %v621
      %v3099 = vunpack.c.h.b16 %v621
      %v3100 = vunpack.c.l.b16 %v622
      %v3101 = vunpack.c.h.b16 %v622
      %v3102 = vunpack.c.l.b16 %v623
      %v3103 = vunpack.c.h.b16 %v623
      %v3104 = vunpack.c.l.b16 %v624
      %v3105 = vunpack.c.h.b16 %v624
      %v3106 = vunpack.c.l.b16 %v625
      %v3107 = vunpack.c.h.b16 %v625
      %v3108 = vunpack.c.l.b16 %v626
      %v3109 = vunpack.c.h.b16 %v626
      %v3110 = vunpack.c.l.b16 %v627
      %v3111 = vunpack.c.h.b16 %v627
      %v3112 = vunpack.c.l.b16 %v628
      %v3113 = vunpack.c.h.b16 %v628
      %v3114 = vunpack.c.l.b16 %v629
      %v3115 = vunpack.c.h.b16 %v629
      %v3116 = vunpack.c.l.b16 %v630
      %v3117 = vunpack.c.h.b16 %v630
      %v3118 = vunpack.c.l.b16 %v631
      %v3119 = vunpack.c.h.b16 %v631
      %v3120 = vunpack.c.l.b16 %v632
      %v3121 = vunpack.c.h.b16 %v632
      %v3122 = vunpack.c.l.b16 %v633
      %v3123 = vunpack.c.h.b16 %v633
      %v3124 = vunpack.c.l.b16 %v634
      %v3125 = vunpack.c.h.b16 %v634
      %v3126 = vunpack.c.l.b16 %v635
      %v3127 = vunpack.c.h.b16 %v635
      %v3128 = vunpack.c.l.b16 %v636
      %v3129 = vunpack.c.h.b16 %v636
      %v3130 = vunpack.c.l.b16 %v637
      %v3131 = vunpack.c.h.b16 %v637
      %v3132 = vunpack.c.l.b16 %v638
      %v3133 = vunpack.c.h.b16 %v638
      %v3134 = vunpack.c.l.b16 %v639
      %v3135 = vunpack.c.h.b16 %v639
      %v3136 = vunpack.c.l.b16 %v640
      %v3137 = vunpack.c.h.b16 %v640
      %v3138 = vunpack.c.l.b16 %v641
      %v3139 = vunpack.c.h.b16 %v641
      %v3140 = vunpack.c.l.b16 %v642
      %v3141 = vunpack.c.h.b16 %v642
      %v3142 = vunpack.c.l.b16 %v643
      %v3143 = vunpack.c.h.b16 %v643
      %v3144 = vunpack.c.l.b16 %v644
      %v3145 = vunpack.c.h.b16 %v644
      %v3146 = vunpack.c.l.b16 %v645
      %v3147 = vunpack.c.h.b16 %v645
      %v3148 = vunpack.c.l.b16 %v646
      %v3149 = vunpack.c.h.b16 %v646
      %v3150 = vunpack.c.l.b16 %v647
      %v3151 = vunpack.c.h.b16 %v647
      %v3152 = vunpack.c.l.b16 %v648
      %v3153 = vunpack.c.h.b16 %v648
      %v3154 = vunpack.c.l.b16 %v649
      %v3155 = vunpack.c.h.b16 %v649
      %v3156 = vunpack.c.l.b16 %v650
      %v3157 = vunpack.c.h.b16 %v650
      %v3158 = vunpack.c.l.b16 %v651
      %v3159 = vunpack.c.h.b16 %v651
      %v3160 = vunpack.c.l.b16 %v652
      %v3161 = vunpack.c.h.b16 %v652
      %v3162 = vunpack.c.l.b16 %v653
      %v3163 = vunpack.c.h.b16 %v653
      %v3164 = vunpack.c.l.b16 %v654
      %v3165 = vunpack.c.h.b16 %v654
      %v3166 = vunpack.c.l.b16 %v655
      %v3167 = vunpack.c.h.b16 %v655
      %v3168 = vunpack.c.l.b16 %v656
      %v3169 = vunpack.c.h.b16 %v656
      %v3170 = vunpack.c.l.b16 %v657
      %v3171 = vunpack.c.h.b16 %v657
      %v3172 = vunpack.c.l.b16 %v658
      %v3173 = vunpack.c.h.b16 %v658
      %v3174 = vunpack.c.l.b16 %v659
      %v3175 = vunpack.c.h.b16 %v659
      %v3176 = vunpack.c.l.b16 %v660
      %v3177 = vunpack.c.h.b16 %v660
      %v3178 = vunpack.c.l.b16 %v661
      %v3179 = vunpack.c.h.b16 %v661
      %v3180 = vunpack.c.l.b16 %v662
      %v3181 = vunpack.c.h.b16 %v662
      %v3182 = vunpack.c.l.b16 %v663
      %v3183 = vunpack.c.h.b16 %v663
      %v3184 = vunpack.c.l.b16 %v664
      %v3185 = vunpack.c.h.b16 %v664
      %v3186 = vunpack.c.l.b16 %v665
      %v3187 = vunpack.c.h.b16 %v665
      %v3188 = vunpack.c.l.b16 %v666
      %v3189 = vunpack.c.h.b16 %v666
      %v3190 = vunpack.c.l.b16 %v667
      %v3191 = vunpack.c.h.b16 %v667
      %v3192 = vunpack.c.l.b16 %v668
      %v3193 = vunpack.c.h.b16 %v668
      %v3194 = vunpack.c.l.b16 %v669
      %v3195 = vunpack.c.h.b16 %v669
      %v3196 = vunpack.c.l.b16 %v670
      %v3197 = vunpack.c.h.b16 %v670
      %v3198 = vunpack.c.l.b16 %v671
      %v3199 = vunpack.c.h.b16 %v671
      %v3200 = vunpack.c.l.b16 %v672
      %v3201 = vunpack.c.h.b16 %v672
      %v3202 = vunpack.c.l.b16 %v673
      %v3203 = vunpack.c.h.b16 %v673
      %v3204 = vunpack.c.l.b16 %v674
      %v3205 = vunpack.c.h.b16 %v674
      %v3206 = vunpack.c.l.b16 %v675
      %v3207 = vunpack.c.h.b16 %v675
      %v3208 = vunpack.c.l.b16 %v676
      %v3209 = vunpack.c.h.b16 %v676
      %v3210 = vunpack.c.l.b16 %v677
      %v3211 = vunpack.c.h.b16 %v677
      %v3212 = vunpack.c.l.b16 %v678
      %v3213 = vunpack.c.h.b16 %v678
      %v3214 = vunpack.c.l.b16 %v679
      %v3215 = vunpack.c.h.b16 %v679
      %v3216 = vunpack.c.l.b16 %v680
      %v3217 = vunpack.c.h.b16 %v680
      %v3218 = vunpack.c.l.b16 %v681
      %v3219 = vunpack.c.h.b16 %v681
      %v3220 = vunpack.c.l.b16 %v682
      %v3221 = vunpack.c.h.b16 %v682
      %v3222 = vunpack.c.l.b16 %v683
      %v3223 = vunpack.c.h.b16 %v683
      %v3224 = vunpack.c.l.b16 %v684
      %v3225 = vunpack.c.h.b16 %v684
      %v3226 = vunpack.c.l.b16 %v685
      %v3227 = vunpack.c.h.b16 %v685
      %v3228 = vunpack.c.l.b16 %v686
      %v3229 = vunpack.c.h.b16 %v686
      %v3230 = vunpack.c.l.b16 %v687
      %v3231 = vunpack.c.h.b16 %v687
      %v3232 = vunpack.c.l.b16 %v688
      %v3233 = vunpack.c.h.b16 %v688
      %v3234 = vunpack.c.l.b16 %v689
      %v3235 = vunpack.c.h.b16 %v689
      %v3236 = vunpack.c.l.b16 %v690
      %v3237 = vunpack.c.h.b16 %v690
      %v3238 = vunpack.c.l.b16 %v691
      %v3239 = vunpack.c.h.b16 %v691
      %v3240 = vunpack.c.l.b16 %v692
      %v3241 = vunpack.c.h.b16 %v692
      %v3242 = vunpack.c.l.b16 %v693
      %v3243 = vunpack.c.h.b16 %v693
      %v3244 = vunpack.c.l.b16 %v694
      %v3245 = vunpack.c.h.b16 %v694
      %v3246 = vunpack.c.l.b16 %v695
      %v3247 = vunpack.c.h.b16 %v695
      %v3248 = vunpack.c.l.b16 %v696
      %v3249 = vunpack.c.h.b16 %v696
      %v3250 = vunpack.c.l.b16 %v697
      %v3251 = vunpack.c.h.b16 %v697
      %v3252 = vunpack.c.l.b16 %v698
      %v3253 = vunpack.c.h.b16 %v698
      %v3254 = vunpack.c.l.b16 %v699
      %v3255 = vunpack.c.h.b16 %v699
      %v3256 = vunpack.c.l.b16 %v700
      %v3257 = vunpack.c.h.b16 %v700
      %v3258 = vunpack.c.l.b16 %v701
      %v3259 = vunpack.c.h.b16 %v701
      %v3260 = vunpack.c.l.b16 %v702
      %v3261 = vunpack.c.h.b16 %v702
      %v3262 = vunpack.c.l.b16 %v703
      %v3263 = vunpack.c.h.b16 %v703
      %v3264 = vunpack.c.l.b16 %v704
      %v3265 = vunpack.c.h.b16 %v704
      %v3266 = vunpack.c.l.b16 %v705
      %v3267 = vunpack.c.h.b16 %v705
      %v3268 = vunpack.c.l.b16 %v706
      %v3269 = vunpack.c.h.b16 %v706
      %v3270 = vunpack.c.l.b16 %v707
      %v3271 = vunpack.c.h.b16 %v707
      %v3272 = vunpack.c.l.b16 %v708
      %v3273 = vunpack.c.h.b16 %v708
      %v3274 = vunpack.c.l.b16 %v709
      %v3275 = vunpack.c.h.b16 %v709
      %v3276 = vunpack.c.l.b16 %v710
      %v3277 = vunpack.c.h.b16 %v710
      %v3278 = vunpack.c.l.b16 %v711
      %v3279 = vunpack.c.h.b16 %v711
      %v3280 = vunpack.c.l.b16 %v712
      %v3281 = vunpack.c.h.b16 %v712
      %v3282 = vunpack.c.l.b16 %v713
      %v3283 = vunpack.c.h.b16 %v713
      %v3284 = vunpack.c.l.b16 %v714
      %v3285 = vunpack.c.h.b16 %v714
      %v3286 = vunpack.c.l.b16 %v715
      %v3287 = vunpack.c.h.b16 %v715
      %v3288 = vunpack.c.l.b16 %v716
      %v3289 = vunpack.c.h.b16 %v716
      %v3290 = vunpack.c.l.b16 %v717
      %v3291 = vunpack.c.h.b16 %v717
      %v3292 = vunpack.c.l.b16 %v718
      %v3293 = vunpack.c.h.b16 %v718
      %v3294 = vunpack.c.l.b16 %v719
      %v3295 = vunpack.c.h.b16 %v719
      %v3296 = vunpack.c.l.b16 %v720
      %v3297 = vunpack.c.h.b16 %v720
      %v3298 = vunpack.c.l.b16 %v721
      %v3299 = vunpack.c.h.b16 %v721
      %v3300 = vunpack.c.l.b16 %v722
      %v3301 = vunpack.c.h.b16 %v722
      %v3302 = vunpack.c.l.b16 %v723
      %v3303 = vunpack.c.h.b16 %v723
      %v3304 = vunpack.c.l.b16 %v724
      %v3305 = vunpack.c.h.b16 %v724
      %v3306 = vunpack.c.l.b16 %v725
      %v3307 = vunpack.c.h.b16 %v725
      %v3308 = vunpack.c.l.b16 %v726
      %v3309 = vunpack.c.h.b16 %v726
      %v3310 = vunpack.c.l.b16 %v727
      %v3311 = vunpack.c.h.b16 %v727
      %v3312 = vunpack.c.l.b16 %v728
      %v3313 = vunpack.c.h.b16 %v728
      %v3314 = vunpack.c.l.b16 %v729
      %v3315 = vunpack.c.h.b16 %v729
      %v3316 = vunpack.c.l.b16 %v730
      %v3317 = vunpack.c.h.b16 %v730
      %v3318 = vunpack.c.l.b16 %v731
      %v3319 = vunpack.c.h.b16 %v731
      %v3320 = vunpack.c.l.b16 %v732
      %v3321 = vunpack.c.h.b16 %v732
      %v3322 = vunpack.c.l.b16 %v733
      %v3323 = vunpack.c.h.b16 %v733
      %v3324 = vunpack.c.l.b16 %v734
      %v3325 = vunpack.c.h.b16 %v734
      %v3326 = vunpack.c.l.b16 %v735
      %v3327 = vunpack.c.h.b16 %v735
      %v3328 = vunpack.c.l.b16 %v736
      %v3329 = vunpack.c.h.b16 %v736
      %v3330 = vunpack.c.l.b16 %v737
      %v3331 = vunpack.c.h.b16 %v737
      %v3332 = vunpack.c.l.b16 %v738
      %v3333 = vunpack.c.h.b16 %v738
      %v3334 = vunpack.c.l.b16 %v739
      %v3335 = vunpack.c.h.b16 %v739
      %v3336 = vunpack.c.l.b16 %v740
      %v3337 = vunpack.c.h.b16 %v740
      %v3338 = vunpack.c.l.b16 %v741
      %v3339 = vunpack.c.h.b16 %v741
      %v3340 = vunpack.c.l.b16 %v742
      %v3341 = vunpack.c.h.b16 %v742
      %v3342 = vunpack.c.l.b16 %v743
      %v3343 = vunpack.c.h.b16 %v743
      %v3344 = vunpack.c.l.b16 %v744
      %v3345 = vunpack.c.h.b16 %v744
      %v3346 = vunpack.c.l.b16 %v745
      %v3347 = vunpack.c.h.b16 %v745
      %v3348 = vunpack.c.l.b16 %v746
      %v3349 = vunpack.c.h.b16 %v746
      %v3350 = vunpack.c.l.b16 %v747
      %v3351 = vunpack.c.h.b16 %v747
      %v3352 = vunpack.c.l.b16 %v748
      %v3353 = vunpack.c.h.b16 %v748
      %v3354 = vunpack.c.l.b16 %v749
      %v3355 = vunpack.c.h.b16 %v749
      %v3356 = vunpack.c.l.b16 %v750
      %v3357 = vunpack.c.h.b16 %v750
      %v3358 = vunpack.c.l.b16 %v751
      %v3359 = vunpack.c.h.b16 %v751
      %v3360 = vunpack.c.l.b16 %v752
      %v3361 = vunpack.c.h.b16 %v752
      %v3362 = vunpack.c.l.b16 %v753
      %v3363 = vunpack.c.h.b16 %v753
      %v3364 = vunpack.c.l.b16 %v754
      %v3365 = vunpack.c.h.b16 %v754
      %v3366 = vunpack.c.l.b16 %v755
      %v3367 = vunpack.c.h.b16 %v755
      %v3368 = vunpack.c.l.b16 %v756
      %v3369 = vunpack.c.h.b16 %v756
      %v3370 = vunpack.c.l.b16 %v757
      %v3371 = vunpack.c.h.b16 %v757
      %v3372 = vunpack.c.l.b16 %v758
      %v3373 = vunpack.c.h.b16 %v758
      %v3374 = vunpack.c.l.b16 %v759
      %v3375 = vunpack.c.h.b16 %v759
      %v3376 = vunpack.c.l.b16 %v760
      %v3377 = vunpack.c.h.b16 %v760
      %v3378 = vunpack.c.l.b16 %v761
      %v3379 = vunpack.c.h.b16 %v761
      %v3380 = vunpack.c.l.b16 %v762
      %v3381 = vunpack.c.h.b16 %v762
      %v3382 = vunpack.c.l.b16 %v763
      %v3383 = vunpack.c.h.b16 %v763
      %v3384 = vunpack.c.l.b16 %v764
      %v3385 = vunpack.c.h.b16 %v764
      %v3386 = vunpack.c.l.b16 %v765
      %v3387 = vunpack.c.h.b16 %v765
      %v3388 = vunpack.c.l.b16 %v766
      %v3389 = vunpack.c.h.b16 %v766
      %v3390 = vunpack.c.l.b16 %v767
      %v3391 = vunpack.c.h.b16 %v767
      %v3392 = vunpack.c.l.b16 %v768
      %v3393 = vunpack.c.h.b16 %v768
      %v3394 = vunpack.c.l.b16 %v769
      %v3395 = vunpack.c.h.b16 %v769
      %v3396 = vunpack.c.l.b16 %v770
      %v3397 = vunpack.c.h.b16 %v770
      %v3398 = vunpack.c.l.b16 %v771
      %v3399 = vunpack.c.h.b16 %v771
      %v3400 = vunpack.c.l.b16 %v772
      %v3401 = vunpack.c.h.b16 %v772
      %v3402 = vunpack.c.l.b16 %v773
      %v3403 = vunpack.c.h.b16 %v773
      %v3404 = vunpack.c.l.b16 %v774
      %v3405 = vunpack.c.h.b16 %v774
      %v3406 = vunpack.c.l.b16 %v775
      %v3407 = vunpack.c.h.b16 %v775
      %v3408 = vunpack.c.l.b16 %v776
      %v3409 = vunpack.c.h.b16 %v776
      %v3410 = vunpack.c.l.b16 %v777
      %v3411 = vunpack.c.h.b16 %v777
      %v3412 = vunpack.c.l.b16 %v778
      %v3413 = vunpack.c.h.b16 %v778
      %v3414 = vunpack.c.l.b16 %v779
      %v3415 = vunpack.c.h.b16 %v779
      %v3416 = vunpack.c.l.b16 %v780
      %v3417 = vunpack.c.h.b16 %v780
      %v3418 = vunpack.c.l.b16 %v781
      %v3419 = vunpack.c.h.b16 %v781
      %v3420 = vunpack.c.l.b16 %v782
      %v3421 = vunpack.c.h.b16 %v782
      %v3422 = vunpack.c.l.b16 %v783
      %v3423 = vunpack.c.h.b16 %v783
      %v3424 = vunpack.c.l.b16 %v784
      %v3425 = vunpack.c.h.b16 %v784
      %v3426 = vunpack.c.l.b16 %v785
      %v3427 = vunpack.c.h.b16 %v785
      %v3428 = vunpack.c.l.b16 %v786
      %v3429 = vunpack.c.h.b16 %v786
      %v3430 = vunpack.c.l.b16 %v787
      %v3431 = vunpack.c.h.b16 %v787
      %v3432 = vunpack.c.l.b16 %v788
      %v3433 = vunpack.c.h.b16 %v788
      %v3434 = vunpack.c.l.b16 %v789
      %v3435 = vunpack.c.h.b16 %v789
      %v3436 = vunpack.c.l.b16 %v790
      %v3437 = vunpack.c.h.b16 %v790
      %v3438 = vunpack.c.l.b16 %v791
      %v3439 = vunpack.c.h.b16 %v791
      %v3440 = vunpack.c.l.b16 %v792
      %v3441 = vunpack.c.h.b16 %v792
      %v3442 = vunpack.c.l.b16 %v793
      %v3443 = vunpack.c.h.b16 %v793
      %v3444 = vunpack.c.l.b16 %v794
      %v3445 = vunpack.c.h.b16 %v794
      %v3446 = vunpack.c.l.b16 %v795
      %v3447 = vunpack.c.h.b16 %v795
      %v3448 = vunpack.c.l.b16 %v796
      %v3449 = vunpack.c.h.b16 %v796
      %v3450 = vunpack.c.l.b16 %v797
      %v3451 = vunpack.c.h.b16 %v797
      %v3452 = vunpack.c.l.b16 %v798
      %v3453 = vunpack.c.h.b16 %v798
      %v3454 = vunpack.c.l.b16 %v799
      %v3455 = vunpack.c.h.b16 %v799
      %v3456 = vunpack.c.l.b16 %v800
      %v3457 = vunpack.c.h.b16 %v800
      %v3458 = vunpack.c.l.b16 %v801
      %v3459 = vunpack.c.h.b16 %v801
      %v3460 = vunpack.c.l.b16 %v802
      %v3461 = vunpack.c.h.b16 %v802
      %v3462 = vunpack.c.l.b16 %v803
      %v3463 = vunpack.c.h.b16 %v803
      %v3464 = vunpack.c.l.b16 %v804
      %v3465 = vunpack.c.h.b16 %v804
      %v3466 = vunpack.c.l.b16 %v805
      %v3467 = vunpack.c.h.b16 %v805
      %v3468 = vunpack.c.l.b16 %v806
      %v3469 = vunpack.c.h.b16 %v806
      %v3470 = vunpack.c.l.b16 %v807
      %v3471 = vunpack.c.h.b16 %v807
      %v3472 = vunpack.c.l.b16 %v808
      %v3473 = vunpack.c.h.b16 %v808
      %v3474 = vunpack.c.l.b16 %v809
      %v3475 = vunpack.c.h.b16 %v809
      %v3476 = vunpack.c.l.b16 %v810
      %v3477 = vunpack.c.h.b16 %v810
      %v3478 = vunpack.c.l.b16 %v811
      %v3479 = vunpack.c.h.b16 %v811
      %v3480 = vunpack.c.l.b16 %v812
      %v3481 = vunpack.c.h.b16 %v812
      %v3482 = vunpack.c.l.b16 %v813
      %v3483 = vunpack.c.h.b16 %v813
      %v3484 = vunpack.c.l.b16 %v814
      %v3485 = vunpack.c.h.b16 %v814
      %v3486 = vunpack.c.l.b16 %v815
      %v3487 = vunpack.c.h.b16 %v815
      %v3488 = vunpack.c.l.b16 %v816
      %v3489 = vunpack.c.h.b16 %v816
      %v3490 = vunpack.c.l.b16 %v817
      %v3491 = vunpack.c.h.b16 %v817
      %v3492 = vunpack.c.l.b16 %v818
      %v3493 = vunpack.c.h.b16 %v818
      %v3494 = vunpack.c.l.b16 %v819
      %v3495 = vunpack.c.h.b16 %v819
      %v3496 = vunpack.c.l.b16 %v820
      %v3497 = vunpack.c.h.b16 %v820
      %v3498 = vunpack.c.l.b16 %v821
      %v3499 = vunpack.c.h.b16 %v821
      %v3500 = vunpack.c.l.b16 %v822
      %v3501 = vunpack.c.h.b16 %v822
      %v3502 = vunpack.c.l.b16 %v823
      %v3503 = vunpack.c.h.b16 %v823
      %v3504 = vunpack.c.l.b16 %v824
      %v3505 = vunpack.c.h.b16 %v824
      %v3506 = vunpack.c.l.b16 %v825
      %v3507 = vunpack.c.h.b16 %v825
      %v3508 = vunpack.c.l.b16 %v826
      %v3509 = vunpack.c.h.b16 %v826
      %v3510 = vunpack.c.l.b16 %v827
      %v3511 = vunpack.c.h.b16 %v827
      %v3512 = vunpack.c.l.b16 %v828
      %v3513 = vunpack.c.h.b16 %v828
      %v3514 = vunpack.c.l.b16 %v829
      %v3515 = vunpack.c.h.b16 %v829
      %v3516 = vunpack.c.l.b16 %v830
      %v3517 = vunpack.c.h.b16 %v830
      %v3518 = vunpack.c.l.b16 %v831
      %v3519 = vunpack.c.h.b16 %v831
      %v3520 = vunpack.c.l.b16 %v832
      %v3521 = vunpack.c.h.b16 %v832
      %v3522 = vunpack.c.l.b16 %v833
      %v3523 = vunpack.c.h.b16 %v833
      %v3524 = vunpack.c.l.b16 %v834
      %v3525 = vunpack.c.h.b16 %v834
      %v3526 = vunpack.c.l.b16 %v835
      %v3527 = vunpack.c.h.b16 %v835
      %v3528 = vunpack.c.l.b16 %v836
      %v3529 = vunpack.c.h.b16 %v836
      %v3530 = vunpack.c.l.b16 %v837
      %v3531 = vunpack.c.h.b16 %v837
      %v3532 = vunpack.c.l.b16 %v838
      %v3533 = vunpack.c.h.b16 %v838
      %v3534 = vunpack.c.l.b16 %v839
      %v3535 = vunpack.c.h.b16 %v839
      %v3536 = vunpack.c.l.b16 %v840
      %v3537 = vunpack.c.h.b16 %v840
      %v3538 = vunpack.c.l.b16 %v841
      %v3539 = vunpack.c.h.b16 %v841
      %v3540 = vunpack.c.l.b16 %v842
      %v3541 = vunpack.c.h.b16 %v842
      %v3542 = vunpack.c.l.b16 %v843
      %v3543 = vunpack.c.h.b16 %v843
      %v3544 = vunpack.c.l.b16 %v844
      %v3545 = vunpack.c.h.b16 %v844
      %v3546 = vunpack.c.l.b16 %v845
      %v3547 = vunpack.c.h.b16 %v845
      %v3548 = vunpack.c.l.b16 %v846
      %v3549 = vunpack.c.h.b16 %v846
      %v3550 = vunpack.c.l.b16 %v847
      %v3551 = vunpack.c.h.b16 %v847
      %v3552 = vunpack.c.l.b16 %v848
      %v3553 = vunpack.c.h.b16 %v848
      %v3554 = vunpack.c.l.b16 %v849
      %v3555 = vunpack.c.h.b16 %v849
      %v3556 = vunpack.c.l.b16 %v850
      %v3557 = vunpack.c.h.b16 %v850
      %v3558 = vunpack.c.l.b16 %v851
      %v3559 = vunpack.c.h.b16 %v851
      %v3560 = vunpack.c.l.b16 %v852
      %v3561 = vunpack.c.h.b16 %v852
      %v3562 = vunpack.c.l.b16 %v853
      %v3563 = vunpack.c.h.b16 %v853
      %v3564 = vunpack.c.l.b16 %v854
      %v3565 = vunpack.c.h.b16 %v854
      %v3566 = vunpack.c.l.b16 %v855
      %v3567 = vunpack.c.h.b16 %v855
      %v3568 = vunpack.c.l.b16 %v856
      %v3569 = vunpack.c.h.b16 %v856
      %v3570 = vunpack.c.l.b16 %v857
      %v3571 = vunpack.c.h.b16 %v857
      %v3572 = vunpack.c.l.b16 %v858
      %v3573 = vunpack.c.h.b16 %v858
      %v3574 = vunpack.c.l.b16 %v859
      %v3575 = vunpack.c.h.b16 %v859
      %v3576 = vunpack.c.l.b16 %v860
      %v3577 = vunpack.c.h.b16 %v860
      %v3578 = vunpack.c.l.b16 %v861
      %v3579 = vunpack.c.h.b16 %v861
      %v3580 = vunpack.c.l.b16 %v862
      %v3581 = vunpack.c.h.b16 %v862
      %v3582 = vunpack.c.l.b16 %v863
      %v3583 = vunpack.c.h.b16 %v863
      %v3584 = vunpack.c.l.b16 %v864
      %v3585 = vunpack.c.h.b16 %v864
      %v3586 = vunpack.c.l.b16 %v865
      %v3587 = vunpack.c.h.b16 %v865
      %v3588 = vunpack.c.l.b16 %v866
      %v3589 = vunpack.c.h.b16 %v866
      %v3590 = vunpack.c.l.b16 %v867
      %v3591 = vunpack.c.h.b16 %v867
      %v3592 = vunpack.c.l.b16 %v868
      %v3593 = vunpack.c.h.b16 %v868
      %v3594 = vunpack.c.l.b16 %v869
      %v3595 = vunpack.c.h.b16 %v869
      %v3596 = vunpack.c.l.b16 %v870
      %v3597 = vunpack.c.h.b16 %v870
      %v3598 = vunpack.c.l.b16 %v871
      %v3599 = vunpack.c.h.b16 %v871
      %v3600 = vunpack.c.l.b16 %v872
      %v3601 = vunpack.c.h.b16 %v872
      %v3602 = vunpack.c.l.b16 %v873
      %v3603 = vunpack.c.h.b16 %v873
      %v3604 = vunpack.c.l.b16 %v874
      %v3605 = vunpack.c.h.b16 %v874
      %v3606 = vunpack.c.l.b16 %v875
      %v3607 = vunpack.c.h.b16 %v875
      %v3608 = vunpack.c.l.b16 %v876
      %v3609 = vunpack.c.h.b16 %v876
      %v3610 = vunpack.c.l.b16 %v877
      %v3611 = vunpack.c.h.b16 %v877
      %v3612 = vunpack.c.l.b16 %v878
      %v3613 = vunpack.c.h.b16 %v878
      %v3614 = vunpack.c.l.b16 %v879
      %v3615 = vunpack.c.h.b16 %v879
      %v3616 = vunpack.c.l.b16 %v880
      %v3617 = vunpack.c.h.b16 %v880
      %v3618 = vunpack.c.l.b16 %v881
      %v3619 = vunpack.c.h.b16 %v881
      %v3620 = vunpack.c.l.b16 %v882
      %v3621 = vunpack.c.h.b16 %v882
      %v3622 = vunpack.c.l.b16 %v883
      %v3623 = vunpack.c.h.b16 %v883
      %v3624 = vunpack.c.l.b16 %v884
      %v3625 = vunpack.c.h.b16 %v884
      %v3626 = vunpack.c.l.b16 %v885
      %v3627 = vunpack.c.h.b16 %v885
      %v3628 = vunpack.c.l.b16 %v886
      %v3629 = vunpack.c.h.b16 %v886
      %v3630 = vunpack.c.l.b16 %v887
      %v3631 = vunpack.c.h.b16 %v887
      %v3632 = vunpack.c.l.b16 %v888
      %v3633 = vunpack.c.h.b16 %v888
      %v3634 = vunpack.c.l.b16 %v889
      %v3635 = vunpack.c.h.b16 %v889
      %v3636 = vunpack.c.l.b16 %v890
      %v3637 = vunpack.c.h.b16 %v890
      %v3638 = vunpack.c.l.b16 %v891
      %v3639 = vunpack.c.h.b16 %v891
      %v3640 = vunpack.c.l.b16 %v892
      %v3641 = vunpack.c.h.b16 %v892
      %v3642 = vunpack.c.l.b16 %v893
      %v3643 = vunpack.c.h.b16 %v893
      %v3644 = vunpack.c.l.b16 %v894
      %v3645 = vunpack.c.h.b16 %v894
      %v3646 = vunpack.c.l.b16 %v895
      %v3647 = vunpack.c.h.b16 %v895
      %v3648 = vunpack.c.l.b16 %v896
      %v3649 = vunpack.c.h.b16 %v896
      %v3650 = vunpack.c.l.b16 %v897
      %v3651 = vunpack.c.h.b16 %v897
      %v3652 = vunpack.c.l.b16 %v898
      %v3653 = vunpack.c.h.b16 %v898
      %v3654 = vunpack.c.l.b16 %v899
      %v3655 = vunpack.c.h.b16 %v899
      %v3656 = vunpack.c.l.b16 %v900
      %v3657 = vunpack.c.h.b16 %v900
      %v3658 = vunpack.c.l.b16 %v901
      %v3659 = vunpack.c.h.b16 %v901
      %v3660 = vunpack.c.l.b16 %v902
      %v3661 = vunpack.c.h.b16 %v902
      %v3662 = vunpack.c.l.b16 %v903
      %v3663 = vunpack.c.h.b16 %v903
      %v3664 = vunpack.c.l.b16 %v904
      %v3665 = vunpack.c.h.b16 %v904
      %v3666 = vunpack.c.l.b16 %v905
      %v3667 = vunpack.c.h.b16 %v905
      %v3668 = vunpack.c.l.b16 %v906
      %v3669 = vunpack.c.h.b16 %v906
      %v3670 = vunpack.c.l.b16 %v907
      %v3671 = vunpack.c.h.b16 %v907
      %v3672 = vunpack.c.l.b16 %v908
      %v3673 = vunpack.c.h.b16 %v908
      %v3674 = vunpack.c.l.b16 %v909
      %v3675 = vunpack.c.h.b16 %v909
      %v3676 = vunpack.c.l.b16 %v910
      %v3677 = vunpack.c.h.b16 %v910
      %v3678 = vunpack.c.l.b16 %v911
      %v3679 = vunpack.c.h.b16 %v911
      %v3680 = vunpack.c.l.b16 %v912
      %v3681 = vunpack.c.h.b16 %v912
      %v3682 = vunpack.c.l.b16 %v913
      %v3683 = vunpack.c.h.b16 %v913
      %v3684 = vunpack.c.l.b16 %v914
      %v3685 = vunpack.c.h.b16 %v914
      %v3686 = vunpack.c.l.b16 %v915
      %v3687 = vunpack.c.h.b16 %v915
      %v3688 = vunpack.c.l.b16 %v916
      %v3689 = vunpack.c.h.b16 %v916
      %v3690 = vunpack.c.l.b16 %v917
      %v3691 = vunpack.c.h.b16 %v917
      %v3692 = vunpack.c.l.b16 %v918
      %v3693 = vunpack.c.h.b16 %v918
      %v3694 = vunpack.c.l.b16 %v919
      %v3695 = vunpack.c.h.b16 %v919
      %v3696 = vunpack.c.l.b16 %v920
      %v3697 = vunpack.c.h.b16 %v920
      %v3698 = vunpack.c.l.b16 %v921
      %v3699 = vunpack.c.h.b16 %v921
      %v3700 = vunpack.c.l.b16 %v922
      %v3701 = vunpack.c.h.b16 %v922
      %v3702 = vunpack.c.l.b16 %v923
      %v3703 = vunpack.c.h.b16 %v923
      %v3704 = vunpack.c.l.b16 %v924
      %v3705 = vunpack.c.h.b16 %v924
      %v3706 = vunpack.c.l.b16 %v925
      %v3707 = vunpack.c.h.b16 %v925
      %v3708 = vunpack.c.l.b16 %v926
      %v3709 = vunpack.c.h.b16 %v926
      %v3710 = vunpack.c.l.b16 %v927
      %v3711 = vunpack.c.h.b16 %v927
      %v3712 = vunpack.c.l.b16 %v928
      %v3713 = vunpack.c.h.b16 %v928
      %v3714 = vunpack.c.l.b16 %v929
      %v3715 = vunpack.c.h.b16 %v929
      %v3716 = vunpack.c.l.b16 %v930
      %v3717 = vunpack.c.h.b16 %v930
      %v3718 = vunpack.c.l.b16 %v931
      %v3719 = vunpack.c.h.b16 %v931
      %v3720 = vunpack.c.l.b16 %v932
      %v3721 = vunpack.c.h.b16 %v932
      %v3722 = vunpack.c.l.b16 %v933
      %v3723 = vunpack.c.h.b16 %v933
      %v3724 = vunpack.c.l.b16 %v934
      %v3725 = vunpack.c.h.b16 %v934
      %v3726 = vunpack.c.l.b16 %v935
      %v3727 = vunpack.c.h.b16 %v935
      %v3728 = vunpack.c.l.b16 %v936
      %v3729 = vunpack.c.h.b16 %v936
      %v3730 = vunpack.c.l.b16 %v937
      %v3731 = vunpack.c.h.b16 %v937
      %v3732 = vunpack.c.l.b16 %v938
      %v3733 = vunpack.c.h.b16 %v938
      %v3734 = vunpack.c.l.b16 %v939
      %v3735 = vunpack.c.h.b16 %v939
      %v3736 = vunpack.c.l.b16 %v940
      %v3737 = vunpack.c.h.b16 %v940
      %v3738 = vunpack.c.l.b16 %v941
      %v3739 = vunpack.c.h.b16 %v941
      %v3740 = vunpack.c.l.b16 %v942
      %v3741 = vunpack.c.h.b16 %v942
      %v3742 = vunpack.c.l.b16 %v943
      %v3743 = vunpack.c.h.b16 %v943
      %v3744 = vunpack.c.l.b16 %v944
      %v3745 = vunpack.c.h.b16 %v944
      %v3746 = vunpack.c.l.b16 %v945
      %v3747 = vunpack.c.h.b16 %v945
      %v3748 = vunpack.c.l.b16 %v946
      %v3749 = vunpack.c.h.b16 %v946
      %v3750 = vunpack.c.l.b16 %v947
      %v3751 = vunpack.c.h.b16 %v947
      %v3752 = vunpack.c.l.b16 %v948
      %v3753 = vunpack.c.h.b16 %v948
      %v3754 = vunpack.c.l.b16 %v949
      %v3755 = vunpack.c.h.b16 %v949
      %v3756 = vunpack.c.l.b16 %v950
      %v3757 = vunpack.c.h.b16 %v950
      %v3758 = vunpack.c.l.b16 %v951
      %v3759 = vunpack.c.h.b16 %v951
      %v3760 = vunpack.c.l.b16 %v952
      %v3761 = vunpack.c.h.b16 %v952
      %v3762 = vunpack.c.l.b16 %v953
      %v3763 = vunpack.c.h.b16 %v953
      %v3764 = vunpack.c.l.b16 %v954
      %v3765 = vunpack.c.h.b16 %v954
      %v3766 = vunpack.c.l.b16 %v955
      %v3767 = vunpack.c.h.b16 %v955
      %v3768 = vunpack.c.l.b16 %v956
      %v3769 = vunpack.c.h.b16 %v956
      %v3770 = vunpack.c.l.b16 %v957
      %v3771 = vunpack.c.h.b16 %v957
      %v3772 = vunpack.c.l.b16 %v958
      %v3773 = vunpack.c.h.b16 %v958
      %v3774 = vunpack.c.l.b16 %v959
      %v3775 = vunpack.c.h.b16 %v959
      %v3776 = vunpack.c.l.b16 %v960
      %v3777 = vunpack.c.h.b16 %v960
      %v3778 = vunpack.c.l.b16 %v961
      %v3779 = vunpack.c.h.b16 %v961
      %v3780 = vunpack.c.l.b16 %v962
      %v3781 = vunpack.c.h.b16 %v962
      %v3782 = vunpack.c.l.b16 %v963
      %v3783 = vunpack.c.h.b16 %v963
      %v3784 = vunpack.c.l.b16 %v964
      %v3785 = vunpack.c.h.b16 %v964
      %v3786 = vunpack.c.l.b16 %v965
      %v3787 = vunpack.c.h.b16 %v965
      %v3788 = vunpack.c.l.b16 %v966
      %v3789 = vunpack.c.h.b16 %v966
      %v3790 = vunpack.c.l.b16 %v967
      %v3791 = vunpack.c.h.b16 %v967
      %v3792 = vunpack.c.l.b16 %v968
      %v3793 = vunpack.c.h.b16 %v968
      %v3794 = vunpack.c.l.b16 %v969
      %v3795 = vunpack.c.h.b16 %v969
      %v3796 = vunpack.c.l.b16 %v970
      %v3797 = vunpack.c.h.b16 %v970
      %v3798 = vunpack.c.l.b16 %v971
      %v3799 = vunpack.c.h.b16 %v971
      %v3800 = vunpack.c.l.b16 %v972
      %v3801 = vunpack.c.h.b16 %v972
      %v3802 = vunpack.c.l.b16 %v973
      %v3803 = vunpack.c.h.b16 %v973
      %v3804 = vunpack.c.l.b16 %v974
      %v3805 = vunpack.c.h.b16 %v974
      %v3806 = vunpack.c.l.b16 %v975
      %v3807 = vunpack.c.h.b16 %v975
      %v3808 = vunpack.c.l.b16 %v976
      %v3809 = vunpack.c.h.b16 %v976
      %v3810 = vunpack.c.l.b16 %v977
      %v3811 = vunpack.c.h.b16 %v977
      %v3812 = vunpack.c.l.b16 %v978
      %v3813 = vunpack.c.h.b16 %v978
      %v3814 = vunpack.c.l.b16 %v979
      %v3815 = vunpack.c.h.b16 %v979
      %v3816 = vunpack.c.l.b16 %v980
      %v3817 = vunpack.c.h.b16 %v980
      %v3818 = vunpack.c.l.b16 %v981
      %v3819 = vunpack.c.h.b16 %v981
      %v3820 = vunpack.c.l.b16 %v982
      %v3821 = vunpack.c.h.b16 %v982
      %v3822 = vunpack.c.l.b16 %v983
      %v3823 = vunpack.c.h.b16 %v983
      %v3824 = vunpack.c.l.b16 %v984
      %v3825 = vunpack.c.h.b16 %v984
      %v3826 = vunpack.c.l.b16 %v985
      %v3827 = vunpack.c.h.b16 %v985
      %v3828 = vunpack.c.l.b16 %v986
      %v3829 = vunpack.c.h.b16 %v986
      %v3830 = vunpack.c.l.b16 %v987
      %v3831 = vunpack.c.h.b16 %v987
      %v3832 = vunpack.c.l.b16 %v988
      %v3833 = vunpack.c.h.b16 %v988
      %v3834 = vunpack.c.l.b16 %v989
      %v3835 = vunpack.c.h.b16 %v989
      %v3836 = vunpack.c.l.b16 %v990
      %v3837 = vunpack.c.h.b16 %v990
      %v3838 = vunpack.c.l.b16 %v991
      %v3839 = vunpack.c.h.b16 %v991
      %v3840 = vunpack.c.l.b16 %v992
      %v3841 = vunpack.c.h.b16 %v992
      %v3842 = vunpack.c.l.b16 %v993
      %v3843 = vunpack.c.h.b16 %v993
      %v3844 = vunpack.c.l.b16 %v994
      %v3845 = vunpack.c.h.b16 %v994
      %v3846 = vunpack.c.l.b16 %v995
      %v3847 = vunpack.c.h.b16 %v995
      %v3848 = vunpack.c.l.b16 %v996
      %v3849 = vunpack.c.h.b16 %v996
      %v3850 = vunpack.c.l.b16 %v997
      %v3851 = vunpack.c.h.b16 %v997
      %v3852 = vunpack.c.l.b16 %v998
      %v3853 = vunpack.c.h.b16 %v998
      %v3854 = vunpack.c.l.b16 %v999
      %v3855 = vunpack.c.h.b16 %v999
      %v3856 = vunpack.c.l.b16 %v1000
      %v3857 = vunpack.c.h.b16 %v1000
      %v3858 = vunpack.c.l.b16 %v1001
      %v3859 = vunpack.c.h.b16 %v1001
      %v3860 = vunpack.c.l.b16 %v1002
      %v3861 = vunpack.c.h.b16 %v1002
      %v3862 = vunpack.c.l.b16 %v1003
      %v3863 = vunpack.c.h.b16 %v1003
      %v3864 = vunpack.c.l.b16 %v1004
      %v3865 = vunpack.c.h.b16 %v1004
      %v3866 = vunpack.c.l.b16 %v1005
      %v3867 = vunpack.c.h.b16 %v1005
      %v3868 = vunpack.c.l.b16 %v1006
      %v3869 = vunpack.c.h.b16 %v1006
      %v3870 = vunpack.c.l.b16 %v1007
      %v3871 = vunpack.c.h.b16 %v1007
      %v3872 = vunpack.c.l.b16 %v1008
      %v3873 = vunpack.c.h.b16 %v1008
      %v3874 = vunpack.c.l.b16 %v1009
      %v3875 = vunpack.c.h.b16 %v1009
      %v3876 = vunpack.c.l.b16 %v1010
      %v3877 = vunpack.c.h.b16 %v1010
      %v3878 = vunpack.c.l.b16 %v1011
      %v3879 = vunpack.c.h.b16 %v1011
      %v3880 = vunpack.c.l.b16 %v1012
      %v3881 = vunpack.c.h.b16 %v1012
      %v3882 = vunpack.c.l.b16 %v1013
      %v3883 = vunpack.c.h.b16 %v1013
      %v3884 = vunpack.c.l.b16 %v1014
      %v3885 = vunpack.c.h.b16 %v1014
      %v3886 = vunpack.c.l.b16 %v1015
      %v3887 = vunpack.c.h.b16 %v1015
      %v3888 = vunpack.c.l.b16 %v1016
      %v3889 = vunpack.c.h.b16 %v1016
      %v3890 = vunpack.c.l.b16 %v1017
      %v3891 = vunpack.c.h.b16 %v1017
      %v3892 = vunpack.c.l.b16 %v1018
      %v3893 = vunpack.c.h.b16 %v1018
      %v3894 = vunpack.c.l.b16 %v1019
      %v3895 = vunpack.c.h.b16 %v1019
      %v3896 = vunpack.c.l.b16 %v1020
      %v3897 = vunpack.c.h.b16 %v1020
      %v3898 = vunpack.c.l.b16 %v1021
      %v3899 = vunpack.c.h.b16 %v1021
      %v3900 = vunpack.c.l.b16 %v1022
      %v3901 = vunpack.c.h.b16 %v1022
      %v3902 = vunpack.c.l.b16 %v1023
      %v3903 = vunpack.c.h.b16 %v1023
      %v3904 = vunpack.c.l.b16 %v1024
      %v3905 = vunpack.c.h.b16 %v1024
      %v3906 = vunpack.c.l.b16 %v1025
      %v3907 = vunpack.c.h.b16 %v1025
      %v3908 = vunpack.c.l.b16 %v1026
      %v3909 = vunpack.c.h.b16 %v1026
      %v3910 = vunpack.c.l.b16 %v1027
      %v3911 = vunpack.c.h.b16 %v1027
      %v3912 = vunpack.c.l.b16 %v1028
      %v3913 = vunpack.c.h.b16 %v1028
      %v3914 = vunpack.c.l.b16 %v1029
      %v3915 = vunpack.c.h.b16 %v1029
      %v3916 = vunpack.c.l.b16 %v1030
      %v3917 = vunpack.c.h.b16 %v1030
      %v3918 = vunpack.c.l.b16 %v1031
      %v3919 = vunpack.c.h.b16 %v1031
      %v3920 = vunpack.c.l.b16 %v1032
      %v3921 = vunpack.c.h.b16 %v1032
      %v3922 = vunpack.c.l.b16 %v1033
      %v3923 = vunpack.c.h.b16 %v1033
      %v3924 = vunpack.c.l.b16 %v1034
      %v3925 = vunpack.c.h.b16 %v1034
      %v3926 = vunpack.c.l.b16 %v1035
      %v3927 = vunpack.c.h.b16 %v1035
      %v3928 = vunpack.c.l.b16 %v1036
      %v3929 = vunpack.c.h.b16 %v1036
      %v3930 = vunpack.c.l.b16 %v1037
      %v3931 = vunpack.c.h.b16 %v1037
      %v3932 = vunpack.c.l.b16 %v1038
      %v3933 = vunpack.c.h.b16 %v1038
      %v3934 = vunpack.c.l.b16 %v1039
      %v3935 = vunpack.c.h.b16 %v1039
      %v3936 = vunpack.c.l.b16 %v1040
      %v3937 = vunpack.c.h.b16 %v1040
      %v3938 = vunpack.c.l.b16 %v1041
      %v3939 = vunpack.c.h.b16 %v1041
      %v3940 = vunpack.c.l.b16 %v1042
      %v3941 = vunpack.c.h.b16 %v1042
      %v3942 = vunpack.c.l.b16 %v1043
      %v3943 = vunpack.c.h.b16 %v1043
      %v3944 = vunpack.c.l.b16 %v1044
      %v3945 = vunpack.c.h.b16 %v1044
      %v3946 = vunpack.c.l.b16 %v1045
      %v3947 = vunpack.c.h.b16 %v1045
      %v3948 = vunpack.c.l.b16 %v1046
      %v3949 = vunpack.c.h.b16 %v1046
      %v3950 = vunpack.c.l.b16 %v1047
      %v3951 = vunpack.c.h.b16 %v1047
      %v3952 = vunpack.c.l.b16 %v1048
      %v3953 = vunpack.c.h.b16 %v1048
      %v3954 = vunpack.c.l.b16 %v1049
      %v3955 = vunpack.c.h.b16 %v1049
      %v3956 = vunpack.c.l.b16 %v1050
      %v3957 = vunpack.c.h.b16 %v1050
      %v3958 = vunpack.c.l.b16 %v1051
      %v3959 = vunpack.c.h.b16 %v1051
      %v3960 = vunpack.c.l.b16 %v1052
      %v3961 = vunpack.c.h.b16 %v1052
      %v3962 = vunpack.c.l.b16 %v1053
      %v3963 = vunpack.c.h.b16 %v1053
      %v3964 = vunpack.c.l.b16 %v1054
      %v3965 = vunpack.c.h.b16 %v1054
      %v3966 = vunpack.c.l.b16 %v1055
      %v3967 = vunpack.c.h.b16 %v1055
      %v3968 = vunpack.c.l.b16 %v1056
      %v3969 = vunpack.c.h.b16 %v1056
      %v3970 = vunpack.c.l.b16 %v1057
      %v3971 = vunpack.c.h.b16 %v1057
      %v3972 = vunpack.c.l.b16 %v1058
      %v3973 = vunpack.c.h.b16 %v1058
      %v3974 = vunpack.c.l.b16 %v1059
      %v3975 = vunpack.c.h.b16 %v1059
      %v3976 = vunpack.c.l.b16 %v1060
      %v3977 = vunpack.c.h.b16 %v1060
      %v3978 = vunpack.c.l.b16 %v1061
      %v3979 = vunpack.c.h.b16 %v1061
      %v3980 = vunpack.c.l.b16 %v1062
      %v3981 = vunpack.c.h.b16 %v1062
      %v3982 = vunpack.c.l.b16 %v1063
      %v3983 = vunpack.c.h.b16 %v1063
      %v3984 = vunpack.c.l.b16 %v1064
      %v3985 = vunpack.c.h.b16 %v1064
      %v3986 = vunpack.c.l.b16 %v1065
      %v3987 = vunpack.c.h.b16 %v1065
      %v3988 = vunpack.c.l.b16 %v1066
      %v3989 = vunpack.c.h.b16 %v1066
      %v3990 = vunpack.c.l.b16 %v1067
      %v3991 = vunpack.c.h.b16 %v1067
      %v3992 = vunpack.c.l.b16 %v1068
      %v3993 = vunpack.c.h.b16 %v1068
      %v3994 = vunpack.c.l.b16 %v1069
      %v3995 = vunpack.c.h.b16 %v1069
      %v3996 = vunpack.c.l.b16 %v1070
      %v3997 = vunpack.c.h.b16 %v1070
      %v3998 = vunpack.c.l.b16 %v1071
      %v3999 = vunpack.c.h.b16 %v1071
      %v4000 = vunpack.c.l.b16 %v1072
      %v4001 = vunpack.c.h.b16 %v1072
      %v4002 = vunpack.c.l.b16 %v1073
      %v4003 = vunpack.c.h.b16 %v1073
      %v4004 = vunpack.c.l.b16 %v1074
      %v4005 = vunpack.c.h.b16 %v1074
      %v4006 = vunpack.c.l.b16 %v1075
      %v4007 = vunpack.c.h.b16 %v1075
      %v4008 = vunpack.c.l.b16 %v1076
      %v4009 = vunpack.c.h.b16 %v1076
      %v4010 = vunpack.c.l.b16 %v1077
      %v4011 = vunpack.c.h.b16 %v1077
      %v4012 = vunpack.c.l.b16 %v1078
      %v4013 = vunpack.c.h.b16 %v1078
      %v4014 = vunpack.c.l.b16 %v1079
      %v4015 = vunpack.c.h.b16 %v1079
      %v4016 = vunpack.c.l.b16 %v1080
      %v4017 = vunpack.c.h.b16 %v1080
      %v4018 = vunpack.c.l.b16 %v1081
      %v4019 = vunpack.c.h.b16 %v1081
      %v4020 = vunpack.c.l.b16 %v1082
      %v4021 = vunpack.c.h.b16 %v1082
      %v4022 = vunpack.c.l.b16 %v1083
      %v4023 = vunpack.c.h.b16 %v1083
      %v4024 = vunpack.c.l.b16 %v1084
      %v4025 = vunpack.c.h.b16 %v1084
      %v4026 = vunpack.c.l.b16 %v1085
      %v4027 = vunpack.c.h.b16 %v1085
      %v4028 = vunpack.c.l.b16 %v1086
      %v4029 = vunpack.c.h.b16 %v1086
      %v4030 = vunpack.c.l.b16 %v1087
      %v4031 = vunpack.c.h.b16 %v1087
      %v4032 = vunpack.c.l.b16 %v1088
      %v4033 = vunpack.c.h.b16 %v1088
      %v4034 = vunpack.c.l.b16 %v1089
      %v4035 = vunpack.c.h.b16 %v1089
      %v4036 = vunpack.c.l.b16 %v1090
      %v4037 = vunpack.c.h.b16 %v1090
      %v4038 = vunpack.c.l.b16 %v1091
      %v4039 = vunpack.c.h.b16 %v1091
      %v4040 = vunpack.c.l.b16 %v1092
      %v4041 = vunpack.c.h.b16 %v1092
      %v4042 = vunpack.c.l.b16 %v1093
      %v4043 = vunpack.c.h.b16 %v1093
      %v4044 = vunpack.c.l.b16 %v1094
      %v4045 = vunpack.c.h.b16 %v1094
      %v4046 = vunpack.c.l.b16 %v1095
      %v4047 = vunpack.c.h.b16 %v1095
      %v4048 = vunpack.c.l.b16 %v1096
      %v4049 = vunpack.c.h.b16 %v1096
      %v4050 = vunpack.c.l.b16 %v1097
      %v4051 = vunpack.c.h.b16 %v1097
      %v4052 = vunpack.c.l.b16 %v1098
      %v4053 = vunpack.c.h.b16 %v1098
      %v4054 = vunpack.c.l.b16 %v1099
      %v4055 = vunpack.c.h.b16 %v1099
      %v4056 = vunpack.c.l.b16 %v1100
      %v4057 = vunpack.c.h.b16 %v1100
      %v4058 = vunpack.c.l.b16 %v1101
      %v4059 = vunpack.c.h.b16 %v1101
      %v4060 = vunpack.c.l.b16 %v1102
      %v4061 = vunpack.c.h.b16 %v1102
      %v4062 = vunpack.c.l.b16 %v1103
      %v4063 = vunpack.c.h.b16 %v1103
      %v4064 = vunpack.c.l.b16 %v1104
      %v4065 = vunpack.c.h.b16 %v1104
      %v4066 = vunpack.c.l.b16 %v1105
      %v4067 = vunpack.c.h.b16 %v1105
      %v4068 = vunpack.c.l.b16 %v1106
      %v4069 = vunpack.c.h.b16 %v1106
      %v4070 = vunpack.c.l.b16 %v1107
      %v4071 = vunpack.c.h.b16 %v1107
      %v4072 = vunpack.c.l.b16 %v1108
      %v4073 = vunpack.c.h.b16 %v1108
      %v4074 = vunpack.c.l.b16 %v1109
      %v4075 = vunpack.c.h.b16 %v1109
      %v4076 = vunpack.c.l.b16 %v1110
      %v4077 = vunpack.c.h.b16 %v1110
      %v4078 = vunpack.c.l.b16 %v1111
      %v4079 = vunpack.c.h.b16 %v1111
      %v4080 = vunpack.c.l.b16 %v1112
      %v4081 = vunpack.c.h.b16 %v1112
      %v4082 = vunpack.c.l.b16 %v1113
      %v4083 = vunpack.c.h.b16 %v1113
      %v4084 = vunpack.c.l.b16 %v1114
      %v4085 = vunpack.c.h.b16 %v1114
      %v4086 = vunpack.c.l.b16 %v1115
      %v4087 = vunpack.c.h.b16 %v1115
      %v4088 = vunpack.c.l.b16 %v1116
      %v4089 = vunpack.c.h.b16 %v1116
      %v4090 = vunpack.c.l.b16 %v1117
      %v4091 = vunpack.c.h.b16 %v1117
      %v4092 = vunpack.c.l.b16 %v1118
      %v4093 = vunpack.c.h.b16 %v1118
      %v4094 = vunpack.c.l.b16 %v1119
      %v4095 = vunpack.c.h.b16 %v1119
      %v4096 = vunpack.c.l.b16 %v1120
      %v4097 = vunpack.c.h.b16 %v1120
      %v4098 = vunpack.c.l.b16 %v1121
      %v4099 = vunpack.c.h.b16 %v1121
      %v4100 = vunpack.c.l.b16 %v1122
      %v4101 = vunpack.c.h.b16 %v1122
      %v4102 = vunpack.c.l.b16 %v1123
      %v4103 = vunpack.c.h.b16 %v1123
      %v4104 = vunpack.c.l.b16 %v1124
      %v4105 = vunpack.c.h.b16 %v1124
      %v4106 = vunpack.c.l.b16 %v1125
      %v4107 = vunpack.c.h.b16 %v1125
      %v4108 = vunpack.c.l.b16 %v1126
      %v4109 = vunpack.c.h.b16 %v1126
      %v4110 = vunpack.c.l.b16 %v1127
      %v4111 = vunpack.c.h.b16 %v1127
      %v4112 = vunpack.c.l.b16 %v1128
      %v4113 = vunpack.c.h.b16 %v1128
      %v4114 = vunpack.c.l.b16 %v1129
      %v4115 = vunpack.c.h.b16 %v1129
      %v4116 = vunpack.c.l.b16 %v1130
      %v4117 = vunpack.c.h.b16 %v1130
      %v4118 = vunpack.c.l.b16 %v1131
      %v4119 = vunpack.c.h.b16 %v1131
      %v4120 = vunpack.c.l.b16 %v1132
      %v4121 = vunpack.c.h.b16 %v1132
      %v4122 = vunpack.c.l.b16 %v1133
      %v4123 = vunpack.c.h.b16 %v1133
      %v4124 = vunpack.c.l.b16 %v1134
      %v4125 = vunpack.c.h.b16 %v1134
      %v4126 = vunpack.c.l.b16 %v1135
      %v4127 = vunpack.c.h.b16 %v1135
      %v4128 = vunpack.c.l.b16 %v1136
      %v4129 = vunpack.c.h.b16 %v1136
      %v4130 = vunpack.c.l.b16 %v1137
      %v4131 = vunpack.c.h.b16 %v1137
      %v4132 = vunpack.c.l.b16 %v1138
      %v4133 = vunpack.c.h.b16 %v1138
      %v4134 = vunpack.c.l.b16 %v1139
      %v4135 = vunpack.c.h.b16 %v1139
      %v4136 = vunpack.c.l.b16 %v1140
      %v4137 = vunpack.c.h.b16 %v1140
      %v4138 = vunpack.c.l.b16 %v1141
      %v4139 = vunpack.c.h.b16 %v1141
      %v4140 = vunpack.c.l.b16 %v1142
      %v4141 = vunpack.c.h.b16 %v1142
      %v4142 = vunpack.c.l.b16 %v1143
      %v4143 = vunpack.c.h.b16 %v1143
      %v4144 = vunpack.c.l.b16 %v1144
      %v4145 = vunpack.c.h.b16 %v1144
      %v4146 = vunpack.c.l.b16 %v1145
      %v4147 = vunpack.c.h.b16 %v1145
      %v4148 = vunpack.c.l.b16 %v1146
      %v4149 = vunpack.c.h.b16 %v1146
      %v4150 = vunpack.c.l.b16 %v1147
      %v4151 = vunpack.c.h.b16 %v1147
      %v4152 = vunpack.c.l.b16 %v1148
      %v4153 = vunpack.c.h.b16 %v1148
      %v4154 = vunpack.c.l.b16 %v1149
      %v4155 = vunpack.c.h.b16 %v1149
      %v4156 = vunpack.c.l.b16 %v1150
      %v4157 = vunpack.c.h.b16 %v1150
      %v4158 = vunpack.c.l.b16 %v1151
      %v4159 = vunpack.c.h.b16 %v1151
      %v4160 = vunpack.c.l.b16 %v1152
      %v4161 = vunpack.c.h.b16 %v1152
      %v4162 = vunpack.c.l.b16 %v1153
      %v4163 = vunpack.c.h.b16 %v1153
      %v4164 = vunpack.c.l.b16 %v1154
      %v4165 = vunpack.c.h.b16 %v1154
      %v4166 = vunpack.c.l.b16 %v1155
      %v4167 = vunpack.c.h.b16 %v1155
      %v4168 = vunpack.c.l.b16 %v1156
      %v4169 = vunpack.c.h.b16 %v1156
      %v4170 = vunpack.c.l.b16 %v1157
      %v4171 = vunpack.c.h.b16 %v1157
      %v4172 = vunpack.c.l.b16 %v1158
      %v4173 = vunpack.c.h.b16 %v1158
      %v4174 = vunpack.c.l.b16 %v1159
      %v4175 = vunpack.c.h.b16 %v1159
      %v4176 = vunpack.c.l.b16 %v1160
      %v4177 = vunpack.c.h.b16 %v1160
      %v4178 = vunpack.c.l.b16 %v1161
      %v4179 = vunpack.c.h.b16 %v1161
      %v4180 = vunpack.c.l.b16 %v1162
      %v4181 = vunpack.c.h.b16 %v1162
      %v4182 = vunpack.c.l.b16 %v1163
      %v4183 = vunpack.c.h.b16 %v1163
      %v4184 = vunpack.c.l.b16 %v1164
      %v4185 = vunpack.c.h.b16 %v1164
      %v4186 = vunpack.c.l.b16 %v1165
      %v4187 = vunpack.c.h.b16 %v1165
      %v4188 = vunpack.c.l.b16 %v1166
      %v4189 = vunpack.c.h.b16 %v1166
      %v4190 = vunpack.c.l.b16 %v1167
      %v4191 = vunpack.c.h.b16 %v1167
      %v4192 = vunpack.c.l.b16 %v1168
      %v4193 = vunpack.c.h.b16 %v1168
      %v4194 = vunpack.c.l.b16 %v1169
      %v4195 = vunpack.c.h.b16 %v1169
      %v4196 = vunpack.c.l.b16 %v1170
      %v4197 = vunpack.c.h.b16 %v1170
      %v4198 = vunpack.c.l.b16 %v1171
      %v4199 = vunpack.c.h.b16 %v1171
      %v4200 = vunpack.c.l.b16 %v1172
      %v4201 = vunpack.c.h.b16 %v1172
      %v4202 = vunpack.c.l.b16 %v1173
      %v4203 = vunpack.c.h.b16 %v1173
      %v4204 = vunpack.c.l.b16 %v1174
      %v4205 = vunpack.c.h.b16 %v1174
      %v4206 = vunpack.c.l.b16 %v1175
      %v4207 = vunpack.c.h.b16 %v1175
      %v4208 = vunpack.c.l.b16 %v1176
      %v4209 = vunpack.c.h.b16 %v1176
      %v4210 = vunpack.c.l.b16 %v1177
      %v4211 = vunpack.c.h.b16 %v1177
      %v4212 = vunpack.c.l.b16 %v1178
      %v4213 = vunpack.c.h.b16 %v1178
      %v4214 = vunpack.c.l.b16 %v1179
      %v4215 = vunpack.c.h.b16 %v1179
      %v4216 = vunpack.c.l.b16 %v1180
      %v4217 = vunpack.c.h.b16 %v1180
      %v4218 = vunpack.c.l.b16 %v1181
      %v4219 = vunpack.c.h.b16 %v1181
      %v4220 = vunpack.c.l.b16 %v1182
      %v4221 = vunpack.c.h.b16 %v1182
      %v4222 = vunpack.c.l.b16 %v1183
      %v4223 = vunpack.c.h.b16 %v1183
      %v4224 = vunpack.c.l.b16 %v1184
      %v4225 = vunpack.c.h.b16 %v1184
      %v4226 = vunpack.c.l.b16 %v1185
      %v4227 = vunpack.c.h.b16 %v1185
      %v4228 = vunpack.c.l.b16 %v1186
      %v4229 = vunpack.c.h.b16 %v1186
      %v4230 = vunpack.c.l.b16 %v1187
      %v4231 = vunpack.c.h.b16 %v1187
      %v4232 = vunpack.c.l.b16 %v1188
      %v4233 = vunpack.c.h.b16 %v1188
      %v4234 = vunpack.c.l.b16 %v1189
      %v4235 = vunpack.c.h.b16 %v1189
      %v4236 = vunpack.c.l.b16 %v1190
      %v4237 = vunpack.c.h.b16 %v1190
      %v4238 = vunpack.c.l.b16 %v1191
      %v4239 = vunpack.c.h.b16 %v1191
      %v4240 = vunpack.c.l.b16 %v1192
      %v4241 = vunpack.c.h.b16 %v1192
      %v4242 = vunpack.c.l.b16 %v1193
      %v4243 = vunpack.c.h.b16 %v1193
      %v4244 = vunpack.c.l.b16 %v1194
      %v4245 = vunpack.c.h.b16 %v1194
      %v4246 = vunpack.c.l.b16 %v1195
      %v4247 = vunpack.c.h.b16 %v1195
      %v4248 = vunpack.c.l.b16 %v1196
      %v4249 = vunpack.c.h.b16 %v1196
      %v4250 = vunpack.c.l.b16 %v1197
      %v4251 = vunpack.c.h.b16 %v1197
      %v4252 = vunpack.c.l.b16 %v1198
      %v4253 = vunpack.c.h.b16 %v1198
      %v4254 = vunpack.c.l.b16 %v1199
      %v4255 = vunpack.c.h.b16 %v1199
      %v4256 = vunpack.c.l.b16 %v1200
      %v4257 = vunpack.c.h.b16 %v1200
      %v4258 = vunpack.c.l.b16 %v1201
      %v4259 = vunpack.c.h.b16 %v1201
      %v4260 = vunpack.c.l.b16 %v1202
      %v4261 = vunpack.c.h.b16 %v1202
      %v4262 = vunpack.c.l.b16 %v1203
      %v4263 = vunpack.c.h.b16 %v1203
      %v4264 = vunpack.c.l.b16 %v1204
      %v4265 = vunpack.c.h.b16 %v1204
      %v4266 = vunpack.c.l.b16 %v1205
      %v4267 = vunpack.c.h.b16 %v1205
      %v4268 = vunpack.c.l.b16 %v1206
      %v4269 = vunpack.c.h.b16 %v1206
      %v4270 = vunpack.c.l.b16 %v1207
      %v4271 = vunpack.c.h.b16 %v1207
      %v4272 = vunpack.c.l.b16 %v1208
      %v4273 = vunpack.c.h.b16 %v1208
      %v4274 = vunpack.c.l.b16 %v1209
      %v4275 = vunpack.c.h.b16 %v1209
      %v4276 = vunpack.c.l.b16 %v1210
      %v4277 = vunpack.c.h.b16 %v1210
      %v4278 = vunpack.c.l.b16 %v1211
      %v4279 = vunpack.c.h.b16 %v1211
      %v4280 = vunpack.c.l.b16 %v1212
      %v4281 = vunpack.c.h.b16 %v1212
      %v4282 = vunpack.c.l.b16 %v1213
      %v4283 = vunpack.c.h.b16 %v1213
      %v4284 = vunpack.c.l.b16 %v1214
      %v4285 = vunpack.c.h.b16 %v1214
      %v4286 = vunpack.c.l.b16 %v1215
      %v4287 = vunpack.c.h.b16 %v1215
      %v4288 = vunpack.c.l.b16 %v1216
      %v4289 = vunpack.c.h.b16 %v1216
      %v4290 = vunpack.c.l.b16 %v1217
      %v4291 = vunpack.c.h.b16 %v1217
      %v4292 = vunpack.c.l.b16 %v1218
      %v4293 = vunpack.c.h.b16 %v1218
      %v4294 = vunpack.c.l.b16 %v1219
      %v4295 = vunpack.c.h.b16 %v1219
      %v4296 = vunpack.c.l.b16 %v1220
      %v4297 = vunpack.c.h.b16 %v1220
      %v4298 = vunpack.c.l.b16 %v1221
      %v4299 = vunpack.c.h.b16 %v1221
      %v4300 = vunpack.c.l.b16 %v1222
      %v4301 = vunpack.c.h.b16 %v1222
      %v4302 = vunpack.c.l.b16 %v1223
      %v4303 = vunpack.c.h.b16 %v1223
      %v4304 = vunpack.c.l.b16 %v1224
      %v4305 = vunpack.c.h.b16 %v1224
      %v4306 = vunpack.c.l.b16 %v1225
      %v4307 = vunpack.c.h.b16 %v1225
      %v4308 = vunpack.c.l.b16 %v1226
      %v4309 = vunpack.c.h.b16 %v1226
      %v4310 = vunpack.c.l.b16 %v1227
      %v4311 = vunpack.c.h.b16 %v1227
      %v4312 = vunpack.c.l.b16 %v1228
      %v4313 = vunpack.c.h.b16 %v1228
      %v4314 = vunpack.c.l.b16 %v1229
      %v4315 = vunpack.c.h.b16 %v1229
      %v4316 = vunpack.c.l.b16 %v1230
      %v4317 = vunpack.c.h.b16 %v1230
      %v4318 = vunpack.c.l.b16 %v1231
      %v4319 = vunpack.c.h.b16 %v1231
      %v4320 = vunpack.c.l.b16 %v1232
      %v4321 = vunpack.c.h.b16 %v1232
      %v4322 = vunpack.c.l.b16 %v1233
      %v4323 = vunpack.c.h.b16 %v1233
      %v4324 = vunpack.c.l.b16 %v1234
      %v4325 = vunpack.c.h.b16 %v1234
      %v4326 = vunpack.c.l.b16 %v1235
      %v4327 = vunpack.c.h.b16 %v1235
      %v4328 = vunpack.c.l.b16 %v1236
      %v4329 = vunpack.c.h.b16 %v1236
      %v4330 = vunpack.c.l.b16 %v1237
      %v4331 = vunpack.c.h.b16 %v1237
      %v4332 = vunpack.c.l.b16 %v1238
      %v4333 = vunpack.c.h.b16 %v1238
      %v4334 = vunpack.c.l.b16 %v1239
      %v4335 = vunpack.c.h.b16 %v1239
      %v4336 = vunpack.c.l.b16 %v1240
      %v4337 = vunpack.c.h.b16 %v1240
      %v4338 = vunpack.c.l.b16 %v1241
      %v4339 = vunpack.c.h.b16 %v1241
      %v4340 = vunpack.c.l.b16 %v1242
      %v4341 = vunpack.c.h.b16 %v1242
      %v4342 = vunpack.c.l.b16 %v1243
      %v4343 = vunpack.c.h.b16 %v1243
      %v4344 = vunpack.c.l.b16 %v1244
      %v4345 = vunpack.c.h.b16 %v1244
      %v4346 = vunpack.c.l.b16 %v1245
      %v4347 = vunpack.c.h.b16 %v1245
      %v4348 = vunpack.c.l.b16 %v1246
      %v4349 = vunpack.c.h.b16 %v1246
      %v4350 = vunpack.c.l.b16 %v1247
      %v4351 = vunpack.c.h.b16 %v1247
      %v4352 = vunpack.c.l.b16 %v1248
      %v4353 = vunpack.c.h.b16 %v1248
      %v4354 = vunpack.c.l.b16 %v1249
      %v4355 = vunpack.c.h.b16 %v1249
      %v4356 = vunpack.c.l.b16 %v1250
      %v4357 = vunpack.c.h.b16 %v1250
      %v4358 = vunpack.c.l.b16 %v1251
      %v4359 = vunpack.c.h.b16 %v1251
      %v4360 = vunpack.c.l.b16 %v1252
      %v4361 = vunpack.c.h.b16 %v1252
      %v4362 = vunpack.c.l.b16 %v1253
      %v4363 = vunpack.c.h.b16 %v1253
      %v4364 = vunpack.c.l.b16 %v1254
      %v4365 = vunpack.c.h.b16 %v1254
      %v4366 = vunpack.c.l.b16 %v1255
      %v4367 = vunpack.c.h.b16 %v1255
      %v4368 = vunpack.c.l.b16 %v1256
      %v4369 = vunpack.c.h.b16 %v1256
      %v4370 = vunpack.c.l.b16 %v1257
      %v4371 = vunpack.c.h.b16 %v1257
      %v4372 = vunpack.c.l.b16 %v1258
      %v4373 = vunpack.c.h.b16 %v1258
      %v4374 = vunpack.c.l.b16 %v1259
      %v4375 = vunpack.c.h.b16 %v1259
      %v4376 = vunpack.c.l.b16 %v1260
      %v4377 = vunpack.c.h.b16 %v1260
      %v4378 = vunpack.c.l.b16 %v1261
      %v4379 = vunpack.c.h.b16 %v1261
      %v4380 = vunpack.c.l.b16 %v1262
      %v4381 = vunpack.c.h.b16 %v1262
      %v4382 = vunpack.c.l.b16 %v1263
      %v4383 = vunpack.c.h.b16 %v1263
      %v4384 = vunpack.c.l.b16 %v1264
      %v4385 = vunpack.c.h.b16 %v1264
      %v4386 = vunpack.c.l.b16 %v1265
      %v4387 = vunpack.c.h.b16 %v1265
      %v4388 = vunpack.c.l.b16 %v1266
      %v4389 = vunpack.c.h.b16 %v1266
      %v4390 = vunpack.c.l.b16 %v1267
      %v4391 = vunpack.c.h.b16 %v1267
      %v4392 = vunpack.c.l.b16 %v1268
      %v4393 = vunpack.c.h.b16 %v1268
      %v4394 = vunpack.c.l.b16 %v1269
      %v4395 = vunpack.c.h.b16 %v1269
      %v4396 = vunpack.c.l.b16 %v1270
      %v4397 = vunpack.c.h.b16 %v1270
      %v4398 = vunpack.c.l.b16 %v1271
      %v4399 = vunpack.c.h.b16 %v1271
      %v4400 = vunpack.c.l.b16 %v1272
      %v4401 = vunpack.c.h.b16 %v1272
      %v4402 = vunpack.c.l.b16 %v1273
      %v4403 = vunpack.c.h.b16 %v1273
      %v4404 = vunpack.c.l.b16 %v1274
      %v4405 = vunpack.c.h.b16 %v1274
      %v4406 = vunpack.c.l.b16 %v1275
      %v4407 = vunpack.c.h.b16 %v1275
      %v4408 = vunpack.c.l.b16 %v1276
      %v4409 = vunpack.c.h.b16 %v1276
      %v4410 = vunpack.c.l.b16 %v1277
      %v4411 = vunpack.c.h.b16 %v1277
      %v4412 = vunpack.c.l.b16 %v1278
      %v4413 = vunpack.c.h.b16 %v1278
      %v4414 = vunpack.c.l.b16 %v1279
      %v4415 = vunpack.c.h.b16 %v1279
      %v4416 = vunpack.c.l.b16 %v1280
      %v4417 = vunpack.c.h.b16 %v1280
      %v4418 = vunpack.c.l.b16 %v1281
      %v4419 = vunpack.c.h.b16 %v1281
      %v4420 = vunpack.c.l.b16 %v1282
      %v4421 = vunpack.c.h.b16 %v1282
      %v4422 = vunpack.c.l.b16 %v1283
      %v4423 = vunpack.c.h.b16 %v1283
      %v4424 = vunpack.c.l.b16 %v1284
      %v4425 = vunpack.c.h.b16 %v1284
      %v4426 = vunpack.c.l.b16 %v1285
      %v4427 = vunpack.c.h.b16 %v1285
      %v4428 = vunpack.c.l.b16 %v1286
      %v4429 = vunpack.c.h.b16 %v1286
      %v4430 = vunpack.c.l.b16 %v1287
      %v4431 = vunpack.c.h.b16 %v1287
      %v4432 = vunpack.c.l.b16 %v1288
      %v4433 = vunpack.c.h.b16 %v1288
      %v4434 = vunpack.c.l.b16 %v1289
      %v4435 = vunpack.c.h.b16 %v1289
      %v4436 = vunpack.c.l.b16 %v1290
      %v4437 = vunpack.c.h.b16 %v1290
      %v4438 = vunpack.c.l.b16 %v1291
      %v4439 = vunpack.c.h.b16 %v1291
      %v4440 = vunpack.c.l.b16 %v1292
      %v4441 = vunpack.c.h.b16 %v1292
      %v4442 = vunpack.c.l.b16 %v1293
      %v4443 = vunpack.c.h.b16 %v1293
      %v4444 = vunpack.c.l.b16 %v1294
      %v4445 = vunpack.c.h.b16 %v1294
      %v4446 = vunpack.c.l.b16 %v1295
      %v4447 = vunpack.c.h.b16 %v1295
      %v4448 = vunpack.c.l.b16 %v1296
      %v4449 = vunpack.c.h.b16 %v1296
      %v4450 = vunpack.c.l.b16 %v1297
      %v4451 = vunpack.c.h.b16 %v1297
      %v4452 = vunpack.c.l.b16 %v1298
      %v4453 = vunpack.c.h.b16 %v1298
      %v4454 = vunpack.c.l.b16 %v1299
      %v4455 = vunpack.c.h.b16 %v1299
      %v4456 = vunpack.c.l.b16 %v1300
      %v4457 = vunpack.c.h.b16 %v1300
      %v4458 = vunpack.c.l.b16 %v1301
      %v4459 = vunpack.c.h.b16 %v1301
      %v4460 = vunpack.c.l.b16 %v1302
      %v4461 = vunpack.c.h.b16 %v1302
      %v4462 = vunpack.c.l.b16 %v1303
      %v4463 = vunpack.c.h.b16 %v1303
      %v4464 = vunpack.c.l.b16 %v1304
      %v4465 = vunpack.c.h.b16 %v1304
      %v4466 = vunpack.c.l.b16 %v1305
      %v4467 = vunpack.c.h.b16 %v1305
      %v4468 = vunpack.c.l.b16 %v1306
      %v4469 = vunpack.c.h.b16 %v1306
      %v4470 = vunpack.c.l.b16 %v1307
      %v4471 = vunpack.c.h.b16 %v1307
      %v4472 = vunpack.c.l.b16 %v1308
      %v4473 = vunpack.c.h.b16 %v1308
      %v4474 = vunpack.c.l.b16 %v1309
      %v4475 = vunpack.c.h.b16 %v1309
      %v4476 = vunpack.c.l.b16 %v1310
      %v4477 = vunpack.c.h.b16 %v1310
      %v4478 = vunpack.c.l.b16 %v1311
      %v4479 = vunpack.c.h.b16 %v1311
      %v4480 = vunpack.c.l.b16 %v1312
      %v4481 = vunpack.c.h.b16 %v1312
      %v4482 = vunpack.c.l.b16 %v1313
      %v4483 = vunpack.c.h.b16 %v1313
      %v4484 = vunpack.c.l.b16 %v1314
      %v4485 = vunpack.c.h.b16 %v1314
      %v4486 = vunpack.c.l.b16 %v1315
      %v4487 = vunpack.c.h.b16 %v1315
      %v4488 = vunpack.c.l.b16 %v1316
      %v4489 = vunpack.c.h.b16 %v1316
      %v4490 = vunpack.c.l.b16 %v1317
      %v4491 = vunpack.c.h.b16 %v1317
      %v4492 = vunpack.c.l.b16 %v1318
      %v4493 = vunpack.c.h.b16 %v1318
      %v4494 = vunpack.c.l.b16 %v1319
      %v4495 = vunpack.c.h.b16 %v1319
      %v4496 = vunpack.c.l.b16 %v1320
      %v4497 = vunpack.c.h.b16 %v1320
      %v4498 = vunpack.c.l.b16 %v1321
      %v4499 = vunpack.c.h.b16 %v1321
      %v4500 = vunpack.c.l.b16 %v1322
      %v4501 = vunpack.c.h.b16 %v1322
      %v4502 = vunpack.c.l.b16 %v1323
      %v4503 = vunpack.c.h.b16 %v1323
      %v4504 = vunpack.c.l.b16 %v1324
      %v4505 = vunpack.c.h.b16 %v1324
      %v4506 = vunpack.c.l.b16 %v1325
      %v4507 = vunpack.c.h.b16 %v1325
      %v4508 = vunpack.c.l.b16 %v1326
      %v4509 = vunpack.c.h.b16 %v1326
      %v4510 = vunpack.c.l.b16 %v1327
      %v4511 = vunpack.c.h.b16 %v1327
      %v4512 = vpack.c.b16 %v2468, %v2464
      %v4513 = vpack.c.b16 %v2469, %v2465
      %v4514 = vpack.c.b16 %v2470, %v2466
      %v4515 = vpack.c.b16 %v2471, %v2467
      %v4516 = vpack.c.b16 %v2476, %v2472
      %v4517 = vpack.c.b16 %v2477, %v2473
      %v4518 = vpack.c.b16 %v2478, %v2474
      %v4519 = vpack.c.b16 %v2479, %v2475
      %v4520 = vpack.c.b16 %v2484, %v2480
      %v4521 = vpack.c.b16 %v2485, %v2481
      %v4522 = vpack.c.b16 %v2486, %v2482
      %v4523 = vpack.c.b16 %v2487, %v2483
      %v4524 = vpack.c.b16 %v2492, %v2488
      %v4525 = vpack.c.b16 %v2493, %v2489
      %v4526 = vpack.c.b16 %v2494, %v2490
      %v4527 = vpack.c.b16 %v2495, %v2491
      %v4528 = vpack.c.b16 %v2500, %v2496
      %v4529 = vpack.c.b16 %v2501, %v2497
      %v4530 = vpack.c.b16 %v2502, %v2498
      %v4531 = vpack.c.b16 %v2503, %v2499
      %v4532 = vpack.c.b16 %v2508, %v2504
      %v4533 = vpack.c.b16 %v2509, %v2505
      %v4534 = vpack.c.b16 %v2510, %v2506
      %v4535 = vpack.c.b16 %v2511, %v2507
      %v4536 = vpack.c.b16 %v2516, %v2512
      %v4537 = vpack.c.b16 %v2517, %v2513
      %v4538 = vpack.c.b16 %v2518, %v2514
      %v4539 = vpack.c.b16 %v2519, %v2515
      %v4540 = vpack.c.b16 %v2524, %v2520
      %v4541 = vpack.c.b16 %v2525, %v2521
      %v4542 = vpack.c.b16 %v2526, %v2522
      %v4543 = vpack.c.b16 %v2527, %v2523
      %v4544 = vpack.c.b16 %v2532, %v2528
      %v4545 = vpack.c.b16 %v2533, %v2529
      %v4546 = vpack.c.b16 %v2534, %v2530
      %v4547 = vpack.c.b16 %v2535, %v2531
      %v4548 = vpack.c.b16 %v2540, %v2536
      %v4549 = vpack.c.b16 %v2541, %v2537
      %v4550 = vpack.c.b16 %v2542, %v2538
      %v4551 = vpack.c.b16 %v2543, %v2539
      %v4552 = vpack.c.b16 %v2548, %v2544
      %v4553 = vpack.c.b16 %v2549, %v2545
      %v4554 = vpack.c.b16 %v2550, %v2546
      %v4555 = vpack.c.b16 %v2551, %v2547
      %v4556 = vpack.c.b16 %v2556, %v2552
      %v4557 = vpack.c.b16 %v2557, %v2553
      %v4558 = vpack.c.b16 %v2558, %v2554
      %v4559 = vpack.c.b16 %v2559, %v2555
      %v4560 = vpack.c.b16 %v2564, %v2560
      %v4561 = vpack.c.b16 %v2565, %v2561
      %v4562 = vpack.c.b16 %v2566, %v2562
      %v4563 = vpack.c.b16 %v2567, %v2563
      %v4564 = vpack.c.b16 %v2572, %v2568
      %v4565 = vpack.c.b16 %v2573, %v2569
      %v4566 = vpack.c.b16 %v2574, %v2570
      %v4567 = vpack.c.b16 %v2575, %v2571
      %v4568 = vpack.c.b16 %v2580, %v2576
      %v4569 = vpack.c.b16 %v2581, %v2577
      %v4570 = vpack.c.b16 %v2582, %v2578
      %v4571 = vpack.c.b16 %v2583, %v2579
      %v4572 = vpack.c.b16 %v2588, %v2584
      %v4573 = vpack.c.b16 %v2589, %v2585
      %v4574 = vpack.c.b16 %v2590, %v2586
      %v4575 = vpack.c.b16 %v2591, %v2587
      %v4576 = vpack.c.b16 %v2596, %v2592
      %v4577 = vpack.c.b16 %v2597, %v2593
      %v4578 = vpack.c.b16 %v2598, %v2594
      %v4579 = vpack.c.b16 %v2599, %v2595
      %v4580 = vpack.c.b16 %v2604, %v2600
      %v4581 = vpack.c.b16 %v2605, %v2601
      %v4582 = vpack.c.b16 %v2606, %v2602
      %v4583 = vpack.c.b16 %v2607, %v2603
      %v4584 = vpack.c.b16 %v2612, %v2608
      %v4585 = vpack.c.b16 %v2613, %v2609
      %v4586 = vpack.c.b16 %v2614, %v2610
      %v4587 = vpack.c.b16 %v2615, %v2611
      %v4588 = vpack.c.b16 %v2620, %v2616
      %v4589 = vpack.c.b16 %v2621, %v2617
      %v4590 = vpack.c.b16 %v2622, %v2618
      %v4591 = vpack.c.b16 %v2623, %v2619
      %v4592 = vpack.c.b16 %v2628, %v2624
      %v4593 = vpack.c.b16 %v2629, %v2625
      %v4594 = vpack.c.b16 %v2630, %v2626
      %v4595 = vpack.c.b16 %v2631, %v2627
      %v4596 = vpack.c.b16 %v2636, %v2632
      %v4597 = vpack.c.b16 %v2637, %v2633
      %v4598 = vpack.c.b16 %v2638, %v2634
      %v4599 = vpack.c.b16 %v2639, %v2635
      %v4600 = vpack.c.b16 %v2644, %v2640
      %v4601 = vpack.c.b16 %v2645, %v2641
      %v4602 = vpack.c.b16 %v2646, %v2642
      %v4603 = vpack.c.b16 %v2647, %v2643
      %v4604 = vpack.c.b16 %v2652, %v2648
      %v4605 = vpack.c.b16 %v2653, %v2649
      %v4606 = vpack.c.b16 %v2654, %v2650
      %v4607 = vpack.c.b16 %v2655, %v2651
      %v4608 = vpack.c.b16 %v2660, %v2656
      %v4609 = vpack.c.b16 %v2661, %v2657
      %v4610 = vpack.c.b16 %v2662, %v2658
      %v4611 = vpack.c.b16 %v2663, %v2659
      %v4612 = vpack.c.b16 %v2668, %v2664
      %v4613 = vpack.c.b16 %v2669, %v2665
      %v4614 = vpack.c.b16 %v2670, %v2666
      %v4615 = vpack.c.b16 %v2671, %v2667
      %v4616 = vpack.c.b16 %v2676, %v2672
      %v4617 = vpack.c.b16 %v2677, %v2673
      %v4618 = vpack.c.b16 %v2678, %v2674
      %v4619 = vpack.c.b16 %v2679, %v2675
      %v4620 = vpack.c.b16 %v2684, %v2680
      %v4621 = vpack.c.b16 %v2685, %v2681
      %v4622 = vpack.c.b16 %v2686, %v2682
      %v4623 = vpack.c.b16 %v2687, %v2683
      %v4624 = vpack.c.b16 %v2692, %v2688
      %v4625 = vpack.c.b16 %v2693, %v2689
      %v4626 = vpack.c.b16 %v2694, %v2690
      %v4627 = vpack.c.b16 %v2695, %v2691
      %v4628 = vpack.c.b16 %v2700, %v2696
      %v4629 = vpack.c.b16 %v2701, %v2697
      %v4630 = vpack.c.b16 %v2702, %v2698
      %v4631 = vpack.c.b16 %v2703, %v2699
      %v4632 = vpack.c.b16 %v2708, %v2704
      %v4633 = vpack.c.b16 %v2709, %v2705
      %v4634 = vpack.c.b16 %v2710, %v2706
      %v4635 = vpack.c.b16 %v2711, %v2707
      %v4636 = vpack.c.b16 %v2716, %v2712
      %v4637 = vpack.c.b16 %v2717, %v2713
      %v4638 = vpack.c.b16 %v2718, %v2714
      %v4639 = vpack.c.b16 %v2719, %v2715
      %v4640 = vpack.c.b16 %v2724, %v2720
      %v4641 = vpack.c.b16 %v2725, %v2721
      %v4642 = vpack.c.b16 %v2726, %v2722
      %v4643 = vpack.c.b16 %v2727, %v2723
      %v4644 = vpack.c.b16 %v2732, %v2728
      %v4645 = vpack.c.b16 %v2733, %v2729
      %v4646 = vpack.c.b16 %v2734, %v2730
      %v4647 = vpack.c.b16 %v2735, %v2731
      %v4648 = vpack.c.b16 %v2740, %v2736
      %v4649 = vpack.c.b16 %v2741, %v2737
      %v4650 = vpack.c.b16 %v2742, %v2738
      %v4651 = vpack.c.b16 %v2743, %v2739
      %v4652 = vpack.c.b16 %v2748, %v2744
      %v4653 = vpack.c.b16 %v2749, %v2745
      %v4654 = vpack.c.b16 %v2750, %v2746
      %v4655 = vpack.c.b16 %v2751, %v2747
      %v4656 = vpack.c.b16 %v2756, %v2752
      %v4657 = vpack.c.b16 %v2757, %v2753
      %v4658 = vpack.c.b16 %v2758, %v2754
      %v4659 = vpack.c.b16 %v2759, %v2755
      %v4660 = vpack.c.b16 %v2764, %v2760
      %v4661 = vpack.c.b16 %v2765, %v2761
      %v4662 = vpack.c.b16 %v2766, %v2762
      %v4663 = vpack.c.b16 %v2767, %v2763
      %v4664 = vpack.c.b16 %v2772, %v2768
      %v4665 = vpack.c.b16 %v2773, %v2769
      %v4666 = vpack.c.b16 %v2774, %v2770
      %v4667 = vpack.c.b16 %v2775, %v2771
      %v4668 = vpack.c.b16 %v2780, %v2776
      %v4669 = vpack.c.b16 %v2781, %v2777
      %v4670 = vpack.c.b16 %v2782, %v2778
      %v4671 = vpack.c.b16 %v2783, %v2779
      %v4672 = vpack.c.b16 %v2788, %v2784
      %v4673 = vpack.c.b16 %v2789, %v2785
      %v4674 = vpack.c.b16 %v2790, %v2786
      %v4675 = vpack.c.b16 %v2791, %v2787
      %v4676 = vpack.c.b16 %v2796, %v2792
      %v4677 = vpack.c.b16 %v2797, %v2793
      %v4678 = vpack.c.b16 %v2798, %v2794
      %v4679 = vpack.c.b16 %v2799, %v2795
      %v4680 = vpack.c.b16 %v2804, %v2800
      %v4681 = vpack.c.b16 %v2805, %v2801
      %v4682 = vpack.c.b16 %v2806, %v2802
      %v4683 = vpack.c.b16 %v2807, %v2803
      %v4684 = vpack.c.b16 %v2812, %v2808
      %v4685 = vpack.c.b16 %v2813, %v2809
      %v4686 = vpack.c.b16 %v2814, %v2810
      %v4687 = vpack.c.b16 %v2815, %v2811
      %v4688 = vpack.c.b16 %v2820, %v2816
      %v4689 = vpack.c.b16 %v2821, %v2817
      %v4690 = vpack.c.b16 %v2822, %v2818
      %v4691 = vpack.c.b16 %v2823, %v2819
      %v4692 = vpack.c.b16 %v2828, %v2824
      %v4693 = vpack.c.b16 %v2829, %v2825
      %v4694 = vpack.c.b16 %v2830, %v2826
      %v4695 = vpack.c.b16 %v2831, %v2827
      %v4696 = vpack.c.b16 %v2836, %v2832
      %v4697 = vpack.c.b16 %v2837, %v2833
      %v4698 = vpack.c.b16 %v2838, %v2834
      %v4699 = vpack.c.b16 %v2839, %v2835
      %v4700 = vpack.c.b16 %v2844, %v2840
      %v4701 = vpack.c.b16 %v2845, %v2841
      %v4702 = vpack.c.b16 %v2846, %v2842
      %v4703 = vpack.c.b16 %v2847, %v2843
      %v4704 = vpack.c.b16 %v2852, %v2848
      %v4705 = vpack.c.b16 %v2853, %v2849
      %v4706 = vpack.c.b16 %v2854, %v2850
      %v4707 = vpack.c.b16 %v2855, %v2851
      %v4708 = vpack.c.b16 %v2860, %v2856
      %v4709 = vpack.c.b16 %v2861, %v2857
      %v4710 = vpack.c.b16 %v2862, %v2858
      %v4711 = vpack.c.b16 %v2863, %v2859
      %v4712 = vpack.c.b16 %v2868, %v2864
      %v4713 = vpack.c.b16 %v2869, %v2865
      %v4714 = vpack.c.b16 %v2870, %v2866
      %v4715 = vpack.c.b16 %v2871, %v2867
      %v4716 = vpack.c.b16 %v2876, %v2872
      %v4717 = vpack.c.b16 %v2877, %v2873
      %v4718 = vpack.c.b16 %v2878, %v2874
      %v4719 = vpack.c.b16 %v2879, %v2875
      %v4720 = vpack.c.b16 %v2884, %v2880
      %v4721 = vpack.c.b16 %v2885, %v2881
      %v4722 = vpack.c.b16 %v2886, %v2882
      %v4723 = vpack.c.b16 %v2887, %v2883
      %v4724 = vpack.c.b16 %v2892, %v2888
      %v4725 = vpack.c.b16 %v2893, %v2889
      %v4726 = vpack.c.b16 %v2894, %v2890
      %v4727 = vpack.c.b16 %v2895, %v2891
      %v4728 = vpack.c.b16 %v2900, %v2896
      %v4729 = vpack.c.b16 %v2901, %v2897
      %v4730 = vpack.c.b16 %v2902, %v2898
      %v4731 = vpack.c.b16 %v2903, %v2899
      %v4732 = vpack.c.b16 %v2908, %v2904
      %v4733 = vpack.c.b16 %v2909, %v2905
      %v4734 = vpack.c.b16 %v2910, %v2906
      %v4735 = vpack.c.b16 %v2911, %v2907
      %v4736 = vpack.c.b16 %v2916, %v2912
      %v4737 = vpack.c.b16 %v2917, %v2913
      %v4738 = vpack.c.b16 %v2918, %v2914
      %v4739 = vpack.c.b16 %v2919, %v2915
      %v4740 = vpack.c.b16 %v2924, %v2920
      %v4741 = vpack.c.b16 %v2925, %v2921
      %v4742 = vpack.c.b16 %v2926, %v2922
      %v4743 = vpack.c.b16 %v2927, %v2923
      %v4744 = vpack.c.b16 %v2932, %v2928
      %v4745 = vpack.c.b16 %v2933, %v2929
      %v4746 = vpack.c.b16 %v2934, %v2930
      %v4747 = vpack.c.b16 %v2935, %v2931
      %v4748 = vpack.c.b16 %v2940, %v2936
      %v4749 = vpack.c.b16 %v2941, %v2937
      %v4750 = vpack.c.b16 %v2942, %v2938
      %v4751 = vpack.c.b16 %v2943, %v2939
      %v4752 = vpack.c.b16 %v2948, %v2944
      %v4753 = vpack.c.b16 %v2949, %v2945
      %v4754 = vpack.c.b16 %v2950, %v2946
      %v4755 = vpack.c.b16 %v2951, %v2947
      %v4756 = vpack.c.b16 %v2956, %v2952
      %v4757 = vpack.c.b16 %v2957, %v2953
      %v4758 = vpack.c.b16 %v2958, %v2954
      %v4759 = vpack.c.b16 %v2959, %v2955
      %v4760 = vpack.c.b16 %v2964, %v2960
      %v4761 = vpack.c.b16 %v2965, %v2961
      %v4762 = vpack.c.b16 %v2966, %v2962
      %v4763 = vpack.c.b16 %v2967, %v2963
      %v4764 = vpack.c.b16 %v2972, %v2968
      %v4765 = vpack.c.b16 %v2973, %v2969
      %v4766 = vpack.c.b16 %v2974, %v2970
      %v4767 = vpack.c.b16 %v2975, %v2971
      %v4768 = vpack.c.b16 %v2980, %v2976
      %v4769 = vpack.c.b16 %v2981, %v2977
      %v4770 = vpack.c.b16 %v2982, %v2978
      %v4771 = vpack.c.b16 %v2983, %v2979
      %v4772 = vpack.c.b16 %v2988, %v2984
      %v4773 = vpack.c.b16 %v2989, %v2985
      %v4774 = vpack.c.b16 %v2990, %v2986
      %v4775 = vpack.c.b16 %v2991, %v2987
      %v4776 = vpack.c.b16 %v2996, %v2992
      %v4777 = vpack.c.b16 %v2997, %v2993
      %v4778 = vpack.c.b16 %v2998, %v2994
      %v4779 = vpack.c.b16 %v2999, %v2995
      %v4780 = vpack.c.b16 %v3004, %v3000
      %v4781 = vpack.c.b16 %v3005, %v3001
      %v4782 = vpack.c.b16 %v3006, %v3002
      %v4783 = vpack.c.b16 %v3007, %v3003
      %v4784 = vpack.c.b16 %v3012, %v3008
      %v4785 = vpack.c.b16 %v3013, %v3009
      %v4786 = vpack.c.b16 %v3014, %v3010
      %v4787 = vpack.c.b16 %v3015, %v3011
      %v4788 = vpack.c.b16 %v3020, %v3016
      %v4789 = vpack.c.b16 %v3021, %v3017
      %v4790 = vpack.c.b16 %v3022, %v3018
      %v4791 = vpack.c.b16 %v3023, %v3019
      %v4792 = vpack.c.b16 %v3028, %v3024
      %v4793 = vpack.c.b16 %v3029, %v3025
      %v4794 = vpack.c.b16 %v3030, %v3026
      %v4795 = vpack.c.b16 %v3031, %v3027
      %v4796 = vpack.c.b16 %v3036, %v3032
      %v4797 = vpack.c.b16 %v3037, %v3033
      %v4798 = vpack.c.b16 %v3038, %v3034
      %v4799 = vpack.c.b16 %v3039, %v3035
      %v4800 = vpack.c.b16 %v3044, %v3040
      %v4801 = vpack.c.b16 %v3045, %v3041
      %v4802 = vpack.c.b16 %v3046, %v3042
      %v4803 = vpack.c.b16 %v3047, %v3043
      %v4804 = vpack.c.b16 %v3052, %v3048
      %v4805 = vpack.c.b16 %v3053, %v3049
      %v4806 = vpack.c.b16 %v3054, %v3050
      %v4807 = vpack.c.b16 %v3055, %v3051
      %v4808 = vpack.c.b16 %v3060, %v3056
      %v4809 = vpack.c.b16 %v3061, %v3057
      %v4810 = vpack.c.b16 %v3062, %v3058
      %v4811 = vpack.c.b16 %v3063, %v3059
      %v4812 = vpack.c.b16 %v3068, %v3064
      %v4813 = vpack.c.b16 %v3069, %v3065
      %v4814 = vpack.c.b16 %v3070, %v3066
      %v4815 = vpack.c.b16 %v3071, %v3067
      %v4816 = vpack.c.b16 %v3076, %v3072
      %v4817 = vpack.c.b16 %v3077, %v3073
      %v4818 = vpack.c.b16 %v3078, %v3074
      %v4819 = vpack.c.b16 %v3079, %v3075
      %v4820 = vpack.c.b16 %v3084, %v3080
      %v4821 = vpack.c.b16 %v3085, %v3081
      %v4822 = vpack.c.b16 %v3086, %v3082
      %v4823 = vpack.c.b16 %v3087, %v3083
      %v4824 = vpack.c.b16 %v3092, %v3088
      %v4825 = vpack.c.b16 %v3093, %v3089
      %v4826 = vpack.c.b16 %v3094, %v3090
      %v4827 = vpack.c.b16 %v3095, %v3091
      %v4828 = vpack.c.b16 %v3100, %v3096
      %v4829 = vpack.c.b16 %v3101, %v3097
      %v4830 = vpack.c.b16 %v3102, %v3098
      %v4831 = vpack.c.b16 %v3103, %v3099
      %v4832 = vpack.c.b16 %v3108, %v3104
      %v4833 = vpack.c.b16 %v3109, %v3105
      %v4834 = vpack.c.b16 %v3110, %v3106
      %v4835 = vpack.c.b16 %v3111, %v3107
      %v4836 = vpack.c.b16 %v3116, %v3112
      %v4837 = vpack.c.b16 %v3117, %v3113
      %v4838 = vpack.c.b16 %v3118, %v3114
      %v4839 = vpack.c.b16 %v3119, %v3115
      %v4840 = vpack.c.b16 %v3124, %v3120
      %v4841 = vpack.c.b16 %v3125, %v3121
      %v4842 = vpack.c.b16 %v3126, %v3122
      %v4843 = vpack.c.b16 %v3127, %v3123
      %v4844 = vpack.c.b16 %v3132, %v3128
      %v4845 = vpack.c.b16 %v3133, %v3129
      %v4846 = vpack.c.b16 %v3134, %v3130
      %v4847 = vpack.c.b16 %v3135, %v3131
      %v4848 = vpack.c.b16 %v3140, %v3136
      %v4849 = vpack.c.b16 %v3141, %v3137
      %v4850 = vpack.c.b16 %v3142, %v3138
      %v4851 = vpack.c.b16 %v3143, %v3139
      %v4852 = vpack.c.b16 %v3148, %v3144
      %v4853 = vpack.c.b16 %v3149, %v3145
      %v4854 = vpack.c.b16 %v3150, %v3146
      %v4855 = vpack.c.b16 %v3151, %v3147
      %v4856 = vpack.c.b16 %v3156, %v3152
      %v4857 = vpack.c.b16 %v3157, %v3153
      %v4858 = vpack.c.b16 %v3158, %v3154
      %v4859 = vpack.c.b16 %v3159, %v3155
      %v4860 = vpack.c.b16 %v3164, %v3160
      %v4861 = vpack.c.b16 %v3165, %v3161
      %v4862 = vpack.c.b16 %v3166, %v3162
      %v4863 = vpack.c.b16 %v3167, %v3163
      %v4864 = vpack.c.b16 %v3172, %v3168
      %v4865 = vpack.c.b16 %v3173, %v3169
      %v4866 = vpack.c.b16 %v3174, %v3170
      %v4867 = vpack.c.b16 %v3175, %v3171
      %v4868 = vpack.c.b16 %v3180, %v3176
      %v4869 = vpack.c.b16 %v3181, %v3177
      %v4870 = vpack.c.b16 %v3182, %v3178
      %v4871 = vpack.c.b16 %v3183, %v3179
      %v4872 = vpack.c.b16 %v3188, %v3184
      %v4873 = vpack.c.b16 %v3189, %v3185
      %v4874 = vpack.c.b16 %v3190, %v3186
      %v4875 = vpack.c.b16 %v3191, %v3187
      %v4876 = vpack.c.b16 %v3196, %v3192
      %v4877 = vpack.c.b16 %v3197, %v3193
      %v4878 = vpack.c.b16 %v3198, %v3194
      %v4879 = vpack.c.b16 %v3199, %v3195
      %v4880 = vpack.c.b16 %v3204, %v3200
      %v4881 = vpack.c.b16 %v3205, %v3201
      %v4882 = vpack.c.b16 %v3206, %v3202
      %v4883 = vpack.c.b16 %v3207, %v3203
      %v4884 = vpack.c.b16 %v3212, %v3208
      %v4885 = vpack.c.b16 %v3213, %v3209
      %v4886 = vpack.c.b16 %v3214, %v3210
      %v4887 = vpack.c.b16 %v3215, %v3211
      %v4888 = vpack.c.b16 %v3220, %v3216
      %v4889 = vpack.c.b16 %v3221, %v3217
      %v4890 = vpack.c.b16 %v3222, %v3218
      %v4891 = vpack.c.b16 %v3223, %v3219
      %v4892 = vpack.c.b16 %v3228, %v3224
      %v4893 = vpack.c.b16 %v3229, %v3225
      %v4894 = vpack.c.b16 %v3230, %v3226
      %v4895 = vpack.c.b16 %v3231, %v3227
      %v4896 = vpack.c.b16 %v3236, %v3232
      %v4897 = vpack.c.b16 %v3237, %v3233
      %v4898 = vpack.c.b16 %v3238, %v3234
      %v4899 = vpack.c.b16 %v3239, %v3235
      %v4900 = vpack.c.b16 %v3244, %v3240
      %v4901 = vpack.c.b16 %v3245, %v3241
      %v4902 = vpack.c.b16 %v3246, %v3242
      %v4903 = vpack.c.b16 %v3247, %v3243
      %v4904 = vpack.c.b16 %v3252, %v3248
      %v4905 = vpack.c.b16 %v3253, %v3249
      %v4906 = vpack.c.b16 %v3254, %v3250
      %v4907 = vpack.c.b16 %v3255, %v3251
      %v4908 = vpack.c.b16 %v3260, %v3256
      %v4909 = vpack.c.b16 %v3261, %v3257
      %v4910 = vpack.c.b16 %v3262, %v3258
      %v4911 = vpack.c.b16 %v3263, %v3259
      %v4912 = vpack.c.b16 %v3268, %v3264
      %v4913 = vpack.c.b16 %v3269, %v3265
      %v4914 = vpack.c.b16 %v3270, %v3266
      %v4915 = vpack.c.b16 %v3271, %v3267
      %v4916 = vpack.c.b16 %v3276, %v3272
      %v4917 = vpack.c.b16 %v3277, %v3273
      %v4918 = vpack.c.b16 %v3278, %v3274
      %v4919 = vpack.c.b16 %v3279, %v3275
      %v4920 = vpack.c.b16 %v3284, %v3280
      %v4921 = vpack.c.b16 %v3285, %v3281
      %v4922 = vpack.c.b16 %v3286, %v3282
      %v4923 = vpack.c.b16 %v3287, %v3283
      %v4924 = vpack.c.b16 %v3292, %v3288
      %v4925 = vpack.c.b16 %v3293, %v3289
      %v4926 = vpack.c.b16 %v3294, %v3290
      %v4927 = vpack.c.b16 %v3295, %v3291
      %v4928 = vpack.c.b16 %v3300, %v3296
      %v4929 = vpack.c.b16 %v3301, %v3297
      %v4930 = vpack.c.b16 %v3302, %v3298
      %v4931 = vpack.c.b16 %v3303, %v3299
      %v4932 = vpack.c.b16 %v3308, %v3304
      %v4933 = vpack.c.b16 %v3309, %v3305
      %v4934 = vpack.c.b16 %v3310, %v3306
      %v4935 = vpack.c.b16 %v3311, %v3307
      %v4936 = vpack.c.b16 %v3316, %v3312
      %v4937 = vpack.c.b16 %v3317, %v3313
      %v4938 = vpack.c.b16 %v3318, %v3314
      %v4939 = vpack.c.b16 %v3319, %v3315
      %v4940 = vpack.c.b16 %v3324, %v3320
      %v4941 = vpack.c.b16 %v3325, %v3321
      %v4942 = vpack.c.b16 %v3326, %v3322
      %v4943 = vpack.c.b16 %v3327, %v3323
      %v4944 = vpack.c.b16 %v3332, %v3328
      %v4945 = vpack.c.b16 %v3333, %v3329
      %v4946 = vpack.c.b16 %v3334, %v3330
      %v4947 = vpack.c.b16 %v3335, %v3331
      %v4948 = vpack.c.b16 %v3340, %v3336
      %v4949 = vpack.c.b16 %v3341, %v3337
      %v4950 = vpack.c.b16 %v3342, %v3338
      %v4951 = vpack.c.b16 %v3343, %v3339
      %v4952 = vpack.c.b16 %v3348, %v3344
      %v4953 = vpack.c.b16 %v3349, %v3345
      %v4954 = vpack.c.b16 %v3350, %v3346
      %v4955 = vpack.c.b16 %v3351, %v3347
      %v4956 = vpack.c.b16 %v3356, %v3352
      %v4957 = vpack.c.b16 %v3357, %v3353
      %v4958 = vpack.c.b16 %v3358, %v3354
      %v4959 = vpack.c.b16 %v3359, %v3355
      %v4960 = vpack.c.b16 %v3364, %v3360
      %v4961 = vpack.c.b16 %v3365, %v3361
      %v4962 = vpack.c.b16 %v3366, %v3362
      %v4963 = vpack.c.b16 %v3367, %v3363
      %v4964 = vpack.c.b16 %v3372, %v3368
      %v4965 = vpack.c.b16 %v3373, %v3369
      %v4966 = vpack.c.b16 %v3374, %v3370
      %v4967 = vpack.c.b16 %v3375, %v3371
      %v4968 = vpack.c.b16 %v3380, %v3376
      %v4969 = vpack.c.b16 %v3381, %v3377
      %v4970 = vpack.c.b16 %v3382, %v3378
      %v4971 = vpack.c.b16 %v3383, %v3379
      %v4972 = vpack.c.b16 %v3388, %v3384
      %v4973 = vpack.c.b16 %v3389, %v3385
      %v4974 = vpack.c.b16 %v3390, %v3386
      %v4975 = vpack.c.b16 %v3391, %v3387
      %v4976 = vpack.c.b16 %v3396, %v3392
      %v4977 = vpack.c.b16 %v3397, %v3393
      %v4978 = vpack.c.b16 %v3398, %v3394
      %v4979 = vpack.c.b16 %v3399, %v3395
      %v4980 = vpack.c.b16 %v3404, %v3400
      %v4981 = vpack.c.b16 %v3405, %v3401
      %v4982 = vpack.c.b16 %v3406, %v3402
      %v4983 = vpack.c.b16 %v3407, %v3403
      %v4984 = vpack.c.b16 %v3412, %v3408
      %v4985 = vpack.c.b16 %v3413, %v3409
      %v4986 = vpack.c.b16 %v3414, %v3410
      %v4987 = vpack.c.b16 %v3415, %v3411
      %v4988 = vpack.c.b16 %v3420, %v3416
      %v4989 = vpack.c.b16 %v3421, %v3417
      %v4990 = vpack.c.b16 %v3422, %v3418
      %v4991 = vpack.c.b16 %v3423, %v3419
      %v4992 = vpack.c.b16 %v3428, %v3424
      %v4993 = vpack.c.b16 %v3429, %v3425
      %v4994 = vpack.c.b16 %v3430, %v3426
      %v4995 = vpack.c.b16 %v3431, %v3427
      %v4996 = vpack.c.b16 %v3436, %v3432
      %v4997 = vpack.c.b16 %v3437, %v3433
      %v4998 = vpack.c.b16 %v3438, %v3434
      %v4999 = vpack.c.b16 %v3439, %v3435
      %v5000 = vpack.c.b16 %v3444, %v3440
      %v5001 = vpack.c.b16 %v3445, %v3441
      %v5002 = vpack.c.b16 %v3446, %v3442
      %v5003 = vpack.c.b16 %v3447, %v3443
      %v5004 = vpack.c.b16 %v3452, %v3448
      %v5005 = vpack.c.b16 %v3453, %v3449
      %v5006 = vpack.c.b16 %v3454, %v3450
      %v5007 = vpack.c.b16 %v3455, %v3451
      %v5008 = vpack.c.b16 %v3460, %v3456
      %v5009 = vpack.c.b16 %v3461, %v3457
      %v5010 = vpack.c.b16 %v3462, %v3458
      %v5011 = vpack.c.b16 %v3463, %v3459
      %v5012 = vpack.c.b16 %v3468, %v3464
      %v5013 = vpack.c.b16 %v3469, %v3465
      %v5014 = vpack.c.b16 %v3470, %v3466
      %v5015 = vpack.c.b16 %v3471, %v3467
      %v5016 = vpack.c.b16 %v3476, %v3472
      %v5017 = vpack.c.b16 %v3477, %v3473
      %v5018 = vpack.c.b16 %v3478, %v3474
      %v5019 = vpack.c.b16 %v3479, %v3475
      %v5020 = vpack.c.b16 %v3484, %v3480
      %v5021 = vpack.c.b16 %v3485, %v3481
      %v5022 = vpack.c.b16 %v3486, %v3482
      %v5023 = vpack.c.b16 %v3487, %v3483
      %v5024 = vpack.c.b16 %v3492, %v3488
      %v5025 = vpack.c.b16 %v3493, %v3489
      %v5026 = vpack.c.b16 %v3494, %v3490
      %v5027 = vpack.c.b16 %v3495, %v3491
      %v5028 = vpack.c.b16 %v3500, %v3496
      %v5029 = vpack.c.b16 %v3501, %v3497
      %v5030 = vpack.c.b16 %v3502, %v3498
      %v5031 = vpack.c.b16 %v3503, %v3499
      %v5032 = vpack.c.b16 %v3508, %v3504
      %v5033 = vpack.c.b16 %v3509, %v3505
      %v5034 = vpack.c.b16 %v3510, %v3506
      %v5035 = vpack.c.b16 %v3511, %v3507
      %v5036 = vpack.c.b16 %v3516, %v3512
      %v5037 = vpack.c.b16 %v3517, %v3513
      %v5038 = vpack.c.b16 %v3518, %v3514
      %v5039 = vpack.c.b16 %v3519, %v3515
      %v5040 = vpack.c.b16 %v3524, %v3520
      %v5041 = vpack.c.b16 %v3525, %v3521
      %v5042 = vpack.c.b16 %v3526, %v3522
      %v5043 = vpack.c.b16 %v3527, %v3523
      %v5044 = vpack.c.b16 %v3532, %v3528
      %v5045 = vpack.c.b16 %v3533, %v3529
      %v5046 = vpack.c.b16 %v3534, %v3530
      %v5047 = vpack.c.b16 %v3535, %v3531
      %v5048 = vpack.c.b16 %v3540, %v3536
      %v5049 = vpack.c.b16 %v3541, %v3537
      %v5050 = vpack.c.b16 %v3542, %v3538
      %v5051 = vpack.c.b16 %v3543, %v3539
      %v5052 = vpack.c.b16 %v3548, %v3544
      %v5053 = vpack.c.b16 %v3549, %v3545
      %v5054 = vpack.c.b16 %v3550, %v3546
      %v5055 = vpack.c.b16 %v3551, %v3547
      %v5056 = vpack.c.b16 %v3556, %v3552
      %v5057 = vpack.c.b16 %v3557, %v3553
      %v5058 = vpack.c.b16 %v3558, %v3554
      %v5059 = vpack.c.b16 %v3559, %v3555
      %v5060 = vpack.c.b16 %v3564, %v3560
      %v5061 = vpack.c.b16 %v3565, %v3561
      %v5062 = vpack.c.b16 %v3566, %v3562
      %v5063 = vpack.c.b16 %v3567, %v3563
      %v5064 = vpack.c.b16 %v3572, %v3568
      %v5065 = vpack.c.b16 %v3573, %v3569
      %v5066 = vpack.c.b16 %v3574, %v3570
      %v5067 = vpack.c.b16 %v3575, %v3571
      %v5068 = vpack.c.b16 %v3580, %v3576
      %v5069 = vpack.c.b16 %v3581, %v3577
      %v5070 = vpack.c.b16 %v3582, %v3578
      %v5071 = vpack.c.b16 %v3583, %v3579
      %v5072 = vpack.c.b16 %v3588, %v3584
      %v5073 = vpack.c.b16 %v3589, %v3585
      %v5074 = vpack.c.b16 %v3590, %v3586
      %v5075 = vpack.c.b16 %v3591, %v3587
      %v5076 = vpack.c.b16 %v3596, %v3592
      %v5077 = vpack.c.b16 %v3597, %v3593
      %v5078 = vpack.c.b16 %v3598, %v3594
      %v5079 = vpack.c.b16 %v3599, %v3595
      %v5080 = vpack.c.b16 %v3604, %v3600
      %v5081 = vpack.c.b16 %v3605, %v3601
      %v5082 = vpack.c.b16 %v3606, %v3602
      %v5083 = vpack.c.b16 %v3607, %v3603
      %v5084 = vpack.c.b16 %v3612, %v3608
      %v5085 = vpack.c.b16 %v3613, %v3609
      %v5086 = vpack.c.b16 %v3614, %v3610
      %v5087 = vpack.c.b16 %v3615, %v3611
      %v5088 = vpack.c.b16 %v3620, %v3616
      %v5089 = vpack.c.b16 %v3621, %v3617
      %v5090 = vpack.c.b16 %v3622, %v3618
      %v5091 = vpack.c.b16 %v3623, %v3619
      %v5092 = vpack.c.b16 %v3628, %v3624
      %v5093 = vpack.c.b16 %v3629, %v3625
      %v5094 = vpack.c.b16 %v3630, %v3626
      %v5095 = vpack.c.b16 %v3631, %v3627
      %v5096 = vpack.c.b16 %v3636, %v3632
      %v5097 = vpack.c.b16 %v3637, %v3633
      %v5098 = vpack.c.b16 %v3638, %v3634
      %v5099 = vpack.c.b16 %v3639, %v3635
      %v5100 = vpack.c.b16 %v3644, %v3640
      %v5101 = vpack.c.b16 %v3645, %v3641
      %v5102 = vpack.c.b16 %v3646, %v3642
      %v5103 = vpack.c.b16 %v3647, %v3643
      %v5104 = vpack.c.b16 %v3652, %v3648
      %v5105 = vpack.c.b16 %v3653, %v3649
      %v5106 = vpack.c.b16 %v3654, %v3650
      %v5107 = vpack.c.b16 %v3655, %v3651
      %v5108 = vpack.c.b16 %v3660, %v3656
      %v5109 = vpack.c.b16 %v3661, %v3657
      %v5110 = vpack.c.b16 %v3662, %v3658
      %v5111 = vpack.c.b16 %v3663, %v3659
      %v5112 = vpack.c.b16 %v3668, %v3664
      %v5113 = vpack.c.b16 %v3669, %v3665
      %v5114 = vpack.c.b16 %v3670, %v3666
      %v5115 = vpack.c.b16 %v3671, %v3667
      %v5116 = vpack.c.b16 %v3676, %v3672
      %v5117 = vpack.c.b16 %v3677, %v3673
      %v5118 = vpack.c.b16 %v3678, %v3674
      %v5119 = vpack.c.b16 %v3679, %v3675
      %v5120 = vpack.c.b16 %v3684, %v3680
      %v5121 = vpack.c.b16 %v3685, %v3681
      %v5122 = vpack.c.b16 %v3686, %v3682
      %v5123 = vpack.c.b16 %v3687, %v3683
      %v5124 = vpack.c.b16 %v3692, %v3688
      %v5125 = vpack.c.b16 %v3693, %v3689
      %v5126 = vpack.c.b16 %v3694, %v3690
      %v5127 = vpack.c.b16 %v3695, %v3691
      %v5128 = vpack.c.b16 %v3700, %v3696
      %v5129 = vpack.c.b16 %v3701, %v3697
      %v5130 = vpack.c.b16 %v3702, %v3698
      %v5131 = vpack.c.b16 %v3703, %v3699
      %v5132 = vpack.c.b16 %v3708, %v3704
      %v5133 = vpack.c.b16 %v3709, %v3705
      %v5134 = vpack.c.b16 %v3710, %v3706
      %v5135 = vpack.c.b16 %v3711, %v3707
      %v5136 = vpack.c.b16 %v3716, %v3712
      %v5137 = vpack.c.b16 %v3717, %v3713
      %v5138 = vpack.c.b16 %v3718, %v3714
      %v5139 = vpack.c.b16 %v3719, %v3715
      %v5140 = vpack.c.b16 %v3724, %v3720
      %v5141 = vpack.c.b16 %v3725, %v3721
      %v5142 = vpack.c.b16 %v3726, %v3722
      %v5143 = vpack.c.b16 %v3727, %v3723
      %v5144 = vpack.c.b16 %v3732, %v3728
      %v5145 = vpack.c.b16 %v3733, %v3729
      %v5146 = vpack.c.b16 %v3734, %v3730
      %v5147 = vpack.c.b16 %v3735, %v3731
      %v5148 = vpack.c.b16 %v3740, %v3736
      %v5149 = vpack.c.b16 %v3741, %v3737
      %v5150 = vpack.c.b16 %v3742, %v3738
      %v5151 = vpack.c.b16 %v3743, %v3739
      %v5152 = vpack.c.b16 %v3748, %v3744
      %v5153 = vpack.c.b16 %v3749, %v3745
      %v5154 = vpack.c.b16 %v3750, %v3746
      %v5155 = vpack.c.b16 %v3751, %v3747
      %v5156 = vpack.c.b16 %v3756, %v3752
      %v5157 = vpack.c.b16 %v3757, %v3753
      %v5158 = vpack.c.b16 %v3758, %v3754
      %v5159 = vpack.c.b16 %v3759, %v3755
      %v5160 = vpack.c.b16 %v3764, %v3760
      %v5161 = vpack.c.b16 %v3765, %v3761
      %v5162 = vpack.c.b16 %v3766, %v3762
      %v5163 = vpack.c.b16 %v3767, %v3763
      %v5164 = vpack.c.b16 %v3772, %v3768
      %v5165 = vpack.c.b16 %v3773, %v3769
      %v5166 = vpack.c.b16 %v3774, %v3770
      %v5167 = vpack.c.b16 %v3775, %v3771
      %v5168 = vpack.c.b16 %v3780, %v3776
      %v5169 = vpack.c.b16 %v3781, %v3777
      %v5170 = vpack.c.b16 %v3782, %v3778
      %v5171 = vpack.c.b16 %v3783, %v3779
      %v5172 = vpack.c.b16 %v3788, %v3784
      %v5173 = vpack.c.b16 %v3789, %v3785
      %v5174 = vpack.c.b16 %v3790, %v3786
      %v5175 = vpack.c.b16 %v3791, %v3787
      %v5176 = vpack.c.b16 %v3796, %v3792
      %v5177 = vpack.c.b16 %v3797, %v3793
      %v5178 = vpack.c.b16 %v3798, %v3794
      %v5179 = vpack.c.b16 %v3799, %v3795
      %v5180 = vpack.c.b16 %v3804, %v3800
      %v5181 = vpack.c.b16 %v3805, %v3801
      %v5182 = vpack.c.b16 %v3806, %v3802
      %v5183 = vpack.c.b16 %v3807, %v3803
      %v5184 = vpack.c.b16 %v3812, %v3808
      %v5185 = vpack.c.b16 %v3813, %v3809
      %v5186 = vpack.c.b16 %v3814, %v3810
      %v5187 = vpack.c.b16 %v3815, %v3811
      %v5188 = vpack.c.b16 %v3820, %v3816
      %v5189 = vpack.c.b16 %v3821, %v3817
      %v5190 = vpack.c.b16 %v3822, %v3818
      %v5191 = vpack.c.b16 %v3823, %v3819
      %v5192 = vpack.c.b16 %v3828, %v3824
      %v5193 = vpack.c.b16 %v3829, %v3825
      %v5194 = vpack.c.b16 %v3830, %v3826
      %v5195 = vpack.c.b16 %v3831, %v3827
      %v5196 = vpack.c.b16 %v3836, %v3832
      %v5197 = vpack.c.b16 %v3837, %v3833
      %v5198 = vpack.c.b16 %v3838, %v3834
      %v5199 = vpack.c.b16 %v3839, %v3835
      %v5200 = vpack.c.b16 %v3844, %v3840
      %v5201 = vpack.c.b16 %v3845, %v3841
      %v5202 = vpack.c.b16 %v3846, %v3842
      %v5203 = vpack.c.b16 %v3847, %v3843
      %v5204 = vpack.c.b16 %v3852, %v3848
      %v5205 = vpack.c.b16 %v3853, %v3849
      %v5206 = vpack.c.b16 %v3854, %v3850
      %v5207 = vpack.c.b16 %v3855, %v3851
      %v5208 = vpack.c.b16 %v3860, %v3856
      %v5209 = vpack.c.b16 %v3861, %v3857
      %v5210 = vpack.c.b16 %v3862, %v3858
      %v5211 = vpack.c.b16 %v3863, %v3859
      %v5212 = vpack.c.b16 %v3868, %v3864
      %v5213 = vpack.c.b16 %v3869, %v3865
      %v5214 = vpack.c.b16 %v3870, %v3866
      %v5215 = vpack.c.b16 %v3871, %v3867
      %v5216 = vpack.c.b16 %v3876, %v3872
      %v5217 = vpack.c.b16 %v3877, %v3873
      %v5218 = vpack.c.b16 %v3878, %v3874
      %v5219 = vpack.c.b16 %v3879, %v3875
      %v5220 = vpack.c.b16 %v3884, %v3880
      %v5221 = vpack.c.b16 %v3885, %v3881
      %v5222 = vpack.c.b16 %v3886, %v3882
      %v5223 = vpack.c.b16 %v3887, %v3883
      %v5224 = vpack.c.b16 %v3892, %v3888
      %v5225 = vpack.c.b16 %v3893, %v3889
      %v5226 = vpack.c.b16 %v3894, %v3890
      %v5227 = vpack.c.b16 %v3895, %v3891
      %v5228 = vpack.c.b16 %v3900, %v3896
      %v5229 = vpack.c.b16 %v3901, %v3897
      %v5230 = vpack.c.b16 %v3902, %v3898
      %v5231 = vpack.c.b16 %v3903, %v3899
      %v5232 = vpack.c.b16 %v3908, %v3904
      %v5233 = vpack.c.b16 %v3909, %v3905
      %v5234 = vpack.c.b16 %v3910, %v3906
      %v5235 = vpack.c.b16 %v3911, %v3907
      %v5236 = vpack.c.b16 %v3916, %v3912
      %v5237 = vpack.c.b16 %v3917, %v3913
      %v5238 = vpack.c.b16 %v3918, %v3914
      %v5239 = vpack.c.b16 %v3919, %v3915
      %v5240 = vpack.c.b16 %v3924, %v3920
      %v5241 = vpack.c.b16 %v3925, %v3921
      %v5242 = vpack.c.b16 %v3926, %v3922
      %v5243 = vpack.c.b16 %v3927, %v3923
      %v5244 = vpack.c.b16 %v3932, %v3928
      %v5245 = vpack.c.b16 %v3933, %v3929
      %v5246 = vpack.c.b16 %v3934, %v3930
      %v5247 = vpack.c.b16 %v3935, %v3931
      %v5248 = vpack.c.b16 %v3940, %v3936
      %v5249 = vpack.c.b16 %v3941, %v3937
      %v5250 = vpack.c.b16 %v3942, %v3938
      %v5251 = vpack.c.b16 %v3943, %v3939
      %v5252 = vpack.c.b16 %v3948, %v3944
      %v5253 = vpack.c.b16 %v3949, %v3945
      %v5254 = vpack.c.b16 %v3950, %v3946
      %v5255 = vpack.c.b16 %v3951, %v3947
      %v5256 = vpack.c.b16 %v3956, %v3952
      %v5257 = vpack.c.b16 %v3957, %v3953
      %v5258 = vpack.c.b16 %v3958, %v3954
      %v5259 = vpack.c.b16 %v3959, %v3955
      %v5260 = vpack.c.b16 %v3964, %v3960
      %v5261 = vpack.c.b16 %v3965, %v3961
      %v5262 = vpack.c.b16 %v3966, %v3962
      %v5263 = vpack.c.b16 %v3967, %v3963
      %v5264 = vpack.c.b16 %v3972, %v3968
      %v5265 = vpack.c.b16 %v3973, %v3969
      %v5266 = vpack.c.b16 %v3974, %v3970
      %v5267 = vpack.c.b16 %v3975, %v3971
      %v5268 = vpack.c.b16 %v3980, %v3976
      %v5269 = vpack.c.b16 %v3981, %v3977
      %v5270 = vpack.c.b16 %v3982, %v3978
      %v5271 = vpack.c.b16 %v3983, %v3979
      %v5272 = vpack.c.b16 %v3988, %v3984
      %v5273 = vpack.c.b16 %v3989, %v3985
      %v5274 = vpack.c.b16 %v3990, %v3986
      %v5275 = vpack.c.b16 %v3991, %v3987
      %v5276 = vpack.c.b16 %v3996, %v3992
      %v5277 = vpack.c.b16 %v3997, %v3993
      %v5278 = vpack.c.b16 %v3998, %v3994
      %v5279 = vpack.c.b16 %v3999, %v3995
      %v5280 = vpack.c.b16 %v4004, %v4000
      %v5281 = vpack.c.b16 %v4005, %v4001
      %v5282 = vpack.c.b16 %v4006, %v4002
      %v5283 = vpack.c.b16 %v4007, %v4003
      %v5284 = vpack.c.b16 %v4012, %v4008
      %v5285 = vpack.c.b16 %v4013, %v4009
      %v5286 = vpack.c.b16 %v4014, %v4010
      %v5287 = vpack.c.b16 %v4015, %v4011
      %v5288 = vpack.c.b16 %v4020, %v4016
      %v5289 = vpack.c.b16 %v4021, %v4017
      %v5290 = vpack.c.b16 %v4022, %v4018
      %v5291 = vpack.c.b16 %v4023, %v4019
      %v5292 = vpack.c.b16 %v4028, %v4024
      %v5293 = vpack.c.b16 %v4029, %v4025
      %v5294 = vpack.c.b16 %v4030, %v4026
      %v5295 = vpack.c.b16 %v4031, %v4027
      %v5296 = vpack.c.b16 %v4036, %v4032
      %v5297 = vpack.c.b16 %v4037, %v4033
      %v5298 = vpack.c.b16 %v4038, %v4034
      %v5299 = vpack.c.b16 %v4039, %v4035
      %v5300 = vpack.c.b16 %v4044, %v4040
      %v5301 = vpack.c.b16 %v4045, %v4041
      %v5302 = vpack.c.b16 %v4046, %v4042
      %v5303 = vpack.c.b16 %v4047, %v4043
      %v5304 = vpack.c.b16 %v4052, %v4048
      %v5305 = vpack.c.b16 %v4053, %v4049
      %v5306 = vpack.c.b16 %v4054, %v4050
      %v5307 = vpack.c.b16 %v4055, %v4051
      %v5308 = vpack.c.b16 %v4060, %v4056
      %v5309 = vpack.c.b16 %v4061, %v4057
      %v5310 = vpack.c.b16 %v4062, %v4058
      %v5311 = vpack.c.b16 %v4063, %v4059
      %v5312 = vpack.c.b16 %v4068, %v4064
      %v5313 = vpack.c.b16 %v4069, %v4065
      %v5314 = vpack.c.b16 %v4070, %v4066
      %v5315 = vpack.c.b16 %v4071, %v4067
      %v5316 = vpack.c.b16 %v4076, %v4072
      %v5317 = vpack.c.b16 %v4077, %v4073
      %v5318 = vpack.c.b16 %v4078, %v4074
      %v5319 = vpack.c.b16 %v4079, %v4075
      %v5320 = vpack.c.b16 %v4084, %v4080
      %v5321 = vpack.c.b16 %v4085, %v4081
      %v5322 = vpack.c.b16 %v4086, %v4082
      %v5323 = vpack.c.b16 %v4087, %v4083
      %v5324 = vpack.c.b16 %v4092, %v4088
      %v5325 = vpack.c.b16 %v4093, %v4089
      %v5326 = vpack.c.b16 %v4094, %v4090
      %v5327 = vpack.c.b16 %v4095, %v4091
      %v5328 = vpack.c.b16 %v4100, %v4096
      %v5329 = vpack.c.b16 %v4101, %v4097
      %v5330 = vpack.c.b16 %v4102, %v4098
      %v5331 = vpack.c.b16 %v4103, %v4099
      %v5332 = vpack.c.b16 %v4108, %v4104
      %v5333 = vpack.c.b16 %v4109, %v4105
      %v5334 = vpack.c.b16 %v4110, %v4106
      %v5335 = vpack.c.b16 %v4111, %v4107
      %v5336 = vpack.c.b16 %v4116, %v4112
      %v5337 = vpack.c.b16 %v4117, %v4113
      %v5338 = vpack.c.b16 %v4118, %v4114
      %v5339 = vpack.c.b16 %v4119, %v4115
      %v5340 = vpack.c.b16 %v4124, %v4120
      %v5341 = vpack.c.b16 %v4125, %v4121
      %v5342 = vpack.c.b16 %v4126, %v4122
      %v5343 = vpack.c.b16 %v4127, %v4123
      %v5344 = vpack.c.b16 %v4132, %v4128
      %v5345 = vpack.c.b16 %v4133, %v4129
      %v5346 = vpack.c.b16 %v4134, %v4130
      %v5347 = vpack.c.b16 %v4135, %v4131
      %v5348 = vpack.c.b16 %v4140, %v4136
      %v5349 = vpack.c.b16 %v4141, %v4137
      %v5350 = vpack.c.b16 %v4142, %v4138
      %v5351 = vpack.c.b16 %v4143, %v4139
      %v5352 = vpack.c.b16 %v4148, %v4144
      %v5353 = vpack.c.b16 %v4149, %v4145
      %v5354 = vpack.c.b16 %v4150, %v4146
      %v5355 = vpack.c.b16 %v4151, %v4147
      %v5356 = vpack.c.b16 %v4156, %v4152
      %v5357 = vpack.c.b16 %v4157, %v4153
      %v5358 = vpack.c.b16 %v4158, %v4154
      %v5359 = vpack.c.b16 %v4159, %v4155
      %v5360 = vpack.c.b16 %v4164, %v4160
      %v5361 = vpack.c.b16 %v4165, %v4161
      %v5362 = vpack.c.b16 %v4166, %v4162
      %v5363 = vpack.c.b16 %v4167, %v4163
      %v5364 = vpack.c.b16 %v4172, %v4168
      %v5365 = vpack.c.b16 %v4173, %v4169
      %v5366 = vpack.c.b16 %v4174, %v4170
      %v5367 = vpack.c.b16 %v4175, %v4171
      %v5368 = vpack.c.b16 %v4180, %v4176
      %v5369 = vpack.c.b16 %v4181, %v4177
      %v5370 = vpack.c.b16 %v4182, %v4178
      %v5371 = vpack.c.b16 %v4183, %v4179
      %v5372 = vpack.c.b16 %v4188, %v4184
      %v5373 = vpack.c.b16 %v4189, %v4185
      %v5374 = vpack.c.b16 %v4190, %v4186
      %v5375 = vpack.c.b16 %v4191, %v4187
      %v5376 = vpack.c.b16 %v4196, %v4192
      %v5377 = vpack.c.b16 %v4197, %v4193
      %v5378 = vpack.c.b16 %v4198, %v4194
      %v5379 = vpack.c.b16 %v4199, %v4195
      %v5380 = vpack.c.b16 %v4204, %v4200
      %v5381 = vpack.c.b16 %v4205, %v4201
      %v5382 = vpack.c.b16 %v4206, %v4202
      %v5383 = vpack.c.b16 %v4207, %v4203
      %v5384 = vpack.c.b16 %v4212, %v4208
      %v5385 = vpack.c.b16 %v4213, %v4209
      %v5386 = vpack.c.b16 %v4214, %v4210
      %v5387 = vpack.c.b16 %v4215, %v4211
      %v5388 = vpack.c.b16 %v4220, %v4216
      %v5389 = vpack.c.b16 %v4221, %v4217
      %v5390 = vpack.c.b16 %v4222, %v4218
      %v5391 = vpack.c.b16 %v4223, %v4219
      %v5392 = vpack.c.b16 %v4228, %v4224
      %v5393 = vpack.c.b16 %v4229, %v4225
      %v5394 = vpack.c.b16 %v4230, %v4226
      %v5395 = vpack.c.b16 %v4231, %v4227
      %v5396 = vpack.c.b16 %v4236, %v4232
      %v5397 = vpack.c.b16 %v4237, %v4233
      %v5398 = vpack.c.b16 %v4238, %v4234
      %v5399 = vpack.c.b16 %v4239, %v4235
      %v5400 = vpack.c.b16 %v4244, %v4240
      %v5401 = vpack.c.b16 %v4245, %v4241
      %v5402 = vpack.c.b16 %v4246, %v4242
      %v5403 = vpack.c.b16 %v4247, %v4243
      %v5404 = vpack.c.b16 %v4252, %v4248
      %v5405 = vpack.c.b16 %v4253, %v4249
      %v5406 = vpack.c.b16 %v4254, %v4250
      %v5407 = vpack.c.b16 %v4255, %v4251
      %v5408 = vpack.c.b16 %v4260, %v4256
      %v5409 = vpack.c.b16 %v4261, %v4257
      %v5410 = vpack.c.b16 %v4262, %v4258
      %v5411 = vpack.c.b16 %v4263, %v4259
      %v5412 = vpack.c.b16 %v4268, %v4264
      %v5413 = vpack.c.b16 %v4269, %v4265
      %v5414 = vpack.c.b16 %v4270, %v4266
      %v5415 = vpack.c.b16 %v4271, %v4267
      %v5416 = vpack.c.b16 %v4276, %v4272
      %v5417 = vpack.c.b16 %v4277, %v4273
      %v5418 = vpack.c.b16 %v4278, %v4274
      %v5419 = vpack.c.b16 %v4279, %v4275
      %v5420 = vpack.c.b16 %v4284, %v4280
      %v5421 = vpack.c.b16 %v4285, %v4281
      %v5422 = vpack.c.b16 %v4286, %v4282
      %v5423 = vpack.c.b16 %v4287, %v4283
      %v5424 = vpack.c.b16 %v4292, %v4288
      %v5425 = vpack.c.b16 %v4293, %v4289
      %v5426 = vpack.c.b16 %v4294, %v4290
      %v5427 = vpack.c.b16 %v4295, %v4291
      %v5428 = vpack.c.b16 %v4300, %v4296
      %v5429 = vpack.c.b16 %v4301, %v4297
      %v5430 = vpack.c.b16 %v4302, %v4298
      %v5431 = vpack.c.b16 %v4303, %v4299
      %v5432 = vpack.c.b16 %v4308, %v4304
      %v5433 = vpack.c.b16 %v4309, %v4305
      %v5434 = vpack.c.b16 %v4310, %v4306
      %v5435 = vpack.c.b16 %v4311, %v4307
      %v5436 = vpack.c.b16 %v4316, %v4312
      %v5437 = vpack.c.b16 %v4317, %v4313
      %v5438 = vpack.c.b16 %v4318, %v4314
      %v5439 = vpack.c.b16 %v4319, %v4315
      %v5440 = vpack.c.b16 %v4324, %v4320
      %v5441 = vpack.c.b16 %v4325, %v4321
      %v5442 = vpack.c.b16 %v4326, %v4322
      %v5443 = vpack.c.b16 %v4327, %v4323
      %v5444 = vpack.c.b16 %v4332, %v4328
      %v5445 = vpack.c.b16 %v4333, %v4329
      %v5446 = vpack.c.b16 %v4334, %v4330
      %v5447 = vpack.c.b16 %v4335, %v4331
      %v5448 = vpack.c.b16 %v4340, %v4336
      %v5449 = vpack.c.b16 %v4341, %v4337
      %v5450 = vpack.c.b16 %v4342, %v4338
      %v5451 = vpack.c.b16 %v4343, %v4339
      %v5452 = vpack.c.b16 %v4348, %v4344
      %v5453 = vpack.c.b16 %v4349, %v4345
      %v5454 = vpack.c.b16 %v4350, %v4346
      %v5455 = vpack.c.b16 %v4351, %v4347
      %v5456 = vpack.c.b16 %v4356, %v4352
      %v5457 = vpack.c.b16 %v4357, %v4353
      %v5458 = vpack.c.b16 %v4358, %v4354
      %v5459 = vpack.c.b16 %v4359, %v4355
      %v5460 = vpack.c.b16 %v4364, %v4360
      %v5461 = vpack.c.b16 %v4365, %v4361
      %v5462 = vpack.c.b16 %v4366, %v4362
      %v5463 = vpack.c.b16 %v4367, %v4363
      %v5464 = vpack.c.b16 %v4372, %v4368
      %v5465 = vpack.c.b16 %v4373, %v4369
      %v5466 = vpack.c.b16 %v4374, %v4370
      %v5467 = vpack.c.b16 %v4375, %v4371
      %v5468 = vpack.c.b16 %v4380, %v4376
      %v5469 = vpack.c.b16 %v4381, %v4377
      %v5470 = vpack.c.b16 %v4382, %v4378
      %v5471 = vpack.c.b16 %v4383, %v4379
      %v5472 = vpack.c.b16 %v4388, %v4384
      %v5473 = vpack.c.b16 %v4389, %v4385
      %v5474 = vpack.c.b16 %v4390, %v4386
      %v5475 = vpack.c.b16 %v4391, %v4387
      %v5476 = vpack.c.b16 %v4396, %v4392
      %v5477 = vpack.c.b16 %v4397, %v4393
      %v5478 = vpack.c.b16 %v4398, %v4394
      %v5479 = vpack.c.b16 %v4399, %v4395
      %v5480 = vpack.c.b16 %v4404, %v4400
      %v5481 = vpack.c.b16 %v4405, %v4401
      %v5482 = vpack.c.b16 %v4406, %v4402
      %v5483 = vpack.c.b16 %v4407, %v4403
      %v5484 = vpack.c.b16 %v4412, %v4408
      %v5485 = vpack.c.b16 %v4413, %v4409
      %v5486 = vpack.c.b16 %v4414, %v4410
      %v5487 = vpack.c.b16 %v4415, %v4411
      %v5488 = vpack.c.b16 %v4420, %v4416
      %v5489 = vpack.c.b16 %v4421, %v4417
      %v5490 = vpack.c.b16 %v4422, %v4418
      %v5491 = vpack.c.b16 %v4423, %v4419
      %v5492 = vpack.c.b16 %v4428, %v4424
      %v5493 = vpack.c.b16 %v4429, %v4425
      %v5494 = vpack.c.b16 %v4430, %v4426
      %v5495 = vpack.c.b16 %v4431, %v4427
      %v5496 = vpack.c.b16 %v4436, %v4432
      %v5497 = vpack.c.b16 %v4437, %v4433
      %v5498 = vpack.c.b16 %v4438, %v4434
      %v5499 = vpack.c.b16 %v4439, %v4435
      %v5500 = vpack.c.b16 %v4444, %v4440
      %v5501 = vpack.c.b16 %v4445, %v4441
      %v5502 = vpack.c.b16 %v4446, %v4442
      %v5503 = vpack.c.b16 %v4447, %v4443
      %v5504 = vpack.c.b16 %v4452, %v4448
      %v5505 = vpack.c.b16 %v4453, %v4449
      %v5506 = vpack.c.b16 %v4454, %v4450
      %v5507 = vpack.c.b16 %v4455, %v4451
      %v5508 = vpack.c.b16 %v4460, %v4456
      %v5509 = vpack.c.b16 %v4461, %v4457
      %v5510 = vpack.c.b16 %v4462, %v4458
      %v5511 = vpack.c.b16 %v4463, %v4459
      %v5512 = vpack.c.b16 %v4468, %v4464
      %v5513 = vpack.c.b16 %v4469, %v4465
      %v5514 = vpack.c.b16 %v4470, %v4466
      %v5515 = vpack.c.b16 %v4471, %v4467
      %v5516 = vpack.c.b16 %v4476, %v4472
      %v5517 = vpack.c.b16 %v4477, %v4473
      %v5518 = vpack.c.b16 %v4478, %v4474
      %v5519 = vpack.c.b16 %v4479, %v4475
      %v5520 = vpack.c.b16 %v4484, %v4480
      %v5521 = vpack.c.b16 %v4485, %v4481
      %v5522 = vpack.c.b16 %v4486, %v4482
      %v5523 = vpack.c.b16 %v4487, %v4483
      %v5524 = vpack.c.b16 %v4492, %v4488
      %v5525 = vpack.c.b16 %v4493, %v4489
      %v5526 = vpack.c.b16 %v4494, %v4490
      %v5527 = vpack.c.b16 %v4495, %v4491
      %v5528 = vpack.c.b16 %v4500, %v4496
      %v5529 = vpack.c.b16 %v4501, %v4497
      %v5530 = vpack.c.b16 %v4502, %v4498
      %v5531 = vpack.c.b16 %v4503, %v4499
      %v5532 = vpack.c.b16 %v4508, %v4504
      %v5533 = vpack.c.b16 %v4509, %v4505
      %v5534 = vpack.c.b16 %v4510, %v4506
      %v5535 = vpack.c.b16 %v4511, %v4507
      %6560 = vmatprep.subr.bf16.mxu0 %v4541
      %6561 = vmatpush1.bf16.msra.mxu0 %v4540
      %6562 = vmatprep.subr.bf16.mxu0 %v4537
      %6563 = vmatpush1.bf16.msra.mxu0 %v4536
      %6564 = vmatprep.subr.bf16.mxu0 %v4533
      %6565 = vmatpush1.bf16.msra.mxu0 %v4532
      %6566 = vmatprep.subr.bf16.mxu0 %v4529
      %6567 = vmatpush1.bf16.msra.mxu0 %v4528
      %6568 = vmatprep.subr.bf16.mxu0 %v4525
      %6569 = vmatpush1.bf16.msra.mxu0 %v4524
      %6570 = vmatprep.subr.bf16.mxu0 %v4521
      %6571 = vmatpush1.bf16.msra.mxu0 %v4520
      %6572 = vmatprep.subr.bf16.mxu0 %v4517
      %6573 = vmatpush1.bf16.msra.mxu0 %v4516
      %6574 = vmatprep.subr.bf16.mxu0 %v4513
      %6575 = vmatpush1.bf16.msra.mxu0 %v4512
      %6576 = vmatprep.subr.bf16.mxu0 %v4573
      %6577 = vmatpush2.bf16.msra.mxu0 %v4572
      %6578 = vmatprep.subr.bf16.mxu0 %v4569
      %6579 = vmatpush2.bf16.msra.mxu0 %v4568
      %6580 = vmatprep.subr.bf16.mxu0 %v4565
      %6581 = vmatpush2.bf16.msra.mxu0 %v4564
      %6582 = vmatprep.subr.bf16.mxu0 %v4561
      %6583 = vmatpush2.bf16.msra.mxu0 %v4560
      %6584 = vmatprep.subr.bf16.mxu0 %v4557
      %6585 = vmatpush2.bf16.msra.mxu0 %v4556
      %6586 = vmatprep.subr.bf16.mxu0 %v4553
      %6587 = vmatpush2.bf16.msra.mxu0 %v4552
      %6588 = vmatprep.subr.bf16.mxu0 %v4549
      %6589 = vmatpush2.bf16.msra.mxu0 %v4548
      %6590 = vmatprep.subr.bf16.mxu0 %v4545
      %6591 = vmatpush2.bf16.msra.mxu0 %v4544
      %6592 = vmatprep.mubr.bf16.mxu0 %v1377
      %6593 = vmatmul.mubr.bf16.gmra.mxu0 %v1376
      %v6594 = vpop.f32.mrf.mxu0
      %v6595 = vadd.f32 0.0, %v6594
      %v6596 = vpop.f32.mrf.mxu0
      %v6597 = vadd.f32 0.0, %v6596
      %v6598 = vpop.f32.mrf.mxu0
      %v6599 = vpop.f32.mrf.mxu0
      %6600 = vdwg.mxu0
      %6601 = vmatprep.subr.bf16.mxu0 %v4605
      %6602 = vmatpush1.bf16.msra.mxu0 %v4604
      %6603 = vmatprep.subr.bf16.mxu0 %v4601
      %6604 = vmatpush1.bf16.msra.mxu0 %v4600
      %6605 = vmatprep.subr.bf16.mxu0 %v4597
      %6606 = vmatpush1.bf16.msra.mxu0 %v4596
      %6607 = vmatprep.subr.bf16.mxu0 %v4593
      %6608 = vmatpush1.bf16.msra.mxu0 %v4592
      %6609 = vmatprep.subr.bf16.mxu0 %v4589
      %6610 = vmatpush1.bf16.msra.mxu0 %v4588
      %6611 = vmatprep.subr.bf16.mxu0 %v4585
      %6612 = vmatpush1.bf16.msra.mxu0 %v4584
      %6613 = vmatprep.subr.bf16.mxu0 %v4581
      %6614 = vmatpush1.bf16.msra.mxu0 %v4580
      %6615 = vmatprep.subr.bf16.mxu0 %v4577
      %6616 = vmatpush1.bf16.msra.mxu0 %v4576
      %6617 = vmatprep.subr.bf16.mxu0 %v4637
      %6618 = vmatpush2.bf16.msra.mxu0 %v4636
      %6619 = vmatprep.subr.bf16.mxu0 %v4633
      %6620 = vmatpush2.bf16.msra.mxu0 %v4632
      %6621 = vmatprep.subr.bf16.mxu0 %v4629
      %6622 = vmatpush2.bf16.msra.mxu0 %v4628
      %6623 = vmatprep.subr.bf16.mxu0 %v4625
      %6624 = vmatpush2.bf16.msra.mxu0 %v4624
      %6625 = vmatprep.subr.bf16.mxu0 %v4621
      %6626 = vmatpush2.bf16.msra.mxu0 %v4620
      %6627 = vmatprep.subr.bf16.mxu0 %v4617
      %6628 = vmatpush2.bf16.msra.mxu0 %v4616
      %6629 = vmatprep.subr.bf16.mxu0 %v4613
      %6630 = vmatpush2.bf16.msra.mxu0 %v4612
      %6631 = vmatprep.subr.bf16.mxu0 %v4609
      %6632 = vmatpush2.bf16.msra.mxu0 %v4608
      %6633 = vmatprep.mubr.bf16.mxu0 %v1379
      %6634 = vmatmul.mubr.bf16.gmra.mxu0 %v1378
      %v6635 = vpop.f32.mrf.mxu0
      %v6636 = vadd.f32 %v6595, %v6635
      %v6637 = vpop.f32.mrf.mxu0
      %v6638 = vadd.f32 %v6597, %v6637
      %v6639 = vpop.f32.mrf.mxu0
      %v6640 = vpop.f32.mrf.mxu0
      %6641 = vdwg.mxu0
      %6642 = vmatprep.subr.bf16.mxu0 %v4669
      %6643 = vmatpush1.bf16.msra.mxu0 %v4668
      %6644 = vmatprep.subr.bf16.mxu0 %v4665
      %6645 = vmatpush1.bf16.msra.mxu0 %v4664
      %6646 = vmatprep.subr.bf16.mxu0 %v4661
      %6647 = vmatpush1.bf16.msra.mxu0 %v4660
      %6648 = vmatprep.subr.bf16.mxu0 %v4657
      %6649 = vmatpush1.bf16.msra.mxu0 %v4656
      %6650 = vmatprep.subr.bf16.mxu0 %v4653
      %6651 = vmatpush1.bf16.msra.mxu0 %v4652
      %6652 = vmatprep.subr.bf16.mxu0 %v4649
      %6653 = vmatpush1.bf16.msra.mxu0 %v4648
      %6654 = vmatprep.subr.bf16.mxu0 %v4645
      %6655 = vmatpush1.bf16.msra.mxu0 %v4644
      %6656 = vmatprep.subr.bf16.mxu0 %v4641
      %6657 = vmatpush1.bf16.msra.mxu0 %v4640
      %6658 = vmatprep.subr.bf16.mxu0 %v4701
      %6659 = vmatpush2.bf16.msra.mxu0 %v4700
      %6660 = vmatprep.subr.bf16.mxu0 %v4697
      %6661 = vmatpush2.bf16.msra.mxu0 %v4696
      %6662 = vmatprep.subr.bf16.mxu0 %v4693
      %6663 = vmatpush2.bf16.msra.mxu0 %v4692
      %6664 = vmatprep.subr.bf16.mxu0 %v4689
      %6665 = vmatpush2.bf16.msra.mxu0 %v4688
      %6666 = vmatprep.subr.bf16.mxu0 %v4685
      %6667 = vmatpush2.bf16.msra.mxu0 %v4684
      %6668 = vmatprep.subr.bf16.mxu0 %v4681
      %6669 = vmatpush2.bf16.msra.mxu0 %v4680
      %6670 = vmatprep.subr.bf16.mxu0 %v4677
      %6671 = vmatpush2.bf16.msra.mxu0 %v4676
      %6672 = vmatprep.subr.bf16.mxu0 %v4673
      %6673 = vmatpush2.bf16.msra.mxu0 %v4672
      %6674 = vmatprep.mubr.bf16.mxu0 %v1381
      %6675 = vmatmul.mubr.bf16.gmra.mxu0 %v1380
      %v6676 = vpop.f32.mrf.mxu0
      %v6677 = vadd.f32 %v6636, %v6676
      %v6678 = vpop.f32.mrf.mxu0
      %v6679 = vadd.f32 %v6638, %v6678
      %v6680 = vpop.f32.mrf.mxu0
      %v6681 = vpop.f32.mrf.mxu0
      %6682 = vdwg.mxu0
      %6683 = vmatprep.subr.bf16.mxu0 %v4733
      %6684 = vmatpush1.bf16.msra.mxu0 %v4732
      %6685 = vmatprep.subr.bf16.mxu0 %v4729
      %6686 = vmatpush1.bf16.msra.mxu0 %v4728
      %6687 = vmatprep.subr.bf16.mxu0 %v4725
      %6688 = vmatpush1.bf16.msra.mxu0 %v4724
      %6689 = vmatprep.subr.bf16.mxu0 %v4721
      %6690 = vmatpush1.bf16.msra.mxu0 %v4720
      %6691 = vmatprep.subr.bf16.mxu0 %v4717
      %6692 = vmatpush1.bf16.msra.mxu0 %v4716
      %6693 = vmatprep.subr.bf16.mxu0 %v4713
      %6694 = vmatpush1.bf16.msra.mxu0 %v4712
      %6695 = vmatprep.subr.bf16.mxu0 %v4709
      %6696 = vmatpush1.bf16.msra.mxu0 %v4708
      %6697 = vmatprep.subr.bf16.mxu0 %v4705
      %6698 = vmatpush1.bf16.msra.mxu0 %v4704
      %6699 = vmatprep.subr.bf16.mxu0 %v4765
      %6700 = vmatpush2.bf16.msra.mxu0 %v4764
      %6701 = vmatprep.subr.bf16.mxu0 %v4761
      %6702 = vmatpush2.bf16.msra.mxu0 %v4760
      %6703 = vmatprep.subr.bf16.mxu0 %v4757
      %6704 = vmatpush2.bf16.msra.mxu0 %v4756
      %6705 = vmatprep.subr.bf16.mxu0 %v4753
      %6706 = vmatpush2.bf16.msra.mxu0 %v4752
      %6707 = vmatprep.subr.bf16.mxu0 %v4749
      %6708 = vmatpush2.bf16.msra.mxu0 %v4748
      %6709 = vmatprep.subr.bf16.mxu0 %v4745
      %6710 = vmatpush2.bf16.msra.mxu0 %v4744
      %6711 = vmatprep.subr.bf16.mxu0 %v4741
      %6712 = vmatpush2.bf16.msra.mxu0 %v4740
      %6713 = vmatprep.subr.bf16.mxu0 %v4737
      %6714 = vmatpush2.bf16.msra.mxu0 %v4736
      %6715 = vmatprep.mubr.bf16.mxu0 %v1383
      %6716 = vmatmul.mubr.bf16.gmra.mxu0 %v1382
      %v6717 = vpop.f32.mrf.mxu0
      %v6718 = vadd.f32 %v6677, %v6717
      %v6719 = vpop.f32.mrf.mxu0
      %v6720 = vadd.f32 %v6679, %v6719
      %v6721 = vpop.f32.mrf.mxu0
      %v6722 = vpop.f32.mrf.mxu0
      %6723 = vdwg.mxu0
      %6724 = vmatprep.subr.bf16.mxu0 %v4797
      %6725 = vmatpush1.bf16.msra.mxu0 %v4796
      %6726 = vmatprep.subr.bf16.mxu0 %v4793
      %6727 = vmatpush1.bf16.msra.mxu0 %v4792
      %6728 = vmatprep.subr.bf16.mxu0 %v4789
      %6729 = vmatpush1.bf16.msra.mxu0 %v4788
      %6730 = vmatprep.subr.bf16.mxu0 %v4785
      %6731 = vmatpush1.bf16.msra.mxu0 %v4784
      %6732 = vmatprep.subr.bf16.mxu0 %v4781
      %6733 = vmatpush1.bf16.msra.mxu0 %v4780
      %6734 = vmatprep.subr.bf16.mxu0 %v4777
      %6735 = vmatpush1.bf16.msra.mxu0 %v4776
      %6736 = vmatprep.subr.bf16.mxu0 %v4773
      %6737 = vmatpush1.bf16.msra.mxu0 %v4772
      %6738 = vmatprep.subr.bf16.mxu0 %v4769
      %6739 = vmatpush1.bf16.msra.mxu0 %v4768
      %6740 = vmatprep.subr.bf16.mxu0 %v4829
      %6741 = vmatpush2.bf16.msra.mxu0 %v4828
      %6742 = vmatprep.subr.bf16.mxu0 %v4825
      %6743 = vmatpush2.bf16.msra.mxu0 %v4824
      %6744 = vmatprep.subr.bf16.mxu0 %v4821
      %6745 = vmatpush2.bf16.msra.mxu0 %v4820
      %6746 = vmatprep.subr.bf16.mxu0 %v4817
      %6747 = vmatpush2.bf16.msra.mxu0 %v4816
      %6748 = vmatprep.subr.bf16.mxu0 %v4813
      %6749 = vmatpush2.bf16.msra.mxu0 %v4812
      %6750 = vmatprep.subr.bf16.mxu0 %v4809
      %6751 = vmatpush2.bf16.msra.mxu0 %v4808
      %6752 = vmatprep.subr.bf16.mxu0 %v4805
      %6753 = vmatpush2.bf16.msra.mxu0 %v4804
      %6754 = vmatprep.subr.bf16.mxu0 %v4801
      %6755 = vmatpush2.bf16.msra.mxu0 %v4800
      %6756 = vmatprep.mubr.bf16.mxu0 %v1385
      %6757 = vmatmul.mubr.bf16.gmra.mxu0 %v1384
      %v6758 = vpop.f32.mrf.mxu0
      %v6759 = vadd.f32 %v6718, %v6758
      %v6760 = vpop.f32.mrf.mxu0
      %v6761 = vadd.f32 %v6720, %v6760
      %v6762 = vpop.f32.mrf.mxu0
      %v6763 = vpop.f32.mrf.mxu0
      %6764 = vdwg.mxu0
      %6765 = vmatprep.subr.bf16.mxu0 %v4861
      %6766 = vmatpush1.bf16.msra.mxu0 %v4860
      %6767 = vmatprep.subr.bf16.mxu0 %v4857
      %6768 = vmatpush1.bf16.msra.mxu0 %v4856
      %6769 = vmatprep.subr.bf16.mxu0 %v4853
      %6770 = vmatpush1.bf16.msra.mxu0 %v4852
      %6771 = vmatprep.subr.bf16.mxu0 %v4849
      %6772 = vmatpush1.bf16.msra.mxu0 %v4848
      %6773 = vmatprep.subr.bf16.mxu0 %v4845
      %6774 = vmatpush1.bf16.msra.mxu0 %v4844
      %6775 = vmatprep.subr.bf16.mxu0 %v4841
      %6776 = vmatpush1.bf16.msra.mxu0 %v4840
      %6777 = vmatprep.subr.bf16.mxu0 %v4837
      %6778 = vmatpush1.bf16.msra.mxu0 %v4836
      %6779 = vmatprep.subr.bf16.mxu0 %v4833
      %6780 = vmatpush1.bf16.msra.mxu0 %v4832
      %6781 = vmatprep.subr.bf16.mxu0 %v4893
      %6782 = vmatpush2.bf16.msra.mxu0 %v4892
      %6783 = vmatprep.subr.bf16.mxu0 %v4889
      %6784 = vmatpush2.bf16.msra.mxu0 %v4888
      %6785 = vmatprep.subr.bf16.mxu0 %v4885
      %6786 = vmatpush2.bf16.msra.mxu0 %v4884
      %6787 = vmatprep.subr.bf16.mxu0 %v4881
      %6788 = vmatpush2.bf16.msra.mxu0 %v4880
      %6789 = vmatprep.subr.bf16.mxu0 %v4877
      %6790 = vmatpush2.bf16.msra.mxu0 %v4876
      %6791 = vmatprep.subr.bf16.mxu0 %v4873
      %6792 = vmatpush2.bf16.msra.mxu0 %v4872
      %6793 = vmatprep.subr.bf16.mxu0 %v4869
      %6794 = vmatpush2.bf16.msra.mxu0 %v4868
      %6795 = vmatprep.subr.bf16.mxu0 %v4865
      %6796 = vmatpush2.bf16.msra.mxu0 %v4864
      %6797 = vmatprep.mubr.bf16.mxu0 %v1387
      %6798 = vmatmul.mubr.bf16.gmra.mxu0 %v1386
      %v6799 = vpop.f32.mrf.mxu0
      %v6800 = vadd.f32 %v6759, %v6799
      %v6801 = vpop.f32.mrf.mxu0
      %v6802 = vadd.f32 %v6761, %v6801
      %v6803 = vpop.f32.mrf.mxu0
      %v6804 = vpop.f32.mrf.mxu0
      %6805 = vdwg.mxu0
      %6806 = vmatprep.subr.bf16.mxu0 %v4925
      %6807 = vmatpush1.bf16.msra.mxu0 %v4924
      %6808 = vmatprep.subr.bf16.mxu0 %v4921
      %6809 = vmatpush1.bf16.msra.mxu0 %v4920
      %6810 = vmatprep.subr.bf16.mxu0 %v4917
      %6811 = vmatpush1.bf16.msra.mxu0 %v4916
      %6812 = vmatprep.subr.bf16.mxu0 %v4913
      %6813 = vmatpush1.bf16.msra.mxu0 %v4912
      %6814 = vmatprep.subr.bf16.mxu0 %v4909
      %6815 = vmatpush1.bf16.msra.mxu0 %v4908
      %6816 = vmatprep.subr.bf16.mxu0 %v4905
      %6817 = vmatpush1.bf16.msra.mxu0 %v4904
      %6818 = vmatprep.subr.bf16.mxu0 %v4901
      %6819 = vmatpush1.bf16.msra.mxu0 %v4900
      %6820 = vmatprep.subr.bf16.mxu0 %v4897
      %6821 = vmatpush1.bf16.msra.mxu0 %v4896
      %6822 = vmatprep.subr.bf16.mxu0 %v4957
      %6823 = vmatpush2.bf16.msra.mxu0 %v4956
      %6824 = vmatprep.subr.bf16.mxu0 %v4953
      %6825 = vmatpush2.bf16.msra.mxu0 %v4952
      %6826 = vmatprep.subr.bf16.mxu0 %v4949
      %6827 = vmatpush2.bf16.msra.mxu0 %v4948
      %6828 = vmatprep.subr.bf16.mxu0 %v4945
      %6829 = vmatpush2.bf16.msra.mxu0 %v4944
      %6830 = vmatprep.subr.bf16.mxu0 %v4941
      %6831 = vmatpush2.bf16.msra.mxu0 %v4940
      %6832 = vmatprep.subr.bf16.mxu0 %v4937
      %6833 = vmatpush2.bf16.msra.mxu0 %v4936
      %6834 = vmatprep.subr.bf16.mxu0 %v4933
      %6835 = vmatpush2.bf16.msra.mxu0 %v4932
      %6836 = vmatprep.subr.bf16.mxu0 %v4929
      %6837 = vmatpush2.bf16.msra.mxu0 %v4928
      %6838 = vmatprep.mubr.bf16.mxu0 %v1389
      %6839 = vmatmul.mubr.bf16.gmra.mxu0 %v1388
      %v6840 = vpop.f32.mrf.mxu0
      %v6841 = vadd.f32 %v6800, %v6840
      %v6842 = vpop.f32.mrf.mxu0
      %v6843 = vadd.f32 %v6802, %v6842
      %v6844 = vpop.f32.mrf.mxu0
      %v6845 = vpop.f32.mrf.mxu0
      %6846 = vdwg.mxu0
      %6847 = vmatprep.subr.bf16.mxu0 %v4989
      %6848 = vmatpush1.bf16.msra.mxu0 %v4988
      %6849 = vmatprep.subr.bf16.mxu0 %v4985
      %6850 = vmatpush1.bf16.msra.mxu0 %v4984
      %6851 = vmatprep.subr.bf16.mxu0 %v4981
      %6852 = vmatpush1.bf16.msra.mxu0 %v4980
      %6853 = vmatprep.subr.bf16.mxu0 %v4977
      %6854 = vmatpush1.bf16.msra.mxu0 %v4976
      %6855 = vmatprep.subr.bf16.mxu0 %v4973
      %6856 = vmatpush1.bf16.msra.mxu0 %v4972
      %6857 = vmatprep.subr.bf16.mxu0 %v4969
      %6858 = vmatpush1.bf16.msra.mxu0 %v4968
      %6859 = vmatprep.subr.bf16.mxu0 %v4965
      %6860 = vmatpush1.bf16.msra.mxu0 %v4964
      %6861 = vmatprep.subr.bf16.mxu0 %v4961
      %6862 = vmatpush1.bf16.msra.mxu0 %v4960
      %6863 = vmatprep.subr.bf16.mxu0 %v5021
      %6864 = vmatpush2.bf16.msra.mxu0 %v5020
      %6865 = vmatprep.subr.bf16.mxu0 %v5017
      %6866 = vmatpush2.bf16.msra.mxu0 %v5016
      %6867 = vmatprep.subr.bf16.mxu0 %v5013
      %6868 = vmatpush2.bf16.msra.mxu0 %v5012
      %6869 = vmatprep.subr.bf16.mxu0 %v5009
      %6870 = vmatpush2.bf16.msra.mxu0 %v5008
      %6871 = vmatprep.subr.bf16.mxu0 %v5005
      %6872 = vmatpush2.bf16.msra.mxu0 %v5004
      %6873 = vmatprep.subr.bf16.mxu0 %v5001
      %6874 = vmatpush2.bf16.msra.mxu0 %v5000
      %6875 = vmatprep.subr.bf16.mxu0 %v4997
      %6876 = vmatpush2.bf16.msra.mxu0 %v4996
      %6877 = vmatprep.subr.bf16.mxu0 %v4993
      %6878 = vmatpush2.bf16.msra.mxu0 %v4992
      %6879 = vmatprep.mubr.bf16.mxu0 %v1391
      %6880 = vmatmul.mubr.bf16.gmra.mxu0 %v1390
      %v6881 = vpop.f32.mrf.mxu0
      %v6882 = vadd.f32 %v6841, %v6881
      %v6883 = vpop.f32.mrf.mxu0
      %v6884 = vadd.f32 %v6843, %v6883
      %v6885 = vpop.f32.mrf.mxu0
      %v6886 = vpop.f32.mrf.mxu0
      %6887 = vdwg.mxu0
      %6888 = vmatprep.subr.bf16.mxu0 %v5053
      %6889 = vmatpush1.bf16.msra.mxu0 %v5052
      %6890 = vmatprep.subr.bf16.mxu0 %v5049
      %6891 = vmatpush1.bf16.msra.mxu0 %v5048
      %6892 = vmatprep.subr.bf16.mxu0 %v5045
      %6893 = vmatpush1.bf16.msra.mxu0 %v5044
      %6894 = vmatprep.subr.bf16.mxu0 %v5041
      %6895 = vmatpush1.bf16.msra.mxu0 %v5040
      %6896 = vmatprep.subr.bf16.mxu0 %v5037
      %6897 = vmatpush1.bf16.msra.mxu0 %v5036
      %6898 = vmatprep.subr.bf16.mxu0 %v5033
      %6899 = vmatpush1.bf16.msra.mxu0 %v5032
      %6900 = vmatprep.subr.bf16.mxu0 %v5029
      %6901 = vmatpush1.bf16.msra.mxu0 %v5028
      %6902 = vmatprep.subr.bf16.mxu0 %v5025
      %6903 = vmatpush1.bf16.msra.mxu0 %v5024
      %6904 = vmatprep.subr.bf16.mxu0 %v5085
      %6905 = vmatpush2.bf16.msra.mxu0 %v5084
      %6906 = vmatprep.subr.bf16.mxu0 %v5081
      %6907 = vmatpush2.bf16.msra.mxu0 %v5080
      %6908 = vmatprep.subr.bf16.mxu0 %v5077
      %6909 = vmatpush2.bf16.msra.mxu0 %v5076
      %6910 = vmatprep.subr.bf16.mxu0 %v5073
      %6911 = vmatpush2.bf16.msra.mxu0 %v5072
      %6912 = vmatprep.subr.bf16.mxu0 %v5069
      %6913 = vmatpush2.bf16.msra.mxu0 %v5068
      %6914 = vmatprep.subr.bf16.mxu0 %v5065
      %6915 = vmatpush2.bf16.msra.mxu0 %v5064
      %6916 = vmatprep.subr.bf16.mxu0 %v5061
      %6917 = vmatpush2.bf16.msra.mxu0 %v5060
      %6918 = vmatprep.subr.bf16.mxu0 %v5057
      %6919 = vmatpush2.bf16.msra.mxu0 %v5056
      %6920 = vmatprep.mubr.bf16.mxu0 %v1393
      %6921 = vmatmul.mubr.bf16.gmra.mxu0 %v1392
      %v6922 = vpop.f32.mrf.mxu0
      %v6923 = vadd.f32 %v6882, %v6922
      %v6924 = vpop.f32.mrf.mxu0
      %v6925 = vadd.f32 %v6884, %v6924
      %v6926 = vpop.f32.mrf.mxu0
      %v6927 = vpop.f32.mrf.mxu0
      %6928 = vdwg.mxu0
      %6929 = vmatprep.subr.bf16.mxu0 %v5117
      %6930 = vmatpush1.bf16.msra.mxu0 %v5116
      %6931 = vmatprep.subr.bf16.mxu0 %v5113
      %6932 = vmatpush1.bf16.msra.mxu0 %v5112
      %6933 = vmatprep.subr.bf16.mxu0 %v5109
      %6934 = vmatpush1.bf16.msra.mxu0 %v5108
      %6935 = vmatprep.subr.bf16.mxu0 %v5105
      %6936 = vmatpush1.bf16.msra.mxu0 %v5104
      %6937 = vmatprep.subr.bf16.mxu0 %v5101
      %6938 = vmatpush1.bf16.msra.mxu0 %v5100
      %6939 = vmatprep.subr.bf16.mxu0 %v5097
      %6940 = vmatpush1.bf16.msra.mxu0 %v5096
      %6941 = vmatprep.subr.bf16.mxu0 %v5093
      %6942 = vmatpush1.bf16.msra.mxu0 %v5092
      %6943 = vmatprep.subr.bf16.mxu0 %v5089
      %6944 = vmatpush1.bf16.msra.mxu0 %v5088
      %6945 = vmatprep.subr.bf16.mxu0 %v5149
      %6946 = vmatpush2.bf16.msra.mxu0 %v5148
      %6947 = vmatprep.subr.bf16.mxu0 %v5145
      %6948 = vmatpush2.bf16.msra.mxu0 %v5144
      %6949 = vmatprep.subr.bf16.mxu0 %v5141
      %6950 = vmatpush2.bf16.msra.mxu0 %v5140
      %6951 = vmatprep.subr.bf16.mxu0 %v5137
      %6952 = vmatpush2.bf16.msra.mxu0 %v5136
      %6953 = vmatprep.subr.bf16.mxu0 %v5133
      %6954 = vmatpush2.bf16.msra.mxu0 %v5132
      %6955 = vmatprep.subr.bf16.mxu0 %v5129
      %6956 = vmatpush2.bf16.msra.mxu0 %v5128
      %6957 = vmatprep.subr.bf16.mxu0 %v5125
      %6958 = vmatpush2.bf16.msra.mxu0 %v5124
      %6959 = vmatprep.subr.bf16.mxu0 %v5121
      %6960 = vmatpush2.bf16.msra.mxu0 %v5120
      %6961 = vmatprep.mubr.bf16.mxu0 %v1395
      %6962 = vmatmul.mubr.bf16.gmra.mxu0 %v1394
      %v6963 = vpop.f32.mrf.mxu0
      %v6964 = vadd.f32 %v6923, %v6963
      %v6965 = vpop.f32.mrf.mxu0
      %v6966 = vadd.f32 %v6925, %v6965
      %v6967 = vpop.f32.mrf.mxu0
      %v6968 = vpop.f32.mrf.mxu0
      %6969 = vdwg.mxu0
      %6970 = vmatprep.subr.bf16.mxu0 %v5181
      %6971 = vmatpush1.bf16.msra.mxu0 %v5180
      %6972 = vmatprep.subr.bf16.mxu0 %v5177
      %6973 = vmatpush1.bf16.msra.mxu0 %v5176
      %6974 = vmatprep.subr.bf16.mxu0 %v5173
      %6975 = vmatpush1.bf16.msra.mxu0 %v5172
      %6976 = vmatprep.subr.bf16.mxu0 %v5169
      %6977 = vmatpush1.bf16.msra.mxu0 %v5168
      %6978 = vmatprep.subr.bf16.mxu0 %v5165
      %6979 = vmatpush1.bf16.msra.mxu0 %v5164
      %6980 = vmatprep.subr.bf16.mxu0 %v5161
      %6981 = vmatpush1.bf16.msra.mxu0 %v5160
      %6982 = vmatprep.subr.bf16.mxu0 %v5157
      %6983 = vmatpush1.bf16.msra.mxu0 %v5156
      %6984 = vmatprep.subr.bf16.mxu0 %v5153
      %6985 = vmatpush1.bf16.msra.mxu0 %v5152
      %6986 = vmatprep.subr.bf16.mxu0 %v5213
      %6987 = vmatpush2.bf16.msra.mxu0 %v5212
      %6988 = vmatprep.subr.bf16.mxu0 %v5209
      %6989 = vmatpush2.bf16.msra.mxu0 %v5208
      %6990 = vmatprep.subr.bf16.mxu0 %v5205
      %6991 = vmatpush2.bf16.msra.mxu0 %v5204
      %6992 = vmatprep.subr.bf16.mxu0 %v5201
      %6993 = vmatpush2.bf16.msra.mxu0 %v5200
      %6994 = vmatprep.subr.bf16.mxu0 %v5197
      %6995 = vmatpush2.bf16.msra.mxu0 %v5196
      %6996 = vmatprep.subr.bf16.mxu0 %v5193
      %6997 = vmatpush2.bf16.msra.mxu0 %v5192
      %6998 = vmatprep.subr.bf16.mxu0 %v5189
      %6999 = vmatpush2.bf16.msra.mxu0 %v5188
      %7000 = vmatprep.subr.bf16.mxu0 %v5185
      %7001 = vmatpush2.bf16.msra.mxu0 %v5184
      %7002 = vmatprep.mubr.bf16.mxu0 %v1397
      %7003 = vmatmul.mubr.bf16.gmra.mxu0 %v1396
      %v7004 = vpop.f32.mrf.mxu0
      %v7005 = vadd.f32 %v6964, %v7004
      %v7006 = vpop.f32.mrf.mxu0
      %v7007 = vadd.f32 %v6966, %v7006
      %v7008 = vpop.f32.mrf.mxu0
      %v7009 = vpop.f32.mrf.mxu0
      %7010 = vdwg.mxu0
      %7011 = vmatprep.subr.bf16.mxu0 %v5245
      %7012 = vmatpush1.bf16.msra.mxu0 %v5244
      %7013 = vmatprep.subr.bf16.mxu0 %v5241
      %7014 = vmatpush1.bf16.msra.mxu0 %v5240
      %7015 = vmatprep.subr.bf16.mxu0 %v5237
      %7016 = vmatpush1.bf16.msra.mxu0 %v5236
      %7017 = vmatprep.subr.bf16.mxu0 %v5233
      %7018 = vmatpush1.bf16.msra.mxu0 %v5232
      %7019 = vmatprep.subr.bf16.mxu0 %v5229
      %7020 = vmatpush1.bf16.msra.mxu0 %v5228
      %7021 = vmatprep.subr.bf16.mxu0 %v5225
      %7022 = vmatpush1.bf16.msra.mxu0 %v5224
      %7023 = vmatprep.subr.bf16.mxu0 %v5221
      %7024 = vmatpush1.bf16.msra.mxu0 %v5220
      %7025 = vmatprep.subr.bf16.mxu0 %v5217
      %7026 = vmatpush1.bf16.msra.mxu0 %v5216
      %7027 = vmatprep.subr.bf16.mxu0 %v5277
      %7028 = vmatpush2.bf16.msra.mxu0 %v5276
      %7029 = vmatprep.subr.bf16.mxu0 %v5273
      %7030 = vmatpush2.bf16.msra.mxu0 %v5272
      %7031 = vmatprep.subr.bf16.mxu0 %v5269
      %7032 = vmatpush2.bf16.msra.mxu0 %v5268
      %7033 = vmatprep.subr.bf16.mxu0 %v5265
      %7034 = vmatpush2.bf16.msra.mxu0 %v5264
      %7035 = vmatprep.subr.bf16.mxu0 %v5261
      %7036 = vmatpush2.bf16.msra.mxu0 %v5260
      %7037 = vmatprep.subr.bf16.mxu0 %v5257
      %7038 = vmatpush2.bf16.msra.mxu0 %v5256
      %7039 = vmatprep.subr.bf16.mxu0 %v5253
      %7040 = vmatpush2.bf16.msra.mxu0 %v5252
      %7041 = vmatprep.subr.bf16.mxu0 %v5249
      %7042 = vmatpush2.bf16.msra.mxu0 %v5248
      %7043 = vmatprep.mubr.bf16.mxu0 %v1399
      %7044 = vmatmul.mubr.bf16.gmra.mxu0 %v1398
      %v7045 = vpop.f32.mrf.mxu0
      %v7046 = vadd.f32 %v7005, %v7045
      %v7047 = vpop.f32.mrf.mxu0
      %v7048 = vadd.f32 %v7007, %v7047
      %v7049 = vpop.f32.mrf.mxu0
      %v7050 = vpop.f32.mrf.mxu0
      %7051 = vdwg.mxu0
      %7052 = vmatprep.subr.bf16.mxu0 %v5309
      %7053 = vmatpush1.bf16.msra.mxu0 %v5308
      %7054 = vmatprep.subr.bf16.mxu0 %v5305
      %7055 = vmatpush1.bf16.msra.mxu0 %v5304
      %7056 = vmatprep.subr.bf16.mxu0 %v5301
      %7057 = vmatpush1.bf16.msra.mxu0 %v5300
      %7058 = vmatprep.subr.bf16.mxu0 %v5297
      %7059 = vmatpush1.bf16.msra.mxu0 %v5296
      %7060 = vmatprep.subr.bf16.mxu0 %v5293
      %7061 = vmatpush1.bf16.msra.mxu0 %v5292
      %7062 = vmatprep.subr.bf16.mxu0 %v5289
      %7063 = vmatpush1.bf16.msra.mxu0 %v5288
      %7064 = vmatprep.subr.bf16.mxu0 %v5285
      %7065 = vmatpush1.bf16.msra.mxu0 %v5284
      %7066 = vmatprep.subr.bf16.mxu0 %v5281
      %7067 = vmatpush1.bf16.msra.mxu0 %v5280
      %7068 = vmatprep.subr.bf16.mxu0 %v5341
      %7069 = vmatpush2.bf16.msra.mxu0 %v5340
      %7070 = vmatprep.subr.bf16.mxu0 %v5337
      %7071 = vmatpush2.bf16.msra.mxu0 %v5336
      %7072 = vmatprep.subr.bf16.mxu0 %v5333
      %7073 = vmatpush2.bf16.msra.mxu0 %v5332
      %7074 = vmatprep.subr.bf16.mxu0 %v5329
      %7075 = vmatpush2.bf16.msra.mxu0 %v5328
      %7076 = vmatprep.subr.bf16.mxu0 %v5325
      %7077 = vmatpush2.bf16.msra.mxu0 %v5324
      %7078 = vmatprep.subr.bf16.mxu0 %v5321
      %7079 = vmatpush2.bf16.msra.mxu0 %v5320
      %7080 = vmatprep.subr.bf16.mxu0 %v5317
      %7081 = vmatpush2.bf16.msra.mxu0 %v5316
      %7082 = vmatprep.subr.bf16.mxu0 %v5313
      %7083 = vmatpush2.bf16.msra.mxu0 %v5312
      %7084 = vmatprep.mubr.bf16.mxu0 %v1401
      %7085 = vmatmul.mubr.bf16.gmra.mxu0 %v1400
      %v7086 = vpop.f32.mrf.mxu0
      %v7087 = vadd.f32 %v7046, %v7086
      %v7088 = vpop.f32.mrf.mxu0
      %v7089 = vadd.f32 %v7048, %v7088
      %v7090 = vpop.f32.mrf.mxu0
      %v7091 = vpop.f32.mrf.mxu0
      %7092 = vdwg.mxu0
      %7093 = vmatprep.subr.bf16.mxu0 %v5373
      %7094 = vmatpush1.bf16.msra.mxu0 %v5372
      %7095 = vmatprep.subr.bf16.mxu0 %v5369
      %7096 = vmatpush1.bf16.msra.mxu0 %v5368
      %7097 = vmatprep.subr.bf16.mxu0 %v5365
      %7098 = vmatpush1.bf16.msra.mxu0 %v5364
      %7099 = vmatprep.subr.bf16.mxu0 %v5361
      %7100 = vmatpush1.bf16.msra.mxu0 %v5360
      %7101 = vmatprep.subr.bf16.mxu0 %v5357
      %7102 = vmatpush1.bf16.msra.mxu0 %v5356
      %7103 = vmatprep.subr.bf16.mxu0 %v5353
      %7104 = vmatpush1.bf16.msra.mxu0 %v5352
      %7105 = vmatprep.subr.bf16.mxu0 %v5349
      %7106 = vmatpush1.bf16.msra.mxu0 %v5348
      %7107 = vmatprep.subr.bf16.mxu0 %v5345
      %7108 = vmatpush1.bf16.msra.mxu0 %v5344
      %7109 = vmatprep.subr.bf16.mxu0 %v5405
      %7110 = vmatpush2.bf16.msra.mxu0 %v5404
      %7111 = vmatprep.subr.bf16.mxu0 %v5401
      %7112 = vmatpush2.bf16.msra.mxu0 %v5400
      %7113 = vmatprep.subr.bf16.mxu0 %v5397
      %7114 = vmatpush2.bf16.msra.mxu0 %v5396
      %7115 = vmatprep.subr.bf16.mxu0 %v5393
      %7116 = vmatpush2.bf16.msra.mxu0 %v5392
      %7117 = vmatprep.subr.bf16.mxu0 %v5389
      %7118 = vmatpush2.bf16.msra.mxu0 %v5388
      %7119 = vmatprep.subr.bf16.mxu0 %v5385
      %7120 = vmatpush2.bf16.msra.mxu0 %v5384
      %7121 = vmatprep.subr.bf16.mxu0 %v5381
      %7122 = vmatpush2.bf16.msra.mxu0 %v5380
      %7123 = vmatprep.subr.bf16.mxu0 %v5377
      %7124 = vmatpush2.bf16.msra.mxu0 %v5376
      %7125 = vmatprep.mubr.bf16.mxu0 %v1403
      %7126 = vmatmul.mubr.bf16.gmra.mxu0 %v1402
      %v7127 = vpop.f32.mrf.mxu0
      %v7128 = vadd.f32 %v7087, %v7127
      %v7129 = vpop.f32.mrf.mxu0
      %v7130 = vadd.f32 %v7089, %v7129
      %v7131 = vpop.f32.mrf.mxu0
      %v7132 = vpop.f32.mrf.mxu0
      %7133 = vdwg.mxu0
      %7134 = vmatprep.subr.bf16.mxu0 %v5437
      %7135 = vmatpush1.bf16.msra.mxu0 %v5436
      %7136 = vmatprep.subr.bf16.mxu0 %v5433
      %7137 = vmatpush1.bf16.msra.mxu0 %v5432
      %7138 = vmatprep.subr.bf16.mxu0 %v5429
      %7139 = vmatpush1.bf16.msra.mxu0 %v5428
      %7140 = vmatprep.subr.bf16.mxu0 %v5425
      %7141 = vmatpush1.bf16.msra.mxu0 %v5424
      %7142 = vmatprep.subr.bf16.mxu0 %v5421
      %7143 = vmatpush1.bf16.msra.mxu0 %v5420
      %7144 = vmatprep.subr.bf16.mxu0 %v5417
      %7145 = vmatpush1.bf16.msra.mxu0 %v5416
      %7146 = vmatprep.subr.bf16.mxu0 %v5413
      %7147 = vmatpush1.bf16.msra.mxu0 %v5412
      %7148 = vmatprep.subr.bf16.mxu0 %v5409
      %7149 = vmatpush1.bf16.msra.mxu0 %v5408
      %7150 = vmatprep.subr.bf16.mxu0 %v5469
      %7151 = vmatpush2.bf16.msra.mxu0 %v5468
      %7152 = vmatprep.subr.bf16.mxu0 %v5465
      %7153 = vmatpush2.bf16.msra.mxu0 %v5464
      %7154 = vmatprep.subr.bf16.mxu0 %v5461
      %7155 = vmatpush2.bf16.msra.mxu0 %v5460
      %7156 = vmatprep.subr.bf16.mxu0 %v5457
      %7157 = vmatpush2.bf16.msra.mxu0 %v5456
      %7158 = vmatprep.subr.bf16.mxu0 %v5453
      %7159 = vmatpush2.bf16.msra.mxu0 %v5452
      %7160 = vmatprep.subr.bf16.mxu0 %v5449
      %7161 = vmatpush2.bf16.msra.mxu0 %v5448
      %7162 = vmatprep.subr.bf16.mxu0 %v5445
      %7163 = vmatpush2.bf16.msra.mxu0 %v5444
      %7164 = vmatprep.subr.bf16.mxu0 %v5441
      %7165 = vmatpush2.bf16.msra.mxu0 %v5440
      %7166 = vmatprep.mubr.bf16.mxu0 %v1405
      %7167 = vmatmul.mubr.bf16.gmra.mxu0 %v1404
      %v7168 = vpop.f32.mrf.mxu0
      %v7169 = vadd.f32 %v7128, %v7168
      %v7170 = vpop.f32.mrf.mxu0
      %v7171 = vadd.f32 %v7130, %v7170
      %v7172 = vpop.f32.mrf.mxu0
      %v7173 = vpop.f32.mrf.mxu0
      %7174 = vdwg.mxu0
      %7175 = vmatprep.subr.bf16.mxu0 %v5501
      %7176 = vmatpush1.bf16.msra.mxu0 %v5500
      %7177 = vmatprep.subr.bf16.mxu0 %v5497
      %7178 = vmatpush1.bf16.msra.mxu0 %v5496
      %7179 = vmatprep.subr.bf16.mxu0 %v5493
      %7180 = vmatpush1.bf16.msra.mxu0 %v5492
      %7181 = vmatprep.subr.bf16.mxu0 %v5489
      %7182 = vmatpush1.bf16.msra.mxu0 %v5488
      %7183 = vmatprep.subr.bf16.mxu0 %v5485
      %7184 = vmatpush1.bf16.msra.mxu0 %v5484
      %7185 = vmatprep.subr.bf16.mxu0 %v5481
      %7186 = vmatpush1.bf16.msra.mxu0 %v5480
      %7187 = vmatprep.subr.bf16.mxu0 %v5477
      %7188 = vmatpush1.bf16.msra.mxu0 %v5476
      %7189 = vmatprep.subr.bf16.mxu0 %v5473
      %7190 = vmatpush1.bf16.msra.mxu0 %v5472
      %7191 = vmatprep.subr.bf16.mxu0 %v5533
      %7192 = vmatpush2.bf16.msra.mxu0 %v5532
      %7193 = vmatprep.subr.bf16.mxu0 %v5529
      %7194 = vmatpush2.bf16.msra.mxu0 %v5528
      %7195 = vmatprep.subr.bf16.mxu0 %v5525
      %7196 = vmatpush2.bf16.msra.mxu0 %v5524
      %7197 = vmatprep.subr.bf16.mxu0 %v5521
      %7198 = vmatpush2.bf16.msra.mxu0 %v5520
      %7199 = vmatprep.subr.bf16.mxu0 %v5517
      %7200 = vmatpush2.bf16.msra.mxu0 %v5516
      %7201 = vmatprep.subr.bf16.mxu0 %v5513
      %7202 = vmatpush2.bf16.msra.mxu0 %v5512
      %7203 = vmatprep.subr.bf16.mxu0 %v5509
      %7204 = vmatpush2.bf16.msra.mxu0 %v5508
      %7205 = vmatprep.subr.bf16.mxu0 %v5505
      %7206 = vmatpush2.bf16.msra.mxu0 %v5504
      %7207 = vmatprep.mubr.bf16.mxu0 %v1407
      %7208 = vmatmul.mubr.bf16.gmra.mxu0 %v1406
      %v7209 = vpop.f32.mrf.mxu0
      %v7210 = vadd.f32 %v7169, %v7209
      %v7211 = vpop.f32.mrf.mxu0
      %v7212 = vadd.f32 %v7171, %v7211
      %v7213 = vpop.f32.mrf.mxu0
      %v7214 = vpop.f32.mrf.mxu0
      %7215 = vdwg.mxu0
      %7216 = vmatprep.subr.bf16.mxu0 %v4543
      %7217 = vmatpush1.bf16.msra.mxu0 %v4542
      %7218 = vmatprep.subr.bf16.mxu0 %v4539
      %7219 = vmatpush1.bf16.msra.mxu0 %v4538
      %7220 = vmatprep.subr.bf16.mxu0 %v4535
      %7221 = vmatpush1.bf16.msra.mxu0 %v4534
      %7222 = vmatprep.subr.bf16.mxu0 %v4531
      %7223 = vmatpush1.bf16.msra.mxu0 %v4530
      %7224 = vmatprep.subr.bf16.mxu0 %v4527
      %7225 = vmatpush1.bf16.msra.mxu0 %v4526
      %7226 = vmatprep.subr.bf16.mxu0 %v4523
      %7227 = vmatpush1.bf16.msra.mxu0 %v4522
      %7228 = vmatprep.subr.bf16.mxu0 %v4519
      %7229 = vmatpush1.bf16.msra.mxu0 %v4518
      %7230 = vmatprep.subr.bf16.mxu0 %v4515
      %7231 = vmatpush1.bf16.msra.mxu0 %v4514
      %7232 = vmatprep.subr.bf16.mxu0 %v4575
      %7233 = vmatpush2.bf16.msra.mxu0 %v4574
      %7234 = vmatprep.subr.bf16.mxu0 %v4571
      %7235 = vmatpush2.bf16.msra.mxu0 %v4570
      %7236 = vmatprep.subr.bf16.mxu0 %v4567
      %7237 = vmatpush2.bf16.msra.mxu0 %v4566
      %7238 = vmatprep.subr.bf16.mxu0 %v4563
      %7239 = vmatpush2.bf16.msra.mxu0 %v4562
      %7240 = vmatprep.subr.bf16.mxu0 %v4559
      %7241 = vmatpush2.bf16.msra.mxu0 %v4558
      %7242 = vmatprep.subr.bf16.mxu0 %v4555
      %7243 = vmatpush2.bf16.msra.mxu0 %v4554
      %7244 = vmatprep.subr.bf16.mxu0 %v4551
      %7245 = vmatpush2.bf16.msra.mxu0 %v4550
      %7246 = vmatprep.subr.bf16.mxu0 %v4547
      %7247 = vmatpush2.bf16.msra.mxu0 %v4546
      %7248 = vmatprep.mubr.bf16.mxu0 %v1377
      %7249 = vmatmul.mubr.bf16.gmra.mxu0 %v1376
      %v7250 = vpop.f32.mrf.mxu0
      %v7251 = vadd.f32 0.0, %v7250
      %v7252 = vpop.f32.mrf.mxu0
      %v7253 = vadd.f32 0.0, %v7252
      %v7254 = vpop.f32.mrf.mxu0
      %v7255 = vpop.f32.mrf.mxu0
      %7256 = vdwg.mxu0
      %7257 = vmatprep.subr.bf16.mxu0 %v4607
      %7258 = vmatpush1.bf16.msra.mxu0 %v4606
      %7259 = vmatprep.subr.bf16.mxu0 %v4603
      %7260 = vmatpush1.bf16.msra.mxu0 %v4602
      %7261 = vmatprep.subr.bf16.mxu0 %v4599
      %7262 = vmatpush1.bf16.msra.mxu0 %v4598
      %7263 = vmatprep.subr.bf16.mxu0 %v4595
      %7264 = vmatpush1.bf16.msra.mxu0 %v4594
      %7265 = vmatprep.subr.bf16.mxu0 %v4591
      %7266 = vmatpush1.bf16.msra.mxu0 %v4590
      %7267 = vmatprep.subr.bf16.mxu0 %v4587
      %7268 = vmatpush1.bf16.msra.mxu0 %v4586
      %7269 = vmatprep.subr.bf16.mxu0 %v4583
      %7270 = vmatpush1.bf16.msra.mxu0 %v4582
      %7271 = vmatprep.subr.bf16.mxu0 %v4579
      %7272 = vmatpush1.bf16.msra.mxu0 %v4578
      %7273 = vmatprep.subr.bf16.mxu0 %v4639
      %7274 = vmatpush2.bf16.msra.mxu0 %v4638
      %7275 = vmatprep.subr.bf16.mxu0 %v4635
      %7276 = vmatpush2.bf16.msra.mxu0 %v4634
      %7277 = vmatprep.subr.bf16.mxu0 %v4631
      %7278 = vmatpush2.bf16.msra.mxu0 %v4630
      %7279 = vmatprep.subr.bf16.mxu0 %v4627
      %7280 = vmatpush2.bf16.msra.mxu0 %v4626
      %7281 = vmatprep.subr.bf16.mxu0 %v4623
      %7282 = vmatpush2.bf16.msra.mxu0 %v4622
      %7283 = vmatprep.subr.bf16.mxu0 %v4619
      %7284 = vmatpush2.bf16.msra.mxu0 %v4618
      %7285 = vmatprep.subr.bf16.mxu0 %v4615
      %7286 = vmatpush2.bf16.msra.mxu0 %v4614
      %7287 = vmatprep.subr.bf16.mxu0 %v4611
      %7288 = vmatpush2.bf16.msra.mxu0 %v4610
      %7289 = vmatprep.mubr.bf16.mxu0 %v1379
      %7290 = vmatmul.mubr.bf16.gmra.mxu0 %v1378
      %v7291 = vpop.f32.mrf.mxu0
      %v7292 = vadd.f32 %v7251, %v7291
      %v7293 = vpop.f32.mrf.mxu0
      %v7294 = vadd.f32 %v7253, %v7293
      %v7295 = vpop.f32.mrf.mxu0
      %v7296 = vpop.f32.mrf.mxu0
      %7297 = vdwg.mxu0
      %7298 = vmatprep.subr.bf16.mxu0 %v4671
      %7299 = vmatpush1.bf16.msra.mxu0 %v4670
      %7300 = vmatprep.subr.bf16.mxu0 %v4667
      %7301 = vmatpush1.bf16.msra.mxu0 %v4666
      %7302 = vmatprep.subr.bf16.mxu0 %v4663
      %7303 = vmatpush1.bf16.msra.mxu0 %v4662
      %7304 = vmatprep.subr.bf16.mxu0 %v4659
      %7305 = vmatpush1.bf16.msra.mxu0 %v4658
      %7306 = vmatprep.subr.bf16.mxu0 %v4655
      %7307 = vmatpush1.bf16.msra.mxu0 %v4654
      %7308 = vmatprep.subr.bf16.mxu0 %v4651
      %7309 = vmatpush1.bf16.msra.mxu0 %v4650
      %7310 = vmatprep.subr.bf16.mxu0 %v4647
      %7311 = vmatpush1.bf16.msra.mxu0 %v4646
      %7312 = vmatprep.subr.bf16.mxu0 %v4643
      %7313 = vmatpush1.bf16.msra.mxu0 %v4642
      %7314 = vmatprep.subr.bf16.mxu0 %v4703
      %7315 = vmatpush2.bf16.msra.mxu0 %v4702
      %7316 = vmatprep.subr.bf16.mxu0 %v4699
      %7317 = vmatpush2.bf16.msra.mxu0 %v4698
      %7318 = vmatprep.subr.bf16.mxu0 %v4695
      %7319 = vmatpush2.bf16.msra.mxu0 %v4694
      %7320 = vmatprep.subr.bf16.mxu0 %v4691
      %7321 = vmatpush2.bf16.msra.mxu0 %v4690
      %7322 = vmatprep.subr.bf16.mxu0 %v4687
      %7323 = vmatpush2.bf16.msra.mxu0 %v4686
      %7324 = vmatprep.subr.bf16.mxu0 %v4683
      %7325 = vmatpush2.bf16.msra.mxu0 %v4682
      %7326 = vmatprep.subr.bf16.mxu0 %v4679
      %7327 = vmatpush2.bf16.msra.mxu0 %v4678
      %7328 = vmatprep.subr.bf16.mxu0 %v4675
      %7329 = vmatpush2.bf16.msra.mxu0 %v4674
      %7330 = vmatprep.mubr.bf16.mxu0 %v1381
      %7331 = vmatmul.mubr.bf16.gmra.mxu0 %v1380
      %v7332 = vpop.f32.mrf.mxu0
      %v7333 = vadd.f32 %v7292, %v7332
      %v7334 = vpop.f32.mrf.mxu0
      %v7335 = vadd.f32 %v7294, %v7334
      %v7336 = vpop.f32.mrf.mxu0
      %v7337 = vpop.f32.mrf.mxu0
      %7338 = vdwg.mxu0
      %7339 = vmatprep.subr.bf16.mxu0 %v4735
      %7340 = vmatpush1.bf16.msra.mxu0 %v4734
      %7341 = vmatprep.subr.bf16.mxu0 %v4731
      %7342 = vmatpush1.bf16.msra.mxu0 %v4730
      %7343 = vmatprep.subr.bf16.mxu0 %v4727
      %7344 = vmatpush1.bf16.msra.mxu0 %v4726
      %7345 = vmatprep.subr.bf16.mxu0 %v4723
      %7346 = vmatpush1.bf16.msra.mxu0 %v4722
      %7347 = vmatprep.subr.bf16.mxu0 %v4719
      %7348 = vmatpush1.bf16.msra.mxu0 %v4718
      %7349 = vmatprep.subr.bf16.mxu0 %v4715
      %7350 = vmatpush1.bf16.msra.mxu0 %v4714
      %7351 = vmatprep.subr.bf16.mxu0 %v4711
      %7352 = vmatpush1.bf16.msra.mxu0 %v4710
      %7353 = vmatprep.subr.bf16.mxu0 %v4707
      %7354 = vmatpush1.bf16.msra.mxu0 %v4706
      %7355 = vmatprep.subr.bf16.mxu0 %v4767
      %7356 = vmatpush2.bf16.msra.mxu0 %v4766
      %7357 = vmatprep.subr.bf16.mxu0 %v4763
      %7358 = vmatpush2.bf16.msra.mxu0 %v4762
      %7359 = vmatprep.subr.bf16.mxu0 %v4759
      %7360 = vmatpush2.bf16.msra.mxu0 %v4758
      %7361 = vmatprep.subr.bf16.mxu0 %v4755
      %7362 = vmatpush2.bf16.msra.mxu0 %v4754
      %7363 = vmatprep.subr.bf16.mxu0 %v4751
      %7364 = vmatpush2.bf16.msra.mxu0 %v4750
      %7365 = vmatprep.subr.bf16.mxu0 %v4747
      %7366 = vmatpush2.bf16.msra.mxu0 %v4746
      %7367 = vmatprep.subr.bf16.mxu0 %v4743
      %7368 = vmatpush2.bf16.msra.mxu0 %v4742
      %7369 = vmatprep.subr.bf16.mxu0 %v4739
      %7370 = vmatpush2.bf16.msra.mxu0 %v4738
      %7371 = vmatprep.mubr.bf16.mxu0 %v1383
      %7372 = vmatmul.mubr.bf16.gmra.mxu0 %v1382
      %v7373 = vpop.f32.mrf.mxu0
      %v7374 = vadd.f32 %v7333, %v7373
      %v7375 = vpop.f32.mrf.mxu0
      %v7376 = vadd.f32 %v7335, %v7375
      %v7377 = vpop.f32.mrf.mxu0
      %v7378 = vpop.f32.mrf.mxu0
      %7379 = vdwg.mxu0
      %7380 = vmatprep.subr.bf16.mxu0 %v4799
      %7381 = vmatpush1.bf16.msra.mxu0 %v4798
      %7382 = vmatprep.subr.bf16.mxu0 %v4795
      %7383 = vmatpush1.bf16.msra.mxu0 %v4794
      %7384 = vmatprep.subr.bf16.mxu0 %v4791
      %7385 = vmatpush1.bf16.msra.mxu0 %v4790
      %7386 = vmatprep.subr.bf16.mxu0 %v4787
      %7387 = vmatpush1.bf16.msra.mxu0 %v4786
      %7388 = vmatprep.subr.bf16.mxu0 %v4783
      %7389 = vmatpush1.bf16.msra.mxu0 %v4782
      %7390 = vmatprep.subr.bf16.mxu0 %v4779
      %7391 = vmatpush1.bf16.msra.mxu0 %v4778
      %7392 = vmatprep.subr.bf16.mxu0 %v4775
      %7393 = vmatpush1.bf16.msra.mxu0 %v4774
      %7394 = vmatprep.subr.bf16.mxu0 %v4771
      %7395 = vmatpush1.bf16.msra.mxu0 %v4770
      %7396 = vmatprep.subr.bf16.mxu0 %v4831
      %7397 = vmatpush2.bf16.msra.mxu0 %v4830
      %7398 = vmatprep.subr.bf16.mxu0 %v4827
      %7399 = vmatpush2.bf16.msra.mxu0 %v4826
      %7400 = vmatprep.subr.bf16.mxu0 %v4823
      %7401 = vmatpush2.bf16.msra.mxu0 %v4822
      %7402 = vmatprep.subr.bf16.mxu0 %v4819
      %7403 = vmatpush2.bf16.msra.mxu0 %v4818
      %7404 = vmatprep.subr.bf16.mxu0 %v4815
      %7405 = vmatpush2.bf16.msra.mxu0 %v4814
      %7406 = vmatprep.subr.bf16.mxu0 %v4811
      %7407 = vmatpush2.bf16.msra.mxu0 %v4810
      %7408 = vmatprep.subr.bf16.mxu0 %v4807
      %7409 = vmatpush2.bf16.msra.mxu0 %v4806
      %7410 = vmatprep.subr.bf16.mxu0 %v4803
      %7411 = vmatpush2.bf16.msra.mxu0 %v4802
      %7412 = vmatprep.mubr.bf16.mxu0 %v1385
      %7413 = vmatmul.mubr.bf16.gmra.mxu0 %v1384
      %v7414 = vpop.f32.mrf.mxu0
      %v7415 = vadd.f32 %v7374, %v7414
      %v7416 = vpop.f32.mrf.mxu0
      %v7417 = vadd.f32 %v7376, %v7416
      %v7418 = vpop.f32.mrf.mxu0
      %v7419 = vpop.f32.mrf.mxu0
      %7420 = vdwg.mxu0
      %7421 = vmatprep.subr.bf16.mxu0 %v4863
      %7422 = vmatpush1.bf16.msra.mxu0 %v4862
      %7423 = vmatprep.subr.bf16.mxu0 %v4859
      %7424 = vmatpush1.bf16.msra.mxu0 %v4858
      %7425 = vmatprep.subr.bf16.mxu0 %v4855
      %7426 = vmatpush1.bf16.msra.mxu0 %v4854
      %7427 = vmatprep.subr.bf16.mxu0 %v4851
      %7428 = vmatpush1.bf16.msra.mxu0 %v4850
      %7429 = vmatprep.subr.bf16.mxu0 %v4847
      %7430 = vmatpush1.bf16.msra.mxu0 %v4846
      %7431 = vmatprep.subr.bf16.mxu0 %v4843
      %7432 = vmatpush1.bf16.msra.mxu0 %v4842
      %7433 = vmatprep.subr.bf16.mxu0 %v4839
      %7434 = vmatpush1.bf16.msra.mxu0 %v4838
      %7435 = vmatprep.subr.bf16.mxu0 %v4835
      %7436 = vmatpush1.bf16.msra.mxu0 %v4834
      %7437 = vmatprep.subr.bf16.mxu0 %v4895
      %7438 = vmatpush2.bf16.msra.mxu0 %v4894
      %7439 = vmatprep.subr.bf16.mxu0 %v4891
      %7440 = vmatpush2.bf16.msra.mxu0 %v4890
      %7441 = vmatprep.subr.bf16.mxu0 %v4887
      %7442 = vmatpush2.bf16.msra.mxu0 %v4886
      %7443 = vmatprep.subr.bf16.mxu0 %v4883
      %7444 = vmatpush2.bf16.msra.mxu0 %v4882
      %7445 = vmatprep.subr.bf16.mxu0 %v4879
      %7446 = vmatpush2.bf16.msra.mxu0 %v4878
      %7447 = vmatprep.subr.bf16.mxu0 %v4875
      %7448 = vmatpush2.bf16.msra.mxu0 %v4874
      %7449 = vmatprep.subr.bf16.mxu0 %v4871
      %7450 = vmatpush2.bf16.msra.mxu0 %v4870
      %7451 = vmatprep.subr.bf16.mxu0 %v4867
      %7452 = vmatpush2.bf16.msra.mxu0 %v4866
      %7453 = vmatprep.mubr.bf16.mxu0 %v1387
      %7454 = vmatmul.mubr.bf16.gmra.mxu0 %v1386
      %v7455 = vpop.f32.mrf.mxu0
      %v7456 = vadd.f32 %v7415, %v7455
      %v7457 = vpop.f32.mrf.mxu0
      %v7458 = vadd.f32 %v7417, %v7457
      %v7459 = vpop.f32.mrf.mxu0
      %v7460 = vpop.f32.mrf.mxu0
      %7461 = vdwg.mxu0
      %7462 = vmatprep.subr.bf16.mxu0 %v4927
      %7463 = vmatpush1.bf16.msra.mxu0 %v4926
      %7464 = vmatprep.subr.bf16.mxu0 %v4923
      %7465 = vmatpush1.bf16.msra.mxu0 %v4922
      %7466 = vmatprep.subr.bf16.mxu0 %v4919
      %7467 = vmatpush1.bf16.msra.mxu0 %v4918
      %7468 = vmatprep.subr.bf16.mxu0 %v4915
      %7469 = vmatpush1.bf16.msra.mxu0 %v4914
      %7470 = vmatprep.subr.bf16.mxu0 %v4911
      %7471 = vmatpush1.bf16.msra.mxu0 %v4910
      %7472 = vmatprep.subr.bf16.mxu0 %v4907
      %7473 = vmatpush1.bf16.msra.mxu0 %v4906
      %7474 = vmatprep.subr.bf16.mxu0 %v4903
      %7475 = vmatpush1.bf16.msra.mxu0 %v4902
      %7476 = vmatprep.subr.bf16.mxu0 %v4899
      %7477 = vmatpush1.bf16.msra.mxu0 %v4898
      %7478 = vmatprep.subr.bf16.mxu0 %v4959
      %7479 = vmatpush2.bf16.msra.mxu0 %v4958
      %7480 = vmatprep.subr.bf16.mxu0 %v4955
      %7481 = vmatpush2.bf16.msra.mxu0 %v4954
      %7482 = vmatprep.subr.bf16.mxu0 %v4951
      %7483 = vmatpush2.bf16.msra.mxu0 %v4950
      %7484 = vmatprep.subr.bf16.mxu0 %v4947
      %7485 = vmatpush2.bf16.msra.mxu0 %v4946
      %7486 = vmatprep.subr.bf16.mxu0 %v4943
      %7487 = vmatpush2.bf16.msra.mxu0 %v4942
      %7488 = vmatprep.subr.bf16.mxu0 %v4939
      %7489 = vmatpush2.bf16.msra.mxu0 %v4938
      %7490 = vmatprep.subr.bf16.mxu0 %v4935
      %7491 = vmatpush2.bf16.msra.mxu0 %v4934
      %7492 = vmatprep.subr.bf16.mxu0 %v4931
      %7493 = vmatpush2.bf16.msra.mxu0 %v4930
      %7494 = vmatprep.mubr.bf16.mxu0 %v1389
      %7495 = vmatmul.mubr.bf16.gmra.mxu0 %v1388
      %v7496 = vpop.f32.mrf.mxu0
      %v7497 = vadd.f32 %v7456, %v7496
      %v7498 = vpop.f32.mrf.mxu0
      %v7499 = vadd.f32 %v7458, %v7498
      %v7500 = vpop.f32.mrf.mxu0
      %v7501 = vpop.f32.mrf.mxu0
      %7502 = vdwg.mxu0
      %7503 = vmatprep.subr.bf16.mxu0 %v4991
      %7504 = vmatpush1.bf16.msra.mxu0 %v4990
      %7505 = vmatprep.subr.bf16.mxu0 %v4987
      %7506 = vmatpush1.bf16.msra.mxu0 %v4986
      %7507 = vmatprep.subr.bf16.mxu0 %v4983
      %7508 = vmatpush1.bf16.msra.mxu0 %v4982
      %7509 = vmatprep.subr.bf16.mxu0 %v4979
      %7510 = vmatpush1.bf16.msra.mxu0 %v4978
      %7511 = vmatprep.subr.bf16.mxu0 %v4975
      %7512 = vmatpush1.bf16.msra.mxu0 %v4974
      %7513 = vmatprep.subr.bf16.mxu0 %v4971
      %7514 = vmatpush1.bf16.msra.mxu0 %v4970
      %7515 = vmatprep.subr.bf16.mxu0 %v4967
      %7516 = vmatpush1.bf16.msra.mxu0 %v4966
      %7517 = vmatprep.subr.bf16.mxu0 %v4963
      %7518 = vmatpush1.bf16.msra.mxu0 %v4962
      %7519 = vmatprep.subr.bf16.mxu0 %v5023
      %7520 = vmatpush2.bf16.msra.mxu0 %v5022
      %7521 = vmatprep.subr.bf16.mxu0 %v5019
      %7522 = vmatpush2.bf16.msra.mxu0 %v5018
      %7523 = vmatprep.subr.bf16.mxu0 %v5015
      %7524 = vmatpush2.bf16.msra.mxu0 %v5014
      %7525 = vmatprep.subr.bf16.mxu0 %v5011
      %7526 = vmatpush2.bf16.msra.mxu0 %v5010
      %7527 = vmatprep.subr.bf16.mxu0 %v5007
      %7528 = vmatpush2.bf16.msra.mxu0 %v5006
      %7529 = vmatprep.subr.bf16.mxu0 %v5003
      %7530 = vmatpush2.bf16.msra.mxu0 %v5002
      %7531 = vmatprep.subr.bf16.mxu0 %v4999
      %7532 = vmatpush2.bf16.msra.mxu0 %v4998
      %7533 = vmatprep.subr.bf16.mxu0 %v4995
      %7534 = vmatpush2.bf16.msra.mxu0 %v4994
      %7535 = vmatprep.mubr.bf16.mxu0 %v1391
      %7536 = vmatmul.mubr.bf16.gmra.mxu0 %v1390
      %v7537 = vpop.f32.mrf.mxu0
      %v7538 = vadd.f32 %v7497, %v7537
      %v7539 = vpop.f32.mrf.mxu0
      %v7540 = vadd.f32 %v7499, %v7539
      %v7541 = vpop.f32.mrf.mxu0
      %v7542 = vpop.f32.mrf.mxu0
      %7543 = vdwg.mxu0
      %7544 = vmatprep.subr.bf16.mxu0 %v5055
      %7545 = vmatpush1.bf16.msra.mxu0 %v5054
      %7546 = vmatprep.subr.bf16.mxu0 %v5051
      %7547 = vmatpush1.bf16.msra.mxu0 %v5050
      %7548 = vmatprep.subr.bf16.mxu0 %v5047
      %7549 = vmatpush1.bf16.msra.mxu0 %v5046
      %7550 = vmatprep.subr.bf16.mxu0 %v5043
      %7551 = vmatpush1.bf16.msra.mxu0 %v5042
      %7552 = vmatprep.subr.bf16.mxu0 %v5039
      %7553 = vmatpush1.bf16.msra.mxu0 %v5038
      %7554 = vmatprep.subr.bf16.mxu0 %v5035
      %7555 = vmatpush1.bf16.msra.mxu0 %v5034
      %7556 = vmatprep.subr.bf16.mxu0 %v5031
      %7557 = vmatpush1.bf16.msra.mxu0 %v5030
      %7558 = vmatprep.subr.bf16.mxu0 %v5027
      %7559 = vmatpush1.bf16.msra.mxu0 %v5026
      %7560 = vmatprep.subr.bf16.mxu0 %v5087
      %7561 = vmatpush2.bf16.msra.mxu0 %v5086
      %7562 = vmatprep.subr.bf16.mxu0 %v5083
      %7563 = vmatpush2.bf16.msra.mxu0 %v5082
      %7564 = vmatprep.subr.bf16.mxu0 %v5079
      %7565 = vmatpush2.bf16.msra.mxu0 %v5078
      %7566 = vmatprep.subr.bf16.mxu0 %v5075
      %7567 = vmatpush2.bf16.msra.mxu0 %v5074
      %7568 = vmatprep.subr.bf16.mxu0 %v5071
      %7569 = vmatpush2.bf16.msra.mxu0 %v5070
      %7570 = vmatprep.subr.bf16.mxu0 %v5067
      %7571 = vmatpush2.bf16.msra.mxu0 %v5066
      %7572 = vmatprep.subr.bf16.mxu0 %v5063
      %7573 = vmatpush2.bf16.msra.mxu0 %v5062
      %7574 = vmatprep.subr.bf16.mxu0 %v5059
      %7575 = vmatpush2.bf16.msra.mxu0 %v5058
      %7576 = vmatprep.mubr.bf16.mxu0 %v1393
      %7577 = vmatmul.mubr.bf16.gmra.mxu0 %v1392
      %v7578 = vpop.f32.mrf.mxu0
      %v7579 = vadd.f32 %v7538, %v7578
      %v7580 = vpop.f32.mrf.mxu0
      %v7581 = vadd.f32 %v7540, %v7580
      %v7582 = vpop.f32.mrf.mxu0
      %v7583 = vpop.f32.mrf.mxu0
      %7584 = vdwg.mxu0
      %7585 = vmatprep.subr.bf16.mxu0 %v5119
      %7586 = vmatpush1.bf16.msra.mxu0 %v5118
      %7587 = vmatprep.subr.bf16.mxu0 %v5115
      %7588 = vmatpush1.bf16.msra.mxu0 %v5114
      %7589 = vmatprep.subr.bf16.mxu0 %v5111
      %7590 = vmatpush1.bf16.msra.mxu0 %v5110
      %7591 = vmatprep.subr.bf16.mxu0 %v5107
      %7592 = vmatpush1.bf16.msra.mxu0 %v5106
      %7593 = vmatprep.subr.bf16.mxu0 %v5103
      %7594 = vmatpush1.bf16.msra.mxu0 %v5102
      %7595 = vmatprep.subr.bf16.mxu0 %v5099
      %7596 = vmatpush1.bf16.msra.mxu0 %v5098
      %7597 = vmatprep.subr.bf16.mxu0 %v5095
      %7598 = vmatpush1.bf16.msra.mxu0 %v5094
      %7599 = vmatprep.subr.bf16.mxu0 %v5091
      %7600 = vmatpush1.bf16.msra.mxu0 %v5090
      %7601 = vmatprep.subr.bf16.mxu0 %v5151
      %7602 = vmatpush2.bf16.msra.mxu0 %v5150
      %7603 = vmatprep.subr.bf16.mxu0 %v5147
      %7604 = vmatpush2.bf16.msra.mxu0 %v5146
      %7605 = vmatprep.subr.bf16.mxu0 %v5143
      %7606 = vmatpush2.bf16.msra.mxu0 %v5142
      %7607 = vmatprep.subr.bf16.mxu0 %v5139
      %7608 = vmatpush2.bf16.msra.mxu0 %v5138
      %7609 = vmatprep.subr.bf16.mxu0 %v5135
      %7610 = vmatpush2.bf16.msra.mxu0 %v5134
      %7611 = vmatprep.subr.bf16.mxu0 %v5131
      %7612 = vmatpush2.bf16.msra.mxu0 %v5130
      %7613 = vmatprep.subr.bf16.mxu0 %v5127
      %7614 = vmatpush2.bf16.msra.mxu0 %v5126
      %7615 = vmatprep.subr.bf16.mxu0 %v5123
      %7616 = vmatpush2.bf16.msra.mxu0 %v5122
      %7617 = vmatprep.mubr.bf16.mxu0 %v1395
      %7618 = vmatmul.mubr.bf16.gmra.mxu0 %v1394
      %v7619 = vpop.f32.mrf.mxu0
      %v7620 = vadd.f32 %v7579, %v7619
      %v7621 = vpop.f32.mrf.mxu0
      %v7622 = vadd.f32 %v7581, %v7621
      %v7623 = vpop.f32.mrf.mxu0
      %v7624 = vpop.f32.mrf.mxu0
      %7625 = vdwg.mxu0
      %7626 = vmatprep.subr.bf16.mxu0 %v5183
      %7627 = vmatpush1.bf16.msra.mxu0 %v5182
      %7628 = vmatprep.subr.bf16.mxu0 %v5179
      %7629 = vmatpush1.bf16.msra.mxu0 %v5178
      %7630 = vmatprep.subr.bf16.mxu0 %v5175
      %7631 = vmatpush1.bf16.msra.mxu0 %v5174
      %7632 = vmatprep.subr.bf16.mxu0 %v5171
      %7633 = vmatpush1.bf16.msra.mxu0 %v5170
      %7634 = vmatprep.subr.bf16.mxu0 %v5167
      %7635 = vmatpush1.bf16.msra.mxu0 %v5166
      %7636 = vmatprep.subr.bf16.mxu0 %v5163
      %7637 = vmatpush1.bf16.msra.mxu0 %v5162
      %7638 = vmatprep.subr.bf16.mxu0 %v5159
      %7639 = vmatpush1.bf16.msra.mxu0 %v5158
      %7640 = vmatprep.subr.bf16.mxu0 %v5155
      %7641 = vmatpush1.bf16.msra.mxu0 %v5154
      %7642 = vmatprep.subr.bf16.mxu0 %v5215
      %7643 = vmatpush2.bf16.msra.mxu0 %v5214
      %7644 = vmatprep.subr.bf16.mxu0 %v5211
      %7645 = vmatpush2.bf16.msra.mxu0 %v5210
      %7646 = vmatprep.subr.bf16.mxu0 %v5207
      %7647 = vmatpush2.bf16.msra.mxu0 %v5206
      %7648 = vmatprep.subr.bf16.mxu0 %v5203
      %7649 = vmatpush2.bf16.msra.mxu0 %v5202
      %7650 = vmatprep.subr.bf16.mxu0 %v5199
      %7651 = vmatpush2.bf16.msra.mxu0 %v5198
      %7652 = vmatprep.subr.bf16.mxu0 %v5195
      %7653 = vmatpush2.bf16.msra.mxu0 %v5194
      %7654 = vmatprep.subr.bf16.mxu0 %v5191
      %7655 = vmatpush2.bf16.msra.mxu0 %v5190
      %7656 = vmatprep.subr.bf16.mxu0 %v5187
      %7657 = vmatpush2.bf16.msra.mxu0 %v5186
      %7658 = vmatprep.mubr.bf16.mxu0 %v1397
      %7659 = vmatmul.mubr.bf16.gmra.mxu0 %v1396
      %v7660 = vpop.f32.mrf.mxu0
      %v7661 = vadd.f32 %v7620, %v7660
      %v7662 = vpop.f32.mrf.mxu0
      %v7663 = vadd.f32 %v7622, %v7662
      %v7664 = vpop.f32.mrf.mxu0
      %v7665 = vpop.f32.mrf.mxu0
      %7666 = vdwg.mxu0
      %7667 = vmatprep.subr.bf16.mxu0 %v5247
      %7668 = vmatpush1.bf16.msra.mxu0 %v5246
      %7669 = vmatprep.subr.bf16.mxu0 %v5243
      %7670 = vmatpush1.bf16.msra.mxu0 %v5242
      %7671 = vmatprep.subr.bf16.mxu0 %v5239
      %7672 = vmatpush1.bf16.msra.mxu0 %v5238
      %7673 = vmatprep.subr.bf16.mxu0 %v5235
      %7674 = vmatpush1.bf16.msra.mxu0 %v5234
      %7675 = vmatprep.subr.bf16.mxu0 %v5231
      %7676 = vmatpush1.bf16.msra.mxu0 %v5230
      %7677 = vmatprep.subr.bf16.mxu0 %v5227
      %7678 = vmatpush1.bf16.msra.mxu0 %v5226
      %7679 = vmatprep.subr.bf16.mxu0 %v5223
      %7680 = vmatpush1.bf16.msra.mxu0 %v5222
      %7681 = vmatprep.subr.bf16.mxu0 %v5219
      %7682 = vmatpush1.bf16.msra.mxu0 %v5218
      %7683 = vmatprep.subr.bf16.mxu0 %v5279
      %7684 = vmatpush2.bf16.msra.mxu0 %v5278
      %7685 = vmatprep.subr.bf16.mxu0 %v5275
      %7686 = vmatpush2.bf16.msra.mxu0 %v5274
      %7687 = vmatprep.subr.bf16.mxu0 %v5271
      %7688 = vmatpush2.bf16.msra.mxu0 %v5270
      %7689 = vmatprep.subr.bf16.mxu0 %v5267
      %7690 = vmatpush2.bf16.msra.mxu0 %v5266
      %7691 = vmatprep.subr.bf16.mxu0 %v5263
      %7692 = vmatpush2.bf16.msra.mxu0 %v5262
      %7693 = vmatprep.subr.bf16.mxu0 %v5259
      %7694 = vmatpush2.bf16.msra.mxu0 %v5258
      %7695 = vmatprep.subr.bf16.mxu0 %v5255
      %7696 = vmatpush2.bf16.msra.mxu0 %v5254
      %7697 = vmatprep.subr.bf16.mxu0 %v5251
      %7698 = vmatpush2.bf16.msra.mxu0 %v5250
      %7699 = vmatprep.mubr.bf16.mxu0 %v1399
      %7700 = vmatmul.mubr.bf16.gmra.mxu0 %v1398
      %v7701 = vpop.f32.mrf.mxu0
      %v7702 = vadd.f32 %v7661, %v7701
      %v7703 = vpop.f32.mrf.mxu0
      %v7704 = vadd.f32 %v7663, %v7703
      %v7705 = vpop.f32.mrf.mxu0
      %v7706 = vpop.f32.mrf.mxu0
      %7707 = vdwg.mxu0
      %7708 = vmatprep.subr.bf16.mxu0 %v5311
      %7709 = vmatpush1.bf16.msra.mxu0 %v5310
      %7710 = vmatprep.subr.bf16.mxu0 %v5307
      %7711 = vmatpush1.bf16.msra.mxu0 %v5306
      %7712 = vmatprep.subr.bf16.mxu0 %v5303
      %7713 = vmatpush1.bf16.msra.mxu0 %v5302
      %7714 = vmatprep.subr.bf16.mxu0 %v5299
      %7715 = vmatpush1.bf16.msra.mxu0 %v5298
      %7716 = vmatprep.subr.bf16.mxu0 %v5295
      %7717 = vmatpush1.bf16.msra.mxu0 %v5294
      %7718 = vmatprep.subr.bf16.mxu0 %v5291
      %7719 = vmatpush1.bf16.msra.mxu0 %v5290
      %7720 = vmatprep.subr.bf16.mxu0 %v5287
      %7721 = vmatpush1.bf16.msra.mxu0 %v5286
      %7722 = vmatprep.subr.bf16.mxu0 %v5283
      %7723 = vmatpush1.bf16.msra.mxu0 %v5282
      %7724 = vmatprep.subr.bf16.mxu0 %v5343
      %7725 = vmatpush2.bf16.msra.mxu0 %v5342
      %7726 = vmatprep.subr.bf16.mxu0 %v5339
      %7727 = vmatpush2.bf16.msra.mxu0 %v5338
      %7728 = vmatprep.subr.bf16.mxu0 %v5335
      %7729 = vmatpush2.bf16.msra.mxu0 %v5334
      %7730 = vmatprep.subr.bf16.mxu0 %v5331
      %7731 = vmatpush2.bf16.msra.mxu0 %v5330
      %7732 = vmatprep.subr.bf16.mxu0 %v5327
      %7733 = vmatpush2.bf16.msra.mxu0 %v5326
      %7734 = vmatprep.subr.bf16.mxu0 %v5323
      %7735 = vmatpush2.bf16.msra.mxu0 %v5322
      %7736 = vmatprep.subr.bf16.mxu0 %v5319
      %7737 = vmatpush2.bf16.msra.mxu0 %v5318
      %7738 = vmatprep.subr.bf16.mxu0 %v5315
      %7739 = vmatpush2.bf16.msra.mxu0 %v5314
      %7740 = vmatprep.mubr.bf16.mxu0 %v1401
      %7741 = vmatmul.mubr.bf16.gmra.mxu0 %v1400
      %v7742 = vpop.f32.mrf.mxu0
      %v7743 = vadd.f32 %v7702, %v7742
      %v7744 = vpop.f32.mrf.mxu0
      %v7745 = vadd.f32 %v7704, %v7744
      %v7746 = vpop.f32.mrf.mxu0
      %v7747 = vpop.f32.mrf.mxu0
      %7748 = vdwg.mxu0
      %7749 = vmatprep.subr.bf16.mxu0 %v5375
      %7750 = vmatpush1.bf16.msra.mxu0 %v5374
      %7751 = vmatprep.subr.bf16.mxu0 %v5371
      %7752 = vmatpush1.bf16.msra.mxu0 %v5370
      %7753 = vmatprep.subr.bf16.mxu0 %v5367
      %7754 = vmatpush1.bf16.msra.mxu0 %v5366
      %7755 = vmatprep.subr.bf16.mxu0 %v5363
      %7756 = vmatpush1.bf16.msra.mxu0 %v5362
      %7757 = vmatprep.subr.bf16.mxu0 %v5359
      %7758 = vmatpush1.bf16.msra.mxu0 %v5358
      %7759 = vmatprep.subr.bf16.mxu0 %v5355
      %7760 = vmatpush1.bf16.msra.mxu0 %v5354
      %7761 = vmatprep.subr.bf16.mxu0 %v5351
      %7762 = vmatpush1.bf16.msra.mxu0 %v5350
      %7763 = vmatprep.subr.bf16.mxu0 %v5347
      %7764 = vmatpush1.bf16.msra.mxu0 %v5346
      %7765 = vmatprep.subr.bf16.mxu0 %v5407
      %7766 = vmatpush2.bf16.msra.mxu0 %v5406
      %7767 = vmatprep.subr.bf16.mxu0 %v5403
      %7768 = vmatpush2.bf16.msra.mxu0 %v5402
      %7769 = vmatprep.subr.bf16.mxu0 %v5399
      %7770 = vmatpush2.bf16.msra.mxu0 %v5398
      %7771 = vmatprep.subr.bf16.mxu0 %v5395
      %7772 = vmatpush2.bf16.msra.mxu0 %v5394
      %7773 = vmatprep.subr.bf16.mxu0 %v5391
      %7774 = vmatpush2.bf16.msra.mxu0 %v5390
      %7775 = vmatprep.subr.bf16.mxu0 %v5387
      %7776 = vmatpush2.bf16.msra.mxu0 %v5386
      %7777 = vmatprep.subr.bf16.mxu0 %v5383
      %7778 = vmatpush2.bf16.msra.mxu0 %v5382
      %7779 = vmatprep.subr.bf16.mxu0 %v5379
      %7780 = vmatpush2.bf16.msra.mxu0 %v5378
      %7781 = vmatprep.mubr.bf16.mxu0 %v1403
      %7782 = vmatmul.mubr.bf16.gmra.mxu0 %v1402
      %v7783 = vpop.f32.mrf.mxu0
      %v7784 = vadd.f32 %v7743, %v7783
      %v7785 = vpop.f32.mrf.mxu0
      %v7786 = vadd.f32 %v7745, %v7785
      %v7787 = vpop.f32.mrf.mxu0
      %v7788 = vpop.f32.mrf.mxu0
      %7789 = vdwg.mxu0
      %7790 = vmatprep.subr.bf16.mxu0 %v5439
      %7791 = vmatpush1.bf16.msra.mxu0 %v5438
      %7792 = vmatprep.subr.bf16.mxu0 %v5435
      %7793 = vmatpush1.bf16.msra.mxu0 %v5434
      %7794 = vmatprep.subr.bf16.mxu0 %v5431
      %7795 = vmatpush1.bf16.msra.mxu0 %v5430
      %7796 = vmatprep.subr.bf16.mxu0 %v5427
      %7797 = vmatpush1.bf16.msra.mxu0 %v5426
      %7798 = vmatprep.subr.bf16.mxu0 %v5423
      %7799 = vmatpush1.bf16.msra.mxu0 %v5422
      %7800 = vmatprep.subr.bf16.mxu0 %v5419
      %7801 = vmatpush1.bf16.msra.mxu0 %v5418
      %7802 = vmatprep.subr.bf16.mxu0 %v5415
      %7803 = vmatpush1.bf16.msra.mxu0 %v5414
      %7804 = vmatprep.subr.bf16.mxu0 %v5411
      %7805 = vmatpush1.bf16.msra.mxu0 %v5410
      %7806 = vmatprep.subr.bf16.mxu0 %v5471
      %7807 = vmatpush2.bf16.msra.mxu0 %v5470
      %7808 = vmatprep.subr.bf16.mxu0 %v5467
      %7809 = vmatpush2.bf16.msra.mxu0 %v5466
      %7810 = vmatprep.subr.bf16.mxu0 %v5463
      %7811 = vmatpush2.bf16.msra.mxu0 %v5462
      %7812 = vmatprep.subr.bf16.mxu0 %v5459
      %7813 = vmatpush2.bf16.msra.mxu0 %v5458
      %7814 = vmatprep.subr.bf16.mxu0 %v5455
      %7815 = vmatpush2.bf16.msra.mxu0 %v5454
      %7816 = vmatprep.subr.bf16.mxu0 %v5451
      %7817 = vmatpush2.bf16.msra.mxu0 %v5450
      %7818 = vmatprep.subr.bf16.mxu0 %v5447
      %7819 = vmatpush2.bf16.msra.mxu0 %v5446
      %7820 = vmatprep.subr.bf16.mxu0 %v5443
      %7821 = vmatpush2.bf16.msra.mxu0 %v5442
      %7822 = vmatprep.mubr.bf16.mxu0 %v1405
      %7823 = vmatmul.mubr.bf16.gmra.mxu0 %v1404
      %v7824 = vpop.f32.mrf.mxu0
      %v7825 = vadd.f32 %v7784, %v7824
      %v7826 = vpop.f32.mrf.mxu0
      %v7827 = vadd.f32 %v7786, %v7826
      %v7828 = vpop.f32.mrf.mxu0
      %v7829 = vpop.f32.mrf.mxu0
      %7830 = vdwg.mxu0
      %7831 = vmatprep.subr.bf16.mxu0 %v5503
      %7832 = vmatpush1.bf16.msra.mxu0 %v5502
      %7833 = vmatprep.subr.bf16.mxu0 %v5499
      %7834 = vmatpush1.bf16.msra.mxu0 %v5498
      %7835 = vmatprep.subr.bf16.mxu0 %v5495
      %7836 = vmatpush1.bf16.msra.mxu0 %v5494
      %7837 = vmatprep.subr.bf16.mxu0 %v5491
      %7838 = vmatpush1.bf16.msra.mxu0 %v5490
      %7839 = vmatprep.subr.bf16.mxu0 %v5487
      %7840 = vmatpush1.bf16.msra.mxu0 %v5486
      %7841 = vmatprep.subr.bf16.mxu0 %v5483
      %7842 = vmatpush1.bf16.msra.mxu0 %v5482
      %7843 = vmatprep.subr.bf16.mxu0 %v5479
      %7844 = vmatpush1.bf16.msra.mxu0 %v5478
      %7845 = vmatprep.subr.bf16.mxu0 %v5475
      %7846 = vmatpush1.bf16.msra.mxu0 %v5474
      %7847 = vmatprep.subr.bf16.mxu0 %v5535
      %7848 = vmatpush2.bf16.msra.mxu0 %v5534
      %7849 = vmatprep.subr.bf16.mxu0 %v5531
      %7850 = vmatpush2.bf16.msra.mxu0 %v5530
      %7851 = vmatprep.subr.bf16.mxu0 %v5527
      %7852 = vmatpush2.bf16.msra.mxu0 %v5526
      %7853 = vmatprep.subr.bf16.mxu0 %v5523
      %7854 = vmatpush2.bf16.msra.mxu0 %v5522
      %7855 = vmatprep.subr.bf16.mxu0 %v5519
      %7856 = vmatpush2.bf16.msra.mxu0 %v5518
      %7857 = vmatprep.subr.bf16.mxu0 %v5515
      %7858 = vmatpush2.bf16.msra.mxu0 %v5514
      %7859 = vmatprep.subr.bf16.mxu0 %v5511
      %7860 = vmatpush2.bf16.msra.mxu0 %v5510
      %7861 = vmatprep.subr.bf16.mxu0 %v5507
      %7862 = vmatpush2.bf16.msra.mxu0 %v5506
      %7863 = vmatprep.mubr.bf16.mxu0 %v1407
      %7864 = vmatmul.mubr.bf16.gmra.mxu0 %v1406
      %v7865 = vpop.f32.mrf.mxu0
      %v7866 = vadd.f32 %v7825, %v7865
      %v7867 = vpop.f32.mrf.mxu0
      %v7868 = vadd.f32 %v7827, %v7867
      %v7869 = vpop.f32.mrf.mxu0
      %v7870 = vpop.f32.mrf.mxu0
      %7871 = vdwg.mxu0
      %v7872 = vadd.f32 %v284, %v7210
      %v7873 = vadd.f32 %v285, %v7212
      %v7874 = vadd.f32 %v286, %v7866
      %v7875 = vadd.f32 %v287, %v7868
      %7876 = vst [vmem:[#allocation2] sm:$0xff] %v7872
      %7877 = vst [vmem:[#allocation2 + $0x8] sm:$0xff] %v7873
      %7878 = vst [vmem:[#allocation2 + $0x10] sm:$0xff] %v7874
      %7879 = vst [vmem:[#allocation2 + $0x18] sm:$0xff] %v7875
      %p7880 = scmp.eq.s32.totalorder %s21, 3
      // Predicated region
      $region45: #{net_forward.7} parent=39 // pred_check
        %p7881 = pneg %p7880
      $region46: #{net_forward.7} parent=39 // pred_check_branch
        %7883 = sbr.rel (%p7881) target = $region48
      $region47: #{net_forward.7} parent=39 // pred_region
        %v7884 = vld [vmem:[#allocation2] sm:$0xff]
        %v7885 = vld [vmem:[#allocation2 + $0x8] sm:$0xff]
        %v7886 = vld [vmem:[#allocation2 + $0x10] sm:$0xff]
        %v7887 = vld [vmem:[#allocation2 + $0x18] sm:$0xff]
        %v7888 = vld [vmem:[%s2] sm:$0xf]
        %v7890 = vlaneseq
        %v7891 = vshrl.u32 %v7890, 7
        %v7892 = vsub.s32 0, %v7891
        %v7893 = vrot.slane %v7888, %v7892
        %v7894 = vlaneseq
        %v7895 = vshrl.u32 %v7894, 7
        %v7896 = vsub.s32 1, %v7895
        %v7897 = vrot.slane %v7888, %v7896
        %v7898 = vlaneseq
        %v7899 = vshrl.u32 %v7898, 7
        %v7900 = vsub.s32 2, %v7899
        %v7901 = vrot.slane %v7888, %v7900
        %v7902 = vlaneseq
        %v7903 = vshrl.u32 %v7902, 7
        %v7904 = vsub.s32 3, %v7903
        %v7905 = vrot.slane %v7888, %v7904
        %v7910 = vadd.f32 %v7884, %v7893
        %v7911 = vadd.f32 %v7885, %v7897
        %v7912 = vadd.f32 %v7886, %v7901
        %v7913 = vadd.f32 %v7887, %v7905
        %v7914 = vmax.f32 %v7910, 0.0
        %v7915 = vmax.f32 %v7911, 0.0
        %v7916 = vmax.f32 %v7912, 0.0
        %v7917 = vmax.f32 %v7913, 0.0
        %v7918 = vld [vmem:[%s3] sm:$0xff]
        %v7919 = vld [vmem:[%s3 + $0x8] sm:$0xff]
        %v7920 = vld [vmem:[%s3 + $0x10] sm:$0xff]
        %v7921 = vld [vmem:[%s3 + $0x18] sm:$0xff]
        %v7922 = vld [vmem:[%s3 + $0x20] sm:$0xff]
        %v7923 = vld [vmem:[%s3 + $0x28] sm:$0xff]
        %v7924 = vld [vmem:[%s3 + $0x30] sm:$0xff]
        %v7925 = vld [vmem:[%s3 + $0x38] sm:$0xff]
        %v7926 = vld [vmem:[%s3 + $0x40] sm:$0xff]
        %v7927 = vld [vmem:[%s3 + $0x48] sm:$0xff]
        %v7928 = vld [vmem:[%s3 + $0x50] sm:$0xff]
        %v7929 = vld [vmem:[%s3 + $0x58] sm:$0xff]
        %v7930 = vld [vmem:[%s3 + $0x60] sm:$0xff]
        %v7931 = vld [vmem:[%s3 + $0x68] sm:$0xff]
        %v7932 = vld [vmem:[%s3 + $0x70] sm:$0xff]
        %v7933 = vld [vmem:[%s3 + $0x78] sm:$0xff]
        %v7934 = vld [vmem:[%s3 + $0x80] sm:$0xff]
        %v7935 = vld [vmem:[%s3 + $0x88] sm:$0xff]
        %v7936 = vld [vmem:[%s3 + $0x90] sm:$0xff]
        %v7937 = vld [vmem:[%s3 + $0x98] sm:$0xff]
        %v7938 = vld [vmem:[%s3 + $0xa0] sm:$0xff]
        %v7939 = vld [vmem:[%s3 + $0xa8] sm:$0xff]
        %v7940 = vld [vmem:[%s3 + $0xb0] sm:$0xff]
        %v7941 = vld [vmem:[%s3 + $0xb8] sm:$0xff]
        %v7942 = vld [vmem:[%s3 + $0xc0] sm:$0xff]
        %v7943 = vld [vmem:[%s3 + $0xc8] sm:$0xff]
        %v7944 = vld [vmem:[%s3 + $0xd0] sm:$0xff]
        %v7945 = vld [vmem:[%s3 + $0xd8] sm:$0xff]
        %v7946 = vld [vmem:[%s3 + $0xe0] sm:$0xff]
        %v7947 = vld [vmem:[%s3 + $0xe8] sm:$0xff]
        %v7948 = vld [vmem:[%s3 + $0xf0] sm:$0xff]
        %v7949 = vld [vmem:[%s3 + $0xf8] sm:$0xff]
        %v7950 = vld [vmem:[%s3 + $0x100] sm:$0xff]
        %v7951 = vld [vmem:[%s3 + $0x108] sm:$0xff]
        %v7952 = vld [vmem:[%s3 + $0x110] sm:$0xff]
        %v7953 = vld [vmem:[%s3 + $0x118] sm:$0xff]
        %v7954 = vld [vmem:[%s3 + $0x120] sm:$0xff]
        %v7955 = vld [vmem:[%s3 + $0x128] sm:$0xff]
        %v7956 = vld [vmem:[%s3 + $0x130] sm:$0xff]
        %v7957 = vld [vmem:[%s3 + $0x138] sm:$0xff]
        %v7958 = vld [vmem:[%s3 + $0x140] sm:$0xff]
        %v7959 = vld [vmem:[%s3 + $0x148] sm:$0xff]
        %v7960 = vld [vmem:[%s3 + $0x150] sm:$0xff]
        %v7961 = vld [vmem:[%s3 + $0x158] sm:$0xff]
        %v7962 = vld [vmem:[%s3 + $0x160] sm:$0xff]
        %v7963 = vld [vmem:[%s3 + $0x168] sm:$0xff]
        %v7964 = vld [vmem:[%s3 + $0x170] sm:$0xff]
        %v7965 = vld [vmem:[%s3 + $0x178] sm:$0xff]
        %v7966 = vld [vmem:[%s3 + $0x180] sm:$0xff]
        %v7967 = vld [vmem:[%s3 + $0x188] sm:$0xff]
        %v7968 = vld [vmem:[%s3 + $0x190] sm:$0xff]
        %v7969 = vld [vmem:[%s3 + $0x198] sm:$0xff]
        %v7970 = vld [vmem:[%s3 + $0x1a0] sm:$0xff]
        %v7971 = vld [vmem:[%s3 + $0x1a8] sm:$0xff]
        %v7972 = vld [vmem:[%s3 + $0x1b0] sm:$0xff]
        %v7973 = vld [vmem:[%s3 + $0x1b8] sm:$0xff]
        %v7974 = vld [vmem:[%s3 + $0x1c0] sm:$0xff]
        %v7975 = vld [vmem:[%s3 + $0x1c8] sm:$0xff]
        %v7976 = vld [vmem:[%s3 + $0x1d0] sm:$0xff]
        %v7977 = vld [vmem:[%s3 + $0x1d8] sm:$0xff]
        %v7978 = vld [vmem:[%s3 + $0x1e0] sm:$0xff]
        %v7979 = vld [vmem:[%s3 + $0x1e8] sm:$0xff]
        %v7980 = vld [vmem:[%s3 + $0x1f0] sm:$0xff]
        %v7981 = vld [vmem:[%s3 + $0x1f8] sm:$0xff]
        %v7982 = vld [vmem:[%s4] sm:$0x1]
        %v7984 = vlaneseq
        %v7985 = vshrl.u32 %v7984, 7
        %v7986 = vsub.s32 0, %v7985
        %v7987 = vrot.slane %v7982, %v7986
        %7989 = vmatprep.subr.mxu0 0.0
        %7990 = vmatpush1.msra.mxu0 %v7933
        %7991 = vmatprep.subr.mxu0 0.0
        %7992 = vmatpush1.msra.mxu0 %v7932
        %7993 = vmatprep.subr.mxu0 0.0
        %7994 = vmatpush1.msra.mxu0 %v7931
        %7995 = vmatprep.subr.mxu0 0.0
        %7996 = vmatpush1.msra.mxu0 %v7930
        %7997 = vmatprep.subr.mxu0 0.0
        %7998 = vmatpush1.msra.mxu0 %v7929
        %7999 = vmatprep.subr.mxu0 0.0
        %8000 = vmatpush1.msra.mxu0 %v7928
        %8001 = vmatprep.subr.mxu0 0.0
        %8002 = vmatpush1.msra.mxu0 %v7927
        %8003 = vmatprep.subr.mxu0 0.0
        %8004 = vmatpush1.msra.mxu0 %v7926
        %8005 = vmatprep.subr.mxu0 0.0
        %8006 = vmatpush1.msra.mxu0 %v7925
        %8007 = vmatprep.subr.mxu0 0.0
        %8008 = vmatpush1.msra.mxu0 %v7924
        %8009 = vmatprep.subr.mxu0 0.0
        %8010 = vmatpush1.msra.mxu0 %v7923
        %8011 = vmatprep.subr.mxu0 0.0
        %8012 = vmatpush1.msra.mxu0 %v7922
        %8013 = vmatprep.subr.mxu0 0.0
        %8014 = vmatpush1.msra.mxu0 %v7921
        %8015 = vmatprep.subr.mxu0 0.0
        %8016 = vmatpush1.msra.mxu0 %v7920
        %8017 = vmatprep.subr.mxu0 0.0
        %8018 = vmatpush1.msra.mxu0 %v7919
        %8019 = vmatprep.subr.mxu0 0.0
        %8020 = vmatpush1.msra.mxu0 %v7918
        %8021 = vmatprep.subr.mxu0 0.0
        %8022 = vmatpush2.msra.mxu0 %v7949
        %8023 = vmatprep.subr.mxu0 0.0
        %8024 = vmatpush2.msra.mxu0 %v7948
        %8025 = vmatprep.subr.mxu0 0.0
        %8026 = vmatpush2.msra.mxu0 %v7947
        %8027 = vmatprep.subr.mxu0 0.0
        %8028 = vmatpush2.msra.mxu0 %v7946
        %8029 = vmatprep.subr.mxu0 0.0
        %8030 = vmatpush2.msra.mxu0 %v7945
        %8031 = vmatprep.subr.mxu0 0.0
        %8032 = vmatpush2.msra.mxu0 %v7944
        %8033 = vmatprep.subr.mxu0 0.0
        %8034 = vmatpush2.msra.mxu0 %v7943
        %8035 = vmatprep.subr.mxu0 0.0
        %8036 = vmatpush2.msra.mxu0 %v7942
        %8037 = vmatprep.subr.mxu0 0.0
        %8038 = vmatpush2.msra.mxu0 %v7941
        %8039 = vmatprep.subr.mxu0 0.0
        %8040 = vmatpush2.msra.mxu0 %v7940
        %8041 = vmatprep.subr.mxu0 0.0
        %8042 = vmatpush2.msra.mxu0 %v7939
        %8043 = vmatprep.subr.mxu0 0.0
        %8044 = vmatpush2.msra.mxu0 %v7938
        %8045 = vmatprep.subr.mxu0 0.0
        %8046 = vmatpush2.msra.mxu0 %v7937
        %8047 = vmatprep.subr.mxu0 0.0
        %8048 = vmatpush2.msra.mxu0 %v7936
        %8049 = vmatprep.subr.mxu0 0.0
        %8050 = vmatpush2.msra.mxu0 %v7935
        %8051 = vmatprep.subr.mxu0 0.0
        %8052 = vmatpush2.msra.mxu0 %v7934
        %8053 = vmatprep.mubr.f32.mxu0 %v7915
        %8054 = vmatmul.mubr.f32.gmra.mxu0 %v7914
        %v8055 = vpop.f32.mrf.mxu0
        %v8056 = vadd.f32 %v7987, %v8055
        %v8057 = vpop.f32.mrf.mxu0
        %8058 = vdwg.mxu0
        %8059 = vmatprep.subr.mxu0 0.0
        %8060 = vmatpush1.msra.mxu0 %v7965
        %8061 = vmatprep.subr.mxu0 0.0
        %8062 = vmatpush1.msra.mxu0 %v7964
        %8063 = vmatprep.subr.mxu0 0.0
        %8064 = vmatpush1.msra.mxu0 %v7963
        %8065 = vmatprep.subr.mxu0 0.0
        %8066 = vmatpush1.msra.mxu0 %v7962
        %8067 = vmatprep.subr.mxu0 0.0
        %8068 = vmatpush1.msra.mxu0 %v7961
        %8069 = vmatprep.subr.mxu0 0.0
        %8070 = vmatpush1.msra.mxu0 %v7960
        %8071 = vmatprep.subr.mxu0 0.0
        %8072 = vmatpush1.msra.mxu0 %v7959
        %8073 = vmatprep.subr.mxu0 0.0
        %8074 = vmatpush1.msra.mxu0 %v7958
        %8075 = vmatprep.subr.mxu0 0.0
        %8076 = vmatpush1.msra.mxu0 %v7957
        %8077 = vmatprep.subr.mxu0 0.0
        %8078 = vmatpush1.msra.mxu0 %v7956
        %8079 = vmatprep.subr.mxu0 0.0
        %8080 = vmatpush1.msra.mxu0 %v7955
        %8081 = vmatprep.subr.mxu0 0.0
        %8082 = vmatpush1.msra.mxu0 %v7954
        %8083 = vmatprep.subr.mxu0 0.0
        %8084 = vmatpush1.msra.mxu0 %v7953
        %8085 = vmatprep.subr.mxu0 0.0
        %8086 = vmatpush1.msra.mxu0 %v7952
        %8087 = vmatprep.subr.mxu0 0.0
        %8088 = vmatpush1.msra.mxu0 %v7951
        %8089 = vmatprep.subr.mxu0 0.0
        %8090 = vmatpush1.msra.mxu0 %v7950
        %8091 = vmatprep.subr.mxu0 0.0
        %8092 = vmatpush2.msra.mxu0 %v7981
        %8093 = vmatprep.subr.mxu0 0.0
        %8094 = vmatpush2.msra.mxu0 %v7980
        %8095 = vmatprep.subr.mxu0 0.0
        %8096 = vmatpush2.msra.mxu0 %v7979
        %8097 = vmatprep.subr.mxu0 0.0
        %8098 = vmatpush2.msra.mxu0 %v7978
        %8099 = vmatprep.subr.mxu0 0.0
        %8100 = vmatpush2.msra.mxu0 %v7977
        %8101 = vmatprep.subr.mxu0 0.0
        %8102 = vmatpush2.msra.mxu0 %v7976
        %8103 = vmatprep.subr.mxu0 0.0
        %8104 = vmatpush2.msra.mxu0 %v7975
        %8105 = vmatprep.subr.mxu0 0.0
        %8106 = vmatpush2.msra.mxu0 %v7974
        %8107 = vmatprep.subr.mxu0 0.0
        %8108 = vmatpush2.msra.mxu0 %v7973
        %8109 = vmatprep.subr.mxu0 0.0
        %8110 = vmatpush2.msra.mxu0 %v7972
        %8111 = vmatprep.subr.mxu0 0.0
        %8112 = vmatpush2.msra.mxu0 %v7971
        %8113 = vmatprep.subr.mxu0 0.0
        %8114 = vmatpush2.msra.mxu0 %v7970
        %8115 = vmatprep.subr.mxu0 0.0
        %8116 = vmatpush2.msra.mxu0 %v7969
        %8117 = vmatprep.subr.mxu0 0.0
        %8118 = vmatpush2.msra.mxu0 %v7968
        %8119 = vmatprep.subr.mxu0 0.0
        %8120 = vmatpush2.msra.mxu0 %v7967
        %8121 = vmatprep.subr.mxu0 0.0
        %8122 = vmatpush2.msra.mxu0 %v7966
        %8123 = vmatprep.mubr.f32.mxu0 %v7917
        %8124 = vmatmul.mubr.f32.gmra.mxu0 %v7916
        %v8125 = vpop.f32.mrf.mxu0
        %v8126 = vadd.f32 %v8056, %v8125
        %v8127 = vpop.f32.mrf.mxu0
        %8128 = vdwg.mxu0
        %8129 = vst [vmem:[%s275] sm:$0xff] %v8126
      $region48: #{net_forward.7} parent=39 // pred_fallthru
        _
      %p8130 = scmp.lt.s32.totalorder %s20, 0
      %s8131 = scalar_select %p8130, %s20, 0
      %s8132 = smul.addr %s8131, 8
      %s8133 = scalar_lea.vmem %s5, %s8132
      // Predicated region
      $region49: #{net_forward.7} parent=39 // pred_check
        %p8134 = pneg %p163
      $region50: #{net_forward.7} parent=39 // pred_check_branch
        %8136 = sbr.rel (%p8134) target = $region52
      $region51: #{net_forward.7} parent=39 // pred_region
        _
      $region52: #{net_forward.7} parent=39 // pred_fallthru
        _
      // Predicated region
      $region53: #{net_forward.7} parent=39 // pred_check
        %p8137 = pneg %p163
      $region54: #{net_forward.7} parent=39 // pred_check_branch
        %8139 = sbr.rel (%p8137) target = $region56
      $region55: #{net_forward.7} parent=39 // pred_region
        %p8140 = scmp.lt.s32.totalorder %s20, 0
        %s8141 = scalar_select %p8140, %s20, 0
        %s8142 = smul.addr %s8141, 8
        %s8143 = scalar_lea.vmem %s5, %s8142
      $region56: #{net_forward.7} parent=39 // pred_fallthru
        _
    $region40: #{net_forward.7} parent=5 // pred_fallthru
      _
    %p8144 = scmp.le.s32.totalorder 2, %s11
    // Predicated region
    $region57: #{net_forward.7} parent=5 // pred_check
      %p8145 = pneg %p8144
    $region58: #{net_forward.7} parent=5 // pred_check_branch
      %8147 = sbr.rel (%p8145) target = $region60
    $region59: #{net_forward.7} parent=5 // pred_region
      %s8148 = ssub.s32 %s11, 2
    $region60: #{net_forward.7} parent=5 // pred_fallthru
      _
  $region6: #{net_forward.7} parent=0 // loop_footer
    %s15 = sadd.s32 1, %s11
  $region7: #{net_forward.7} parent=0 // loop_footer_branch
    %10 = sbr.rel target = $region3
  $region8: #{net_forward.7} parent=0 // loop_exit
    _

</llo_original>
